<compile_context>
chip_gen: v7x
topology: tpu7x:2x2x1
jax: 0.10.0
libtpu: 0.0.40
codegen_flags: <defaults>
</compile_context>

<pallas_src>
import functools

import jax
import jax.numpy as jnp
from jax import lax
from jax.experimental import pallas as pl
from jax.experimental.pallas import tpu as pltpu


def _cdiv(a, b):
    return -(-a // b)


# ----------------------------------------------------------------------------
# Kernel A: conv1 + relu + conv2 + relu + 2x2 maxpool for a batch tile.
# ----------------------------------------------------------------------------
def _conv_pool_kernel(x_ref, w1_ref, b1_ref, w2_ref, b2_ref, out_ref, *scratch,
                      fast):
    bt = x_ref.shape[0]

    # ---- conv1: (bt,28,28[,1]) -> (bt,26,26,32), bias + relu, cast to bf16.
    if fast:
        # x arrives lane-dense as (bt,28,28); add the unit channel axis once so
        # each tap is a cheap lane-broadcast MAC against the 32 output channels.
        x4 = x_ref[...][:, :, :, None]                           # (bt,28,28,1)
    else:
        x4 = x_ref[...]                                          # (bt,28,28,1)
    y1 = None
    for kh in range(3):
        for kw in range(3):
            tap = x4[:, kh:kh + 26, kw:kw + 26, :] * w1_ref[kh, kw, :]
            y1 = tap if y1 is None else y1 + tap
    y1 = jnp.maximum(y1 + b1_ref[0, :], 0.0).astype(jnp.bfloat16)  # (bt,26,26,32)

    # ---- conv2: (bt,26,26,32) -> (bt*576,64), bf16 MXU matmul, f32 accumulation.
    if fast:
        # Single K=288 matmul over a bf16 im2col tile.
        cols = jnp.concatenate(
            [y1[:, kh:kh + 24, kw:kw + 24, :]
             for kh in range(3) for kw in range(3)], axis=3)     # (bt,24,24,288)
        y2 = jnp.dot(cols.reshape(bt * 576, 288), w2_ref[...],
                     preferred_element_type=jnp.float32)
    else:
        # Nine K=32 matmuls with value accumulation (no ref round trips).
        w2 = w2_ref[...]                                         # (288,64) bf16
        y2 = None
        for kh in range(3):
            for kw in range(3):
                lhs = y1[:, kh:kh + 24, kw:kw + 24, :].reshape(bt * 576, 32)
                k0 = (kh * 3 + kw) * 32
                d = jnp.dot(lhs, w2[k0:k0 + 32, :],
                            preferred_element_type=jnp.float32)
                y2 = d if y2 is None else y2 + d
    y2 = jnp.maximum(y2 + b2_ref[0, :], 0.0)                     # (bt*576,64) f32

    # ---- 2x2 max pool, stride 2.
    if fast:
        # Pool in bf16 (max commutes with rounding); H-pool via leading regroup,
        # W-pool via lane-half max on a contiguous (2,64)->128 lane merge.
        y2b = y2.astype(jnp.bfloat16).reshape(bt * 12, 2, 24, 64)
        hp = jnp.maximum(y2b[:, 0], y2b[:, 1])                   # (bt*12,24,64)
        hp2 = hp.reshape(bt * 12, 12, 128)                       # (2,64)->128 merge
        wp = jnp.maximum(hp2[:, :, 0:64], hp2[:, :, 64:128])     # (bt*12,12,64)
        out_ref[...] = wp.reshape(bt * 12, 6, 128)               # lane-dense store
    else:
        pool_ref = scratch[0]
        y2r = y2.reshape(bt * 12, 2, 24, 64)
        pool_ref[...] = jnp.maximum(y2r[:, 0], y2r[:, 1])        # (bt*12,24,64)
        out_ref[...] = jnp.maximum(
            pool_ref[:, pl.ds(0, 12, 2), :],
            pool_ref[:, pl.ds(1, 12, 2), :]).astype(out_ref.dtype)


def conv_pool(x, w1, b1, w2p, b2, *, bt, fast):
    Bp = x.shape[0]
    assert Bp % bt == 0
    if fast:
        x_spec = pl.BlockSpec((bt, 28, 28), lambda i: (i, 0, 0))
        out_shape = jax.ShapeDtypeStruct((Bp * 12, 6, 128), jnp.bfloat16)
        out_spec = pl.BlockSpec((bt * 12, 6, 128), lambda i: (i, 0, 0))
        scratch = []
    else:
        x_spec = pl.BlockSpec((bt, 28, 28, 1), lambda i: (i, 0, 0, 0))
        out_shape = jax.ShapeDtypeStruct((Bp * 12, 12, 64), jnp.bfloat16)
        out_spec = pl.BlockSpec((bt * 12, 12, 64), lambda i: (i, 0, 0))
        scratch = [pltpu.VMEM((bt * 12, 24, 64), jnp.float32)]
    kernel = functools.partial(_conv_pool_kernel, fast=fast)
    return pl.pallas_call(
        kernel,
        out_shape=out_shape,
        grid_spec=pltpu.PrefetchScalarGridSpec(
            num_scalar_prefetch=0,
            grid=(Bp // bt,),
            in_specs=[
                x_spec,
                pl.BlockSpec((3, 3, 32), lambda i: (0, 0, 0)),
                pl.BlockSpec((1, 32), lambda i: (0, 0)),
                pl.BlockSpec((288, 64), lambda i: (0, 0)),
                pl.BlockSpec((1, 64), lambda i: (0, 0)),
            ],
            out_specs=out_spec,
            scratch_shapes=scratch,
        ),
        compiler_params=pltpu.CompilerParams(
            dimension_semantics=("parallel",),
            vmem_limit_bytes=48 * 1024 * 1024),
    )(x, w1, b1, w2p, b2)


# ----------------------------------------------------------------------------
# Kernel B: fc1 + relu + fc2 (dropout layers are identity at inference).
# Batch-tiled; bf16 weights/activations, f32 accumulation; fc2 padded to 128 lanes.
# ----------------------------------------------------------------------------
def _mlp_kernel(x_ref, w1_ref, b1_ref, w2_ref, b2_ref, out_ref):
    h = jnp.dot(x_ref[...], w1_ref[...], preferred_element_type=jnp.float32)
    h = jnp.maximum(h + b1_ref[0, :], 0.0)
    out_ref[...] = (jnp.dot(h.astype(jnp.bfloat16), w2_ref[...],
                            preferred_element_type=jnp.float32) + b2_ref[0, :])


def mlp(flat_bf16, w1, b1, w2, b2):
    B, K = flat_bf16.shape
    H = w1.shape[1]
    G = w2.shape[1]
    # Batch tile: up to 256 rows, >=2 grid steps for moderate B (v7x megacore),
    # rounded to a multiple of 8 for sublane alignment.
    tb = min(256, max(8, _cdiv(_cdiv(B, 2), 8) * 8))
    Bp = _cdiv(B, tb) * tb
    if Bp != B:
        flat_bf16 = jnp.pad(flat_bf16, ((0, Bp - B), (0, 0)))
    out = pl.pallas_call(
        _mlp_kernel,
        out_shape=jax.ShapeDtypeStruct((Bp, G), jnp.float32),
        grid_spec=pltpu.PrefetchScalarGridSpec(
            num_scalar_prefetch=0,
            grid=(Bp // tb,),
            in_specs=[
                pl.BlockSpec((tb, K), lambda i: (i, 0)),
                pl.BlockSpec((K, H), lambda i: (0, 0)),   # resident fc1 weight
                pl.BlockSpec((1, H), lambda i: (0, 0)),
                pl.BlockSpec((H, G), lambda i: (0, 0)),
                pl.BlockSpec((1, G), lambda i: (0, 0)),
            ],
            out_specs=pl.BlockSpec((tb, G), lambda i: (i, 0)),
        ),
        compiler_params=pltpu.CompilerParams(
            dimension_semantics=("parallel",),
            vmem_limit_bytes=48 * 1024 * 1024),
    )(flat_bf16, w1, b1, w2, b2)
    return out[:B]


# ----------------------------------------------------------------------------
# Parameter setup (deterministic, synthetic) + glue.
# ----------------------------------------------------------------------------
def init_torch_params(key, g_features=100):
    """Parameters in the PyTorch module's native shapes."""
    ks = jax.random.split(key, 8)
    return {
        "conv1_w": jax.random.normal(ks[0], (32, 1, 3, 3), jnp.float32) / 3.0,
        "conv1_b": jax.random.normal(ks[1], (32,), jnp.float32) * 0.1,
        "conv2_w": jax.random.normal(ks[2], (64, 32, 3, 3), jnp.float32)
        / jnp.sqrt(32.0 * 9.0),
        "conv2_b": jax.random.normal(ks[3], (64,), jnp.float32) * 0.1,
        "fc1_w": jax.random.normal(ks[4], (128, 9216), jnp.float32)
        / jnp.sqrt(9216.0),
        "fc1_b": jax.random.normal(ks[5], (128,), jnp.float32) * 0.1,
        "fc2_w": jax.random.normal(ks[6], (g_features, 128), jnp.float32)
        / jnp.sqrt(128.0),
        "fc2_b": jax.random.normal(ks[7], (g_features,), jnp.float32) * 0.1,
    }


def to_kernel_params(p):
    """PyTorch-layout params -> kernel layouts (NHWC, packed bf16 conv2/fc)."""
    g = p["fc2_w"].shape[0]
    gp = _cdiv(g, 128) * 128                                       # pad to 128 lanes
    # conv1: (O,1,kh,kw) -> (kh,kw,O);  conv2: (O,I,kh,kw) -> (kh,kw,I,O) -> (288,O)
    w1 = jnp.transpose(p["conv1_w"][:, 0], (1, 2, 0))              # (3,3,32)
    w2p = jnp.transpose(p["conv2_w"], (2, 3, 1, 0)).reshape(288, 64)
    # fc1: permute in-features from PyTorch (c,h,w) flatten order to (h,w,c) order.
    fc1_hwc = jnp.transpose(p["fc1_w"].T.reshape(64, 12, 12, 128),
                            (1, 2, 0, 3)).reshape(9216, 128)
    fc2 = jnp.zeros((128, gp), jnp.float32).at[:, :g].set(p["fc2_w"].T)
    fc2_b = jnp.zeros((1, gp), jnp.float32).at[:, :g].set(p["fc2_b"][None, :])
    return {
        "w1": w1, "b1": p["conv1_b"].reshape(1, 32),
        "w2p": w2p.astype(jnp.bfloat16), "b2": p["conv2_b"].reshape(1, 64),
        "fc1_w": fc1_hwc.astype(jnp.bfloat16),
        "fc1_b": p["fc1_b"].reshape(1, 128),
        "fc2_w": fc2.astype(jnp.bfloat16),
        "fc2_b": fc2_b,
        "g_features": g,
    }


def cnn_z_forward(x_nchw, kp, *, fast=True):
    """Full forward pass.  x_nchw: (B,1,28,28) float32 -> (B, g_features)."""
    B = x_nchw.shape[0]
    g = kp["g_features"]
    x3 = x_nchw[:, 0, :, :].astype(jnp.float32)                    # (B,28,28)
    # Batch tile: >=2 grid steps whenever B>=2 (v7x megacore), capped by VMEM.
    bt = max(1, min(16 if fast else 4, _cdiv(B, 2)))
    Bp = _cdiv(B, bt) * bt
    if Bp != B:
        x3 = jnp.pad(x3, ((0, Bp - B), (0, 0), (0, 0)))
    x_in = x3 if fast else x3[..., None]
    pooled = conv_pool(x_in, kp["w1"], kp["b1"], kp["w2p"], kp["b2"],
                       bt=bt, fast=fast)                           # bf16 activations
    flat = pooled.reshape(Bp, 12 * 12 * 64)                        # (h,w,c) order
    logits = mlp(flat, kp["fc1_w"], kp["fc1_b"], kp["fc2_w"], kp["fc2_b"])
    return logits[:B, :g]


def reference_forward(x_nchw, p):
    """Pure-JAX reference mirroring the PyTorch module (inference mode)."""
    dn = ("NCHW", "OIHW", "NCHW")
    y = lax.conv_general_dilated(x_nchw, p["conv1_w"], (1, 1), "VALID",
                                 dimension_numbers=dn,
                                 precision=lax.Precision.HIGHEST)
    y = jax.nn.relu(y + p["conv1_b"][None, :, None, None])
    y = lax.conv_general_dilated(y, p["conv2_w"], (1, 1), "VALID",
                                 dimension_numbers=dn,
                                 precision=lax.Precision.HIGHEST)
    y = jax.nn.relu(y + p["conv2_b"][None, :, None, None])
    B = y.shape[0]
    y = y.reshape(B, 64, 12, 2, 12, 2).max(axis=(3, 5))            # maxpool 2x2
    flat = y.reshape(B, -1)                                        # (C,H,W) order
    h = jax.nn.relu(jnp.dot(flat, p["fc1_w"].T,
                            precision=lax.Precision.HIGHEST) + p["fc1_b"])
    return jnp.dot(h, p["fc2_w"].T,
                   precision=lax.Precision.HIGHEST) + p["fc2_b"]


if __name__ == "__main__":
    key = jax.random.PRNGKey(0)
    kx, kp_key = jax.random.split(key)
    x = jax.random.normal(kx, (2, 1, 28, 28), dtype=jnp.float32)

    torch_params = init_torch_params(kp_key, g_features=100)
    kernel_params = to_kernel_params(torch_params)

    ref = reference_forward(x, torch_params)

    def _run(fast):
        out = jax.block_until_ready(cnn_z_forward(x, kernel_params, fast=fast))
        assert out.shape == (2, 100), out.shape
        err = float(jnp.max(jnp.abs(out - ref)))
        # bf16 conv2 / pooled activations / fc weights with f32 accumulation.
        assert err < 6e-2, f"max abs diff vs reference too large: {err}"
        return out

    try:
        out = _run(fast=True)
    except Exception:
        # Fast path (dense 3-D input, fused K=288 bf16 conv2, lane-merged pool)
        # rejected by this Mosaic build: fall back to the conservative path that
        # matches the previously verified kernel structure.
        out = _run(fast=False)

    print("KERNEL_OK")
</pallas_src>

<mosaic_0001>
module attributes {stable_mosaic.version = 11 : i64} {
  func.func @_conv_pool_kernel(%arg0: i32, %arg1: memref<1x28x28xf32, #tpu.memory_space<vmem>>, %arg2: memref<3x3x32xf32, #tpu.memory_space<vmem>>, %arg3: memref<1x32xf32, #tpu.memory_space<vmem>>, %arg4: memref<288x64xbf16, #tpu.memory_space<vmem>>, %arg5: memref<1x64xf32, #tpu.memory_space<vmem>>, %arg6: memref<12x6x128xbf16, #tpu.memory_space<vmem>>) attributes {dimension_semantics = [#tpu.dimension_semantics<parallel>], iteration_bounds = array<i64: 2>, scalar_prefetch = 0 : i64, scratch_operands = 0 : i64, tpu.core_type = #tpu.core_type<tc>, window_params = [{transform_indices = @transform_0, window_bounds = array<i64: 1, 28, 28>}, {pipeline_mode = #tpu.pipeline_mode<synchronous>, transform_indices = @transform_1, window_bounds = array<i64: 3, 3, 32>}, {pipeline_mode = #tpu.pipeline_mode<synchronous>, transform_indices = @transform_2, window_bounds = array<i64: 1, 32>}, {pipeline_mode = #tpu.pipeline_mode<synchronous>, transform_indices = @transform_3, window_bounds = array<i64: 288, 64>}, {pipeline_mode = #tpu.pipeline_mode<synchronous>, transform_indices = @transform_4, window_bounds = array<i64: 1, 64>}, {transform_indices = @transform_5, window_bounds = array<i64: 12, 6, 128>}]} {
    %c0 = arith.constant 0 : index
    %c0_0 = arith.constant 0 : index
    %c0_1 = arith.constant 0 : index
    %0 = vector.load %arg1[%c0, %c0_0, %c0_1] : memref<1x28x28xf32, #tpu.memory_space<vmem>>, vector<1x28x28xf32>
    %1 = vector.shape_cast %0 : vector<1x28x28xf32> to vector<1x28x28x1xf32>
    %2 = vector.extract_strided_slice %1 {offsets = [0, 0, 0, 0], sizes = [1, 26, 26, 1], strides = [1, 1, 1, 1]} : vector<1x28x28x1xf32> to vector<1x26x26x1xf32>
    %c0_2 = arith.constant 0 : index
    %c0_3 = arith.constant 0 : index
    %c0_4 = arith.constant 0 : index
    %3 = vector.load %arg2[%c0_2, %c0_3, %c0_4] : memref<3x3x32xf32, #tpu.memory_space<vmem>>, vector<1x1x32xf32>
    %4 = vector.shape_cast %3 : vector<1x1x32xf32> to vector<32xf32>
    %5 = vector.shape_cast %4 : vector<32xf32> to vector<1x1x1x32xf32>
    %6 = vector.broadcast %2 : vector<1x26x26x1xf32> to vector<1x26x26x32xf32>
    %7 = vector.broadcast %5 : vector<1x1x1x32xf32> to vector<1x26x26x32xf32>
    %8 = arith.mulf %6, %7 : vector<1x26x26x32xf32>
    %9 = vector.extract_strided_slice %1 {offsets = [0, 0, 1, 0], sizes = [1, 26, 26, 1], strides = [1, 1, 1, 1]} : vector<1x28x28x1xf32> to vector<1x26x26x1xf32>
    %c0_5 = arith.constant 0 : index
    %c1 = arith.constant 1 : index
    %c0_6 = arith.constant 0 : index
    %10 = vector.load %arg2[%c0_5, %c1, %c0_6] : memref<3x3x32xf32, #tpu.memory_space<vmem>>, vector<1x1x32xf32>
    %11 = vector.shape_cast %10 : vector<1x1x32xf32> to vector<32xf32>
    %12 = vector.shape_cast %11 : vector<32xf32> to vector<1x1x1x32xf32>
    %13 = vector.broadcast %9 : vector<1x26x26x1xf32> to vector<1x26x26x32xf32>
    %14 = vector.broadcast %12 : vector<1x1x1x32xf32> to vector<1x26x26x32xf32>
    %15 = arith.mulf %13, %14 : vector<1x26x26x32xf32>
    %16 = arith.addf %8, %15 : vector<1x26x26x32xf32>
    %17 = vector.extract_strided_slice %1 {offsets = [0, 0, 2, 0], sizes = [1, 26, 26, 1], strides = [1, 1, 1, 1]} : vector<1x28x28x1xf32> to vector<1x26x26x1xf32>
    %c0_7 = arith.constant 0 : index
    %c2 = arith.constant 2 : index
    %c0_8 = arith.constant 0 : index
    %18 = vector.load %arg2[%c0_7, %c2, %c0_8] : memref<3x3x32xf32, #tpu.memory_space<vmem>>, vector<1x1x32xf32>
    %19 = vector.shape_cast %18 : vector<1x1x32xf32> to vector<32xf32>
    %20 = vector.shape_cast %19 : vector<32xf32> to vector<1x1x1x32xf32>
    %21 = vector.broadcast %17 : vector<1x26x26x1xf32> to vector<1x26x26x32xf32>
    %22 = vector.broadcast %20 : vector<1x1x1x32xf32> to vector<1x26x26x32xf32>
    %23 = arith.mulf %21, %22 : vector<1x26x26x32xf32>
    %24 = arith.addf %16, %23 : vector<1x26x26x32xf32>
    %25 = vector.extract_strided_slice %1 {offsets = [0, 1, 0, 0], sizes = [1, 26, 26, 1], strides = [1, 1, 1, 1]} : vector<1x28x28x1xf32> to vector<1x26x26x1xf32>
    %c1_9 = arith.constant 1 : index
    %c0_10 = arith.constant 0 : index
    %c0_11 = arith.constant 0 : index
    %26 = vector.load %arg2[%c1_9, %c0_10, %c0_11] : memref<3x3x32xf32, #tpu.memory_space<vmem>>, vector<1x1x32xf32>
    %27 = vector.shape_cast %26 : vector<1x1x32xf32> to vector<32xf32>
    %28 = vector.shape_cast %27 : vector<32xf32> to vector<1x1x1x32xf32>
    %29 = vector.broadcast %25 : vector<1x26x26x1xf32> to vector<1x26x26x32xf32>
    %30 = vector.broadcast %28 : vector<1x1x1x32xf32> to vector<1x26x26x32xf32>
    %31 = arith.mulf %29, %30 : vector<1x26x26x32xf32>
    %32 = arith.addf %24, %31 : vector<1x26x26x32xf32>
    %33 = vector.extract_strided_slice %1 {offsets = [0, 1, 1, 0], sizes = [1, 26, 26, 1], strides = [1, 1, 1, 1]} : vector<1x28x28x1xf32> to vector<1x26x26x1xf32>
    %c1_12 = arith.constant 1 : index
    %c1_13 = arith.constant 1 : index
    %c0_14 = arith.constant 0 : index
    %34 = vector.load %arg2[%c1_12, %c1_13, %c0_14] : memref<3x3x32xf32, #tpu.memory_space<vmem>>, vector<1x1x32xf32>
    %35 = vector.shape_cast %34 : vector<1x1x32xf32> to vector<32xf32>
    %36 = vector.shape_cast %35 : vector<32xf32> to vector<1x1x1x32xf32>
    %37 = vector.broadcast %33 : vector<1x26x26x1xf32> to vector<1x26x26x32xf32>
    %38 = vector.broadcast %36 : vector<1x1x1x32xf32> to vector<1x26x26x32xf32>
    %39 = arith.mulf %37, %38 : vector<1x26x26x32xf32>
    %40 = arith.addf %32, %39 : vector<1x26x26x32xf32>
    %41 = vector.extract_strided_slice %1 {offsets = [0, 1, 2, 0], sizes = [1, 26, 26, 1], strides = [1, 1, 1, 1]} : vector<1x28x28x1xf32> to vector<1x26x26x1xf32>
    %c1_15 = arith.constant 1 : index
    %c2_16 = arith.constant 2 : index
    %c0_17 = arith.constant 0 : index
    %42 = vector.load %arg2[%c1_15, %c2_16, %c0_17] : memref<3x3x32xf32, #tpu.memory_space<vmem>>, vector<1x1x32xf32>
    %43 = vector.shape_cast %42 : vector<1x1x32xf32> to vector<32xf32>
    %44 = vector.shape_cast %43 : vector<32xf32> to vector<1x1x1x32xf32>
    %45 = vector.broadcast %41 : vector<1x26x26x1xf32> to vector<1x26x26x32xf32>
    %46 = vector.broadcast %44 : vector<1x1x1x32xf32> to vector<1x26x26x32xf32>
    %47 = arith.mulf %45, %46 : vector<1x26x26x32xf32>
    %48 = arith.addf %40, %47 : vector<1x26x26x32xf32>
    %49 = vector.extract_strided_slice %1 {offsets = [0, 2, 0, 0], sizes = [1, 26, 26, 1], strides = [1, 1, 1, 1]} : vector<1x28x28x1xf32> to vector<1x26x26x1xf32>
    %c2_18 = arith.constant 2 : index
    %c0_19 = arith.constant 0 : index
    %c0_20 = arith.constant 0 : index
    %50 = vector.load %arg2[%c2_18, %c0_19, %c0_20] : memref<3x3x32xf32, #tpu.memory_space<vmem>>, vector<1x1x32xf32>
    %51 = vector.shape_cast %50 : vector<1x1x32xf32> to vector<32xf32>
    %52 = vector.shape_cast %51 : vector<32xf32> to vector<1x1x1x32xf32>
    %53 = vector.broadcast %49 : vector<1x26x26x1xf32> to vector<1x26x26x32xf32>
    %54 = vector.broadcast %52 : vector<1x1x1x32xf32> to vector<1x26x26x32xf32>
    %55 = arith.mulf %53, %54 : vector<1x26x26x32xf32>
    %56 = arith.addf %48, %55 : vector<1x26x26x32xf32>
    %57 = vector.extract_strided_slice %1 {offsets = [0, 2, 1, 0], sizes = [1, 26, 26, 1], strides = [1, 1, 1, 1]} : vector<1x28x28x1xf32> to vector<1x26x26x1xf32>
    %c2_21 = arith.constant 2 : index
    %c1_22 = arith.constant 1 : index
    %c0_23 = arith.constant 0 : index
    %58 = vector.load %arg2[%c2_21, %c1_22, %c0_23] : memref<3x3x32xf32, #tpu.memory_space<vmem>>, vector<1x1x32xf32>
    %59 = vector.shape_cast %58 : vector<1x1x32xf32> to vector<32xf32>
    %60 = vector.shape_cast %59 : vector<32xf32> to vector<1x1x1x32xf32>
    %61 = vector.broadcast %57 : vector<1x26x26x1xf32> to vector<1x26x26x32xf32>
    %62 = vector.broadcast %60 : vector<1x1x1x32xf32> to vector<1x26x26x32xf32>
    %63 = arith.mulf %61, %62 : vector<1x26x26x32xf32>
    %64 = arith.addf %56, %63 : vector<1x26x26x32xf32>
    %65 = vector.extract_strided_slice %1 {offsets = [0, 2, 2, 0], sizes = [1, 26, 26, 1], strides = [1, 1, 1, 1]} : vector<1x28x28x1xf32> to vector<1x26x26x1xf32>
    %c2_24 = arith.constant 2 : index
    %c2_25 = arith.constant 2 : index
    %c0_26 = arith.constant 0 : index
    %66 = vector.load %arg2[%c2_24, %c2_25, %c0_26] : memref<3x3x32xf32, #tpu.memory_space<vmem>>, vector<1x1x32xf32>
    %67 = vector.shape_cast %66 : vector<1x1x32xf32> to vector<32xf32>
    %68 = vector.shape_cast %67 : vector<32xf32> to vector<1x1x1x32xf32>
    %69 = vector.broadcast %65 : vector<1x26x26x1xf32> to vector<1x26x26x32xf32>
    %70 = vector.broadcast %68 : vector<1x1x1x32xf32> to vector<1x26x26x32xf32>
    %71 = arith.mulf %69, %70 : vector<1x26x26x32xf32>
    %72 = arith.addf %64, %71 : vector<1x26x26x32xf32>
    %c0_27 = arith.constant 0 : index
    %c0_28 = arith.constant 0 : index
    %73 = vector.load %arg3[%c0_27, %c0_28] : memref<1x32xf32, #tpu.memory_space<vmem>>, vector<1x32xf32>
    %74 = vector.shape_cast %73 : vector<1x32xf32> to vector<32xf32>
    %75 = vector.shape_cast %74 : vector<32xf32> to vector<1x1x1x32xf32>
    %76 = vector.broadcast %75 : vector<1x1x1x32xf32> to vector<1x26x26x32xf32>
    %77 = arith.addf %72, %76 : vector<1x26x26x32xf32>
    %cst = arith.constant 0.000000e+00 : f32
    %78 = vector.broadcast %cst : f32 to vector<1x26x26x32xf32>
    %79 = arith.maximumf %77, %78 : vector<1x26x26x32xf32>
    %80 = arith.truncf %79 : vector<1x26x26x32xf32> to vector<1x26x26x32xbf16>
    %81 = vector.extract_strided_slice %80 {offsets = [0, 0, 0, 0], sizes = [1, 24, 24, 32], strides = [1, 1, 1, 1]} : vector<1x26x26x32xbf16> to vector<1x24x24x32xbf16>
    %82 = vector.extract_strided_slice %80 {offsets = [0, 0, 1, 0], sizes = [1, 24, 24, 32], strides = [1, 1, 1, 1]} : vector<1x26x26x32xbf16> to vector<1x24x24x32xbf16>
    %83 = vector.extract_strided_slice %80 {offsets = [0, 0, 2, 0], sizes = [1, 24, 24, 32], strides = [1, 1, 1, 1]} : vector<1x26x26x32xbf16> to vector<1x24x24x32xbf16>
    %84 = vector.extract_strided_slice %80 {offsets = [0, 1, 0, 0], sizes = [1, 24, 24, 32], strides = [1, 1, 1, 1]} : vector<1x26x26x32xbf16> to vector<1x24x24x32xbf16>
    %85 = vector.extract_strided_slice %80 {offsets = [0, 1, 1, 0], sizes = [1, 24, 24, 32], strides = [1, 1, 1, 1]} : vector<1x26x26x32xbf16> to vector<1x24x24x32xbf16>
    %86 = vector.extract_strided_slice %80 {offsets = [0, 1, 2, 0], sizes = [1, 24, 24, 32], strides = [1, 1, 1, 1]} : vector<1x26x26x32xbf16> to vector<1x24x24x32xbf16>
    %87 = vector.extract_strided_slice %80 {offsets = [0, 2, 0, 0], sizes = [1, 24, 24, 32], strides = [1, 1, 1, 1]} : vector<1x26x26x32xbf16> to vector<1x24x24x32xbf16>
    %88 = vector.extract_strided_slice %80 {offsets = [0, 2, 1, 0], sizes = [1, 24, 24, 32], strides = [1, 1, 1, 1]} : vector<1x26x26x32xbf16> to vector<1x24x24x32xbf16>
    %89 = vector.extract_strided_slice %80 {offsets = [0, 2, 2, 0], sizes = [1, 24, 24, 32], strides = [1, 1, 1, 1]} : vector<1x26x26x32xbf16> to vector<1x24x24x32xbf16>
    %90 = tpu.concatenate %81, %82, %83, %84, %85, %86, %87, %88, %89 in 3 : vector<1x24x24x32xbf16>, vector<1x24x24x32xbf16>, vector<1x24x24x32xbf16>, vector<1x24x24x32xbf16>, vector<1x24x24x32xbf16>, vector<1x24x24x32xbf16>, vector<1x24x24x32xbf16>, vector<1x24x24x32xbf16>, vector<1x24x24x32xbf16> -> vector<1x24x24x288xbf16>
    %91 = vector.shape_cast %90 : vector<1x24x24x288xbf16> to vector<576x288xbf16>
    %c0_29 = arith.constant 0 : index
    %c0_30 = arith.constant 0 : index
    %92 = vector.load %arg4[%c0_29, %c0_30] : memref<288x64xbf16, #tpu.memory_space<vmem>>, vector<288x64xbf16>
    %cst_31 = arith.constant dense<0.000000e+00> : vector<576x64xf32>
    %93 = tpu.matmul %91, %92, %cst_31 {dimension_numbers = #tpu.dot_dimension_numbers<[1], [0], [0], [1], [0, 0, 1, 1], [], []>} : vector<576x288xbf16>, vector<288x64xbf16>, vector<576x64xf32> -> vector<576x64xf32>
    %c0_32 = arith.constant 0 : index
    %c0_33 = arith.constant 0 : index
    %94 = vector.load %arg5[%c0_32, %c0_33] : memref<1x64xf32, #tpu.memory_space<vmem>>, vector<1x64xf32>
    %95 = vector.shape_cast %94 : vector<1x64xf32> to vector<64xf32>
    %96 = vector.shape_cast %95 : vector<64xf32> to vector<1x64xf32>
    %97 = vector.broadcast %96 : vector<1x64xf32> to vector<576x64xf32>
    %98 = arith.addf %93, %97 : vector<576x64xf32>
    %cst_34 = arith.constant 0.000000e+00 : f32
    %99 = vector.broadcast %cst_34 : f32 to vector<576x64xf32>
    %100 = arith.maximumf %98, %99 : vector<576x64xf32>
    %101 = arith.truncf %100 : vector<576x64xf32> to vector<576x64xbf16>
    %102 = vector.shape_cast %101 : vector<576x64xbf16> to vector<12x2x24x64xbf16>
    %103 = vector.extract_strided_slice %102 {offsets = [0, 0, 0, 0], sizes = [12, 1, 24, 64], strides = [1, 1, 1, 1]} : vector<12x2x24x64xbf16> to vector<12x1x24x64xbf16>
    %104 = vector.shape_cast %103 : vector<12x1x24x64xbf16> to vector<12x24x64xbf16>
    %105 = vector.extract_strided_slice %102 {offsets = [0, 1, 0, 0], sizes = [12, 1, 24, 64], strides = [1, 1, 1, 1]} : vector<12x2x24x64xbf16> to vector<12x1x24x64xbf16>
    %106 = vector.shape_cast %105 : vector<12x1x24x64xbf16> to vector<12x24x64xbf16>
    %107 = arith.maximumf %104, %106 : vector<12x24x64xbf16>
    %108 = vector.shape_cast %107 : vector<12x24x64xbf16> to vector<12x12x128xbf16>
    %109 = vector.extract_strided_slice %108 {offsets = [0, 0, 0], sizes = [12, 12, 64], strides = [1, 1, 1]} : vector<12x12x128xbf16> to vector<12x12x64xbf16>
    %110 = vector.extract_strided_slice %108 {offsets = [0, 0, 64], sizes = [12, 12, 64], strides = [1, 1, 1]} : vector<12x12x128xbf16> to vector<12x12x64xbf16>
    %111 = arith.maximumf %109, %110 : vector<12x12x64xbf16>
    %112 = vector.shape_cast %111 : vector<12x12x64xbf16> to vector<12x6x128xbf16>
    %c0_35 = arith.constant 0 : index
    %c0_36 = arith.constant 0 : index
    %c0_37 = arith.constant 0 : index
    %113 = vector.load %arg6[%c0_35, %c0_36, %c0_37] : memref<12x6x128xbf16, #tpu.memory_space<vmem>>, vector<12x6x128xbf16>
    tpu.vector_store %arg6[%c0_35, %c0_36, %c0_37], %112 {strides = array<i32>} : memref<12x6x128xbf16, #tpu.memory_space<vmem>>, vector<12x6x128xbf16>,
    return
  }
  func.func @transform_0(%arg0: i32) -> (i32, i32, i32) {
    %c0_i32 = arith.constant 0 : i32
    %c0_i32_0 = arith.constant 0 : i32
    %c0_i32_1 = arith.constant 0 : i32
    return %arg0, %c0_i32, %c0_i32_0 : i32, i32, i32
  }
  func.func @transform_1(%arg0: i32) -> (i32, i32, i32) {
    %c0_i32 = arith.constant 0 : i32
    %c0_i32_0 = arith.constant 0 : i32
    %c0_i32_1 = arith.constant 0 : i32
    %c0_i32_2 = arith.constant 0 : i32
    return %c0_i32, %c0_i32_0, %c0_i32_1 : i32, i32, i32
  }
  func.func @transform_2(%arg0: i32) -> (i32, i32) {
    %c0_i32 = arith.constant 0 : i32
    %c0_i32_0 = arith.constant 0 : i32
    %c0_i32_1 = arith.constant 0 : i32
    return %c0_i32, %c0_i32_0 : i32, i32
  }
  func.func @transform_3(%arg0: i32) -> (i32, i32) {
    %c0_i32 = arith.constant 0 : i32
    %c0_i32_0 = arith.constant 0 : i32
    %c0_i32_1 = arith.constant 0 : i32
    return %c0_i32, %c0_i32_0 : i32, i32
  }
  func.func @transform_4(%arg0: i32) -> (i32, i32) {
    %c0_i32 = arith.constant 0 : i32
    %c0_i32_0 = arith.constant 0 : i32
    %c0_i32_1 = arith.constant 0 : i32
    return %c0_i32, %c0_i32_0 : i32, i32
  }
  func.func @transform_5(%arg0: i32) -> (i32, i32, i32) {
    %c0_i32 = arith.constant 0 : i32
    %c0_i32_0 = arith.constant 0 : i32
    %c0_i32_1 = arith.constant 0 : i32
    return %arg0, %c0_i32, %c0_i32_0 : i32, i32, i32
  }
}

module attributes {stable_mosaic.version = 11 : i64} {
  func.func @_conv_pool_kernel(%arg0: i32, %arg1: memref<1x28x28x1xf32, #tpu.memory_space<vmem>>, %arg2: memref<3x3x32xf32, #tpu.memory_space<vmem>>, %arg3: memref<1x32xf32, #tpu.memory_space<vmem>>, %arg4: memref<288x64xbf16, #tpu.memory_space<vmem>>, %arg5: memref<1x64xf32, #tpu.memory_space<vmem>>, %arg6: memref<12x12x64xbf16, #tpu.memory_space<vmem>>, %arg7: memref<12x24x64xf32, #tpu.memory_space<vmem>>) attributes {dimension_semantics = [#tpu.dimension_semantics<parallel>], iteration_bounds = array<i64: 2>, scalar_prefetch = 0 : i64, scratch_operands = 1 : i64, tpu.core_type = #tpu.core_type<tc>, window_params = [{transform_indices = @transform_0, window_bounds = array<i64: 1, 28, 28, 1>}, {pipeline_mode = #tpu.pipeline_mode<synchronous>, transform_indices = @transform_1, window_bounds = array<i64: 3, 3, 32>}, {pipeline_mode = #tpu.pipeline_mode<synchronous>, transform_indices = @transform_2, window_bounds = array<i64: 1, 32>}, {pipeline_mode = #tpu.pipeline_mode<synchronous>, transform_indices = @transform_3, window_bounds = array<i64: 288, 64>}, {pipeline_mode = #tpu.pipeline_mode<synchronous>, transform_indices = @transform_4, window_bounds = array<i64: 1, 64>}, {transform_indices = @transform_5, window_bounds = array<i64: 12, 12, 64>}]} {
    %c0 = arith.constant 0 : index
    %c0_0 = arith.constant 0 : index
    %c0_1 = arith.constant 0 : index
    %c0_2 = arith.constant 0 : index
    %0 = vector.load %arg1[%c0, %c0_0, %c0_1, %c0_2] : memref<1x28x28x1xf32, #tpu.memory_space<vmem>>, vector<1x28x28x1xf32>
    %1 = vector.extract_strided_slice %0 {offsets = [0, 0, 0, 0], sizes = [1, 26, 26, 1], strides = [1, 1, 1, 1]} : vector<1x28x28x1xf32> to vector<1x26x26x1xf32>
    %c0_3 = arith.constant 0 : index
    %c0_4 = arith.constant 0 : index
    %c0_5 = arith.constant 0 : index
    %2 = vector.load %arg2[%c0_3, %c0_4, %c0_5] : memref<3x3x32xf32, #tpu.memory_space<vmem>>, vector<1x1x32xf32>
    %3 = vector.shape_cast %2 : vector<1x1x32xf32> to vector<32xf32>
    %4 = vector.shape_cast %3 : vector<32xf32> to vector<1x1x1x32xf32>
    %5 = vector.broadcast %1 : vector<1x26x26x1xf32> to vector<1x26x26x32xf32>
    %6 = vector.broadcast %4 : vector<1x1x1x32xf32> to vector<1x26x26x32xf32>
    %7 = arith.mulf %5, %6 : vector<1x26x26x32xf32>
    %8 = vector.extract_strided_slice %0 {offsets = [0, 0, 1, 0], sizes = [1, 26, 26, 1], strides = [1, 1, 1, 1]} : vector<1x28x28x1xf32> to vector<1x26x26x1xf32>
    %c0_6 = arith.constant 0 : index
    %c1 = arith.constant 1 : index
    %c0_7 = arith.constant 0 : index
    %9 = vector.load %arg2[%c0_6, %c1, %c0_7] : memref<3x3x32xf32, #tpu.memory_space<vmem>>, vector<1x1x32xf32>
    %10 = vector.shape_cast %9 : vector<1x1x32xf32> to vector<32xf32>
    %11 = vector.shape_cast %10 : vector<32xf32> to vector<1x1x1x32xf32>
    %12 = vector.broadcast %8 : vector<1x26x26x1xf32> to vector<1x26x26x32xf32>
    %13 = vector.broadcast %11 : vector<1x1x1x32xf32> to vector<1x26x26x32xf32>
    %14 = arith.mulf %12, %13 : vector<1x26x26x32xf32>
    %15 = arith.addf %7, %14 : vector<1x26x26x32xf32>
    %16 = vector.extract_strided_slice %0 {offsets = [0, 0, 2, 0], sizes = [1, 26, 26, 1], strides = [1, 1, 1, 1]} : vector<1x28x28x1xf32> to vector<1x26x26x1xf32>
    %c0_8 = arith.constant 0 : index
    %c2 = arith.constant 2 : index
    %c0_9 = arith.constant 0 : index
    %17 = vector.load %arg2[%c0_8, %c2, %c0_9] : memref<3x3x32xf32, #tpu.memory_space<vmem>>, vector<1x1x32xf32>
    %18 = vector.shape_cast %17 : vector<1x1x32xf32> to vector<32xf32>
    %19 = vector.shape_cast %18 : vector<32xf32> to vector<1x1x1x32xf32>
    %20 = vector.broadcast %16 : vector<1x26x26x1xf32> to vector<1x26x26x32xf32>
    %21 = vector.broadcast %19 : vector<1x1x1x32xf32> to vector<1x26x26x32xf32>
    %22 = arith.mulf %20, %21 : vector<1x26x26x32xf32>
    %23 = arith.addf %15, %22 : vector<1x26x26x32xf32>
    %24 = vector.extract_strided_slice %0 {offsets = [0, 1, 0, 0], sizes = [1, 26, 26, 1], strides = [1, 1, 1, 1]} : vector<1x28x28x1xf32> to vector<1x26x26x1xf32>
    %c1_10 = arith.constant 1 : index
    %c0_11 = arith.constant 0 : index
    %c0_12 = arith.constant 0 : index
    %25 = vector.load %arg2[%c1_10, %c0_11, %c0_12] : memref<3x3x32xf32, #tpu.memory_space<vmem>>, vector<1x1x32xf32>
    %26 = vector.shape_cast %25 : vector<1x1x32xf32> to vector<32xf32>
    %27 = vector.shape_cast %26 : vector<32xf32> to vector<1x1x1x32xf32>
    %28 = vector.broadcast %24 : vector<1x26x26x1xf32> to vector<1x26x26x32xf32>
    %29 = vector.broadcast %27 : vector<1x1x1x32xf32> to vector<1x26x26x32xf32>
    %30 = arith.mulf %28, %29 : vector<1x26x26x32xf32>
    %31 = arith.addf %23, %30 : vector<1x26x26x32xf32>
    %32 = vector.extract_strided_slice %0 {offsets = [0, 1, 1, 0], sizes = [1, 26, 26, 1], strides = [1, 1, 1, 1]} : vector<1x28x28x1xf32> to vector<1x26x26x1xf32>
    %c1_13 = arith.constant 1 : index
    %c1_14 = arith.constant 1 : index
    %c0_15 = arith.constant 0 : index
    %33 = vector.load %arg2[%c1_13, %c1_14, %c0_15] : memref<3x3x32xf32, #tpu.memory_space<vmem>>, vector<1x1x32xf32>
    %34 = vector.shape_cast %33 : vector<1x1x32xf32> to vector<32xf32>
    %35 = vector.shape_cast %34 : vector<32xf32> to vector<1x1x1x32xf32>
    %36 = vector.broadcast %32 : vector<1x26x26x1xf32> to vector<1x26x26x32xf32>
    %37 = vector.broadcast %35 : vector<1x1x1x32xf32> to vector<1x26x26x32xf32>
    %38 = arith.mulf %36, %37 : vector<1x26x26x32xf32>
    %39 = arith.addf %31, %38 : vector<1x26x26x32xf32>
    %40 = vector.extract_strided_slice %0 {offsets = [0, 1, 2, 0], sizes = [1, 26, 26, 1], strides = [1, 1, 1, 1]} : vector<1x28x28x1xf32> to vector<1x26x26x1xf32>
    %c1_16 = arith.constant 1 : index
    %c2_17 = arith.constant 2 : index
    %c0_18 = arith.constant 0 : index
    %41 = vector.load %arg2[%c1_16, %c2_17, %c0_18] : memref<3x3x32xf32, #tpu.memory_space<vmem>>, vector<1x1x32xf32>
    %42 = vector.shape_cast %41 : vector<1x1x32xf32> to vector<32xf32>
    %43 = vector.shape_cast %42 : vector<32xf32> to vector<1x1x1x32xf32>
    %44 = vector.broadcast %40 : vector<1x26x26x1xf32> to vector<1x26x26x32xf32>
    %45 = vector.broadcast %43 : vector<1x1x1x32xf32> to vector<1x26x26x32xf32>
    %46 = arith.mulf %44, %45 : vector<1x26x26x32xf32>
    %47 = arith.addf %39, %46 : vector<1x26x26x32xf32>
    %48 = vector.extract_strided_slice %0 {offsets = [0, 2, 0, 0], sizes = [1, 26, 26, 1], strides = [1, 1, 1, 1]} : vector<1x28x28x1xf32> to vector<1x26x26x1xf32>
    %c2_19 = arith.constant 2 : index
    %c0_20 = arith.constant 0 : index
    %c0_21 = arith.constant 0 : index
    %49 = vector.load %arg2[%c2_19, %c0_20, %c0_21] : memref<3x3x32xf32, #tpu.memory_space<vmem>>, vector<1x1x32xf32>
    %50 = vector.shape_cast %49 : vector<1x1x32xf32> to vector<32xf32>
    %51 = vector.shape_cast %50 : vector<32xf32> to vector<1x1x1x32xf32>
    %52 = vector.broadcast %48 : vector<1x26x26x1xf32> to vector<1x26x26x32xf32>
    %53 = vector.broadcast %51 : vector<1x1x1x32xf32> to vector<1x26x26x32xf32>
    %54 = arith.mulf %52, %53 : vector<1x26x26x32xf32>
    %55 = arith.addf %47, %54 : vector<1x26x26x32xf32>
    %56 = vector.extract_strided_slice %0 {offsets = [0, 2, 1, 0], sizes = [1, 26, 26, 1], strides = [1, 1, 1, 1]} : vector<1x28x28x1xf32> to vector<1x26x26x1xf32>
    %c2_22 = arith.constant 2 : index
    %c1_23 = arith.constant 1 : index
    %c0_24 = arith.constant 0 : index
    %57 = vector.load %arg2[%c2_22, %c1_23, %c0_24] : memref<3x3x32xf32, #tpu.memory_space<vmem>>, vector<1x1x32xf32>
    %58 = vector.shape_cast %57 : vector<1x1x32xf32> to vector<32xf32>
    %59 = vector.shape_cast %58 : vector<32xf32> to vector<1x1x1x32xf32>
    %60 = vector.broadcast %56 : vector<1x26x26x1xf32> to vector<1x26x26x32xf32>
    %61 = vector.broadcast %59 : vector<1x1x1x32xf32> to vector<1x26x26x32xf32>
    %62 = arith.mulf %60, %61 : vector<1x26x26x32xf32>
    %63 = arith.addf %55, %62 : vector<1x26x26x32xf32>
    %64 = vector.extract_strided_slice %0 {offsets = [0, 2, 2, 0], sizes = [1, 26, 26, 1], strides = [1, 1, 1, 1]} : vector<1x28x28x1xf32> to vector<1x26x26x1xf32>
    %c2_25 = arith.constant 2 : index
    %c2_26 = arith.constant 2 : index
    %c0_27 = arith.constant 0 : index
    %65 = vector.load %arg2[%c2_25, %c2_26, %c0_27] : memref<3x3x32xf32, #tpu.memory_space<vmem>>, vector<1x1x32xf32>
    %66 = vector.shape_cast %65 : vector<1x1x32xf32> to vector<32xf32>
    %67 = vector.shape_cast %66 : vector<32xf32> to vector<1x1x1x32xf32>
    %68 = vector.broadcast %64 : vector<1x26x26x1xf32> to vector<1x26x26x32xf32>
    %69 = vector.broadcast %67 : vector<1x1x1x32xf32> to vector<1x26x26x32xf32>
    %70 = arith.mulf %68, %69 : vector<1x26x26x32xf32>
    %71 = arith.addf %63, %70 : vector<1x26x26x32xf32>
    %c0_28 = arith.constant 0 : index
    %c0_29 = arith.constant 0 : index
    %72 = vector.load %arg3[%c0_28, %c0_29] : memref<1x32xf32, #tpu.memory_space<vmem>>, vector<1x32xf32>
    %73 = vector.shape_cast %72 : vector<1x32xf32> to vector<32xf32>
    %74 = vector.shape_cast %73 : vector<32xf32> to vector<1x1x1x32xf32>
    %75 = vector.broadcast %74 : vector<1x1x1x32xf32> to vector<1x26x26x32xf32>
    %76 = arith.addf %71, %75 : vector<1x26x26x32xf32>
    %cst = arith.constant 0.000000e+00 : f32
    %77 = vector.broadcast %cst : f32 to vector<1x26x26x32xf32>
    %78 = arith.maximumf %76, %77 : vector<1x26x26x32xf32>
    %79 = arith.truncf %78 : vector<1x26x26x32xf32> to vector<1x26x26x32xbf16>
    %c0_30 = arith.constant 0 : index
    %c0_31 = arith.constant 0 : index
    %80 = vector.load %arg4[%c0_30, %c0_31] : memref<288x64xbf16, #tpu.memory_space<vmem>>, vector<288x64xbf16>
    %81 = vector.extract_strided_slice %79 {offsets = [0, 0, 0, 0], sizes = [1, 24, 24, 32], strides = [1, 1, 1, 1]} : vector<1x26x26x32xbf16> to vector<1x24x24x32xbf16>
    %82 = vector.shape_cast %81 : vector<1x24x24x32xbf16> to vector<576x32xbf16>
    %83 = vector.extract_strided_slice %80 {offsets = [0, 0], sizes = [32, 64], strides = [1, 1]} : vector<288x64xbf16> to vector<32x64xbf16>
    %cst_32 = arith.constant dense<0.000000e+00> : vector<576x64xf32>
    %84 = tpu.matmul %82, %83, %cst_32 {dimension_numbers = #tpu.dot_dimension_numbers<[1], [0], [0], [1], [0, 0, 1, 1], [], []>} : vector<576x32xbf16>, vector<32x64xbf16>, vector<576x64xf32> -> vector<576x64xf32>
    %85 = vector.extract_strided_slice %79 {offsets = [0, 0, 1, 0], sizes = [1, 24, 24, 32], strides = [1, 1, 1, 1]} : vector<1x26x26x32xbf16> to vector<1x24x24x32xbf16>
    %86 = vector.shape_cast %85 : vector<1x24x24x32xbf16> to vector<576x32xbf16>
    %87 = vector.extract_strided_slice %80 {offsets = [32, 0], sizes = [32, 64], strides = [1, 1]} : vector<288x64xbf16> to vector<32x64xbf16>
    %cst_33 = arith.constant dense<0.000000e+00> : vector<576x64xf32>
    %88 = tpu.matmul %86, %87, %cst_33 {dimension_numbers = #tpu.dot_dimension_numbers<[1], [0], [0], [1], [0, 0, 1, 1], [], []>} : vector<576x32xbf16>, vector<32x64xbf16>, vector<576x64xf32> -> vector<576x64xf32>
    %89 = arith.addf %84, %88 : vector<576x64xf32>
    %90 = vector.extract_strided_slice %79 {offsets = [0, 0, 2, 0], sizes = [1, 24, 24, 32], strides = [1, 1, 1, 1]} : vector<1x26x26x32xbf16> to vector<1x24x24x32xbf16>
    %91 = vector.shape_cast %90 : vector<1x24x24x32xbf16> to vector<576x32xbf16>
    %92 = vector.extract_strided_slice %80 {offsets = [64, 0], sizes = [32, 64], strides = [1, 1]} : vector<288x64xbf16> to vector<32x64xbf16>
    %cst_34 = arith.constant dense<0.000000e+00> : vector<576x64xf32>
    %93 = tpu.matmul %91, %92, %cst_34 {dimension_numbers = #tpu.dot_dimension_numbers<[1], [0], [0], [1], [0, 0, 1, 1], [], []>} : vector<576x32xbf16>, vector<32x64xbf16>, vector<576x64xf32> -> vector<576x64xf32>
    %94 = arith.addf %89, %93 : vector<576x64xf32>
    %95 = vector.extract_strided_slice %79 {offsets = [0, 1, 0, 0], sizes = [1, 24, 24, 32], strides = [1, 1, 1, 1]} : vector<1x26x26x32xbf16> to vector<1x24x24x32xbf16>
    %96 = vector.shape_cast %95 : vector<1x24x24x32xbf16> to vector<576x32xbf16>
    %97 = vector.extract_strided_slice %80 {offsets = [96, 0], sizes = [32, 64], strides = [1, 1]} : vector<288x64xbf16> to vector<32x64xbf16>
    %cst_35 = arith.constant dense<0.000000e+00> : vector<576x64xf32>
    %98 = tpu.matmul %96, %97, %cst_35 {dimension_numbers = #tpu.dot_dimension_numbers<[1], [0], [0], [1], [0, 0, 1, 1], [], []>} : vector<576x32xbf16>, vector<32x64xbf16>, vector<576x64xf32> -> vector<576x64xf32>
    %99 = arith.addf %94, %98 : vector<576x64xf32>
    %100 = vector.extract_strided_slice %79 {offsets = [0, 1, 1, 0], sizes = [1, 24, 24, 32], strides = [1, 1, 1, 1]} : vector<1x26x26x32xbf16> to vector<1x24x24x32xbf16>
    %101 = vector.shape_cast %100 : vector<1x24x24x32xbf16> to vector<576x32xbf16>
    %102 = vector.extract_strided_slice %80 {offsets = [128, 0], sizes = [32, 64], strides = [1, 1]} : vector<288x64xbf16> to vector<32x64xbf16>
    %cst_36 = arith.constant dense<0.000000e+00> : vector<576x64xf32>
    %103 = tpu.matmul %101, %102, %cst_36 {dimension_numbers = #tpu.dot_dimension_numbers<[1], [0], [0], [1], [0, 0, 1, 1], [], []>} : vector<576x32xbf16>, vector<32x64xbf16>, vector<576x64xf32> -> vector<576x64xf32>
    %104 = arith.addf %99, %103 : vector<576x64xf32>
    %105 = vector.extract_strided_slice %79 {offsets = [0, 1, 2, 0], sizes = [1, 24, 24, 32], strides = [1, 1, 1, 1]} : vector<1x26x26x32xbf16> to vector<1x24x24x32xbf16>
    %106 = vector.shape_cast %105 : vector<1x24x24x32xbf16> to vector<576x32xbf16>
    %107 = vector.extract_strided_slice %80 {offsets = [160, 0], sizes = [32, 64], strides = [1, 1]} : vector<288x64xbf16> to vector<32x64xbf16>
    %cst_37 = arith.constant dense<0.000000e+00> : vector<576x64xf32>
    %108 = tpu.matmul %106, %107, %cst_37 {dimension_numbers = #tpu.dot_dimension_numbers<[1], [0], [0], [1], [0, 0, 1, 1], [], []>} : vector<576x32xbf16>, vector<32x64xbf16>, vector<576x64xf32> -> vector<576x64xf32>
    %109 = arith.addf %104, %108 : vector<576x64xf32>
    %110 = vector.extract_strided_slice %79 {offsets = [0, 2, 0, 0], sizes = [1, 24, 24, 32], strides = [1, 1, 1, 1]} : vector<1x26x26x32xbf16> to vector<1x24x24x32xbf16>
    %111 = vector.shape_cast %110 : vector<1x24x24x32xbf16> to vector<576x32xbf16>
    %112 = vector.extract_strided_slice %80 {offsets = [192, 0], sizes = [32, 64], strides = [1, 1]} : vector<288x64xbf16> to vector<32x64xbf16>
    %cst_38 = arith.constant dense<0.000000e+00> : vector<576x64xf32>
    %113 = tpu.matmul %111, %112, %cst_38 {dimension_numbers = #tpu.dot_dimension_numbers<[1], [0], [0], [1], [0, 0, 1, 1], [], []>} : vector<576x32xbf16>, vector<32x64xbf16>, vector<576x64xf32> -> vector<576x64xf32>
    %114 = arith.addf %109, %113 : vector<576x64xf32>
    %115 = vector.extract_strided_slice %79 {offsets = [0, 2, 1, 0], sizes = [1, 24, 24, 32], strides = [1, 1, 1, 1]} : vector<1x26x26x32xbf16> to vector<1x24x24x32xbf16>
    %116 = vector.shape_cast %115 : vector<1x24x24x32xbf16> to vector<576x32xbf16>
    %117 = vector.extract_strided_slice %80 {offsets = [224, 0], sizes = [32, 64], strides = [1, 1]} : vector<288x64xbf16> to vector<32x64xbf16>
    %cst_39 = arith.constant dense<0.000000e+00> : vector<576x64xf32>
    %118 = tpu.matmul %116, %117, %cst_39 {dimension_numbers = #tpu.dot_dimension_numbers<[1], [0], [0], [1], [0, 0, 1, 1], [], []>} : vector<576x32xbf16>, vector<32x64xbf16>, vector<576x64xf32> -> vector<576x64xf32>
    %119 = arith.addf %114, %118 : vector<576x64xf32>
    %120 = vector.extract_strided_slice %79 {offsets = [0, 2, 2, 0], sizes = [1, 24, 24, 32], strides = [1, 1, 1, 1]} : vector<1x26x26x32xbf16> to vector<1x24x24x32xbf16>
    %121 = vector.shape_cast %120 : vector<1x24x24x32xbf16> to vector<576x32xbf16>
    %122 = vector.extract_strided_slice %80 {offsets = [256, 0], sizes = [32, 64], strides = [1, 1]} : vector<288x64xbf16> to vector<32x64xbf16>
    %cst_40 = arith.constant dense<0.000000e+00> : vector<576x64xf32>
    %123 = tpu.matmul %121, %122, %cst_40 {dimension_numbers = #tpu.dot_dimension_numbers<[1], [0], [0], [1], [0, 0, 1, 1], [], []>} : vector<576x32xbf16>, vector<32x64xbf16>, vector<576x64xf32> -> vector<576x64xf32>
    %124 = arith.addf %119, %123 : vector<576x64xf32>
    %c0_41 = arith.constant 0 : index
    %c0_42 = arith.constant 0 : index
    %125 = vector.load %arg5[%c0_41, %c0_42] : memref<1x64xf32, #tpu.memory_space<vmem>>, vector<1x64xf32>
    %126 = vector.shape_cast %125 : vector<1x64xf32> to vector<64xf32>
    %127 = vector.shape_cast %126 : vector<64xf32> to vector<1x64xf32>
    %128 = vector.broadcast %127 : vector<1x64xf32> to vector<576x64xf32>
    %129 = arith.addf %124, %128 : vector<576x64xf32>
    %cst_43 = arith.constant 0.000000e+00 : f32
    %130 = vector.broadcast %cst_43 : f32 to vector<576x64xf32>
    %131 = arith.maximumf %129, %130 : vector<576x64xf32>
    %132 = vector.shape_cast %131 : vector<576x64xf32> to vector<12x2x24x64xf32>
    %133 = vector.extract_strided_slice %132 {offsets = [0, 0, 0, 0], sizes = [12, 1, 24, 64], strides = [1, 1, 1, 1]} : vector<12x2x24x64xf32> to vector<12x1x24x64xf32>
    %134 = vector.shape_cast %133 : vector<12x1x24x64xf32> to vector<12x24x64xf32>
    %135 = vector.extract_strided_slice %132 {offsets = [0, 1, 0, 0], sizes = [12, 1, 24, 64], strides = [1, 1, 1, 1]} : vector<12x2x24x64xf32> to vector<12x1x24x64xf32>
    %136 = vector.shape_cast %135 : vector<12x1x24x64xf32> to vector<12x24x64xf32>
    %137 = arith.maximumf %134, %136 : vector<12x24x64xf32>
    %c0_44 = arith.constant 0 : index
    %c0_45 = arith.constant 0 : index
    %c0_46 = arith.constant 0 : index
    %138 = vector.load %arg7[%c0_44, %c0_45, %c0_46] : memref<12x24x64xf32, #tpu.memory_space<vmem>>, vector<12x24x64xf32>
    tpu.vector_store %arg7[%c0_44, %c0_45, %c0_46], %137 {strides = array<i32>} : memref<12x24x64xf32, #tpu.memory_space<vmem>>, vector<12x24x64xf32>,
    %c0_47 = arith.constant 0 : index
    %c0_48 = arith.constant 0 : index
    %c0_49 = arith.constant 0 : index
    %139 = tpu.strided_load %arg7[%c0_47, %c0_48, %c0_49] {strides = array<i32: 1, 2, 1>} : memref<12x24x64xf32, #tpu.memory_space<vmem>>, vector<12x12x64xf32>
    %c0_50 = arith.constant 0 : index
    %c1_51 = arith.constant 1 : index
    %c0_52 = arith.constant 0 : index
    %140 = tpu.strided_load %arg7[%c0_50, %c1_51, %c0_52] {strides = array<i32: 1, 2, 1>} : memref<12x24x64xf32, #tpu.memory_space<vmem>>, vector<12x12x64xf32>
    %141 = arith.maximumf %139, %140 : vector<12x12x64xf32>
    %142 = arith.truncf %141 : vector<12x12x64xf32> to vector<12x12x64xbf16>
    %c0_53 = arith.constant 0 : index
    %c0_54 = arith.constant 0 : index
    %c0_55 = arith.constant 0 : index
    %143 = vector.load %arg6[%c0_53, %c0_54, %c0_55] : memref<12x12x64xbf16, #tpu.memory_space<vmem>>, vector<12x12x64xbf16>
    tpu.vector_store %arg6[%c0_53, %c0_54, %c0_55], %142 {strides = array<i32>} : memref<12x12x64xbf16, #tpu.memory_space<vmem>>, vector<12x12x64xbf16>,
    return
  }
  func.func @transform_0(%arg0: i32) -> (i32, i32, i32, i32) {
    %c0_i32 = arith.constant 0 : i32
    %c0_i32_0 = arith.constant 0 : i32
    %c0_i32_1 = arith.constant 0 : i32
    %c0_i32_2 = arith.constant 0 : i32
    return %arg0, %c0_i32, %c0_i32_0, %c0_i32_1 : i32, i32, i32, i32
  }
  func.func @transform_1(%arg0: i32) -> (i32, i32, i32) {
    %c0_i32 = arith.constant 0 : i32
    %c0_i32_0 = arith.constant 0 : i32
    %c0_i32_1 = arith.constant 0 : i32
    %c0_i32_2 = arith.constant 0 : i32
    return %c0_i32, %c0_i32_0, %c0_i32_1 : i32, i32, i32
  }
  func.func @transform_2(%arg0: i32) -> (i32, i32) {
    %c0_i32 = arith.constant 0 : i32
    %c0_i32_0 = arith.constant 0 : i32
    %c0_i32_1 = arith.constant 0 : i32
    return %c0_i32, %c0_i32_0 : i32, i32
  }
  func.func @transform_3(%arg0: i32) -> (i32, i32) {
    %c0_i32 = arith.constant 0 : i32
    %c0_i32_0 = arith.constant 0 : i32
    %c0_i32_1 = arith.constant 0 : i32
    return %c0_i32, %c0_i32_0 : i32, i32
  }
  func.func @transform_4(%arg0: i32) -> (i32, i32) {
    %c0_i32 = arith.constant 0 : i32
    %c0_i32_0 = arith.constant 0 : i32
    %c0_i32_1 = arith.constant 0 : i32
    return %c0_i32, %c0_i32_0 : i32, i32
  }
  func.func @transform_5(%arg0: i32) -> (i32, i32, i32) {
    %c0_i32 = arith.constant 0 : i32
    %c0_i32_0 = arith.constant 0 : i32
    %c0_i32_1 = arith.constant 0 : i32
    return %arg0, %c0_i32, %c0_i32_0 : i32, i32, i32
  }
}

</mosaic_0001>

<llo_original>
// kernel: tpu_custom_call.1
$region0: #{tpu_custom_call.1}
  #allocation0 [shape = 'u32[]', space=smem, size = 0x4, offset = 0x4, fixed_abs, tag = 'smem constant byte address 0x4 - core index']
  #allocation1 [shape = 'u32[144,128]{1,0:T(1,128)}', space=vmem, size = 0x12000, scoped, tag = 'internal scratch']
  #allocation2 [shape = 'f32[12,24,64]{2,1,0:T(8,128)}', space=vmem, size = 0x24000, scoped, tag = 'scratch operand']
  %s0 = inlined_call_operand.vmem [shape: f32[2,28,28,1], index: 0, kind: input, shape index: {}]
  %s1 = inlined_call_operand.vmem [shape: f32[3,3,32], index: 1, kind: input, shape index: {}]
  %s2 = inlined_call_operand.vmem [shape: f32[1,32], index: 2, kind: input, shape index: {}]
  %s3 = inlined_call_operand.vmem [shape: bf16[288,64], index: 3, kind: input, shape index: {}]
  %s4 = inlined_call_operand.vmem [shape: f32[1,64], index: 4, kind: input, shape index: {}]
  %s5 = inlined_call_operand.vmem [shape: bf16[24,12,64], index: 5, kind: output, shape index: {}]
  %s6 = sld [smem:[#allocation0]]
  $region53: #{tpu_custom_call.1} parent=0
    _
  %s8 = ssub.s32 1, %s6
  %s9 = scalar_select 0, %s8, %s6
  loop: start=0, step=1, limit=4
  $region2: #{tpu_custom_call.1} parent=0 // loop_pre_header
    _
  $region3: #{tpu_custom_call.1} parent=0 // loop_header
    %s11 = sphi 0, %s15
    %p12 = scmp.ge.s32.totalorder %s11, 4
    %s21 = sphi 0, %s23
    %s24 = sphi 0, %s21
    %s25 = sphi 0, %s24
    %s41 = sphi 0, %s25
    %s45 = sphi 0, %s45
    %s47 = sphi 0, %s45
    %s48 = sphi 0, %s47
    %s62 = sphi 0, %s48
    %s66 = sphi 0, %s66
    %s68 = sphi 0, %s66
    %s69 = sphi 0, %s68
    %s83 = sphi 0, %s69
    %s87 = sphi 0, %s87
    %s89 = sphi 0, %s87
    %s90 = sphi 0, %s89
    %s104 = sphi 0, %s90
    %s108 = sphi 0, %s108
    %s110 = sphi 0, %s108
    %s111 = sphi 0, %s110
    %s125 = sphi 0, %s111
    %s131 = sphi 0, %s133
    %s134 = sphi 0, %s131
    %s135 = sphi 0, %s134
    %s151 = sphi 0, %s135
  $region4: #{tpu_custom_call.1} parent=0 // loop_header_branch
    %14 = sbr.rel (%p12) target = $region8
  $region5: #{tpu_custom_call.1} parent=0 // loop_body
    %s16 = ssub.s32 %s11, 1
    %s17 = ssub.s32 %s11, 2
    %s18 = sadd.s32 %s11, 1
    %s19 = ssub.s32 %s11, %s18
    %p20 = scmp.eq.s32.totalorder %s19, 0
    %s22 = sadd.s32 %s21, 1
    %s23 = scalar_select %p20, %s21, %s22
    %p26 = pneg %p20
    %p27 = scmp.eq.s32.totalorder %s11, 1
    %p28 = por %p26, %p27
    %p29 = scmp.ne.s32.totalorder %s21, %s24
    %p30 = scmp.eq.s32.totalorder %s11, 0
    %p31 = por %p29, %p30
    %p32 = scmp.ne.s32.totalorder %s21, %s24
    %p33 = scmp.eq.s32.totalorder %s16, 1
    %p34 = por %p32, %p33
    %p35 = scmp.ne.s32.totalorder %s24, %s25
    %p36 = scmp.eq.s32.totalorder %s16, 0
    %p37 = por %p35, %p36
    %p38 = scmp.ne.s32.totalorder %s24, %s25
    %p39 = scmp.eq.s32.totalorder %s17, 1
    %p40 = por %p38, %p39
    %p42 = scmp.ne.s32.totalorder %s25, %s41
    %p43 = scmp.eq.s32.totalorder %s17, 0
    %p44 = por %p42, %p43
    %s46 = sadd.s32 %s45, 1
    %p49 = scmp.eq.s32.totalorder %s11, 1
    %p50 = scmp.ne.s32.totalorder %s45, %s47
    %p51 = scmp.eq.s32.totalorder %s11, 0
    %p52 = por %p50, %p51
    %p53 = scmp.ne.s32.totalorder %s45, %s47
    %p54 = scmp.eq.s32.totalorder %s16, 1
    %p55 = por %p53, %p54
    %p56 = scmp.ne.s32.totalorder %s47, %s48
    %p57 = scmp.eq.s32.totalorder %s16, 0
    %p58 = por %p56, %p57
    %p59 = scmp.ne.s32.totalorder %s47, %s48
    %p60 = scmp.eq.s32.totalorder %s17, 1
    %p61 = por %p59, %p60
    %p63 = scmp.ne.s32.totalorder %s48, %s62
    %p64 = scmp.eq.s32.totalorder %s17, 0
    %p65 = por %p63, %p64
    %s67 = sadd.s32 %s66, 1
    %p70 = scmp.eq.s32.totalorder %s11, 1
    %p71 = scmp.ne.s32.totalorder %s66, %s68
    %p72 = scmp.eq.s32.totalorder %s11, 0
    %p73 = por %p71, %p72
    %p74 = scmp.ne.s32.totalorder %s66, %s68
    %p75 = scmp.eq.s32.totalorder %s16, 1
    %p76 = por %p74, %p75
    %p77 = scmp.ne.s32.totalorder %s68, %s69
    %p78 = scmp.eq.s32.totalorder %s16, 0
    %p79 = por %p77, %p78
    %p80 = scmp.ne.s32.totalorder %s68, %s69
    %p81 = scmp.eq.s32.totalorder %s17, 1
    %p82 = por %p80, %p81
    %p84 = scmp.ne.s32.totalorder %s69, %s83
    %p85 = scmp.eq.s32.totalorder %s17, 0
    %p86 = por %p84, %p85
    %s88 = sadd.s32 %s87, 1
    %p91 = scmp.eq.s32.totalorder %s11, 1
    %p92 = scmp.ne.s32.totalorder %s87, %s89
    %p93 = scmp.eq.s32.totalorder %s11, 0
    %p94 = por %p92, %p93
    %p95 = scmp.ne.s32.totalorder %s87, %s89
    %p96 = scmp.eq.s32.totalorder %s16, 1
    %p97 = por %p95, %p96
    %p98 = scmp.ne.s32.totalorder %s89, %s90
    %p99 = scmp.eq.s32.totalorder %s16, 0
    %p100 = por %p98, %p99
    %p101 = scmp.ne.s32.totalorder %s89, %s90
    %p102 = scmp.eq.s32.totalorder %s17, 1
    %p103 = por %p101, %p102
    %p105 = scmp.ne.s32.totalorder %s90, %s104
    %p106 = scmp.eq.s32.totalorder %s17, 0
    %p107 = por %p105, %p106
    %s109 = sadd.s32 %s108, 1
    %p112 = scmp.eq.s32.totalorder %s11, 1
    %p113 = scmp.ne.s32.totalorder %s108, %s110
    %p114 = scmp.eq.s32.totalorder %s11, 0
    %p115 = por %p113, %p114
    %p116 = scmp.ne.s32.totalorder %s108, %s110
    %p117 = scmp.eq.s32.totalorder %s16, 1
    %p118 = por %p116, %p117
    %p119 = scmp.ne.s32.totalorder %s110, %s111
    %p120 = scmp.eq.s32.totalorder %s16, 0
    %p121 = por %p119, %p120
    %p122 = scmp.ne.s32.totalorder %s110, %s111
    %p123 = scmp.eq.s32.totalorder %s17, 1
    %p124 = por %p122, %p123
    %p126 = scmp.ne.s32.totalorder %s111, %s125
    %p127 = scmp.eq.s32.totalorder %s17, 0
    %p128 = por %p126, %p127
    %s129 = ssub.s32 %s11, %s18
    %p130 = scmp.eq.s32.totalorder %s129, 0
    %s132 = sadd.s32 %s131, 1
    %s133 = scalar_select %p130, %s131, %s132
    %p136 = pneg %p130
    %p137 = scmp.eq.s32.totalorder %s11, 1
    %p138 = por %p136, %p137
    %p139 = scmp.ne.s32.totalorder %s131, %s134
    %p140 = scmp.eq.s32.totalorder %s11, 0
    %p141 = por %p139, %p140
    %p142 = scmp.ne.s32.totalorder %s131, %s134
    %p143 = scmp.eq.s32.totalorder %s16, 1
    %p144 = por %p142, %p143
    %p145 = scmp.ne.s32.totalorder %s134, %s135
    %p146 = scmp.eq.s32.totalorder %s16, 0
    %p147 = por %p145, %p146
    %p148 = scmp.ne.s32.totalorder %s134, %s135
    %p149 = scmp.eq.s32.totalorder %s17, 1
    %p150 = por %p148, %p149
    %p152 = scmp.ne.s32.totalorder %s135, %s151
    %p153 = scmp.eq.s32.totalorder %s17, 0
    %p154 = por %p152, %p153
    %p155 = scmp.le.s32.totalorder 1, %s11
    %p156 = scmp.lt.s32.totalorder %s11, 3
    %p157 = pnand %p155, %p156
    %p158 = pneg %p157
    // Predicated region
    $region9: #{tpu_custom_call.1} parent=5 // pred_check
      _
    $region10: #{tpu_custom_call.1} parent=5 // pred_check_branch
      %160 = sbr.rel (%p157) target = $region12
    $region11: #{tpu_custom_call.1} parent=5 // pred_region
      %s161 = ssub.s32 %s11, 1
      // Predicated region
      $region13: #{tpu_custom_call.1} parent=11 // pred_check
        %p162 = pneg %p58
      $region14: #{tpu_custom_call.1} parent=11 // pred_check_branch
        %164 = sbr.rel (%p162) target = $region16
      $region15: #{tpu_custom_call.1} parent=11 // pred_region
        _
      $region16: #{tpu_custom_call.1} parent=11 // pred_fallthru
        _
      // Predicated region
      $region17: #{tpu_custom_call.1} parent=11 // pred_check
        %p165 = pneg %p79
      $region18: #{tpu_custom_call.1} parent=11 // pred_check_branch
        %167 = sbr.rel (%p165) target = $region20
      $region19: #{tpu_custom_call.1} parent=11 // pred_region
        _
      $region20: #{tpu_custom_call.1} parent=11 // pred_fallthru
        _
      // Predicated region
      $region21: #{tpu_custom_call.1} parent=11 // pred_check
        %p168 = pneg %p100
      $region22: #{tpu_custom_call.1} parent=11 // pred_check_branch
        %170 = sbr.rel (%p168) target = $region24
      $region23: #{tpu_custom_call.1} parent=11 // pred_region
        _
      $region24: #{tpu_custom_call.1} parent=11 // pred_fallthru
        _
      // Predicated region
      $region25: #{tpu_custom_call.1} parent=11 // pred_check
        %p171 = pneg %p121
      $region26: #{tpu_custom_call.1} parent=11 // pred_check_branch
        %173 = sbr.rel (%p171) target = $region28
      $region27: #{tpu_custom_call.1} parent=11 // pred_region
        _
      $region28: #{tpu_custom_call.1} parent=11 // pred_fallthru
        _
    $region12: #{tpu_custom_call.1} parent=5 // pred_fallthru
      _
    %p174 = scmp.lt.s32.totalorder %s11, 2
    // Predicated region
    $region29: #{tpu_custom_call.1} parent=5 // pred_check
      %p175 = pneg %p174
    $region30: #{tpu_custom_call.1} parent=5 // pred_check_branch
      %177 = sbr.rel (%p175) target = $region32
    $region31: #{tpu_custom_call.1} parent=5 // pred_region
      // Predicated region
      $region33: #{tpu_custom_call.1} parent=31 // pred_check
        %p178 = pneg %p31
      $region34: #{tpu_custom_call.1} parent=31 // pred_check_branch
        %180 = sbr.rel (%p178) target = $region36
      $region35: #{tpu_custom_call.1} parent=31 // pred_region
        %p181 = scmp.lt.s32.totalorder %s11, 1
        %s182 = scalar_select %p181, %s11, 1
        %s183 = smul.addr %s182, 112
        %s184 = smul.addr %s183, 8
        %s185 = scalar_lea.vmem %s0, %s184
      $region36: #{tpu_custom_call.1} parent=31 // pred_fallthru
        _
    $region32: #{tpu_custom_call.1} parent=5 // pred_fallthru
      _
    %p186 = scmp.le.s32.totalorder 1, %s11
    %p187 = scmp.lt.s32.totalorder %s11, 3
    %p188 = pnand %p186, %p187
    %p189 = pneg %p188
    // Predicated region
    $region37: #{tpu_custom_call.1} parent=5 // pred_check
      _
    $region38: #{tpu_custom_call.1} parent=5 // pred_check_branch
      %191 = sbr.rel (%p188) target = $region40
    $region39: #{tpu_custom_call.1} parent=5 // pred_region
      %s192 = ssub.s32 %s11, 1
      %p193 = scmp.lt.s32.totalorder %s16, 1
      %s194 = scalar_select %p193, %s16, 1
      %s195 = smul.addr %s194, 112
      %s196 = smul.addr %s195, 8
      %s197 = scalar_lea.vmem %s0, %s196
      %p198 = pneg %p37
      %p199 = pneg %p34
      %p200 = pneg %p58
      %p201 = pneg %p55
      %p202 = pneg %p79
      %p203 = pneg %p76
      %p204 = pneg %p100
      %p205 = pneg %p97
      %p206 = pneg %p121
      %p207 = pneg %p118
      %p208 = pneg %p147
      %p209 = pneg %p144
      %s210 = smul.u32 12, %s16
      %p211 = scmp.lt.s32.totalorder %s210, 23
      %s212 = scalar_select %p211, %s210, 23
      %s213 = smul.addr %s212, 2
      %s214 = smul.addr %s213, 4
      %s215 = scalar_lea.vmem %s5, %s214
      %p216 = scmp.lt.s32.totalorder %s16, 1
      %s217 = scalar_select %p216, %s16, 1
      %s218 = smul.addr %s217, 112
      %s219 = smul.addr %s218, 8
      %s220 = scalar_lea.vmem %s0, %s219
      %s221 = smul.u32 12, %s16
      %p222 = scmp.lt.s32.totalorder %s221, 23
      %s223 = scalar_select %p222, %s221, 23
      %s224 = smul.addr %s223, 2
      %s225 = smul.addr %s224, 4
      %s226 = scalar_lea.vmem %s5, %s225
      %s227 = smul.u32 12, %s16
      %v229 = vld [vmem:[%s220] sm:$0xff]
      %v230 = vld [vmem:[%s220 + $0x8] sm:$0xff]
      %v231 = vld [vmem:[%s220 + $0x10] sm:$0xff]
      %v232 = vld [vmem:[%s220 + $0x18] sm:$0xf]
      %v233 = vld [vmem:[%s220 + $0x20] sm:$0xff]
      %v234 = vld [vmem:[%s220 + $0x28] sm:$0xff]
      %v235 = vld [vmem:[%s220 + $0x30] sm:$0xff]
      %v236 = vld [vmem:[%s220 + $0x38] sm:$0xf]
      %v237 = vld [vmem:[%s220 + $0x40] sm:$0xff]
      %v238 = vld [vmem:[%s220 + $0x48] sm:$0xff]
      %v239 = vld [vmem:[%s220 + $0x50] sm:$0xff]
      %v240 = vld [vmem:[%s220 + $0x58] sm:$0xf]
      %v241 = vld [vmem:[%s220 + $0x60] sm:$0xff]
      %v242 = vld [vmem:[%s220 + $0x68] sm:$0xff]
      %v243 = vld [vmem:[%s220 + $0x70] sm:$0xff]
      %v244 = vld [vmem:[%s220 + $0x78] sm:$0xf]
      %v245 = vld [vmem:[%s220 + $0x80] sm:$0xff]
      %v246 = vld [vmem:[%s220 + $0x88] sm:$0xff]
      %v247 = vld [vmem:[%s220 + $0x90] sm:$0xff]
      %v248 = vld [vmem:[%s220 + $0x98] sm:$0xf]
      %v249 = vld [vmem:[%s220 + $0xa0] sm:$0xff]
      %v250 = vld [vmem:[%s220 + $0xa8] sm:$0xff]
      %v251 = vld [vmem:[%s220 + $0xb0] sm:$0xff]
      %v252 = vld [vmem:[%s220 + $0xb8] sm:$0xf]
      %v253 = vld [vmem:[%s220 + $0xc0] sm:$0xff]
      %v254 = vld [vmem:[%s220 + $0xc8] sm:$0xff]
      %v255 = vld [vmem:[%s220 + $0xd0] sm:$0xff]
      %v256 = vld [vmem:[%s220 + $0xd8] sm:$0xf]
      %v257 = vld [vmem:[%s220 + $0xe0] sm:$0xff]
      %v258 = vld [vmem:[%s220 + $0xe8] sm:$0xff]
      %v259 = vld [vmem:[%s220 + $0xf0] sm:$0xff]
      %v260 = vld [vmem:[%s220 + $0xf8] sm:$0xf]
      %v261 = vld [vmem:[%s220 + $0x100] sm:$0xff]
      %v262 = vld [vmem:[%s220 + $0x108] sm:$0xff]
      %v263 = vld [vmem:[%s220 + $0x110] sm:$0xff]
      %v264 = vld [vmem:[%s220 + $0x118] sm:$0xf]
      %v265 = vld [vmem:[%s220 + $0x120] sm:$0xff]
      %v266 = vld [vmem:[%s220 + $0x128] sm:$0xff]
      %v267 = vld [vmem:[%s220 + $0x130] sm:$0xff]
      %v268 = vld [vmem:[%s220 + $0x138] sm:$0xf]
      %v269 = vld [vmem:[%s220 + $0x140] sm:$0xff]
      %v270 = vld [vmem:[%s220 + $0x148] sm:$0xff]
      %v271 = vld [vmem:[%s220 + $0x150] sm:$0xff]
      %v272 = vld [vmem:[%s220 + $0x158] sm:$0xf]
      %v273 = vld [vmem:[%s220 + $0x160] sm:$0xff]
      %v274 = vld [vmem:[%s220 + $0x168] sm:$0xff]
      %v275 = vld [vmem:[%s220 + $0x170] sm:$0xff]
      %v276 = vld [vmem:[%s220 + $0x178] sm:$0xf]
      %v277 = vld [vmem:[%s220 + $0x180] sm:$0xff]
      %v278 = vld [vmem:[%s220 + $0x188] sm:$0xff]
      %v279 = vld [vmem:[%s220 + $0x190] sm:$0xff]
      %v280 = vld [vmem:[%s220 + $0x198] sm:$0xf]
      %v281 = vld [vmem:[%s220 + $0x1a0] sm:$0xff]
      %v282 = vld [vmem:[%s220 + $0x1a8] sm:$0xff]
      %v283 = vld [vmem:[%s220 + $0x1b0] sm:$0xff]
      %v284 = vld [vmem:[%s220 + $0x1b8] sm:$0xf]
      %v285 = vld [vmem:[%s220 + $0x1c0] sm:$0xff]
      %v286 = vld [vmem:[%s220 + $0x1c8] sm:$0xff]
      %v287 = vld [vmem:[%s220 + $0x1d0] sm:$0xff]
      %v288 = vld [vmem:[%s220 + $0x1d8] sm:$0xf]
      %v289 = vld [vmem:[%s220 + $0x1e0] sm:$0xff]
      %v290 = vld [vmem:[%s220 + $0x1e8] sm:$0xff]
      %v291 = vld [vmem:[%s220 + $0x1f0] sm:$0xff]
      %v292 = vld [vmem:[%s220 + $0x1f8] sm:$0xf]
      %v293 = vld [vmem:[%s220 + $0x200] sm:$0xff]
      %v294 = vld [vmem:[%s220 + $0x208] sm:$0xff]
      %v295 = vld [vmem:[%s220 + $0x210] sm:$0xff]
      %v296 = vld [vmem:[%s220 + $0x218] sm:$0xf]
      %v297 = vld [vmem:[%s220 + $0x220] sm:$0xff]
      %v298 = vld [vmem:[%s220 + $0x228] sm:$0xff]
      %v299 = vld [vmem:[%s220 + $0x230] sm:$0xff]
      %v300 = vld [vmem:[%s220 + $0x238] sm:$0xf]
      %v301 = vld [vmem:[%s220 + $0x240] sm:$0xff]
      %v302 = vld [vmem:[%s220 + $0x248] sm:$0xff]
      %v303 = vld [vmem:[%s220 + $0x250] sm:$0xff]
      %v304 = vld [vmem:[%s220 + $0x258] sm:$0xf]
      %v305 = vld [vmem:[%s220 + $0x260] sm:$0xff]
      %v306 = vld [vmem:[%s220 + $0x268] sm:$0xff]
      %v307 = vld [vmem:[%s220 + $0x270] sm:$0xff]
      %v308 = vld [vmem:[%s220 + $0x278] sm:$0xf]
      %v309 = vld [vmem:[%s220 + $0x280] sm:$0xff]
      %v310 = vld [vmem:[%s220 + $0x288] sm:$0xff]
      %v311 = vld [vmem:[%s220 + $0x290] sm:$0xff]
      %v312 = vld [vmem:[%s220 + $0x298] sm:$0xf]
      %v313 = vld [vmem:[%s220 + $0x2a0] sm:$0xff]
      %v314 = vld [vmem:[%s220 + $0x2a8] sm:$0xff]
      %v315 = vld [vmem:[%s220 + $0x2b0] sm:$0xff]
      %v316 = vld [vmem:[%s220 + $0x2b8] sm:$0xf]
      %v317 = vld [vmem:[%s220 + $0x2c0] sm:$0xff]
      %v318 = vld [vmem:[%s220 + $0x2c8] sm:$0xff]
      %v319 = vld [vmem:[%s220 + $0x2d0] sm:$0xff]
      %v320 = vld [vmem:[%s220 + $0x2d8] sm:$0xf]
      %v321 = vld [vmem:[%s220 + $0x2e0] sm:$0xff]
      %v322 = vld [vmem:[%s220 + $0x2e8] sm:$0xff]
      %v323 = vld [vmem:[%s220 + $0x2f0] sm:$0xff]
      %v324 = vld [vmem:[%s220 + $0x2f8] sm:$0xf]
      %v325 = vld [vmem:[%s220 + $0x300] sm:$0xff]
      %v326 = vld [vmem:[%s220 + $0x308] sm:$0xff]
      %v327 = vld [vmem:[%s220 + $0x310] sm:$0xff]
      %v328 = vld [vmem:[%s220 + $0x318] sm:$0xf]
      %v329 = vld [vmem:[%s220 + $0x320] sm:$0xff]
      %v330 = vld [vmem:[%s220 + $0x328] sm:$0xff]
      %v331 = vld [vmem:[%s220 + $0x330] sm:$0xff]
      %v332 = vld [vmem:[%s220 + $0x338] sm:$0xf]
      %v333 = vld [vmem:[%s220 + $0x340] sm:$0xff]
      %v334 = vld [vmem:[%s220 + $0x348] sm:$0xff]
      %v335 = vld [vmem:[%s220 + $0x350] sm:$0xff]
      %v336 = vld [vmem:[%s220 + $0x358] sm:$0xf]
      %v337 = vld [vmem:[%s220 + $0x360] sm:$0xff]
      %v338 = vld [vmem:[%s220 + $0x368] sm:$0xff]
      %v339 = vld [vmem:[%s220 + $0x370] sm:$0xff]
      %v340 = vld [vmem:[%s220 + $0x378] sm:$0xf]
      %v341 = vld [vmem:[%s1] sm:$0x1]
      %343 = vset.pattern.permute.xlu0 0
      %344 = vperm.xlu0 %343, %v229
      %v345 = vpop.permute.xlu0 %344
      %348 = vset.pattern.permute.xlu0 0
      %349 = vperm.xlu0 %348, %v230
      %v350 = vpop.permute.xlu0 %349
      %353 = vset.pattern.permute.xlu0 0
      %354 = vperm.xlu0 %353, %v231
      %v355 = vpop.permute.xlu0 %354
      %358 = vset.pattern.permute.xlu0 0
      %359 = vperm.xlu0 %358, %v232
      %v360 = vpop.permute.xlu0 %359
      %363 = vset.pattern.permute.xlu0 0
      %364 = vperm.xlu0 %363, %v233
      %v365 = vpop.permute.xlu0 %364
      %368 = vset.pattern.permute.xlu0 0
      %369 = vperm.xlu0 %368, %v234
      %v370 = vpop.permute.xlu0 %369
      %373 = vset.pattern.permute.xlu0 0
      %374 = vperm.xlu0 %373, %v235
      %v375 = vpop.permute.xlu0 %374
      %378 = vset.pattern.permute.xlu0 0
      %379 = vperm.xlu0 %378, %v236
      %v380 = vpop.permute.xlu0 %379
      %383 = vset.pattern.permute.xlu0 0
      %384 = vperm.xlu0 %383, %v237
      %v385 = vpop.permute.xlu0 %384
      %388 = vset.pattern.permute.xlu0 0
      %389 = vperm.xlu0 %388, %v238
      %v390 = vpop.permute.xlu0 %389
      %393 = vset.pattern.permute.xlu0 0
      %394 = vperm.xlu0 %393, %v239
      %v395 = vpop.permute.xlu0 %394
      %398 = vset.pattern.permute.xlu0 0
      %399 = vperm.xlu0 %398, %v240
      %v400 = vpop.permute.xlu0 %399
      %403 = vset.pattern.permute.xlu0 0
      %404 = vperm.xlu0 %403, %v241
      %v405 = vpop.permute.xlu0 %404
      %408 = vset.pattern.permute.xlu0 0
      %409 = vperm.xlu0 %408, %v242
      %v410 = vpop.permute.xlu0 %409
      %413 = vset.pattern.permute.xlu0 0
      %414 = vperm.xlu0 %413, %v243
      %v415 = vpop.permute.xlu0 %414
      %418 = vset.pattern.permute.xlu0 0
      %419 = vperm.xlu0 %418, %v244
      %v420 = vpop.permute.xlu0 %419
      %423 = vset.pattern.permute.xlu0 0
      %424 = vperm.xlu0 %423, %v245
      %v425 = vpop.permute.xlu0 %424
      %428 = vset.pattern.permute.xlu0 0
      %429 = vperm.xlu0 %428, %v246
      %v430 = vpop.permute.xlu0 %429
      %433 = vset.pattern.permute.xlu0 0
      %434 = vperm.xlu0 %433, %v247
      %v435 = vpop.permute.xlu0 %434
      %438 = vset.pattern.permute.xlu0 0
      %439 = vperm.xlu0 %438, %v248
      %v440 = vpop.permute.xlu0 %439
      %443 = vset.pattern.permute.xlu0 0
      %444 = vperm.xlu0 %443, %v249
      %v445 = vpop.permute.xlu0 %444
      %448 = vset.pattern.permute.xlu0 0
      %449 = vperm.xlu0 %448, %v250
      %v450 = vpop.permute.xlu0 %449
      %453 = vset.pattern.permute.xlu0 0
      %454 = vperm.xlu0 %453, %v251
      %v455 = vpop.permute.xlu0 %454
      %458 = vset.pattern.permute.xlu0 0
      %459 = vperm.xlu0 %458, %v252
      %v460 = vpop.permute.xlu0 %459
      %463 = vset.pattern.permute.xlu0 0
      %464 = vperm.xlu0 %463, %v253
      %v465 = vpop.permute.xlu0 %464
      %468 = vset.pattern.permute.xlu0 0
      %469 = vperm.xlu0 %468, %v254
      %v470 = vpop.permute.xlu0 %469
      %473 = vset.pattern.permute.xlu0 0
      %474 = vperm.xlu0 %473, %v255
      %v475 = vpop.permute.xlu0 %474
      %478 = vset.pattern.permute.xlu0 0
      %479 = vperm.xlu0 %478, %v256
      %v480 = vpop.permute.xlu0 %479
      %483 = vset.pattern.permute.xlu0 0
      %484 = vperm.xlu0 %483, %v257
      %v485 = vpop.permute.xlu0 %484
      %488 = vset.pattern.permute.xlu0 0
      %489 = vperm.xlu0 %488, %v258
      %v490 = vpop.permute.xlu0 %489
      %493 = vset.pattern.permute.xlu0 0
      %494 = vperm.xlu0 %493, %v259
      %v495 = vpop.permute.xlu0 %494
      %498 = vset.pattern.permute.xlu0 0
      %499 = vperm.xlu0 %498, %v260
      %v500 = vpop.permute.xlu0 %499
      %503 = vset.pattern.permute.xlu0 0
      %504 = vperm.xlu0 %503, %v261
      %v505 = vpop.permute.xlu0 %504
      %508 = vset.pattern.permute.xlu0 0
      %509 = vperm.xlu0 %508, %v262
      %v510 = vpop.permute.xlu0 %509
      %513 = vset.pattern.permute.xlu0 0
      %514 = vperm.xlu0 %513, %v263
      %v515 = vpop.permute.xlu0 %514
      %518 = vset.pattern.permute.xlu0 0
      %519 = vperm.xlu0 %518, %v264
      %v520 = vpop.permute.xlu0 %519
      %523 = vset.pattern.permute.xlu0 0
      %524 = vperm.xlu0 %523, %v265
      %v525 = vpop.permute.xlu0 %524
      %528 = vset.pattern.permute.xlu0 0
      %529 = vperm.xlu0 %528, %v266
      %v530 = vpop.permute.xlu0 %529
      %533 = vset.pattern.permute.xlu0 0
      %534 = vperm.xlu0 %533, %v267
      %v535 = vpop.permute.xlu0 %534
      %538 = vset.pattern.permute.xlu0 0
      %539 = vperm.xlu0 %538, %v268
      %v540 = vpop.permute.xlu0 %539
      %543 = vset.pattern.permute.xlu0 0
      %544 = vperm.xlu0 %543, %v269
      %v545 = vpop.permute.xlu0 %544
      %548 = vset.pattern.permute.xlu0 0
      %549 = vperm.xlu0 %548, %v270
      %v550 = vpop.permute.xlu0 %549
      %553 = vset.pattern.permute.xlu0 0
      %554 = vperm.xlu0 %553, %v271
      %v555 = vpop.permute.xlu0 %554
      %558 = vset.pattern.permute.xlu0 0
      %559 = vperm.xlu0 %558, %v272
      %v560 = vpop.permute.xlu0 %559
      %563 = vset.pattern.permute.xlu0 0
      %564 = vperm.xlu0 %563, %v273
      %v565 = vpop.permute.xlu0 %564
      %568 = vset.pattern.permute.xlu0 0
      %569 = vperm.xlu0 %568, %v274
      %v570 = vpop.permute.xlu0 %569
      %573 = vset.pattern.permute.xlu0 0
      %574 = vperm.xlu0 %573, %v275
      %v575 = vpop.permute.xlu0 %574
      %578 = vset.pattern.permute.xlu0 0
      %579 = vperm.xlu0 %578, %v276
      %v580 = vpop.permute.xlu0 %579
      %583 = vset.pattern.permute.xlu0 0
      %584 = vperm.xlu0 %583, %v277
      %v585 = vpop.permute.xlu0 %584
      %588 = vset.pattern.permute.xlu0 0
      %589 = vperm.xlu0 %588, %v278
      %v590 = vpop.permute.xlu0 %589
      %593 = vset.pattern.permute.xlu0 0
      %594 = vperm.xlu0 %593, %v279
      %v595 = vpop.permute.xlu0 %594
      %598 = vset.pattern.permute.xlu0 0
      %599 = vperm.xlu0 %598, %v280
      %v600 = vpop.permute.xlu0 %599
      %603 = vset.pattern.permute.xlu0 0
      %604 = vperm.xlu0 %603, %v281
      %v605 = vpop.permute.xlu0 %604
      %608 = vset.pattern.permute.xlu0 0
      %609 = vperm.xlu0 %608, %v282
      %v610 = vpop.permute.xlu0 %609
      %613 = vset.pattern.permute.xlu0 0
      %614 = vperm.xlu0 %613, %v283
      %v615 = vpop.permute.xlu0 %614
      %618 = vset.pattern.permute.xlu0 0
      %619 = vperm.xlu0 %618, %v284
      %v620 = vpop.permute.xlu0 %619
      %623 = vset.pattern.permute.xlu0 0
      %624 = vperm.xlu0 %623, %v285
      %v625 = vpop.permute.xlu0 %624
      %628 = vset.pattern.permute.xlu0 0
      %629 = vperm.xlu0 %628, %v286
      %v630 = vpop.permute.xlu0 %629
      %633 = vset.pattern.permute.xlu0 0
      %634 = vperm.xlu0 %633, %v287
      %v635 = vpop.permute.xlu0 %634
      %638 = vset.pattern.permute.xlu0 0
      %639 = vperm.xlu0 %638, %v288
      %v640 = vpop.permute.xlu0 %639
      %643 = vset.pattern.permute.xlu0 0
      %644 = vperm.xlu0 %643, %v289
      %v645 = vpop.permute.xlu0 %644
      %648 = vset.pattern.permute.xlu0 0
      %649 = vperm.xlu0 %648, %v290
      %v650 = vpop.permute.xlu0 %649
      %653 = vset.pattern.permute.xlu0 0
      %654 = vperm.xlu0 %653, %v291
      %v655 = vpop.permute.xlu0 %654
      %658 = vset.pattern.permute.xlu0 0
      %659 = vperm.xlu0 %658, %v292
      %v660 = vpop.permute.xlu0 %659
      %663 = vset.pattern.permute.xlu0 0
      %664 = vperm.xlu0 %663, %v293
      %v665 = vpop.permute.xlu0 %664
      %668 = vset.pattern.permute.xlu0 0
      %669 = vperm.xlu0 %668, %v294
      %v670 = vpop.permute.xlu0 %669
      %673 = vset.pattern.permute.xlu0 0
      %674 = vperm.xlu0 %673, %v295
      %v675 = vpop.permute.xlu0 %674
      %678 = vset.pattern.permute.xlu0 0
      %679 = vperm.xlu0 %678, %v296
      %v680 = vpop.permute.xlu0 %679
      %683 = vset.pattern.permute.xlu0 0
      %684 = vperm.xlu0 %683, %v297
      %v685 = vpop.permute.xlu0 %684
      %688 = vset.pattern.permute.xlu0 0
      %689 = vperm.xlu0 %688, %v298
      %v690 = vpop.permute.xlu0 %689
      %693 = vset.pattern.permute.xlu0 0
      %694 = vperm.xlu0 %693, %v299
      %v695 = vpop.permute.xlu0 %694
      %698 = vset.pattern.permute.xlu0 0
      %699 = vperm.xlu0 %698, %v300
      %v700 = vpop.permute.xlu0 %699
      %703 = vset.pattern.permute.xlu0 0
      %704 = vperm.xlu0 %703, %v301
      %v705 = vpop.permute.xlu0 %704
      %708 = vset.pattern.permute.xlu0 0
      %709 = vperm.xlu0 %708, %v302
      %v710 = vpop.permute.xlu0 %709
      %713 = vset.pattern.permute.xlu0 0
      %714 = vperm.xlu0 %713, %v303
      %v715 = vpop.permute.xlu0 %714
      %718 = vset.pattern.permute.xlu0 0
      %719 = vperm.xlu0 %718, %v304
      %v720 = vpop.permute.xlu0 %719
      %723 = vset.pattern.permute.xlu0 0
      %724 = vperm.xlu0 %723, %v305
      %v725 = vpop.permute.xlu0 %724
      %728 = vset.pattern.permute.xlu0 0
      %729 = vperm.xlu0 %728, %v306
      %v730 = vpop.permute.xlu0 %729
      %733 = vset.pattern.permute.xlu0 0
      %734 = vperm.xlu0 %733, %v307
      %v735 = vpop.permute.xlu0 %734
      %738 = vset.pattern.permute.xlu0 0
      %739 = vperm.xlu0 %738, %v308
      %v740 = vpop.permute.xlu0 %739
      %743 = vset.pattern.permute.xlu0 0
      %744 = vperm.xlu0 %743, %v309
      %v745 = vpop.permute.xlu0 %744
      %748 = vset.pattern.permute.xlu0 0
      %749 = vperm.xlu0 %748, %v310
      %v750 = vpop.permute.xlu0 %749
      %753 = vset.pattern.permute.xlu0 0
      %754 = vperm.xlu0 %753, %v311
      %v755 = vpop.permute.xlu0 %754
      %758 = vset.pattern.permute.xlu0 0
      %759 = vperm.xlu0 %758, %v312
      %v760 = vpop.permute.xlu0 %759
      %763 = vset.pattern.permute.xlu0 0
      %764 = vperm.xlu0 %763, %v313
      %v765 = vpop.permute.xlu0 %764
      %768 = vset.pattern.permute.xlu0 0
      %769 = vperm.xlu0 %768, %v314
      %v770 = vpop.permute.xlu0 %769
      %773 = vset.pattern.permute.xlu0 0
      %774 = vperm.xlu0 %773, %v315
      %v775 = vpop.permute.xlu0 %774
      %778 = vset.pattern.permute.xlu0 0
      %779 = vperm.xlu0 %778, %v316
      %v780 = vpop.permute.xlu0 %779
      %783 = vset.pattern.permute.xlu0 0
      %784 = vperm.xlu0 %783, %v317
      %v785 = vpop.permute.xlu0 %784
      %788 = vset.pattern.permute.xlu0 0
      %789 = vperm.xlu0 %788, %v318
      %v790 = vpop.permute.xlu0 %789
      %793 = vset.pattern.permute.xlu0 0
      %794 = vperm.xlu0 %793, %v319
      %v795 = vpop.permute.xlu0 %794
      %798 = vset.pattern.permute.xlu0 0
      %799 = vperm.xlu0 %798, %v320
      %v800 = vpop.permute.xlu0 %799
      %803 = vset.pattern.permute.xlu0 0
      %804 = vperm.xlu0 %803, %v321
      %v805 = vpop.permute.xlu0 %804
      %808 = vset.pattern.permute.xlu0 0
      %809 = vperm.xlu0 %808, %v322
      %v810 = vpop.permute.xlu0 %809
      %813 = vset.pattern.permute.xlu0 0
      %814 = vperm.xlu0 %813, %v323
      %v815 = vpop.permute.xlu0 %814
      %818 = vset.pattern.permute.xlu0 0
      %819 = vperm.xlu0 %818, %v324
      %v820 = vpop.permute.xlu0 %819
      %823 = vset.pattern.permute.xlu0 0
      %824 = vperm.xlu0 %823, %v325
      %v825 = vpop.permute.xlu0 %824
      %828 = vset.pattern.permute.xlu0 0
      %829 = vperm.xlu0 %828, %v326
      %v830 = vpop.permute.xlu0 %829
      %833 = vset.pattern.permute.xlu0 0
      %834 = vperm.xlu0 %833, %v327
      %v835 = vpop.permute.xlu0 %834
      %838 = vset.pattern.permute.xlu0 0
      %839 = vperm.xlu0 %838, %v328
      %v840 = vpop.permute.xlu0 %839
      %843 = vset.pattern.permute.xlu0 0
      %844 = vperm.xlu0 %843, %v329
      %v845 = vpop.permute.xlu0 %844
      %848 = vset.pattern.permute.xlu0 0
      %849 = vperm.xlu0 %848, %v330
      %v850 = vpop.permute.xlu0 %849
      %853 = vset.pattern.permute.xlu0 0
      %854 = vperm.xlu0 %853, %v331
      %v855 = vpop.permute.xlu0 %854
      %858 = vset.pattern.permute.xlu0 0
      %859 = vperm.xlu0 %858, %v332
      %v860 = vpop.permute.xlu0 %859
      %v862 = vlaneseq
      %v863 = vshrl.u32 %v862, 7
      %v864 = vsub.s32 0, %v863
      %v865 = vrot.slane %v341, %v864
      %v866 = vmul.f32 %v345, %v865
      %v867 = vmul.f32 %v350, %v865
      %v868 = vmul.f32 %v355, %v865
      %v869 = vmul.f32 %v360, %v865
      %v870 = vmul.f32 %v365, %v865
      %v871 = vmul.f32 %v370, %v865
      %v872 = vmul.f32 %v375, %v865
      %v873 = vmul.f32 %v380, %v865
      %v874 = vmul.f32 %v385, %v865
      %v875 = vmul.f32 %v390, %v865
      %v876 = vmul.f32 %v395, %v865
      %v877 = vmul.f32 %v400, %v865
      %v878 = vmul.f32 %v405, %v865
      %v879 = vmul.f32 %v410, %v865
      %v880 = vmul.f32 %v415, %v865
      %v881 = vmul.f32 %v420, %v865
      %v882 = vmul.f32 %v425, %v865
      %v883 = vmul.f32 %v430, %v865
      %v884 = vmul.f32 %v435, %v865
      %v885 = vmul.f32 %v440, %v865
      %v886 = vmul.f32 %v445, %v865
      %v887 = vmul.f32 %v450, %v865
      %v888 = vmul.f32 %v455, %v865
      %v889 = vmul.f32 %v460, %v865
      %v890 = vmul.f32 %v465, %v865
      %v891 = vmul.f32 %v470, %v865
      %v892 = vmul.f32 %v475, %v865
      %v893 = vmul.f32 %v480, %v865
      %v894 = vmul.f32 %v485, %v865
      %v895 = vmul.f32 %v490, %v865
      %v896 = vmul.f32 %v495, %v865
      %v897 = vmul.f32 %v500, %v865
      %v898 = vmul.f32 %v505, %v865
      %v899 = vmul.f32 %v510, %v865
      %v900 = vmul.f32 %v515, %v865
      %v901 = vmul.f32 %v520, %v865
      %v902 = vmul.f32 %v525, %v865
      %v903 = vmul.f32 %v530, %v865
      %v904 = vmul.f32 %v535, %v865
      %v905 = vmul.f32 %v540, %v865
      %v906 = vmul.f32 %v545, %v865
      %v907 = vmul.f32 %v550, %v865
      %v908 = vmul.f32 %v555, %v865
      %v909 = vmul.f32 %v560, %v865
      %v910 = vmul.f32 %v565, %v865
      %v911 = vmul.f32 %v570, %v865
      %v912 = vmul.f32 %v575, %v865
      %v913 = vmul.f32 %v580, %v865
      %v914 = vmul.f32 %v585, %v865
      %v915 = vmul.f32 %v590, %v865
      %v916 = vmul.f32 %v595, %v865
      %v917 = vmul.f32 %v600, %v865
      %v918 = vmul.f32 %v605, %v865
      %v919 = vmul.f32 %v610, %v865
      %v920 = vmul.f32 %v615, %v865
      %v921 = vmul.f32 %v620, %v865
      %v922 = vmul.f32 %v625, %v865
      %v923 = vmul.f32 %v630, %v865
      %v924 = vmul.f32 %v635, %v865
      %v925 = vmul.f32 %v640, %v865
      %v926 = vmul.f32 %v645, %v865
      %v927 = vmul.f32 %v650, %v865
      %v928 = vmul.f32 %v655, %v865
      %v929 = vmul.f32 %v660, %v865
      %v930 = vmul.f32 %v665, %v865
      %v931 = vmul.f32 %v670, %v865
      %v932 = vmul.f32 %v675, %v865
      %v933 = vmul.f32 %v680, %v865
      %v934 = vmul.f32 %v685, %v865
      %v935 = vmul.f32 %v690, %v865
      %v936 = vmul.f32 %v695, %v865
      %v937 = vmul.f32 %v700, %v865
      %v938 = vmul.f32 %v705, %v865
      %v939 = vmul.f32 %v710, %v865
      %v940 = vmul.f32 %v715, %v865
      %v941 = vmul.f32 %v720, %v865
      %v942 = vmul.f32 %v725, %v865
      %v943 = vmul.f32 %v730, %v865
      %v944 = vmul.f32 %v735, %v865
      %v945 = vmul.f32 %v740, %v865
      %v946 = vmul.f32 %v745, %v865
      %v947 = vmul.f32 %v750, %v865
      %v948 = vmul.f32 %v755, %v865
      %v949 = vmul.f32 %v760, %v865
      %v950 = vmul.f32 %v765, %v865
      %v951 = vmul.f32 %v770, %v865
      %v952 = vmul.f32 %v775, %v865
      %v953 = vmul.f32 %v780, %v865
      %v954 = vmul.f32 %v785, %v865
      %v955 = vmul.f32 %v790, %v865
      %v956 = vmul.f32 %v795, %v865
      %v957 = vmul.f32 %v800, %v865
      %v958 = vmul.f32 %v805, %v865
      %v959 = vmul.f32 %v810, %v865
      %v960 = vmul.f32 %v815, %v865
      %v961 = vmul.f32 %v820, %v865
      %v962 = vmul.f32 %v825, %v865
      %v963 = vmul.f32 %v830, %v865
      %v964 = vmul.f32 %v835, %v865
      %v965 = vmul.f32 %v840, %v865
      %v966 = vmul.f32 %v845, %v865
      %v967 = vmul.f32 %v850, %v865
      %v968 = vmul.f32 %v855, %v865
      %v969 = vmul.f32 %v860, %v865
      %v970 = vld [vmem:[%s1 + $0x1] sm:$0x1]
      %v971 = vlaneseq
      %v972 = vshrl.u32 %v971, 7
      %v973 = vsub.s32 0, %v972
      %v974 = vrot.slane %v970, %v973
      %v975 = vmul.f32 %v345, %v974
      %v976 = vmul.f32 %v350, %v974
      %v977 = vmul.f32 %v355, %v974
      %v978 = vmul.f32 %v360, %v974
      %v979 = vmul.f32 %v365, %v974
      %v980 = vmul.f32 %v370, %v974
      %v981 = vmul.f32 %v375, %v974
      %v982 = vmul.f32 %v380, %v974
      %v983 = vmul.f32 %v385, %v974
      %v984 = vmul.f32 %v390, %v974
      %v985 = vmul.f32 %v395, %v974
      %v986 = vmul.f32 %v400, %v974
      %v987 = vmul.f32 %v405, %v974
      %v988 = vmul.f32 %v410, %v974
      %v989 = vmul.f32 %v415, %v974
      %v990 = vmul.f32 %v420, %v974
      %v991 = vmul.f32 %v425, %v974
      %v992 = vmul.f32 %v430, %v974
      %v993 = vmul.f32 %v435, %v974
      %v994 = vmul.f32 %v440, %v974
      %v995 = vmul.f32 %v445, %v974
      %v996 = vmul.f32 %v450, %v974
      %v997 = vmul.f32 %v455, %v974
      %v998 = vmul.f32 %v460, %v974
      %v999 = vmul.f32 %v465, %v974
      %v1000 = vmul.f32 %v470, %v974
      %v1001 = vmul.f32 %v475, %v974
      %v1002 = vmul.f32 %v480, %v974
      %v1003 = vmul.f32 %v485, %v974
      %v1004 = vmul.f32 %v490, %v974
      %v1005 = vmul.f32 %v495, %v974
      %v1006 = vmul.f32 %v500, %v974
      %v1007 = vmul.f32 %v505, %v974
      %v1008 = vmul.f32 %v510, %v974
      %v1009 = vmul.f32 %v515, %v974
      %v1010 = vmul.f32 %v520, %v974
      %v1011 = vmul.f32 %v525, %v974
      %v1012 = vmul.f32 %v530, %v974
      %v1013 = vmul.f32 %v535, %v974
      %v1014 = vmul.f32 %v540, %v974
      %v1015 = vmul.f32 %v545, %v974
      %v1016 = vmul.f32 %v550, %v974
      %v1017 = vmul.f32 %v555, %v974
      %v1018 = vmul.f32 %v560, %v974
      %v1019 = vmul.f32 %v565, %v974
      %v1020 = vmul.f32 %v570, %v974
      %v1021 = vmul.f32 %v575, %v974
      %v1022 = vmul.f32 %v580, %v974
      %v1023 = vmul.f32 %v585, %v974
      %v1024 = vmul.f32 %v590, %v974
      %v1025 = vmul.f32 %v595, %v974
      %v1026 = vmul.f32 %v600, %v974
      %v1027 = vmul.f32 %v605, %v974
      %v1028 = vmul.f32 %v610, %v974
      %v1029 = vmul.f32 %v615, %v974
      %v1030 = vmul.f32 %v620, %v974
      %v1031 = vmul.f32 %v625, %v974
      %v1032 = vmul.f32 %v630, %v974
      %v1033 = vmul.f32 %v635, %v974
      %v1034 = vmul.f32 %v640, %v974
      %v1035 = vmul.f32 %v645, %v974
      %v1036 = vmul.f32 %v650, %v974
      %v1037 = vmul.f32 %v655, %v974
      %v1038 = vmul.f32 %v660, %v974
      %v1039 = vmul.f32 %v665, %v974
      %v1040 = vmul.f32 %v670, %v974
      %v1041 = vmul.f32 %v675, %v974
      %v1042 = vmul.f32 %v680, %v974
      %v1043 = vmul.f32 %v685, %v974
      %v1044 = vmul.f32 %v690, %v974
      %v1045 = vmul.f32 %v695, %v974
      %v1046 = vmul.f32 %v700, %v974
      %v1047 = vmul.f32 %v705, %v974
      %v1048 = vmul.f32 %v710, %v974
      %v1049 = vmul.f32 %v715, %v974
      %v1050 = vmul.f32 %v720, %v974
      %v1051 = vmul.f32 %v725, %v974
      %v1052 = vmul.f32 %v730, %v974
      %v1053 = vmul.f32 %v735, %v974
      %v1054 = vmul.f32 %v740, %v974
      %v1055 = vmul.f32 %v745, %v974
      %v1056 = vmul.f32 %v750, %v974
      %v1057 = vmul.f32 %v755, %v974
      %v1058 = vmul.f32 %v760, %v974
      %v1059 = vmul.f32 %v765, %v974
      %v1060 = vmul.f32 %v770, %v974
      %v1061 = vmul.f32 %v775, %v974
      %v1062 = vmul.f32 %v780, %v974
      %v1063 = vmul.f32 %v785, %v974
      %v1064 = vmul.f32 %v790, %v974
      %v1065 = vmul.f32 %v795, %v974
      %v1066 = vmul.f32 %v800, %v974
      %v1067 = vmul.f32 %v805, %v974
      %v1068 = vmul.f32 %v810, %v974
      %v1069 = vmul.f32 %v815, %v974
      %v1070 = vmul.f32 %v820, %v974
      %v1071 = vmul.f32 %v825, %v974
      %v1072 = vmul.f32 %v830, %v974
      %v1073 = vmul.f32 %v835, %v974
      %v1074 = vmul.f32 %v840, %v974
      %v1075 = vmul.f32 %v845, %v974
      %v1076 = vmul.f32 %v850, %v974
      %v1077 = vmul.f32 %v855, %v974
      %v1078 = vmul.f32 %v860, %v974
      %vm1183 = vcmask 1046528
      %v1184 = vrot.slane %v975, 1
      %v1185 = vrot.slane %v976, 1
      %v1186 = vsel %vm1183, %v1184, %v1185
      %v1187 = vrot.slane %v977, 1
      %v1188 = vsel %vm1183, %v1185, %v1187
      %v1189 = vrot.slane %v978, 1
      %v1190 = vsel %vm1183, %v1187, %v1189
      %v1191 = vrot.slane %v979, 1
      %v1192 = vrot.slane %v980, 1
      %v1193 = vsel %vm1183, %v1191, %v1192
      %v1194 = vrot.slane %v981, 1
      %v1195 = vsel %vm1183, %v1192, %v1194
      %v1196 = vrot.slane %v982, 1
      %v1197 = vsel %vm1183, %v1194, %v1196
      %v1198 = vrot.slane %v983, 1
      %v1199 = vrot.slane %v984, 1
      %v1200 = vsel %vm1183, %v1198, %v1199
      %v1201 = vrot.slane %v985, 1
      %v1202 = vsel %vm1183, %v1199, %v1201
      %v1203 = vrot.slane %v986, 1
      %v1204 = vsel %vm1183, %v1201, %v1203
      %v1205 = vrot.slane %v987, 1
      %v1206 = vrot.slane %v988, 1
      %v1207 = vsel %vm1183, %v1205, %v1206
      %v1208 = vrot.slane %v989, 1
      %v1209 = vsel %vm1183, %v1206, %v1208
      %v1210 = vrot.slane %v990, 1
      %v1211 = vsel %vm1183, %v1208, %v1210
      %v1212 = vrot.slane %v991, 1
      %v1213 = vrot.slane %v992, 1
      %v1214 = vsel %vm1183, %v1212, %v1213
      %v1215 = vrot.slane %v993, 1
      %v1216 = vsel %vm1183, %v1213, %v1215
      %v1217 = vrot.slane %v994, 1
      %v1218 = vsel %vm1183, %v1215, %v1217
      %v1219 = vrot.slane %v995, 1
      %v1220 = vrot.slane %v996, 1
      %v1221 = vsel %vm1183, %v1219, %v1220
      %v1222 = vrot.slane %v997, 1
      %v1223 = vsel %vm1183, %v1220, %v1222
      %v1224 = vrot.slane %v998, 1
      %v1225 = vsel %vm1183, %v1222, %v1224
      %v1226 = vrot.slane %v999, 1
      %v1227 = vrot.slane %v1000, 1
      %v1228 = vsel %vm1183, %v1226, %v1227
      %v1229 = vrot.slane %v1001, 1
      %v1230 = vsel %vm1183, %v1227, %v1229
      %v1231 = vrot.slane %v1002, 1
      %v1232 = vsel %vm1183, %v1229, %v1231
      %v1233 = vrot.slane %v1003, 1
      %v1234 = vrot.slane %v1004, 1
      %v1235 = vsel %vm1183, %v1233, %v1234
      %v1236 = vrot.slane %v1005, 1
      %v1237 = vsel %vm1183, %v1234, %v1236
      %v1238 = vrot.slane %v1006, 1
      %v1239 = vsel %vm1183, %v1236, %v1238
      %v1240 = vrot.slane %v1007, 1
      %v1241 = vrot.slane %v1008, 1
      %v1242 = vsel %vm1183, %v1240, %v1241
      %v1243 = vrot.slane %v1009, 1
      %v1244 = vsel %vm1183, %v1241, %v1243
      %v1245 = vrot.slane %v1010, 1
      %v1246 = vsel %vm1183, %v1243, %v1245
      %v1247 = vrot.slane %v1011, 1
      %v1248 = vrot.slane %v1012, 1
      %v1249 = vsel %vm1183, %v1247, %v1248
      %v1250 = vrot.slane %v1013, 1
      %v1251 = vsel %vm1183, %v1248, %v1250
      %v1252 = vrot.slane %v1014, 1
      %v1253 = vsel %vm1183, %v1250, %v1252
      %v1254 = vrot.slane %v1015, 1
      %v1255 = vrot.slane %v1016, 1
      %v1256 = vsel %vm1183, %v1254, %v1255
      %v1257 = vrot.slane %v1017, 1
      %v1258 = vsel %vm1183, %v1255, %v1257
      %v1259 = vrot.slane %v1018, 1
      %v1260 = vsel %vm1183, %v1257, %v1259
      %v1261 = vrot.slane %v1019, 1
      %v1262 = vrot.slane %v1020, 1
      %v1263 = vsel %vm1183, %v1261, %v1262
      %v1264 = vrot.slane %v1021, 1
      %v1265 = vsel %vm1183, %v1262, %v1264
      %v1266 = vrot.slane %v1022, 1
      %v1267 = vsel %vm1183, %v1264, %v1266
      %v1268 = vrot.slane %v1023, 1
      %v1269 = vrot.slane %v1024, 1
      %v1270 = vsel %vm1183, %v1268, %v1269
      %v1271 = vrot.slane %v1025, 1
      %v1272 = vsel %vm1183, %v1269, %v1271
      %v1273 = vrot.slane %v1026, 1
      %v1274 = vsel %vm1183, %v1271, %v1273
      %v1275 = vrot.slane %v1027, 1
      %v1276 = vrot.slane %v1028, 1
      %v1277 = vsel %vm1183, %v1275, %v1276
      %v1278 = vrot.slane %v1029, 1
      %v1279 = vsel %vm1183, %v1276, %v1278
      %v1280 = vrot.slane %v1030, 1
      %v1281 = vsel %vm1183, %v1278, %v1280
      %v1282 = vrot.slane %v1031, 1
      %v1283 = vrot.slane %v1032, 1
      %v1284 = vsel %vm1183, %v1282, %v1283
      %v1285 = vrot.slane %v1033, 1
      %v1286 = vsel %vm1183, %v1283, %v1285
      %v1287 = vrot.slane %v1034, 1
      %v1288 = vsel %vm1183, %v1285, %v1287
      %v1289 = vrot.slane %v1035, 1
      %v1290 = vrot.slane %v1036, 1
      %v1291 = vsel %vm1183, %v1289, %v1290
      %v1292 = vrot.slane %v1037, 1
      %v1293 = vsel %vm1183, %v1290, %v1292
      %v1294 = vrot.slane %v1038, 1
      %v1295 = vsel %vm1183, %v1292, %v1294
      %v1296 = vrot.slane %v1039, 1
      %v1297 = vrot.slane %v1040, 1
      %v1298 = vsel %vm1183, %v1296, %v1297
      %v1299 = vrot.slane %v1041, 1
      %v1300 = vsel %vm1183, %v1297, %v1299
      %v1301 = vrot.slane %v1042, 1
      %v1302 = vsel %vm1183, %v1299, %v1301
      %v1303 = vrot.slane %v1043, 1
      %v1304 = vrot.slane %v1044, 1
      %v1305 = vsel %vm1183, %v1303, %v1304
      %v1306 = vrot.slane %v1045, 1
      %v1307 = vsel %vm1183, %v1304, %v1306
      %v1308 = vrot.slane %v1046, 1
      %v1309 = vsel %vm1183, %v1306, %v1308
      %v1310 = vrot.slane %v1047, 1
      %v1311 = vrot.slane %v1048, 1
      %v1312 = vsel %vm1183, %v1310, %v1311
      %v1313 = vrot.slane %v1049, 1
      %v1314 = vsel %vm1183, %v1311, %v1313
      %v1315 = vrot.slane %v1050, 1
      %v1316 = vsel %vm1183, %v1313, %v1315
      %v1317 = vrot.slane %v1051, 1
      %v1318 = vrot.slane %v1052, 1
      %v1319 = vsel %vm1183, %v1317, %v1318
      %v1320 = vrot.slane %v1053, 1
      %v1321 = vsel %vm1183, %v1318, %v1320
      %v1322 = vrot.slane %v1054, 1
      %v1323 = vsel %vm1183, %v1320, %v1322
      %v1324 = vrot.slane %v1055, 1
      %v1325 = vrot.slane %v1056, 1
      %v1326 = vsel %vm1183, %v1324, %v1325
      %v1327 = vrot.slane %v1057, 1
      %v1328 = vsel %vm1183, %v1325, %v1327
      %v1329 = vrot.slane %v1058, 1
      %v1330 = vsel %vm1183, %v1327, %v1329
      %v1331 = vrot.slane %v1059, 1
      %v1332 = vrot.slane %v1060, 1
      %v1333 = vsel %vm1183, %v1331, %v1332
      %v1334 = vrot.slane %v1061, 1
      %v1335 = vsel %vm1183, %v1332, %v1334
      %v1336 = vrot.slane %v1062, 1
      %v1337 = vsel %vm1183, %v1334, %v1336
      %v1338 = vrot.slane %v1063, 1
      %v1339 = vrot.slane %v1064, 1
      %v1340 = vsel %vm1183, %v1338, %v1339
      %v1341 = vrot.slane %v1065, 1
      %v1342 = vsel %vm1183, %v1339, %v1341
      %v1343 = vrot.slane %v1066, 1
      %v1344 = vsel %vm1183, %v1341, %v1343
      %v1345 = vrot.slane %v1067, 1
      %v1346 = vrot.slane %v1068, 1
      %v1347 = vsel %vm1183, %v1345, %v1346
      %v1348 = vrot.slane %v1069, 1
      %v1349 = vsel %vm1183, %v1346, %v1348
      %v1350 = vrot.slane %v1070, 1
      %v1351 = vsel %vm1183, %v1348, %v1350
      %v1352 = vrot.slane %v1071, 1
      %v1353 = vrot.slane %v1072, 1
      %v1354 = vsel %vm1183, %v1352, %v1353
      %v1355 = vrot.slane %v1073, 1
      %v1356 = vsel %vm1183, %v1353, %v1355
      %v1357 = vrot.slane %v1074, 1
      %v1358 = vsel %vm1183, %v1355, %v1357
      %v1359 = vrot.slane %v1075, 1
      %v1360 = vrot.slane %v1076, 1
      %v1361 = vsel %vm1183, %v1359, %v1360
      %v1362 = vrot.slane %v1077, 1
      %v1363 = vsel %vm1183, %v1360, %v1362
      %v1364 = vrot.slane %v1078, 1
      %v1365 = vsel %vm1183, %v1362, %v1364
      %v1470 = vadd.f32 %v866, %v1186
      %v1471 = vadd.f32 %v867, %v1188
      %v1472 = vadd.f32 %v868, %v1190
      %v1473 = vadd.f32 %v869, %v1189
      %v1474 = vadd.f32 %v870, %v1193
      %v1475 = vadd.f32 %v871, %v1195
      %v1476 = vadd.f32 %v872, %v1197
      %v1477 = vadd.f32 %v873, %v1196
      %v1478 = vadd.f32 %v874, %v1200
      %v1479 = vadd.f32 %v875, %v1202
      %v1480 = vadd.f32 %v876, %v1204
      %v1481 = vadd.f32 %v877, %v1203
      %v1482 = vadd.f32 %v878, %v1207
      %v1483 = vadd.f32 %v879, %v1209
      %v1484 = vadd.f32 %v880, %v1211
      %v1485 = vadd.f32 %v881, %v1210
      %v1486 = vadd.f32 %v882, %v1214
      %v1487 = vadd.f32 %v883, %v1216
      %v1488 = vadd.f32 %v884, %v1218
      %v1489 = vadd.f32 %v885, %v1217
      %v1490 = vadd.f32 %v886, %v1221
      %v1491 = vadd.f32 %v887, %v1223
      %v1492 = vadd.f32 %v888, %v1225
      %v1493 = vadd.f32 %v889, %v1224
      %v1494 = vadd.f32 %v890, %v1228
      %v1495 = vadd.f32 %v891, %v1230
      %v1496 = vadd.f32 %v892, %v1232
      %v1497 = vadd.f32 %v893, %v1231
      %v1498 = vadd.f32 %v894, %v1235
      %v1499 = vadd.f32 %v895, %v1237
      %v1500 = vadd.f32 %v896, %v1239
      %v1501 = vadd.f32 %v897, %v1238
      %v1502 = vadd.f32 %v898, %v1242
      %v1503 = vadd.f32 %v899, %v1244
      %v1504 = vadd.f32 %v900, %v1246
      %v1505 = vadd.f32 %v901, %v1245
      %v1506 = vadd.f32 %v902, %v1249
      %v1507 = vadd.f32 %v903, %v1251
      %v1508 = vadd.f32 %v904, %v1253
      %v1509 = vadd.f32 %v905, %v1252
      %v1510 = vadd.f32 %v906, %v1256
      %v1511 = vadd.f32 %v907, %v1258
      %v1512 = vadd.f32 %v908, %v1260
      %v1513 = vadd.f32 %v909, %v1259
      %v1514 = vadd.f32 %v910, %v1263
      %v1515 = vadd.f32 %v911, %v1265
      %v1516 = vadd.f32 %v912, %v1267
      %v1517 = vadd.f32 %v913, %v1266
      %v1518 = vadd.f32 %v914, %v1270
      %v1519 = vadd.f32 %v915, %v1272
      %v1520 = vadd.f32 %v916, %v1274
      %v1521 = vadd.f32 %v917, %v1273
      %v1522 = vadd.f32 %v918, %v1277
      %v1523 = vadd.f32 %v919, %v1279
      %v1524 = vadd.f32 %v920, %v1281
      %v1525 = vadd.f32 %v921, %v1280
      %v1526 = vadd.f32 %v922, %v1284
      %v1527 = vadd.f32 %v923, %v1286
      %v1528 = vadd.f32 %v924, %v1288
      %v1529 = vadd.f32 %v925, %v1287
      %v1530 = vadd.f32 %v926, %v1291
      %v1531 = vadd.f32 %v927, %v1293
      %v1532 = vadd.f32 %v928, %v1295
      %v1533 = vadd.f32 %v929, %v1294
      %v1534 = vadd.f32 %v930, %v1298
      %v1535 = vadd.f32 %v931, %v1300
      %v1536 = vadd.f32 %v932, %v1302
      %v1537 = vadd.f32 %v933, %v1301
      %v1538 = vadd.f32 %v934, %v1305
      %v1539 = vadd.f32 %v935, %v1307
      %v1540 = vadd.f32 %v936, %v1309
      %v1541 = vadd.f32 %v937, %v1308
      %v1542 = vadd.f32 %v938, %v1312
      %v1543 = vadd.f32 %v939, %v1314
      %v1544 = vadd.f32 %v940, %v1316
      %v1545 = vadd.f32 %v941, %v1315
      %v1546 = vadd.f32 %v942, %v1319
      %v1547 = vadd.f32 %v943, %v1321
      %v1548 = vadd.f32 %v944, %v1323
      %v1549 = vadd.f32 %v945, %v1322
      %v1550 = vadd.f32 %v946, %v1326
      %v1551 = vadd.f32 %v947, %v1328
      %v1552 = vadd.f32 %v948, %v1330
      %v1553 = vadd.f32 %v949, %v1329
      %v1554 = vadd.f32 %v950, %v1333
      %v1555 = vadd.f32 %v951, %v1335
      %v1556 = vadd.f32 %v952, %v1337
      %v1557 = vadd.f32 %v953, %v1336
      %v1558 = vadd.f32 %v954, %v1340
      %v1559 = vadd.f32 %v955, %v1342
      %v1560 = vadd.f32 %v956, %v1344
      %v1561 = vadd.f32 %v957, %v1343
      %v1562 = vadd.f32 %v958, %v1347
      %v1563 = vadd.f32 %v959, %v1349
      %v1564 = vadd.f32 %v960, %v1351
      %v1565 = vadd.f32 %v961, %v1350
      %v1566 = vadd.f32 %v962, %v1354
      %v1567 = vadd.f32 %v963, %v1356
      %v1568 = vadd.f32 %v964, %v1358
      %v1569 = vadd.f32 %v965, %v1357
      %v1570 = vadd.f32 %v966, %v1361
      %v1571 = vadd.f32 %v967, %v1363
      %v1572 = vadd.f32 %v968, %v1365
      %v1573 = vadd.f32 %v969, %v1364
      %v1574 = vld [vmem:[%s1 + $0x2] sm:$0x1]
      %v1575 = vlaneseq
      %v1576 = vshrl.u32 %v1575, 7
      %v1577 = vsub.s32 0, %v1576
      %v1578 = vrot.slane %v1574, %v1577
      %v1579 = vmul.f32 %v345, %v1578
      %v1580 = vmul.f32 %v350, %v1578
      %v1581 = vmul.f32 %v355, %v1578
      %v1582 = vmul.f32 %v360, %v1578
      %v1583 = vmul.f32 %v365, %v1578
      %v1584 = vmul.f32 %v370, %v1578
      %v1585 = vmul.f32 %v375, %v1578
      %v1586 = vmul.f32 %v380, %v1578
      %v1587 = vmul.f32 %v385, %v1578
      %v1588 = vmul.f32 %v390, %v1578
      %v1589 = vmul.f32 %v395, %v1578
      %v1590 = vmul.f32 %v400, %v1578
      %v1591 = vmul.f32 %v405, %v1578
      %v1592 = vmul.f32 %v410, %v1578
      %v1593 = vmul.f32 %v415, %v1578
      %v1594 = vmul.f32 %v420, %v1578
      %v1595 = vmul.f32 %v425, %v1578
      %v1596 = vmul.f32 %v430, %v1578
      %v1597 = vmul.f32 %v435, %v1578
      %v1598 = vmul.f32 %v440, %v1578
      %v1599 = vmul.f32 %v445, %v1578
      %v1600 = vmul.f32 %v450, %v1578
      %v1601 = vmul.f32 %v455, %v1578
      %v1602 = vmul.f32 %v460, %v1578
      %v1603 = vmul.f32 %v465, %v1578
      %v1604 = vmul.f32 %v470, %v1578
      %v1605 = vmul.f32 %v475, %v1578
      %v1606 = vmul.f32 %v480, %v1578
      %v1607 = vmul.f32 %v485, %v1578
      %v1608 = vmul.f32 %v490, %v1578
      %v1609 = vmul.f32 %v495, %v1578
      %v1610 = vmul.f32 %v500, %v1578
      %v1611 = vmul.f32 %v505, %v1578
      %v1612 = vmul.f32 %v510, %v1578
      %v1613 = vmul.f32 %v515, %v1578
      %v1614 = vmul.f32 %v520, %v1578
      %v1615 = vmul.f32 %v525, %v1578
      %v1616 = vmul.f32 %v530, %v1578
      %v1617 = vmul.f32 %v535, %v1578
      %v1618 = vmul.f32 %v540, %v1578
      %v1619 = vmul.f32 %v545, %v1578
      %v1620 = vmul.f32 %v550, %v1578
      %v1621 = vmul.f32 %v555, %v1578
      %v1622 = vmul.f32 %v560, %v1578
      %v1623 = vmul.f32 %v565, %v1578
      %v1624 = vmul.f32 %v570, %v1578
      %v1625 = vmul.f32 %v575, %v1578
      %v1626 = vmul.f32 %v580, %v1578
      %v1627 = vmul.f32 %v585, %v1578
      %v1628 = vmul.f32 %v590, %v1578
      %v1629 = vmul.f32 %v595, %v1578
      %v1630 = vmul.f32 %v600, %v1578
      %v1631 = vmul.f32 %v605, %v1578
      %v1632 = vmul.f32 %v610, %v1578
      %v1633 = vmul.f32 %v615, %v1578
      %v1634 = vmul.f32 %v620, %v1578
      %v1635 = vmul.f32 %v625, %v1578
      %v1636 = vmul.f32 %v630, %v1578
      %v1637 = vmul.f32 %v635, %v1578
      %v1638 = vmul.f32 %v640, %v1578
      %v1639 = vmul.f32 %v645, %v1578
      %v1640 = vmul.f32 %v650, %v1578
      %v1641 = vmul.f32 %v655, %v1578
      %v1642 = vmul.f32 %v660, %v1578
      %v1643 = vmul.f32 %v665, %v1578
      %v1644 = vmul.f32 %v670, %v1578
      %v1645 = vmul.f32 %v675, %v1578
      %v1646 = vmul.f32 %v680, %v1578
      %v1647 = vmul.f32 %v685, %v1578
      %v1648 = vmul.f32 %v690, %v1578
      %v1649 = vmul.f32 %v695, %v1578
      %v1650 = vmul.f32 %v700, %v1578
      %v1651 = vmul.f32 %v705, %v1578
      %v1652 = vmul.f32 %v710, %v1578
      %v1653 = vmul.f32 %v715, %v1578
      %v1654 = vmul.f32 %v720, %v1578
      %v1655 = vmul.f32 %v725, %v1578
      %v1656 = vmul.f32 %v730, %v1578
      %v1657 = vmul.f32 %v735, %v1578
      %v1658 = vmul.f32 %v740, %v1578
      %v1659 = vmul.f32 %v745, %v1578
      %v1660 = vmul.f32 %v750, %v1578
      %v1661 = vmul.f32 %v755, %v1578
      %v1662 = vmul.f32 %v760, %v1578
      %v1663 = vmul.f32 %v765, %v1578
      %v1664 = vmul.f32 %v770, %v1578
      %v1665 = vmul.f32 %v775, %v1578
      %v1666 = vmul.f32 %v780, %v1578
      %v1667 = vmul.f32 %v785, %v1578
      %v1668 = vmul.f32 %v790, %v1578
      %v1669 = vmul.f32 %v795, %v1578
      %v1670 = vmul.f32 %v800, %v1578
      %v1671 = vmul.f32 %v805, %v1578
      %v1672 = vmul.f32 %v810, %v1578
      %v1673 = vmul.f32 %v815, %v1578
      %v1674 = vmul.f32 %v820, %v1578
      %v1675 = vmul.f32 %v825, %v1578
      %v1676 = vmul.f32 %v830, %v1578
      %v1677 = vmul.f32 %v835, %v1578
      %v1678 = vmul.f32 %v840, %v1578
      %v1679 = vmul.f32 %v845, %v1578
      %v1680 = vmul.f32 %v850, %v1578
      %v1681 = vmul.f32 %v855, %v1578
      %v1682 = vmul.f32 %v860, %v1578
      %vm1787 = vcmask 1045504
      %v1788 = vrot.slane %v1579, 2
      %v1789 = vrot.slane %v1580, 2
      %v1790 = vsel %vm1787, %v1788, %v1789
      %v1791 = vrot.slane %v1581, 2
      %v1792 = vsel %vm1787, %v1789, %v1791
      %v1793 = vrot.slane %v1582, 2
      %v1794 = vsel %vm1787, %v1791, %v1793
      %v1795 = vrot.slane %v1583, 2
      %v1796 = vrot.slane %v1584, 2
      %v1797 = vsel %vm1787, %v1795, %v1796
      %v1798 = vrot.slane %v1585, 2
      %v1799 = vsel %vm1787, %v1796, %v1798
      %v1800 = vrot.slane %v1586, 2
      %v1801 = vsel %vm1787, %v1798, %v1800
      %v1802 = vrot.slane %v1587, 2
      %v1803 = vrot.slane %v1588, 2
      %v1804 = vsel %vm1787, %v1802, %v1803
      %v1805 = vrot.slane %v1589, 2
      %v1806 = vsel %vm1787, %v1803, %v1805
      %v1807 = vrot.slane %v1590, 2
      %v1808 = vsel %vm1787, %v1805, %v1807
      %v1809 = vrot.slane %v1591, 2
      %v1810 = vrot.slane %v1592, 2
      %v1811 = vsel %vm1787, %v1809, %v1810
      %v1812 = vrot.slane %v1593, 2
      %v1813 = vsel %vm1787, %v1810, %v1812
      %v1814 = vrot.slane %v1594, 2
      %v1815 = vsel %vm1787, %v1812, %v1814
      %v1816 = vrot.slane %v1595, 2
      %v1817 = vrot.slane %v1596, 2
      %v1818 = vsel %vm1787, %v1816, %v1817
      %v1819 = vrot.slane %v1597, 2
      %v1820 = vsel %vm1787, %v1817, %v1819
      %v1821 = vrot.slane %v1598, 2
      %v1822 = vsel %vm1787, %v1819, %v1821
      %v1823 = vrot.slane %v1599, 2
      %v1824 = vrot.slane %v1600, 2
      %v1825 = vsel %vm1787, %v1823, %v1824
      %v1826 = vrot.slane %v1601, 2
      %v1827 = vsel %vm1787, %v1824, %v1826
      %v1828 = vrot.slane %v1602, 2
      %v1829 = vsel %vm1787, %v1826, %v1828
      %v1830 = vrot.slane %v1603, 2
      %v1831 = vrot.slane %v1604, 2
      %v1832 = vsel %vm1787, %v1830, %v1831
      %v1833 = vrot.slane %v1605, 2
      %v1834 = vsel %vm1787, %v1831, %v1833
      %v1835 = vrot.slane %v1606, 2
      %v1836 = vsel %vm1787, %v1833, %v1835
      %v1837 = vrot.slane %v1607, 2
      %v1838 = vrot.slane %v1608, 2
      %v1839 = vsel %vm1787, %v1837, %v1838
      %v1840 = vrot.slane %v1609, 2
      %v1841 = vsel %vm1787, %v1838, %v1840
      %v1842 = vrot.slane %v1610, 2
      %v1843 = vsel %vm1787, %v1840, %v1842
      %v1844 = vrot.slane %v1611, 2
      %v1845 = vrot.slane %v1612, 2
      %v1846 = vsel %vm1787, %v1844, %v1845
      %v1847 = vrot.slane %v1613, 2
      %v1848 = vsel %vm1787, %v1845, %v1847
      %v1849 = vrot.slane %v1614, 2
      %v1850 = vsel %vm1787, %v1847, %v1849
      %v1851 = vrot.slane %v1615, 2
      %v1852 = vrot.slane %v1616, 2
      %v1853 = vsel %vm1787, %v1851, %v1852
      %v1854 = vrot.slane %v1617, 2
      %v1855 = vsel %vm1787, %v1852, %v1854
      %v1856 = vrot.slane %v1618, 2
      %v1857 = vsel %vm1787, %v1854, %v1856
      %v1858 = vrot.slane %v1619, 2
      %v1859 = vrot.slane %v1620, 2
      %v1860 = vsel %vm1787, %v1858, %v1859
      %v1861 = vrot.slane %v1621, 2
      %v1862 = vsel %vm1787, %v1859, %v1861
      %v1863 = vrot.slane %v1622, 2
      %v1864 = vsel %vm1787, %v1861, %v1863
      %v1865 = vrot.slane %v1623, 2
      %v1866 = vrot.slane %v1624, 2
      %v1867 = vsel %vm1787, %v1865, %v1866
      %v1868 = vrot.slane %v1625, 2
      %v1869 = vsel %vm1787, %v1866, %v1868
      %v1870 = vrot.slane %v1626, 2
      %v1871 = vsel %vm1787, %v1868, %v1870
      %v1872 = vrot.slane %v1627, 2
      %v1873 = vrot.slane %v1628, 2
      %v1874 = vsel %vm1787, %v1872, %v1873
      %v1875 = vrot.slane %v1629, 2
      %v1876 = vsel %vm1787, %v1873, %v1875
      %v1877 = vrot.slane %v1630, 2
      %v1878 = vsel %vm1787, %v1875, %v1877
      %v1879 = vrot.slane %v1631, 2
      %v1880 = vrot.slane %v1632, 2
      %v1881 = vsel %vm1787, %v1879, %v1880
      %v1882 = vrot.slane %v1633, 2
      %v1883 = vsel %vm1787, %v1880, %v1882
      %v1884 = vrot.slane %v1634, 2
      %v1885 = vsel %vm1787, %v1882, %v1884
      %v1886 = vrot.slane %v1635, 2
      %v1887 = vrot.slane %v1636, 2
      %v1888 = vsel %vm1787, %v1886, %v1887
      %v1889 = vrot.slane %v1637, 2
      %v1890 = vsel %vm1787, %v1887, %v1889
      %v1891 = vrot.slane %v1638, 2
      %v1892 = vsel %vm1787, %v1889, %v1891
      %v1893 = vrot.slane %v1639, 2
      %v1894 = vrot.slane %v1640, 2
      %v1895 = vsel %vm1787, %v1893, %v1894
      %v1896 = vrot.slane %v1641, 2
      %v1897 = vsel %vm1787, %v1894, %v1896
      %v1898 = vrot.slane %v1642, 2
      %v1899 = vsel %vm1787, %v1896, %v1898
      %v1900 = vrot.slane %v1643, 2
      %v1901 = vrot.slane %v1644, 2
      %v1902 = vsel %vm1787, %v1900, %v1901
      %v1903 = vrot.slane %v1645, 2
      %v1904 = vsel %vm1787, %v1901, %v1903
      %v1905 = vrot.slane %v1646, 2
      %v1906 = vsel %vm1787, %v1903, %v1905
      %v1907 = vrot.slane %v1647, 2
      %v1908 = vrot.slane %v1648, 2
      %v1909 = vsel %vm1787, %v1907, %v1908
      %v1910 = vrot.slane %v1649, 2
      %v1911 = vsel %vm1787, %v1908, %v1910
      %v1912 = vrot.slane %v1650, 2
      %v1913 = vsel %vm1787, %v1910, %v1912
      %v1914 = vrot.slane %v1651, 2
      %v1915 = vrot.slane %v1652, 2
      %v1916 = vsel %vm1787, %v1914, %v1915
      %v1917 = vrot.slane %v1653, 2
      %v1918 = vsel %vm1787, %v1915, %v1917
      %v1919 = vrot.slane %v1654, 2
      %v1920 = vsel %vm1787, %v1917, %v1919
      %v1921 = vrot.slane %v1655, 2
      %v1922 = vrot.slane %v1656, 2
      %v1923 = vsel %vm1787, %v1921, %v1922
      %v1924 = vrot.slane %v1657, 2
      %v1925 = vsel %vm1787, %v1922, %v1924
      %v1926 = vrot.slane %v1658, 2
      %v1927 = vsel %vm1787, %v1924, %v1926
      %v1928 = vrot.slane %v1659, 2
      %v1929 = vrot.slane %v1660, 2
      %v1930 = vsel %vm1787, %v1928, %v1929
      %v1931 = vrot.slane %v1661, 2
      %v1932 = vsel %vm1787, %v1929, %v1931
      %v1933 = vrot.slane %v1662, 2
      %v1934 = vsel %vm1787, %v1931, %v1933
      %v1935 = vrot.slane %v1663, 2
      %v1936 = vrot.slane %v1664, 2
      %v1937 = vsel %vm1787, %v1935, %v1936
      %v1938 = vrot.slane %v1665, 2
      %v1939 = vsel %vm1787, %v1936, %v1938
      %v1940 = vrot.slane %v1666, 2
      %v1941 = vsel %vm1787, %v1938, %v1940
      %v1942 = vrot.slane %v1667, 2
      %v1943 = vrot.slane %v1668, 2
      %v1944 = vsel %vm1787, %v1942, %v1943
      %v1945 = vrot.slane %v1669, 2
      %v1946 = vsel %vm1787, %v1943, %v1945
      %v1947 = vrot.slane %v1670, 2
      %v1948 = vsel %vm1787, %v1945, %v1947
      %v1949 = vrot.slane %v1671, 2
      %v1950 = vrot.slane %v1672, 2
      %v1951 = vsel %vm1787, %v1949, %v1950
      %v1952 = vrot.slane %v1673, 2
      %v1953 = vsel %vm1787, %v1950, %v1952
      %v1954 = vrot.slane %v1674, 2
      %v1955 = vsel %vm1787, %v1952, %v1954
      %v1956 = vrot.slane %v1675, 2
      %v1957 = vrot.slane %v1676, 2
      %v1958 = vsel %vm1787, %v1956, %v1957
      %v1959 = vrot.slane %v1677, 2
      %v1960 = vsel %vm1787, %v1957, %v1959
      %v1961 = vrot.slane %v1678, 2
      %v1962 = vsel %vm1787, %v1959, %v1961
      %v1963 = vrot.slane %v1679, 2
      %v1964 = vrot.slane %v1680, 2
      %v1965 = vsel %vm1787, %v1963, %v1964
      %v1966 = vrot.slane %v1681, 2
      %v1967 = vsel %vm1787, %v1964, %v1966
      %v1968 = vrot.slane %v1682, 2
      %v1969 = vsel %vm1787, %v1966, %v1968
      %v2074 = vadd.f32 %v1470, %v1790
      %v2075 = vadd.f32 %v1471, %v1792
      %v2076 = vadd.f32 %v1472, %v1794
      %v2077 = vadd.f32 %v1473, %v1793
      %v2078 = vadd.f32 %v1474, %v1797
      %v2079 = vadd.f32 %v1475, %v1799
      %v2080 = vadd.f32 %v1476, %v1801
      %v2081 = vadd.f32 %v1477, %v1800
      %v2082 = vadd.f32 %v1478, %v1804
      %v2083 = vadd.f32 %v1479, %v1806
      %v2084 = vadd.f32 %v1480, %v1808
      %v2085 = vadd.f32 %v1481, %v1807
      %v2086 = vadd.f32 %v1482, %v1811
      %v2087 = vadd.f32 %v1483, %v1813
      %v2088 = vadd.f32 %v1484, %v1815
      %v2089 = vadd.f32 %v1485, %v1814
      %v2090 = vadd.f32 %v1486, %v1818
      %v2091 = vadd.f32 %v1487, %v1820
      %v2092 = vadd.f32 %v1488, %v1822
      %v2093 = vadd.f32 %v1489, %v1821
      %v2094 = vadd.f32 %v1490, %v1825
      %v2095 = vadd.f32 %v1491, %v1827
      %v2096 = vadd.f32 %v1492, %v1829
      %v2097 = vadd.f32 %v1493, %v1828
      %v2098 = vadd.f32 %v1494, %v1832
      %v2099 = vadd.f32 %v1495, %v1834
      %v2100 = vadd.f32 %v1496, %v1836
      %v2101 = vadd.f32 %v1497, %v1835
      %v2102 = vadd.f32 %v1498, %v1839
      %v2103 = vadd.f32 %v1499, %v1841
      %v2104 = vadd.f32 %v1500, %v1843
      %v2105 = vadd.f32 %v1501, %v1842
      %v2106 = vadd.f32 %v1502, %v1846
      %v2107 = vadd.f32 %v1503, %v1848
      %v2108 = vadd.f32 %v1504, %v1850
      %v2109 = vadd.f32 %v1505, %v1849
      %v2110 = vadd.f32 %v1506, %v1853
      %v2111 = vadd.f32 %v1507, %v1855
      %v2112 = vadd.f32 %v1508, %v1857
      %v2113 = vadd.f32 %v1509, %v1856
      %v2114 = vadd.f32 %v1510, %v1860
      %v2115 = vadd.f32 %v1511, %v1862
      %v2116 = vadd.f32 %v1512, %v1864
      %v2117 = vadd.f32 %v1513, %v1863
      %v2118 = vadd.f32 %v1514, %v1867
      %v2119 = vadd.f32 %v1515, %v1869
      %v2120 = vadd.f32 %v1516, %v1871
      %v2121 = vadd.f32 %v1517, %v1870
      %v2122 = vadd.f32 %v1518, %v1874
      %v2123 = vadd.f32 %v1519, %v1876
      %v2124 = vadd.f32 %v1520, %v1878
      %v2125 = vadd.f32 %v1521, %v1877
      %v2126 = vadd.f32 %v1522, %v1881
      %v2127 = vadd.f32 %v1523, %v1883
      %v2128 = vadd.f32 %v1524, %v1885
      %v2129 = vadd.f32 %v1525, %v1884
      %v2130 = vadd.f32 %v1526, %v1888
      %v2131 = vadd.f32 %v1527, %v1890
      %v2132 = vadd.f32 %v1528, %v1892
      %v2133 = vadd.f32 %v1529, %v1891
      %v2134 = vadd.f32 %v1530, %v1895
      %v2135 = vadd.f32 %v1531, %v1897
      %v2136 = vadd.f32 %v1532, %v1899
      %v2137 = vadd.f32 %v1533, %v1898
      %v2138 = vadd.f32 %v1534, %v1902
      %v2139 = vadd.f32 %v1535, %v1904
      %v2140 = vadd.f32 %v1536, %v1906
      %v2141 = vadd.f32 %v1537, %v1905
      %v2142 = vadd.f32 %v1538, %v1909
      %v2143 = vadd.f32 %v1539, %v1911
      %v2144 = vadd.f32 %v1540, %v1913
      %v2145 = vadd.f32 %v1541, %v1912
      %v2146 = vadd.f32 %v1542, %v1916
      %v2147 = vadd.f32 %v1543, %v1918
      %v2148 = vadd.f32 %v1544, %v1920
      %v2149 = vadd.f32 %v1545, %v1919
      %v2150 = vadd.f32 %v1546, %v1923
      %v2151 = vadd.f32 %v1547, %v1925
      %v2152 = vadd.f32 %v1548, %v1927
      %v2153 = vadd.f32 %v1549, %v1926
      %v2154 = vadd.f32 %v1550, %v1930
      %v2155 = vadd.f32 %v1551, %v1932
      %v2156 = vadd.f32 %v1552, %v1934
      %v2157 = vadd.f32 %v1553, %v1933
      %v2158 = vadd.f32 %v1554, %v1937
      %v2159 = vadd.f32 %v1555, %v1939
      %v2160 = vadd.f32 %v1556, %v1941
      %v2161 = vadd.f32 %v1557, %v1940
      %v2162 = vadd.f32 %v1558, %v1944
      %v2163 = vadd.f32 %v1559, %v1946
      %v2164 = vadd.f32 %v1560, %v1948
      %v2165 = vadd.f32 %v1561, %v1947
      %v2166 = vadd.f32 %v1562, %v1951
      %v2167 = vadd.f32 %v1563, %v1953
      %v2168 = vadd.f32 %v1564, %v1955
      %v2169 = vadd.f32 %v1565, %v1954
      %v2170 = vadd.f32 %v1566, %v1958
      %v2171 = vadd.f32 %v1567, %v1960
      %v2172 = vadd.f32 %v1568, %v1962
      %v2173 = vadd.f32 %v1569, %v1961
      %v2174 = vadd.f32 %v1570, %v1965
      %v2175 = vadd.f32 %v1571, %v1967
      %v2176 = vadd.f32 %v1572, %v1969
      %v2177 = vadd.f32 %v1573, %v1968
      %s2178 = scalar_lea.vmem %s1, 4
      %v2179 = vld [vmem:[%s2178] sm:$0x1]
      %2181 = vset.pattern.permute.xlu0 0
      %2182 = vperm.xlu0 %2181, %v333
      %v2183 = vpop.permute.xlu0 %2182
      %2186 = vset.pattern.permute.xlu0 0
      %2187 = vperm.xlu0 %2186, %v334
      %v2188 = vpop.permute.xlu0 %2187
      %2191 = vset.pattern.permute.xlu0 0
      %2192 = vperm.xlu0 %2191, %v335
      %v2193 = vpop.permute.xlu0 %2192
      %2196 = vset.pattern.permute.xlu0 0
      %2197 = vperm.xlu0 %2196, %v336
      %v2198 = vpop.permute.xlu0 %2197
      %v2200 = vlaneseq
      %v2201 = vshrl.u32 %v2200, 7
      %v2202 = vsub.s32 0, %v2201
      %v2203 = vrot.slane %v2179, %v2202
      %v2204 = vmul.f32 %v365, %v2203
      %v2205 = vmul.f32 %v370, %v2203
      %v2206 = vmul.f32 %v375, %v2203
      %v2207 = vmul.f32 %v380, %v2203
      %v2208 = vmul.f32 %v385, %v2203
      %v2209 = vmul.f32 %v390, %v2203
      %v2210 = vmul.f32 %v395, %v2203
      %v2211 = vmul.f32 %v400, %v2203
      %v2212 = vmul.f32 %v405, %v2203
      %v2213 = vmul.f32 %v410, %v2203
      %v2214 = vmul.f32 %v415, %v2203
      %v2215 = vmul.f32 %v420, %v2203
      %v2216 = vmul.f32 %v425, %v2203
      %v2217 = vmul.f32 %v430, %v2203
      %v2218 = vmul.f32 %v435, %v2203
      %v2219 = vmul.f32 %v440, %v2203
      %v2220 = vmul.f32 %v445, %v2203
      %v2221 = vmul.f32 %v450, %v2203
      %v2222 = vmul.f32 %v455, %v2203
      %v2223 = vmul.f32 %v460, %v2203
      %v2224 = vmul.f32 %v465, %v2203
      %v2225 = vmul.f32 %v470, %v2203
      %v2226 = vmul.f32 %v475, %v2203
      %v2227 = vmul.f32 %v480, %v2203
      %v2228 = vmul.f32 %v485, %v2203
      %v2229 = vmul.f32 %v490, %v2203
      %v2230 = vmul.f32 %v495, %v2203
      %v2231 = vmul.f32 %v500, %v2203
      %v2232 = vmul.f32 %v505, %v2203
      %v2233 = vmul.f32 %v510, %v2203
      %v2234 = vmul.f32 %v515, %v2203
      %v2235 = vmul.f32 %v520, %v2203
      %v2236 = vmul.f32 %v525, %v2203
      %v2237 = vmul.f32 %v530, %v2203
      %v2238 = vmul.f32 %v535, %v2203
      %v2239 = vmul.f32 %v540, %v2203
      %v2240 = vmul.f32 %v545, %v2203
      %v2241 = vmul.f32 %v550, %v2203
      %v2242 = vmul.f32 %v555, %v2203
      %v2243 = vmul.f32 %v560, %v2203
      %v2244 = vmul.f32 %v565, %v2203
      %v2245 = vmul.f32 %v570, %v2203
      %v2246 = vmul.f32 %v575, %v2203
      %v2247 = vmul.f32 %v580, %v2203
      %v2248 = vmul.f32 %v585, %v2203
      %v2249 = vmul.f32 %v590, %v2203
      %v2250 = vmul.f32 %v595, %v2203
      %v2251 = vmul.f32 %v600, %v2203
      %v2252 = vmul.f32 %v605, %v2203
      %v2253 = vmul.f32 %v610, %v2203
      %v2254 = vmul.f32 %v615, %v2203
      %v2255 = vmul.f32 %v620, %v2203
      %v2256 = vmul.f32 %v625, %v2203
      %v2257 = vmul.f32 %v630, %v2203
      %v2258 = vmul.f32 %v635, %v2203
      %v2259 = vmul.f32 %v640, %v2203
      %v2260 = vmul.f32 %v645, %v2203
      %v2261 = vmul.f32 %v650, %v2203
      %v2262 = vmul.f32 %v655, %v2203
      %v2263 = vmul.f32 %v660, %v2203
      %v2264 = vmul.f32 %v665, %v2203
      %v2265 = vmul.f32 %v670, %v2203
      %v2266 = vmul.f32 %v675, %v2203
      %v2267 = vmul.f32 %v680, %v2203
      %v2268 = vmul.f32 %v685, %v2203
      %v2269 = vmul.f32 %v690, %v2203
      %v2270 = vmul.f32 %v695, %v2203
      %v2271 = vmul.f32 %v700, %v2203
      %v2272 = vmul.f32 %v705, %v2203
      %v2273 = vmul.f32 %v710, %v2203
      %v2274 = vmul.f32 %v715, %v2203
      %v2275 = vmul.f32 %v720, %v2203
      %v2276 = vmul.f32 %v725, %v2203
      %v2277 = vmul.f32 %v730, %v2203
      %v2278 = vmul.f32 %v735, %v2203
      %v2279 = vmul.f32 %v740, %v2203
      %v2280 = vmul.f32 %v745, %v2203
      %v2281 = vmul.f32 %v750, %v2203
      %v2282 = vmul.f32 %v755, %v2203
      %v2283 = vmul.f32 %v760, %v2203
      %v2284 = vmul.f32 %v765, %v2203
      %v2285 = vmul.f32 %v770, %v2203
      %v2286 = vmul.f32 %v775, %v2203
      %v2287 = vmul.f32 %v780, %v2203
      %v2288 = vmul.f32 %v785, %v2203
      %v2289 = vmul.f32 %v790, %v2203
      %v2290 = vmul.f32 %v795, %v2203
      %v2291 = vmul.f32 %v800, %v2203
      %v2292 = vmul.f32 %v805, %v2203
      %v2293 = vmul.f32 %v810, %v2203
      %v2294 = vmul.f32 %v815, %v2203
      %v2295 = vmul.f32 %v820, %v2203
      %v2296 = vmul.f32 %v825, %v2203
      %v2297 = vmul.f32 %v830, %v2203
      %v2298 = vmul.f32 %v835, %v2203
      %v2299 = vmul.f32 %v840, %v2203
      %v2300 = vmul.f32 %v845, %v2203
      %v2301 = vmul.f32 %v850, %v2203
      %v2302 = vmul.f32 %v855, %v2203
      %v2303 = vmul.f32 %v860, %v2203
      %v2304 = vmul.f32 %v2183, %v2203
      %v2305 = vmul.f32 %v2188, %v2203
      %v2306 = vmul.f32 %v2193, %v2203
      %v2307 = vmul.f32 %v2198, %v2203
      %v2308 = vadd.f32 %v2074, %v2204
      %v2309 = vadd.f32 %v2075, %v2205
      %v2310 = vadd.f32 %v2076, %v2206
      %v2311 = vadd.f32 %v2077, %v2207
      %v2312 = vadd.f32 %v2078, %v2208
      %v2313 = vadd.f32 %v2079, %v2209
      %v2314 = vadd.f32 %v2080, %v2210
      %v2315 = vadd.f32 %v2081, %v2211
      %v2316 = vadd.f32 %v2082, %v2212
      %v2317 = vadd.f32 %v2083, %v2213
      %v2318 = vadd.f32 %v2084, %v2214
      %v2319 = vadd.f32 %v2085, %v2215
      %v2320 = vadd.f32 %v2086, %v2216
      %v2321 = vadd.f32 %v2087, %v2217
      %v2322 = vadd.f32 %v2088, %v2218
      %v2323 = vadd.f32 %v2089, %v2219
      %v2324 = vadd.f32 %v2090, %v2220
      %v2325 = vadd.f32 %v2091, %v2221
      %v2326 = vadd.f32 %v2092, %v2222
      %v2327 = vadd.f32 %v2093, %v2223
      %v2328 = vadd.f32 %v2094, %v2224
      %v2329 = vadd.f32 %v2095, %v2225
      %v2330 = vadd.f32 %v2096, %v2226
      %v2331 = vadd.f32 %v2097, %v2227
      %v2332 = vadd.f32 %v2098, %v2228
      %v2333 = vadd.f32 %v2099, %v2229
      %v2334 = vadd.f32 %v2100, %v2230
      %v2335 = vadd.f32 %v2101, %v2231
      %v2336 = vadd.f32 %v2102, %v2232
      %v2337 = vadd.f32 %v2103, %v2233
      %v2338 = vadd.f32 %v2104, %v2234
      %v2339 = vadd.f32 %v2105, %v2235
      %v2340 = vadd.f32 %v2106, %v2236
      %v2341 = vadd.f32 %v2107, %v2237
      %v2342 = vadd.f32 %v2108, %v2238
      %v2343 = vadd.f32 %v2109, %v2239
      %v2344 = vadd.f32 %v2110, %v2240
      %v2345 = vadd.f32 %v2111, %v2241
      %v2346 = vadd.f32 %v2112, %v2242
      %v2347 = vadd.f32 %v2113, %v2243
      %v2348 = vadd.f32 %v2114, %v2244
      %v2349 = vadd.f32 %v2115, %v2245
      %v2350 = vadd.f32 %v2116, %v2246
      %v2351 = vadd.f32 %v2117, %v2247
      %v2352 = vadd.f32 %v2118, %v2248
      %v2353 = vadd.f32 %v2119, %v2249
      %v2354 = vadd.f32 %v2120, %v2250
      %v2355 = vadd.f32 %v2121, %v2251
      %v2356 = vadd.f32 %v2122, %v2252
      %v2357 = vadd.f32 %v2123, %v2253
      %v2358 = vadd.f32 %v2124, %v2254
      %v2359 = vadd.f32 %v2125, %v2255
      %v2360 = vadd.f32 %v2126, %v2256
      %v2361 = vadd.f32 %v2127, %v2257
      %v2362 = vadd.f32 %v2128, %v2258
      %v2363 = vadd.f32 %v2129, %v2259
      %v2364 = vadd.f32 %v2130, %v2260
      %v2365 = vadd.f32 %v2131, %v2261
      %v2366 = vadd.f32 %v2132, %v2262
      %v2367 = vadd.f32 %v2133, %v2263
      %v2368 = vadd.f32 %v2134, %v2264
      %v2369 = vadd.f32 %v2135, %v2265
      %v2370 = vadd.f32 %v2136, %v2266
      %v2371 = vadd.f32 %v2137, %v2267
      %v2372 = vadd.f32 %v2138, %v2268
      %v2373 = vadd.f32 %v2139, %v2269
      %v2374 = vadd.f32 %v2140, %v2270
      %v2375 = vadd.f32 %v2141, %v2271
      %v2376 = vadd.f32 %v2142, %v2272
      %v2377 = vadd.f32 %v2143, %v2273
      %v2378 = vadd.f32 %v2144, %v2274
      %v2379 = vadd.f32 %v2145, %v2275
      %v2380 = vadd.f32 %v2146, %v2276
      %v2381 = vadd.f32 %v2147, %v2277
      %v2382 = vadd.f32 %v2148, %v2278
      %v2383 = vadd.f32 %v2149, %v2279
      %v2384 = vadd.f32 %v2150, %v2280
      %v2385 = vadd.f32 %v2151, %v2281
      %v2386 = vadd.f32 %v2152, %v2282
      %v2387 = vadd.f32 %v2153, %v2283
      %v2388 = vadd.f32 %v2154, %v2284
      %v2389 = vadd.f32 %v2155, %v2285
      %v2390 = vadd.f32 %v2156, %v2286
      %v2391 = vadd.f32 %v2157, %v2287
      %v2392 = vadd.f32 %v2158, %v2288
      %v2393 = vadd.f32 %v2159, %v2289
      %v2394 = vadd.f32 %v2160, %v2290
      %v2395 = vadd.f32 %v2161, %v2291
      %v2396 = vadd.f32 %v2162, %v2292
      %v2397 = vadd.f32 %v2163, %v2293
      %v2398 = vadd.f32 %v2164, %v2294
      %v2399 = vadd.f32 %v2165, %v2295
      %v2400 = vadd.f32 %v2166, %v2296
      %v2401 = vadd.f32 %v2167, %v2297
      %v2402 = vadd.f32 %v2168, %v2298
      %v2403 = vadd.f32 %v2169, %v2299
      %v2404 = vadd.f32 %v2170, %v2300
      %v2405 = vadd.f32 %v2171, %v2301
      %v2406 = vadd.f32 %v2172, %v2302
      %v2407 = vadd.f32 %v2173, %v2303
      %v2408 = vadd.f32 %v2174, %v2304
      %v2409 = vadd.f32 %v2175, %v2305
      %v2410 = vadd.f32 %v2176, %v2306
      %v2411 = vadd.f32 %v2177, %v2307
      %v2412 = vld [vmem:[%s2178 + $0x1] sm:$0x1]
      %v2413 = vlaneseq
      %v2414 = vshrl.u32 %v2413, 7
      %v2415 = vsub.s32 0, %v2414
      %v2416 = vrot.slane %v2412, %v2415
      %v2417 = vmul.f32 %v365, %v2416
      %v2418 = vmul.f32 %v370, %v2416
      %v2419 = vmul.f32 %v375, %v2416
      %v2420 = vmul.f32 %v380, %v2416
      %v2421 = vmul.f32 %v385, %v2416
      %v2422 = vmul.f32 %v390, %v2416
      %v2423 = vmul.f32 %v395, %v2416
      %v2424 = vmul.f32 %v400, %v2416
      %v2425 = vmul.f32 %v405, %v2416
      %v2426 = vmul.f32 %v410, %v2416
      %v2427 = vmul.f32 %v415, %v2416
      %v2428 = vmul.f32 %v420, %v2416
      %v2429 = vmul.f32 %v425, %v2416
      %v2430 = vmul.f32 %v430, %v2416
      %v2431 = vmul.f32 %v435, %v2416
      %v2432 = vmul.f32 %v440, %v2416
      %v2433 = vmul.f32 %v445, %v2416
      %v2434 = vmul.f32 %v450, %v2416
      %v2435 = vmul.f32 %v455, %v2416
      %v2436 = vmul.f32 %v460, %v2416
      %v2437 = vmul.f32 %v465, %v2416
      %v2438 = vmul.f32 %v470, %v2416
      %v2439 = vmul.f32 %v475, %v2416
      %v2440 = vmul.f32 %v480, %v2416
      %v2441 = vmul.f32 %v485, %v2416
      %v2442 = vmul.f32 %v490, %v2416
      %v2443 = vmul.f32 %v495, %v2416
      %v2444 = vmul.f32 %v500, %v2416
      %v2445 = vmul.f32 %v505, %v2416
      %v2446 = vmul.f32 %v510, %v2416
      %v2447 = vmul.f32 %v515, %v2416
      %v2448 = vmul.f32 %v520, %v2416
      %v2449 = vmul.f32 %v525, %v2416
      %v2450 = vmul.f32 %v530, %v2416
      %v2451 = vmul.f32 %v535, %v2416
      %v2452 = vmul.f32 %v540, %v2416
      %v2453 = vmul.f32 %v545, %v2416
      %v2454 = vmul.f32 %v550, %v2416
      %v2455 = vmul.f32 %v555, %v2416
      %v2456 = vmul.f32 %v560, %v2416
      %v2457 = vmul.f32 %v565, %v2416
      %v2458 = vmul.f32 %v570, %v2416
      %v2459 = vmul.f32 %v575, %v2416
      %v2460 = vmul.f32 %v580, %v2416
      %v2461 = vmul.f32 %v585, %v2416
      %v2462 = vmul.f32 %v590, %v2416
      %v2463 = vmul.f32 %v595, %v2416
      %v2464 = vmul.f32 %v600, %v2416
      %v2465 = vmul.f32 %v605, %v2416
      %v2466 = vmul.f32 %v610, %v2416
      %v2467 = vmul.f32 %v615, %v2416
      %v2468 = vmul.f32 %v620, %v2416
      %v2469 = vmul.f32 %v625, %v2416
      %v2470 = vmul.f32 %v630, %v2416
      %v2471 = vmul.f32 %v635, %v2416
      %v2472 = vmul.f32 %v640, %v2416
      %v2473 = vmul.f32 %v645, %v2416
      %v2474 = vmul.f32 %v650, %v2416
      %v2475 = vmul.f32 %v655, %v2416
      %v2476 = vmul.f32 %v660, %v2416
      %v2477 = vmul.f32 %v665, %v2416
      %v2478 = vmul.f32 %v670, %v2416
      %v2479 = vmul.f32 %v675, %v2416
      %v2480 = vmul.f32 %v680, %v2416
      %v2481 = vmul.f32 %v685, %v2416
      %v2482 = vmul.f32 %v690, %v2416
      %v2483 = vmul.f32 %v695, %v2416
      %v2484 = vmul.f32 %v700, %v2416
      %v2485 = vmul.f32 %v705, %v2416
      %v2486 = vmul.f32 %v710, %v2416
      %v2487 = vmul.f32 %v715, %v2416
      %v2488 = vmul.f32 %v720, %v2416
      %v2489 = vmul.f32 %v725, %v2416
      %v2490 = vmul.f32 %v730, %v2416
      %v2491 = vmul.f32 %v735, %v2416
      %v2492 = vmul.f32 %v740, %v2416
      %v2493 = vmul.f32 %v745, %v2416
      %v2494 = vmul.f32 %v750, %v2416
      %v2495 = vmul.f32 %v755, %v2416
      %v2496 = vmul.f32 %v760, %v2416
      %v2497 = vmul.f32 %v765, %v2416
      %v2498 = vmul.f32 %v770, %v2416
      %v2499 = vmul.f32 %v775, %v2416
      %v2500 = vmul.f32 %v780, %v2416
      %v2501 = vmul.f32 %v785, %v2416
      %v2502 = vmul.f32 %v790, %v2416
      %v2503 = vmul.f32 %v795, %v2416
      %v2504 = vmul.f32 %v800, %v2416
      %v2505 = vmul.f32 %v805, %v2416
      %v2506 = vmul.f32 %v810, %v2416
      %v2507 = vmul.f32 %v815, %v2416
      %v2508 = vmul.f32 %v820, %v2416
      %v2509 = vmul.f32 %v825, %v2416
      %v2510 = vmul.f32 %v830, %v2416
      %v2511 = vmul.f32 %v835, %v2416
      %v2512 = vmul.f32 %v840, %v2416
      %v2513 = vmul.f32 %v845, %v2416
      %v2514 = vmul.f32 %v850, %v2416
      %v2515 = vmul.f32 %v855, %v2416
      %v2516 = vmul.f32 %v860, %v2416
      %v2517 = vmul.f32 %v2183, %v2416
      %v2518 = vmul.f32 %v2188, %v2416
      %v2519 = vmul.f32 %v2193, %v2416
      %v2520 = vmul.f32 %v2198, %v2416
      %v2625 = vrot.slane %v2417, 1
      %v2626 = vrot.slane %v2418, 1
      %v2627 = vsel %vm1183, %v2625, %v2626
      %v2628 = vrot.slane %v2419, 1
      %v2629 = vsel %vm1183, %v2626, %v2628
      %v2630 = vrot.slane %v2420, 1
      %v2631 = vsel %vm1183, %v2628, %v2630
      %v2632 = vrot.slane %v2421, 1
      %v2633 = vrot.slane %v2422, 1
      %v2634 = vsel %vm1183, %v2632, %v2633
      %v2635 = vrot.slane %v2423, 1
      %v2636 = vsel %vm1183, %v2633, %v2635
      %v2637 = vrot.slane %v2424, 1
      %v2638 = vsel %vm1183, %v2635, %v2637
      %v2639 = vrot.slane %v2425, 1
      %v2640 = vrot.slane %v2426, 1
      %v2641 = vsel %vm1183, %v2639, %v2640
      %v2642 = vrot.slane %v2427, 1
      %v2643 = vsel %vm1183, %v2640, %v2642
      %v2644 = vrot.slane %v2428, 1
      %v2645 = vsel %vm1183, %v2642, %v2644
      %v2646 = vrot.slane %v2429, 1
      %v2647 = vrot.slane %v2430, 1
      %v2648 = vsel %vm1183, %v2646, %v2647
      %v2649 = vrot.slane %v2431, 1
      %v2650 = vsel %vm1183, %v2647, %v2649
      %v2651 = vrot.slane %v2432, 1
      %v2652 = vsel %vm1183, %v2649, %v2651
      %v2653 = vrot.slane %v2433, 1
      %v2654 = vrot.slane %v2434, 1
      %v2655 = vsel %vm1183, %v2653, %v2654
      %v2656 = vrot.slane %v2435, 1
      %v2657 = vsel %vm1183, %v2654, %v2656
      %v2658 = vrot.slane %v2436, 1
      %v2659 = vsel %vm1183, %v2656, %v2658
      %v2660 = vrot.slane %v2437, 1
      %v2661 = vrot.slane %v2438, 1
      %v2662 = vsel %vm1183, %v2660, %v2661
      %v2663 = vrot.slane %v2439, 1
      %v2664 = vsel %vm1183, %v2661, %v2663
      %v2665 = vrot.slane %v2440, 1
      %v2666 = vsel %vm1183, %v2663, %v2665
      %v2667 = vrot.slane %v2441, 1
      %v2668 = vrot.slane %v2442, 1
      %v2669 = vsel %vm1183, %v2667, %v2668
      %v2670 = vrot.slane %v2443, 1
      %v2671 = vsel %vm1183, %v2668, %v2670
      %v2672 = vrot.slane %v2444, 1
      %v2673 = vsel %vm1183, %v2670, %v2672
      %v2674 = vrot.slane %v2445, 1
      %v2675 = vrot.slane %v2446, 1
      %v2676 = vsel %vm1183, %v2674, %v2675
      %v2677 = vrot.slane %v2447, 1
      %v2678 = vsel %vm1183, %v2675, %v2677
      %v2679 = vrot.slane %v2448, 1
      %v2680 = vsel %vm1183, %v2677, %v2679
      %v2681 = vrot.slane %v2449, 1
      %v2682 = vrot.slane %v2450, 1
      %v2683 = vsel %vm1183, %v2681, %v2682
      %v2684 = vrot.slane %v2451, 1
      %v2685 = vsel %vm1183, %v2682, %v2684
      %v2686 = vrot.slane %v2452, 1
      %v2687 = vsel %vm1183, %v2684, %v2686
      %v2688 = vrot.slane %v2453, 1
      %v2689 = vrot.slane %v2454, 1
      %v2690 = vsel %vm1183, %v2688, %v2689
      %v2691 = vrot.slane %v2455, 1
      %v2692 = vsel %vm1183, %v2689, %v2691
      %v2693 = vrot.slane %v2456, 1
      %v2694 = vsel %vm1183, %v2691, %v2693
      %v2695 = vrot.slane %v2457, 1
      %v2696 = vrot.slane %v2458, 1
      %v2697 = vsel %vm1183, %v2695, %v2696
      %v2698 = vrot.slane %v2459, 1
      %v2699 = vsel %vm1183, %v2696, %v2698
      %v2700 = vrot.slane %v2460, 1
      %v2701 = vsel %vm1183, %v2698, %v2700
      %v2702 = vrot.slane %v2461, 1
      %v2703 = vrot.slane %v2462, 1
      %v2704 = vsel %vm1183, %v2702, %v2703
      %v2705 = vrot.slane %v2463, 1
      %v2706 = vsel %vm1183, %v2703, %v2705
      %v2707 = vrot.slane %v2464, 1
      %v2708 = vsel %vm1183, %v2705, %v2707
      %v2709 = vrot.slane %v2465, 1
      %v2710 = vrot.slane %v2466, 1
      %v2711 = vsel %vm1183, %v2709, %v2710
      %v2712 = vrot.slane %v2467, 1
      %v2713 = vsel %vm1183, %v2710, %v2712
      %v2714 = vrot.slane %v2468, 1
      %v2715 = vsel %vm1183, %v2712, %v2714
      %v2716 = vrot.slane %v2469, 1
      %v2717 = vrot.slane %v2470, 1
      %v2718 = vsel %vm1183, %v2716, %v2717
      %v2719 = vrot.slane %v2471, 1
      %v2720 = vsel %vm1183, %v2717, %v2719
      %v2721 = vrot.slane %v2472, 1
      %v2722 = vsel %vm1183, %v2719, %v2721
      %v2723 = vrot.slane %v2473, 1
      %v2724 = vrot.slane %v2474, 1
      %v2725 = vsel %vm1183, %v2723, %v2724
      %v2726 = vrot.slane %v2475, 1
      %v2727 = vsel %vm1183, %v2724, %v2726
      %v2728 = vrot.slane %v2476, 1
      %v2729 = vsel %vm1183, %v2726, %v2728
      %v2730 = vrot.slane %v2477, 1
      %v2731 = vrot.slane %v2478, 1
      %v2732 = vsel %vm1183, %v2730, %v2731
      %v2733 = vrot.slane %v2479, 1
      %v2734 = vsel %vm1183, %v2731, %v2733
      %v2735 = vrot.slane %v2480, 1
      %v2736 = vsel %vm1183, %v2733, %v2735
      %v2737 = vrot.slane %v2481, 1
      %v2738 = vrot.slane %v2482, 1
      %v2739 = vsel %vm1183, %v2737, %v2738
      %v2740 = vrot.slane %v2483, 1
      %v2741 = vsel %vm1183, %v2738, %v2740
      %v2742 = vrot.slane %v2484, 1
      %v2743 = vsel %vm1183, %v2740, %v2742
      %v2744 = vrot.slane %v2485, 1
      %v2745 = vrot.slane %v2486, 1
      %v2746 = vsel %vm1183, %v2744, %v2745
      %v2747 = vrot.slane %v2487, 1
      %v2748 = vsel %vm1183, %v2745, %v2747
      %v2749 = vrot.slane %v2488, 1
      %v2750 = vsel %vm1183, %v2747, %v2749
      %v2751 = vrot.slane %v2489, 1
      %v2752 = vrot.slane %v2490, 1
      %v2753 = vsel %vm1183, %v2751, %v2752
      %v2754 = vrot.slane %v2491, 1
      %v2755 = vsel %vm1183, %v2752, %v2754
      %v2756 = vrot.slane %v2492, 1
      %v2757 = vsel %vm1183, %v2754, %v2756
      %v2758 = vrot.slane %v2493, 1
      %v2759 = vrot.slane %v2494, 1
      %v2760 = vsel %vm1183, %v2758, %v2759
      %v2761 = vrot.slane %v2495, 1
      %v2762 = vsel %vm1183, %v2759, %v2761
      %v2763 = vrot.slane %v2496, 1
      %v2764 = vsel %vm1183, %v2761, %v2763
      %v2765 = vrot.slane %v2497, 1
      %v2766 = vrot.slane %v2498, 1
      %v2767 = vsel %vm1183, %v2765, %v2766
      %v2768 = vrot.slane %v2499, 1
      %v2769 = vsel %vm1183, %v2766, %v2768
      %v2770 = vrot.slane %v2500, 1
      %v2771 = vsel %vm1183, %v2768, %v2770
      %v2772 = vrot.slane %v2501, 1
      %v2773 = vrot.slane %v2502, 1
      %v2774 = vsel %vm1183, %v2772, %v2773
      %v2775 = vrot.slane %v2503, 1
      %v2776 = vsel %vm1183, %v2773, %v2775
      %v2777 = vrot.slane %v2504, 1
      %v2778 = vsel %vm1183, %v2775, %v2777
      %v2779 = vrot.slane %v2505, 1
      %v2780 = vrot.slane %v2506, 1
      %v2781 = vsel %vm1183, %v2779, %v2780
      %v2782 = vrot.slane %v2507, 1
      %v2783 = vsel %vm1183, %v2780, %v2782
      %v2784 = vrot.slane %v2508, 1
      %v2785 = vsel %vm1183, %v2782, %v2784
      %v2786 = vrot.slane %v2509, 1
      %v2787 = vrot.slane %v2510, 1
      %v2788 = vsel %vm1183, %v2786, %v2787
      %v2789 = vrot.slane %v2511, 1
      %v2790 = vsel %vm1183, %v2787, %v2789
      %v2791 = vrot.slane %v2512, 1
      %v2792 = vsel %vm1183, %v2789, %v2791
      %v2793 = vrot.slane %v2513, 1
      %v2794 = vrot.slane %v2514, 1
      %v2795 = vsel %vm1183, %v2793, %v2794
      %v2796 = vrot.slane %v2515, 1
      %v2797 = vsel %vm1183, %v2794, %v2796
      %v2798 = vrot.slane %v2516, 1
      %v2799 = vsel %vm1183, %v2796, %v2798
      %v2800 = vrot.slane %v2517, 1
      %v2801 = vrot.slane %v2518, 1
      %v2802 = vsel %vm1183, %v2800, %v2801
      %v2803 = vrot.slane %v2519, 1
      %v2804 = vsel %vm1183, %v2801, %v2803
      %v2805 = vrot.slane %v2520, 1
      %v2806 = vsel %vm1183, %v2803, %v2805
      %v2911 = vadd.f32 %v2308, %v2627
      %v2912 = vadd.f32 %v2309, %v2629
      %v2913 = vadd.f32 %v2310, %v2631
      %v2914 = vadd.f32 %v2311, %v2630
      %v2915 = vadd.f32 %v2312, %v2634
      %v2916 = vadd.f32 %v2313, %v2636
      %v2917 = vadd.f32 %v2314, %v2638
      %v2918 = vadd.f32 %v2315, %v2637
      %v2919 = vadd.f32 %v2316, %v2641
      %v2920 = vadd.f32 %v2317, %v2643
      %v2921 = vadd.f32 %v2318, %v2645
      %v2922 = vadd.f32 %v2319, %v2644
      %v2923 = vadd.f32 %v2320, %v2648
      %v2924 = vadd.f32 %v2321, %v2650
      %v2925 = vadd.f32 %v2322, %v2652
      %v2926 = vadd.f32 %v2323, %v2651
      %v2927 = vadd.f32 %v2324, %v2655
      %v2928 = vadd.f32 %v2325, %v2657
      %v2929 = vadd.f32 %v2326, %v2659
      %v2930 = vadd.f32 %v2327, %v2658
      %v2931 = vadd.f32 %v2328, %v2662
      %v2932 = vadd.f32 %v2329, %v2664
      %v2933 = vadd.f32 %v2330, %v2666
      %v2934 = vadd.f32 %v2331, %v2665
      %v2935 = vadd.f32 %v2332, %v2669
      %v2936 = vadd.f32 %v2333, %v2671
      %v2937 = vadd.f32 %v2334, %v2673
      %v2938 = vadd.f32 %v2335, %v2672
      %v2939 = vadd.f32 %v2336, %v2676
      %v2940 = vadd.f32 %v2337, %v2678
      %v2941 = vadd.f32 %v2338, %v2680
      %v2942 = vadd.f32 %v2339, %v2679
      %v2943 = vadd.f32 %v2340, %v2683
      %v2944 = vadd.f32 %v2341, %v2685
      %v2945 = vadd.f32 %v2342, %v2687
      %v2946 = vadd.f32 %v2343, %v2686
      %v2947 = vadd.f32 %v2344, %v2690
      %v2948 = vadd.f32 %v2345, %v2692
      %v2949 = vadd.f32 %v2346, %v2694
      %v2950 = vadd.f32 %v2347, %v2693
      %v2951 = vadd.f32 %v2348, %v2697
      %v2952 = vadd.f32 %v2349, %v2699
      %v2953 = vadd.f32 %v2350, %v2701
      %v2954 = vadd.f32 %v2351, %v2700
      %v2955 = vadd.f32 %v2352, %v2704
      %v2956 = vadd.f32 %v2353, %v2706
      %v2957 = vadd.f32 %v2354, %v2708
      %v2958 = vadd.f32 %v2355, %v2707
      %v2959 = vadd.f32 %v2356, %v2711
      %v2960 = vadd.f32 %v2357, %v2713
      %v2961 = vadd.f32 %v2358, %v2715
      %v2962 = vadd.f32 %v2359, %v2714
      %v2963 = vadd.f32 %v2360, %v2718
      %v2964 = vadd.f32 %v2361, %v2720
      %v2965 = vadd.f32 %v2362, %v2722
      %v2966 = vadd.f32 %v2363, %v2721
      %v2967 = vadd.f32 %v2364, %v2725
      %v2968 = vadd.f32 %v2365, %v2727
      %v2969 = vadd.f32 %v2366, %v2729
      %v2970 = vadd.f32 %v2367, %v2728
      %v2971 = vadd.f32 %v2368, %v2732
      %v2972 = vadd.f32 %v2369, %v2734
      %v2973 = vadd.f32 %v2370, %v2736
      %v2974 = vadd.f32 %v2371, %v2735
      %v2975 = vadd.f32 %v2372, %v2739
      %v2976 = vadd.f32 %v2373, %v2741
      %v2977 = vadd.f32 %v2374, %v2743
      %v2978 = vadd.f32 %v2375, %v2742
      %v2979 = vadd.f32 %v2376, %v2746
      %v2980 = vadd.f32 %v2377, %v2748
      %v2981 = vadd.f32 %v2378, %v2750
      %v2982 = vadd.f32 %v2379, %v2749
      %v2983 = vadd.f32 %v2380, %v2753
      %v2984 = vadd.f32 %v2381, %v2755
      %v2985 = vadd.f32 %v2382, %v2757
      %v2986 = vadd.f32 %v2383, %v2756
      %v2987 = vadd.f32 %v2384, %v2760
      %v2988 = vadd.f32 %v2385, %v2762
      %v2989 = vadd.f32 %v2386, %v2764
      %v2990 = vadd.f32 %v2387, %v2763
      %v2991 = vadd.f32 %v2388, %v2767
      %v2992 = vadd.f32 %v2389, %v2769
      %v2993 = vadd.f32 %v2390, %v2771
      %v2994 = vadd.f32 %v2391, %v2770
      %v2995 = vadd.f32 %v2392, %v2774
      %v2996 = vadd.f32 %v2393, %v2776
      %v2997 = vadd.f32 %v2394, %v2778
      %v2998 = vadd.f32 %v2395, %v2777
      %v2999 = vadd.f32 %v2396, %v2781
      %v3000 = vadd.f32 %v2397, %v2783
      %v3001 = vadd.f32 %v2398, %v2785
      %v3002 = vadd.f32 %v2399, %v2784
      %v3003 = vadd.f32 %v2400, %v2788
      %v3004 = vadd.f32 %v2401, %v2790
      %v3005 = vadd.f32 %v2402, %v2792
      %v3006 = vadd.f32 %v2403, %v2791
      %v3007 = vadd.f32 %v2404, %v2795
      %v3008 = vadd.f32 %v2405, %v2797
      %v3009 = vadd.f32 %v2406, %v2799
      %v3010 = vadd.f32 %v2407, %v2798
      %v3011 = vadd.f32 %v2408, %v2802
      %v3012 = vadd.f32 %v2409, %v2804
      %v3013 = vadd.f32 %v2410, %v2806
      %v3014 = vadd.f32 %v2411, %v2805
      %v3015 = vld [vmem:[%s2178 + $0x2] sm:$0x1]
      %v3016 = vlaneseq
      %v3017 = vshrl.u32 %v3016, 7
      %v3018 = vsub.s32 0, %v3017
      %v3019 = vrot.slane %v3015, %v3018
      %v3020 = vmul.f32 %v365, %v3019
      %v3021 = vmul.f32 %v370, %v3019
      %v3022 = vmul.f32 %v375, %v3019
      %v3023 = vmul.f32 %v380, %v3019
      %v3024 = vmul.f32 %v385, %v3019
      %v3025 = vmul.f32 %v390, %v3019
      %v3026 = vmul.f32 %v395, %v3019
      %v3027 = vmul.f32 %v400, %v3019
      %v3028 = vmul.f32 %v405, %v3019
      %v3029 = vmul.f32 %v410, %v3019
      %v3030 = vmul.f32 %v415, %v3019
      %v3031 = vmul.f32 %v420, %v3019
      %v3032 = vmul.f32 %v425, %v3019
      %v3033 = vmul.f32 %v430, %v3019
      %v3034 = vmul.f32 %v435, %v3019
      %v3035 = vmul.f32 %v440, %v3019
      %v3036 = vmul.f32 %v445, %v3019
      %v3037 = vmul.f32 %v450, %v3019
      %v3038 = vmul.f32 %v455, %v3019
      %v3039 = vmul.f32 %v460, %v3019
      %v3040 = vmul.f32 %v465, %v3019
      %v3041 = vmul.f32 %v470, %v3019
      %v3042 = vmul.f32 %v475, %v3019
      %v3043 = vmul.f32 %v480, %v3019
      %v3044 = vmul.f32 %v485, %v3019
      %v3045 = vmul.f32 %v490, %v3019
      %v3046 = vmul.f32 %v495, %v3019
      %v3047 = vmul.f32 %v500, %v3019
      %v3048 = vmul.f32 %v505, %v3019
      %v3049 = vmul.f32 %v510, %v3019
      %v3050 = vmul.f32 %v515, %v3019
      %v3051 = vmul.f32 %v520, %v3019
      %v3052 = vmul.f32 %v525, %v3019
      %v3053 = vmul.f32 %v530, %v3019
      %v3054 = vmul.f32 %v535, %v3019
      %v3055 = vmul.f32 %v540, %v3019
      %v3056 = vmul.f32 %v545, %v3019
      %v3057 = vmul.f32 %v550, %v3019
      %v3058 = vmul.f32 %v555, %v3019
      %v3059 = vmul.f32 %v560, %v3019
      %v3060 = vmul.f32 %v565, %v3019
      %v3061 = vmul.f32 %v570, %v3019
      %v3062 = vmul.f32 %v575, %v3019
      %v3063 = vmul.f32 %v580, %v3019
      %v3064 = vmul.f32 %v585, %v3019
      %v3065 = vmul.f32 %v590, %v3019
      %v3066 = vmul.f32 %v595, %v3019
      %v3067 = vmul.f32 %v600, %v3019
      %v3068 = vmul.f32 %v605, %v3019
      %v3069 = vmul.f32 %v610, %v3019
      %v3070 = vmul.f32 %v615, %v3019
      %v3071 = vmul.f32 %v620, %v3019
      %v3072 = vmul.f32 %v625, %v3019
      %v3073 = vmul.f32 %v630, %v3019
      %v3074 = vmul.f32 %v635, %v3019
      %v3075 = vmul.f32 %v640, %v3019
      %v3076 = vmul.f32 %v645, %v3019
      %v3077 = vmul.f32 %v650, %v3019
      %v3078 = vmul.f32 %v655, %v3019
      %v3079 = vmul.f32 %v660, %v3019
      %v3080 = vmul.f32 %v665, %v3019
      %v3081 = vmul.f32 %v670, %v3019
      %v3082 = vmul.f32 %v675, %v3019
      %v3083 = vmul.f32 %v680, %v3019
      %v3084 = vmul.f32 %v685, %v3019
      %v3085 = vmul.f32 %v690, %v3019
      %v3086 = vmul.f32 %v695, %v3019
      %v3087 = vmul.f32 %v700, %v3019
      %v3088 = vmul.f32 %v705, %v3019
      %v3089 = vmul.f32 %v710, %v3019
      %v3090 = vmul.f32 %v715, %v3019
      %v3091 = vmul.f32 %v720, %v3019
      %v3092 = vmul.f32 %v725, %v3019
      %v3093 = vmul.f32 %v730, %v3019
      %v3094 = vmul.f32 %v735, %v3019
      %v3095 = vmul.f32 %v740, %v3019
      %v3096 = vmul.f32 %v745, %v3019
      %v3097 = vmul.f32 %v750, %v3019
      %v3098 = vmul.f32 %v755, %v3019
      %v3099 = vmul.f32 %v760, %v3019
      %v3100 = vmul.f32 %v765, %v3019
      %v3101 = vmul.f32 %v770, %v3019
      %v3102 = vmul.f32 %v775, %v3019
      %v3103 = vmul.f32 %v780, %v3019
      %v3104 = vmul.f32 %v785, %v3019
      %v3105 = vmul.f32 %v790, %v3019
      %v3106 = vmul.f32 %v795, %v3019
      %v3107 = vmul.f32 %v800, %v3019
      %v3108 = vmul.f32 %v805, %v3019
      %v3109 = vmul.f32 %v810, %v3019
      %v3110 = vmul.f32 %v815, %v3019
      %v3111 = vmul.f32 %v820, %v3019
      %v3112 = vmul.f32 %v825, %v3019
      %v3113 = vmul.f32 %v830, %v3019
      %v3114 = vmul.f32 %v835, %v3019
      %v3115 = vmul.f32 %v840, %v3019
      %v3116 = vmul.f32 %v845, %v3019
      %v3117 = vmul.f32 %v850, %v3019
      %v3118 = vmul.f32 %v855, %v3019
      %v3119 = vmul.f32 %v860, %v3019
      %v3120 = vmul.f32 %v2183, %v3019
      %v3121 = vmul.f32 %v2188, %v3019
      %v3122 = vmul.f32 %v2193, %v3019
      %v3123 = vmul.f32 %v2198, %v3019
      %v3228 = vrot.slane %v3020, 2
      %v3229 = vrot.slane %v3021, 2
      %v3230 = vsel %vm1787, %v3228, %v3229
      %v3231 = vrot.slane %v3022, 2
      %v3232 = vsel %vm1787, %v3229, %v3231
      %v3233 = vrot.slane %v3023, 2
      %v3234 = vsel %vm1787, %v3231, %v3233
      %v3235 = vrot.slane %v3024, 2
      %v3236 = vrot.slane %v3025, 2
      %v3237 = vsel %vm1787, %v3235, %v3236
      %v3238 = vrot.slane %v3026, 2
      %v3239 = vsel %vm1787, %v3236, %v3238
      %v3240 = vrot.slane %v3027, 2
      %v3241 = vsel %vm1787, %v3238, %v3240
      %v3242 = vrot.slane %v3028, 2
      %v3243 = vrot.slane %v3029, 2
      %v3244 = vsel %vm1787, %v3242, %v3243
      %v3245 = vrot.slane %v3030, 2
      %v3246 = vsel %vm1787, %v3243, %v3245
      %v3247 = vrot.slane %v3031, 2
      %v3248 = vsel %vm1787, %v3245, %v3247
      %v3249 = vrot.slane %v3032, 2
      %v3250 = vrot.slane %v3033, 2
      %v3251 = vsel %vm1787, %v3249, %v3250
      %v3252 = vrot.slane %v3034, 2
      %v3253 = vsel %vm1787, %v3250, %v3252
      %v3254 = vrot.slane %v3035, 2
      %v3255 = vsel %vm1787, %v3252, %v3254
      %v3256 = vrot.slane %v3036, 2
      %v3257 = vrot.slane %v3037, 2
      %v3258 = vsel %vm1787, %v3256, %v3257
      %v3259 = vrot.slane %v3038, 2
      %v3260 = vsel %vm1787, %v3257, %v3259
      %v3261 = vrot.slane %v3039, 2
      %v3262 = vsel %vm1787, %v3259, %v3261
      %v3263 = vrot.slane %v3040, 2
      %v3264 = vrot.slane %v3041, 2
      %v3265 = vsel %vm1787, %v3263, %v3264
      %v3266 = vrot.slane %v3042, 2
      %v3267 = vsel %vm1787, %v3264, %v3266
      %v3268 = vrot.slane %v3043, 2
      %v3269 = vsel %vm1787, %v3266, %v3268
      %v3270 = vrot.slane %v3044, 2
      %v3271 = vrot.slane %v3045, 2
      %v3272 = vsel %vm1787, %v3270, %v3271
      %v3273 = vrot.slane %v3046, 2
      %v3274 = vsel %vm1787, %v3271, %v3273
      %v3275 = vrot.slane %v3047, 2
      %v3276 = vsel %vm1787, %v3273, %v3275
      %v3277 = vrot.slane %v3048, 2
      %v3278 = vrot.slane %v3049, 2
      %v3279 = vsel %vm1787, %v3277, %v3278
      %v3280 = vrot.slane %v3050, 2
      %v3281 = vsel %vm1787, %v3278, %v3280
      %v3282 = vrot.slane %v3051, 2
      %v3283 = vsel %vm1787, %v3280, %v3282
      %v3284 = vrot.slane %v3052, 2
      %v3285 = vrot.slane %v3053, 2
      %v3286 = vsel %vm1787, %v3284, %v3285
      %v3287 = vrot.slane %v3054, 2
      %v3288 = vsel %vm1787, %v3285, %v3287
      %v3289 = vrot.slane %v3055, 2
      %v3290 = vsel %vm1787, %v3287, %v3289
      %v3291 = vrot.slane %v3056, 2
      %v3292 = vrot.slane %v3057, 2
      %v3293 = vsel %vm1787, %v3291, %v3292
      %v3294 = vrot.slane %v3058, 2
      %v3295 = vsel %vm1787, %v3292, %v3294
      %v3296 = vrot.slane %v3059, 2
      %v3297 = vsel %vm1787, %v3294, %v3296
      %v3298 = vrot.slane %v3060, 2
      %v3299 = vrot.slane %v3061, 2
      %v3300 = vsel %vm1787, %v3298, %v3299
      %v3301 = vrot.slane %v3062, 2
      %v3302 = vsel %vm1787, %v3299, %v3301
      %v3303 = vrot.slane %v3063, 2
      %v3304 = vsel %vm1787, %v3301, %v3303
      %v3305 = vrot.slane %v3064, 2
      %v3306 = vrot.slane %v3065, 2
      %v3307 = vsel %vm1787, %v3305, %v3306
      %v3308 = vrot.slane %v3066, 2
      %v3309 = vsel %vm1787, %v3306, %v3308
      %v3310 = vrot.slane %v3067, 2
      %v3311 = vsel %vm1787, %v3308, %v3310
      %v3312 = vrot.slane %v3068, 2
      %v3313 = vrot.slane %v3069, 2
      %v3314 = vsel %vm1787, %v3312, %v3313
      %v3315 = vrot.slane %v3070, 2
      %v3316 = vsel %vm1787, %v3313, %v3315
      %v3317 = vrot.slane %v3071, 2
      %v3318 = vsel %vm1787, %v3315, %v3317
      %v3319 = vrot.slane %v3072, 2
      %v3320 = vrot.slane %v3073, 2
      %v3321 = vsel %vm1787, %v3319, %v3320
      %v3322 = vrot.slane %v3074, 2
      %v3323 = vsel %vm1787, %v3320, %v3322
      %v3324 = vrot.slane %v3075, 2
      %v3325 = vsel %vm1787, %v3322, %v3324
      %v3326 = vrot.slane %v3076, 2
      %v3327 = vrot.slane %v3077, 2
      %v3328 = vsel %vm1787, %v3326, %v3327
      %v3329 = vrot.slane %v3078, 2
      %v3330 = vsel %vm1787, %v3327, %v3329
      %v3331 = vrot.slane %v3079, 2
      %v3332 = vsel %vm1787, %v3329, %v3331
      %v3333 = vrot.slane %v3080, 2
      %v3334 = vrot.slane %v3081, 2
      %v3335 = vsel %vm1787, %v3333, %v3334
      %v3336 = vrot.slane %v3082, 2
      %v3337 = vsel %vm1787, %v3334, %v3336
      %v3338 = vrot.slane %v3083, 2
      %v3339 = vsel %vm1787, %v3336, %v3338
      %v3340 = vrot.slane %v3084, 2
      %v3341 = vrot.slane %v3085, 2
      %v3342 = vsel %vm1787, %v3340, %v3341
      %v3343 = vrot.slane %v3086, 2
      %v3344 = vsel %vm1787, %v3341, %v3343
      %v3345 = vrot.slane %v3087, 2
      %v3346 = vsel %vm1787, %v3343, %v3345
      %v3347 = vrot.slane %v3088, 2
      %v3348 = vrot.slane %v3089, 2
      %v3349 = vsel %vm1787, %v3347, %v3348
      %v3350 = vrot.slane %v3090, 2
      %v3351 = vsel %vm1787, %v3348, %v3350
      %v3352 = vrot.slane %v3091, 2
      %v3353 = vsel %vm1787, %v3350, %v3352
      %v3354 = vrot.slane %v3092, 2
      %v3355 = vrot.slane %v3093, 2
      %v3356 = vsel %vm1787, %v3354, %v3355
      %v3357 = vrot.slane %v3094, 2
      %v3358 = vsel %vm1787, %v3355, %v3357
      %v3359 = vrot.slane %v3095, 2
      %v3360 = vsel %vm1787, %v3357, %v3359
      %v3361 = vrot.slane %v3096, 2
      %v3362 = vrot.slane %v3097, 2
      %v3363 = vsel %vm1787, %v3361, %v3362
      %v3364 = vrot.slane %v3098, 2
      %v3365 = vsel %vm1787, %v3362, %v3364
      %v3366 = vrot.slane %v3099, 2
      %v3367 = vsel %vm1787, %v3364, %v3366
      %v3368 = vrot.slane %v3100, 2
      %v3369 = vrot.slane %v3101, 2
      %v3370 = vsel %vm1787, %v3368, %v3369
      %v3371 = vrot.slane %v3102, 2
      %v3372 = vsel %vm1787, %v3369, %v3371
      %v3373 = vrot.slane %v3103, 2
      %v3374 = vsel %vm1787, %v3371, %v3373
      %v3375 = vrot.slane %v3104, 2
      %v3376 = vrot.slane %v3105, 2
      %v3377 = vsel %vm1787, %v3375, %v3376
      %v3378 = vrot.slane %v3106, 2
      %v3379 = vsel %vm1787, %v3376, %v3378
      %v3380 = vrot.slane %v3107, 2
      %v3381 = vsel %vm1787, %v3378, %v3380
      %v3382 = vrot.slane %v3108, 2
      %v3383 = vrot.slane %v3109, 2
      %v3384 = vsel %vm1787, %v3382, %v3383
      %v3385 = vrot.slane %v3110, 2
      %v3386 = vsel %vm1787, %v3383, %v3385
      %v3387 = vrot.slane %v3111, 2
      %v3388 = vsel %vm1787, %v3385, %v3387
      %v3389 = vrot.slane %v3112, 2
      %v3390 = vrot.slane %v3113, 2
      %v3391 = vsel %vm1787, %v3389, %v3390
      %v3392 = vrot.slane %v3114, 2
      %v3393 = vsel %vm1787, %v3390, %v3392
      %v3394 = vrot.slane %v3115, 2
      %v3395 = vsel %vm1787, %v3392, %v3394
      %v3396 = vrot.slane %v3116, 2
      %v3397 = vrot.slane %v3117, 2
      %v3398 = vsel %vm1787, %v3396, %v3397
      %v3399 = vrot.slane %v3118, 2
      %v3400 = vsel %vm1787, %v3397, %v3399
      %v3401 = vrot.slane %v3119, 2
      %v3402 = vsel %vm1787, %v3399, %v3401
      %v3403 = vrot.slane %v3120, 2
      %v3404 = vrot.slane %v3121, 2
      %v3405 = vsel %vm1787, %v3403, %v3404
      %v3406 = vrot.slane %v3122, 2
      %v3407 = vsel %vm1787, %v3404, %v3406
      %v3408 = vrot.slane %v3123, 2
      %v3409 = vsel %vm1787, %v3406, %v3408
      %v3514 = vadd.f32 %v2911, %v3230
      %v3515 = vadd.f32 %v2912, %v3232
      %v3516 = vadd.f32 %v2913, %v3234
      %v3517 = vadd.f32 %v2914, %v3233
      %v3518 = vadd.f32 %v2915, %v3237
      %v3519 = vadd.f32 %v2916, %v3239
      %v3520 = vadd.f32 %v2917, %v3241
      %v3521 = vadd.f32 %v2918, %v3240
      %v3522 = vadd.f32 %v2919, %v3244
      %v3523 = vadd.f32 %v2920, %v3246
      %v3524 = vadd.f32 %v2921, %v3248
      %v3525 = vadd.f32 %v2922, %v3247
      %v3526 = vadd.f32 %v2923, %v3251
      %v3527 = vadd.f32 %v2924, %v3253
      %v3528 = vadd.f32 %v2925, %v3255
      %v3529 = vadd.f32 %v2926, %v3254
      %v3530 = vadd.f32 %v2927, %v3258
      %v3531 = vadd.f32 %v2928, %v3260
      %v3532 = vadd.f32 %v2929, %v3262
      %v3533 = vadd.f32 %v2930, %v3261
      %v3534 = vadd.f32 %v2931, %v3265
      %v3535 = vadd.f32 %v2932, %v3267
      %v3536 = vadd.f32 %v2933, %v3269
      %v3537 = vadd.f32 %v2934, %v3268
      %v3538 = vadd.f32 %v2935, %v3272
      %v3539 = vadd.f32 %v2936, %v3274
      %v3540 = vadd.f32 %v2937, %v3276
      %v3541 = vadd.f32 %v2938, %v3275
      %v3542 = vadd.f32 %v2939, %v3279
      %v3543 = vadd.f32 %v2940, %v3281
      %v3544 = vadd.f32 %v2941, %v3283
      %v3545 = vadd.f32 %v2942, %v3282
      %v3546 = vadd.f32 %v2943, %v3286
      %v3547 = vadd.f32 %v2944, %v3288
      %v3548 = vadd.f32 %v2945, %v3290
      %v3549 = vadd.f32 %v2946, %v3289
      %v3550 = vadd.f32 %v2947, %v3293
      %v3551 = vadd.f32 %v2948, %v3295
      %v3552 = vadd.f32 %v2949, %v3297
      %v3553 = vadd.f32 %v2950, %v3296
      %v3554 = vadd.f32 %v2951, %v3300
      %v3555 = vadd.f32 %v2952, %v3302
      %v3556 = vadd.f32 %v2953, %v3304
      %v3557 = vadd.f32 %v2954, %v3303
      %v3558 = vadd.f32 %v2955, %v3307
      %v3559 = vadd.f32 %v2956, %v3309
      %v3560 = vadd.f32 %v2957, %v3311
      %v3561 = vadd.f32 %v2958, %v3310
      %v3562 = vadd.f32 %v2959, %v3314
      %v3563 = vadd.f32 %v2960, %v3316
      %v3564 = vadd.f32 %v2961, %v3318
      %v3565 = vadd.f32 %v2962, %v3317
      %v3566 = vadd.f32 %v2963, %v3321
      %v3567 = vadd.f32 %v2964, %v3323
      %v3568 = vadd.f32 %v2965, %v3325
      %v3569 = vadd.f32 %v2966, %v3324
      %v3570 = vadd.f32 %v2967, %v3328
      %v3571 = vadd.f32 %v2968, %v3330
      %v3572 = vadd.f32 %v2969, %v3332
      %v3573 = vadd.f32 %v2970, %v3331
      %v3574 = vadd.f32 %v2971, %v3335
      %v3575 = vadd.f32 %v2972, %v3337
      %v3576 = vadd.f32 %v2973, %v3339
      %v3577 = vadd.f32 %v2974, %v3338
      %v3578 = vadd.f32 %v2975, %v3342
      %v3579 = vadd.f32 %v2976, %v3344
      %v3580 = vadd.f32 %v2977, %v3346
      %v3581 = vadd.f32 %v2978, %v3345
      %v3582 = vadd.f32 %v2979, %v3349
      %v3583 = vadd.f32 %v2980, %v3351
      %v3584 = vadd.f32 %v2981, %v3353
      %v3585 = vadd.f32 %v2982, %v3352
      %v3586 = vadd.f32 %v2983, %v3356
      %v3587 = vadd.f32 %v2984, %v3358
      %v3588 = vadd.f32 %v2985, %v3360
      %v3589 = vadd.f32 %v2986, %v3359
      %v3590 = vadd.f32 %v2987, %v3363
      %v3591 = vadd.f32 %v2988, %v3365
      %v3592 = vadd.f32 %v2989, %v3367
      %v3593 = vadd.f32 %v2990, %v3366
      %v3594 = vadd.f32 %v2991, %v3370
      %v3595 = vadd.f32 %v2992, %v3372
      %v3596 = vadd.f32 %v2993, %v3374
      %v3597 = vadd.f32 %v2994, %v3373
      %v3598 = vadd.f32 %v2995, %v3377
      %v3599 = vadd.f32 %v2996, %v3379
      %v3600 = vadd.f32 %v2997, %v3381
      %v3601 = vadd.f32 %v2998, %v3380
      %v3602 = vadd.f32 %v2999, %v3384
      %v3603 = vadd.f32 %v3000, %v3386
      %v3604 = vadd.f32 %v3001, %v3388
      %v3605 = vadd.f32 %v3002, %v3387
      %v3606 = vadd.f32 %v3003, %v3391
      %v3607 = vadd.f32 %v3004, %v3393
      %v3608 = vadd.f32 %v3005, %v3395
      %v3609 = vadd.f32 %v3006, %v3394
      %v3610 = vadd.f32 %v3007, %v3398
      %v3611 = vadd.f32 %v3008, %v3400
      %v3612 = vadd.f32 %v3009, %v3402
      %v3613 = vadd.f32 %v3010, %v3401
      %v3614 = vadd.f32 %v3011, %v3405
      %v3615 = vadd.f32 %v3012, %v3407
      %v3616 = vadd.f32 %v3013, %v3409
      %v3617 = vadd.f32 %v3014, %v3408
      %s3618 = scalar_lea.vmem %s1, 8
      %v3619 = vld [vmem:[%s3618] sm:$0x1]
      %3621 = vset.pattern.permute.xlu0 0
      %3622 = vperm.xlu0 %3621, %v337
      %v3623 = vpop.permute.xlu0 %3622
      %3626 = vset.pattern.permute.xlu0 0
      %3627 = vperm.xlu0 %3626, %v338
      %v3628 = vpop.permute.xlu0 %3627
      %3631 = vset.pattern.permute.xlu0 0
      %3632 = vperm.xlu0 %3631, %v339
      %v3633 = vpop.permute.xlu0 %3632
      %3636 = vset.pattern.permute.xlu0 0
      %3637 = vperm.xlu0 %3636, %v340
      %v3638 = vpop.permute.xlu0 %3637
      %v3640 = vlaneseq
      %v3641 = vshrl.u32 %v3640, 7
      %v3642 = vsub.s32 0, %v3641
      %v3643 = vrot.slane %v3619, %v3642
      %v3644 = vmul.f32 %v385, %v3643
      %v3645 = vmul.f32 %v390, %v3643
      %v3646 = vmul.f32 %v395, %v3643
      %v3647 = vmul.f32 %v400, %v3643
      %v3648 = vmul.f32 %v405, %v3643
      %v3649 = vmul.f32 %v410, %v3643
      %v3650 = vmul.f32 %v415, %v3643
      %v3651 = vmul.f32 %v420, %v3643
      %v3652 = vmul.f32 %v425, %v3643
      %v3653 = vmul.f32 %v430, %v3643
      %v3654 = vmul.f32 %v435, %v3643
      %v3655 = vmul.f32 %v440, %v3643
      %v3656 = vmul.f32 %v445, %v3643
      %v3657 = vmul.f32 %v450, %v3643
      %v3658 = vmul.f32 %v455, %v3643
      %v3659 = vmul.f32 %v460, %v3643
      %v3660 = vmul.f32 %v465, %v3643
      %v3661 = vmul.f32 %v470, %v3643
      %v3662 = vmul.f32 %v475, %v3643
      %v3663 = vmul.f32 %v480, %v3643
      %v3664 = vmul.f32 %v485, %v3643
      %v3665 = vmul.f32 %v490, %v3643
      %v3666 = vmul.f32 %v495, %v3643
      %v3667 = vmul.f32 %v500, %v3643
      %v3668 = vmul.f32 %v505, %v3643
      %v3669 = vmul.f32 %v510, %v3643
      %v3670 = vmul.f32 %v515, %v3643
      %v3671 = vmul.f32 %v520, %v3643
      %v3672 = vmul.f32 %v525, %v3643
      %v3673 = vmul.f32 %v530, %v3643
      %v3674 = vmul.f32 %v535, %v3643
      %v3675 = vmul.f32 %v540, %v3643
      %v3676 = vmul.f32 %v545, %v3643
      %v3677 = vmul.f32 %v550, %v3643
      %v3678 = vmul.f32 %v555, %v3643
      %v3679 = vmul.f32 %v560, %v3643
      %v3680 = vmul.f32 %v565, %v3643
      %v3681 = vmul.f32 %v570, %v3643
      %v3682 = vmul.f32 %v575, %v3643
      %v3683 = vmul.f32 %v580, %v3643
      %v3684 = vmul.f32 %v585, %v3643
      %v3685 = vmul.f32 %v590, %v3643
      %v3686 = vmul.f32 %v595, %v3643
      %v3687 = vmul.f32 %v600, %v3643
      %v3688 = vmul.f32 %v605, %v3643
      %v3689 = vmul.f32 %v610, %v3643
      %v3690 = vmul.f32 %v615, %v3643
      %v3691 = vmul.f32 %v620, %v3643
      %v3692 = vmul.f32 %v625, %v3643
      %v3693 = vmul.f32 %v630, %v3643
      %v3694 = vmul.f32 %v635, %v3643
      %v3695 = vmul.f32 %v640, %v3643
      %v3696 = vmul.f32 %v645, %v3643
      %v3697 = vmul.f32 %v650, %v3643
      %v3698 = vmul.f32 %v655, %v3643
      %v3699 = vmul.f32 %v660, %v3643
      %v3700 = vmul.f32 %v665, %v3643
      %v3701 = vmul.f32 %v670, %v3643
      %v3702 = vmul.f32 %v675, %v3643
      %v3703 = vmul.f32 %v680, %v3643
      %v3704 = vmul.f32 %v685, %v3643
      %v3705 = vmul.f32 %v690, %v3643
      %v3706 = vmul.f32 %v695, %v3643
      %v3707 = vmul.f32 %v700, %v3643
      %v3708 = vmul.f32 %v705, %v3643
      %v3709 = vmul.f32 %v710, %v3643
      %v3710 = vmul.f32 %v715, %v3643
      %v3711 = vmul.f32 %v720, %v3643
      %v3712 = vmul.f32 %v725, %v3643
      %v3713 = vmul.f32 %v730, %v3643
      %v3714 = vmul.f32 %v735, %v3643
      %v3715 = vmul.f32 %v740, %v3643
      %v3716 = vmul.f32 %v745, %v3643
      %v3717 = vmul.f32 %v750, %v3643
      %v3718 = vmul.f32 %v755, %v3643
      %v3719 = vmul.f32 %v760, %v3643
      %v3720 = vmul.f32 %v765, %v3643
      %v3721 = vmul.f32 %v770, %v3643
      %v3722 = vmul.f32 %v775, %v3643
      %v3723 = vmul.f32 %v780, %v3643
      %v3724 = vmul.f32 %v785, %v3643
      %v3725 = vmul.f32 %v790, %v3643
      %v3726 = vmul.f32 %v795, %v3643
      %v3727 = vmul.f32 %v800, %v3643
      %v3728 = vmul.f32 %v805, %v3643
      %v3729 = vmul.f32 %v810, %v3643
      %v3730 = vmul.f32 %v815, %v3643
      %v3731 = vmul.f32 %v820, %v3643
      %v3732 = vmul.f32 %v825, %v3643
      %v3733 = vmul.f32 %v830, %v3643
      %v3734 = vmul.f32 %v835, %v3643
      %v3735 = vmul.f32 %v840, %v3643
      %v3736 = vmul.f32 %v845, %v3643
      %v3737 = vmul.f32 %v850, %v3643
      %v3738 = vmul.f32 %v855, %v3643
      %v3739 = vmul.f32 %v860, %v3643
      %v3740 = vmul.f32 %v2183, %v3643
      %v3741 = vmul.f32 %v2188, %v3643
      %v3742 = vmul.f32 %v2193, %v3643
      %v3743 = vmul.f32 %v2198, %v3643
      %v3744 = vmul.f32 %v3623, %v3643
      %v3745 = vmul.f32 %v3628, %v3643
      %v3746 = vmul.f32 %v3633, %v3643
      %v3747 = vmul.f32 %v3638, %v3643
      %v3748 = vadd.f32 %v3514, %v3644
      %v3749 = vadd.f32 %v3515, %v3645
      %v3750 = vadd.f32 %v3516, %v3646
      %v3751 = vadd.f32 %v3517, %v3647
      %v3752 = vadd.f32 %v3518, %v3648
      %v3753 = vadd.f32 %v3519, %v3649
      %v3754 = vadd.f32 %v3520, %v3650
      %v3755 = vadd.f32 %v3521, %v3651
      %v3756 = vadd.f32 %v3522, %v3652
      %v3757 = vadd.f32 %v3523, %v3653
      %v3758 = vadd.f32 %v3524, %v3654
      %v3759 = vadd.f32 %v3525, %v3655
      %v3760 = vadd.f32 %v3526, %v3656
      %v3761 = vadd.f32 %v3527, %v3657
      %v3762 = vadd.f32 %v3528, %v3658
      %v3763 = vadd.f32 %v3529, %v3659
      %v3764 = vadd.f32 %v3530, %v3660
      %v3765 = vadd.f32 %v3531, %v3661
      %v3766 = vadd.f32 %v3532, %v3662
      %v3767 = vadd.f32 %v3533, %v3663
      %v3768 = vadd.f32 %v3534, %v3664
      %v3769 = vadd.f32 %v3535, %v3665
      %v3770 = vadd.f32 %v3536, %v3666
      %v3771 = vadd.f32 %v3537, %v3667
      %v3772 = vadd.f32 %v3538, %v3668
      %v3773 = vadd.f32 %v3539, %v3669
      %v3774 = vadd.f32 %v3540, %v3670
      %v3775 = vadd.f32 %v3541, %v3671
      %v3776 = vadd.f32 %v3542, %v3672
      %v3777 = vadd.f32 %v3543, %v3673
      %v3778 = vadd.f32 %v3544, %v3674
      %v3779 = vadd.f32 %v3545, %v3675
      %v3780 = vadd.f32 %v3546, %v3676
      %v3781 = vadd.f32 %v3547, %v3677
      %v3782 = vadd.f32 %v3548, %v3678
      %v3783 = vadd.f32 %v3549, %v3679
      %v3784 = vadd.f32 %v3550, %v3680
      %v3785 = vadd.f32 %v3551, %v3681
      %v3786 = vadd.f32 %v3552, %v3682
      %v3787 = vadd.f32 %v3553, %v3683
      %v3788 = vadd.f32 %v3554, %v3684
      %v3789 = vadd.f32 %v3555, %v3685
      %v3790 = vadd.f32 %v3556, %v3686
      %v3791 = vadd.f32 %v3557, %v3687
      %v3792 = vadd.f32 %v3558, %v3688
      %v3793 = vadd.f32 %v3559, %v3689
      %v3794 = vadd.f32 %v3560, %v3690
      %v3795 = vadd.f32 %v3561, %v3691
      %v3796 = vadd.f32 %v3562, %v3692
      %v3797 = vadd.f32 %v3563, %v3693
      %v3798 = vadd.f32 %v3564, %v3694
      %v3799 = vadd.f32 %v3565, %v3695
      %v3800 = vadd.f32 %v3566, %v3696
      %v3801 = vadd.f32 %v3567, %v3697
      %v3802 = vadd.f32 %v3568, %v3698
      %v3803 = vadd.f32 %v3569, %v3699
      %v3804 = vadd.f32 %v3570, %v3700
      %v3805 = vadd.f32 %v3571, %v3701
      %v3806 = vadd.f32 %v3572, %v3702
      %v3807 = vadd.f32 %v3573, %v3703
      %v3808 = vadd.f32 %v3574, %v3704
      %v3809 = vadd.f32 %v3575, %v3705
      %v3810 = vadd.f32 %v3576, %v3706
      %v3811 = vadd.f32 %v3577, %v3707
      %v3812 = vadd.f32 %v3578, %v3708
      %v3813 = vadd.f32 %v3579, %v3709
      %v3814 = vadd.f32 %v3580, %v3710
      %v3815 = vadd.f32 %v3581, %v3711
      %v3816 = vadd.f32 %v3582, %v3712
      %v3817 = vadd.f32 %v3583, %v3713
      %v3818 = vadd.f32 %v3584, %v3714
      %v3819 = vadd.f32 %v3585, %v3715
      %v3820 = vadd.f32 %v3586, %v3716
      %v3821 = vadd.f32 %v3587, %v3717
      %v3822 = vadd.f32 %v3588, %v3718
      %v3823 = vadd.f32 %v3589, %v3719
      %v3824 = vadd.f32 %v3590, %v3720
      %v3825 = vadd.f32 %v3591, %v3721
      %v3826 = vadd.f32 %v3592, %v3722
      %v3827 = vadd.f32 %v3593, %v3723
      %v3828 = vadd.f32 %v3594, %v3724
      %v3829 = vadd.f32 %v3595, %v3725
      %v3830 = vadd.f32 %v3596, %v3726
      %v3831 = vadd.f32 %v3597, %v3727
      %v3832 = vadd.f32 %v3598, %v3728
      %v3833 = vadd.f32 %v3599, %v3729
      %v3834 = vadd.f32 %v3600, %v3730
      %v3835 = vadd.f32 %v3601, %v3731
      %v3836 = vadd.f32 %v3602, %v3732
      %v3837 = vadd.f32 %v3603, %v3733
      %v3838 = vadd.f32 %v3604, %v3734
      %v3839 = vadd.f32 %v3605, %v3735
      %v3840 = vadd.f32 %v3606, %v3736
      %v3841 = vadd.f32 %v3607, %v3737
      %v3842 = vadd.f32 %v3608, %v3738
      %v3843 = vadd.f32 %v3609, %v3739
      %v3844 = vadd.f32 %v3610, %v3740
      %v3845 = vadd.f32 %v3611, %v3741
      %v3846 = vadd.f32 %v3612, %v3742
      %v3847 = vadd.f32 %v3613, %v3743
      %v3848 = vadd.f32 %v3614, %v3744
      %v3849 = vadd.f32 %v3615, %v3745
      %v3850 = vadd.f32 %v3616, %v3746
      %v3851 = vadd.f32 %v3617, %v3747
      %v3852 = vld [vmem:[%s3618 + $0x1] sm:$0x1]
      %v3853 = vlaneseq
      %v3854 = vshrl.u32 %v3853, 7
      %v3855 = vsub.s32 0, %v3854
      %v3856 = vrot.slane %v3852, %v3855
      %v3857 = vmul.f32 %v385, %v3856
      %v3858 = vmul.f32 %v390, %v3856
      %v3859 = vmul.f32 %v395, %v3856
      %v3860 = vmul.f32 %v400, %v3856
      %v3861 = vmul.f32 %v405, %v3856
      %v3862 = vmul.f32 %v410, %v3856
      %v3863 = vmul.f32 %v415, %v3856
      %v3864 = vmul.f32 %v420, %v3856
      %v3865 = vmul.f32 %v425, %v3856
      %v3866 = vmul.f32 %v430, %v3856
      %v3867 = vmul.f32 %v435, %v3856
      %v3868 = vmul.f32 %v440, %v3856
      %v3869 = vmul.f32 %v445, %v3856
      %v3870 = vmul.f32 %v450, %v3856
      %v3871 = vmul.f32 %v455, %v3856
      %v3872 = vmul.f32 %v460, %v3856
      %v3873 = vmul.f32 %v465, %v3856
      %v3874 = vmul.f32 %v470, %v3856
      %v3875 = vmul.f32 %v475, %v3856
      %v3876 = vmul.f32 %v480, %v3856
      %v3877 = vmul.f32 %v485, %v3856
      %v3878 = vmul.f32 %v490, %v3856
      %v3879 = vmul.f32 %v495, %v3856
      %v3880 = vmul.f32 %v500, %v3856
      %v3881 = vmul.f32 %v505, %v3856
      %v3882 = vmul.f32 %v510, %v3856
      %v3883 = vmul.f32 %v515, %v3856
      %v3884 = vmul.f32 %v520, %v3856
      %v3885 = vmul.f32 %v525, %v3856
      %v3886 = vmul.f32 %v530, %v3856
      %v3887 = vmul.f32 %v535, %v3856
      %v3888 = vmul.f32 %v540, %v3856
      %v3889 = vmul.f32 %v545, %v3856
      %v3890 = vmul.f32 %v550, %v3856
      %v3891 = vmul.f32 %v555, %v3856
      %v3892 = vmul.f32 %v560, %v3856
      %v3893 = vmul.f32 %v565, %v3856
      %v3894 = vmul.f32 %v570, %v3856
      %v3895 = vmul.f32 %v575, %v3856
      %v3896 = vmul.f32 %v580, %v3856
      %v3897 = vmul.f32 %v585, %v3856
      %v3898 = vmul.f32 %v590, %v3856
      %v3899 = vmul.f32 %v595, %v3856
      %v3900 = vmul.f32 %v600, %v3856
      %v3901 = vmul.f32 %v605, %v3856
      %v3902 = vmul.f32 %v610, %v3856
      %v3903 = vmul.f32 %v615, %v3856
      %v3904 = vmul.f32 %v620, %v3856
      %v3905 = vmul.f32 %v625, %v3856
      %v3906 = vmul.f32 %v630, %v3856
      %v3907 = vmul.f32 %v635, %v3856
      %v3908 = vmul.f32 %v640, %v3856
      %v3909 = vmul.f32 %v645, %v3856
      %v3910 = vmul.f32 %v650, %v3856
      %v3911 = vmul.f32 %v655, %v3856
      %v3912 = vmul.f32 %v660, %v3856
      %v3913 = vmul.f32 %v665, %v3856
      %v3914 = vmul.f32 %v670, %v3856
      %v3915 = vmul.f32 %v675, %v3856
      %v3916 = vmul.f32 %v680, %v3856
      %v3917 = vmul.f32 %v685, %v3856
      %v3918 = vmul.f32 %v690, %v3856
      %v3919 = vmul.f32 %v695, %v3856
      %v3920 = vmul.f32 %v700, %v3856
      %v3921 = vmul.f32 %v705, %v3856
      %v3922 = vmul.f32 %v710, %v3856
      %v3923 = vmul.f32 %v715, %v3856
      %v3924 = vmul.f32 %v720, %v3856
      %v3925 = vmul.f32 %v725, %v3856
      %v3926 = vmul.f32 %v730, %v3856
      %v3927 = vmul.f32 %v735, %v3856
      %v3928 = vmul.f32 %v740, %v3856
      %v3929 = vmul.f32 %v745, %v3856
      %v3930 = vmul.f32 %v750, %v3856
      %v3931 = vmul.f32 %v755, %v3856
      %v3932 = vmul.f32 %v760, %v3856
      %v3933 = vmul.f32 %v765, %v3856
      %v3934 = vmul.f32 %v770, %v3856
      %v3935 = vmul.f32 %v775, %v3856
      %v3936 = vmul.f32 %v780, %v3856
      %v3937 = vmul.f32 %v785, %v3856
      %v3938 = vmul.f32 %v790, %v3856
      %v3939 = vmul.f32 %v795, %v3856
      %v3940 = vmul.f32 %v800, %v3856
      %v3941 = vmul.f32 %v805, %v3856
      %v3942 = vmul.f32 %v810, %v3856
      %v3943 = vmul.f32 %v815, %v3856
      %v3944 = vmul.f32 %v820, %v3856
      %v3945 = vmul.f32 %v825, %v3856
      %v3946 = vmul.f32 %v830, %v3856
      %v3947 = vmul.f32 %v835, %v3856
      %v3948 = vmul.f32 %v840, %v3856
      %v3949 = vmul.f32 %v845, %v3856
      %v3950 = vmul.f32 %v850, %v3856
      %v3951 = vmul.f32 %v855, %v3856
      %v3952 = vmul.f32 %v860, %v3856
      %v3953 = vmul.f32 %v2183, %v3856
      %v3954 = vmul.f32 %v2188, %v3856
      %v3955 = vmul.f32 %v2193, %v3856
      %v3956 = vmul.f32 %v2198, %v3856
      %v3957 = vmul.f32 %v3623, %v3856
      %v3958 = vmul.f32 %v3628, %v3856
      %v3959 = vmul.f32 %v3633, %v3856
      %v3960 = vmul.f32 %v3638, %v3856
      %v4065 = vrot.slane %v3857, 1
      %v4066 = vrot.slane %v3858, 1
      %v4067 = vsel %vm1183, %v4065, %v4066
      %v4068 = vrot.slane %v3859, 1
      %v4069 = vsel %vm1183, %v4066, %v4068
      %v4070 = vrot.slane %v3860, 1
      %v4071 = vsel %vm1183, %v4068, %v4070
      %v4072 = vrot.slane %v3861, 1
      %v4073 = vrot.slane %v3862, 1
      %v4074 = vsel %vm1183, %v4072, %v4073
      %v4075 = vrot.slane %v3863, 1
      %v4076 = vsel %vm1183, %v4073, %v4075
      %v4077 = vrot.slane %v3864, 1
      %v4078 = vsel %vm1183, %v4075, %v4077
      %v4079 = vrot.slane %v3865, 1
      %v4080 = vrot.slane %v3866, 1
      %v4081 = vsel %vm1183, %v4079, %v4080
      %v4082 = vrot.slane %v3867, 1
      %v4083 = vsel %vm1183, %v4080, %v4082
      %v4084 = vrot.slane %v3868, 1
      %v4085 = vsel %vm1183, %v4082, %v4084
      %v4086 = vrot.slane %v3869, 1
      %v4087 = vrot.slane %v3870, 1
      %v4088 = vsel %vm1183, %v4086, %v4087
      %v4089 = vrot.slane %v3871, 1
      %v4090 = vsel %vm1183, %v4087, %v4089
      %v4091 = vrot.slane %v3872, 1
      %v4092 = vsel %vm1183, %v4089, %v4091
      %v4093 = vrot.slane %v3873, 1
      %v4094 = vrot.slane %v3874, 1
      %v4095 = vsel %vm1183, %v4093, %v4094
      %v4096 = vrot.slane %v3875, 1
      %v4097 = vsel %vm1183, %v4094, %v4096
      %v4098 = vrot.slane %v3876, 1
      %v4099 = vsel %vm1183, %v4096, %v4098
      %v4100 = vrot.slane %v3877, 1
      %v4101 = vrot.slane %v3878, 1
      %v4102 = vsel %vm1183, %v4100, %v4101
      %v4103 = vrot.slane %v3879, 1
      %v4104 = vsel %vm1183, %v4101, %v4103
      %v4105 = vrot.slane %v3880, 1
      %v4106 = vsel %vm1183, %v4103, %v4105
      %v4107 = vrot.slane %v3881, 1
      %v4108 = vrot.slane %v3882, 1
      %v4109 = vsel %vm1183, %v4107, %v4108
      %v4110 = vrot.slane %v3883, 1
      %v4111 = vsel %vm1183, %v4108, %v4110
      %v4112 = vrot.slane %v3884, 1
      %v4113 = vsel %vm1183, %v4110, %v4112
      %v4114 = vrot.slane %v3885, 1
      %v4115 = vrot.slane %v3886, 1
      %v4116 = vsel %vm1183, %v4114, %v4115
      %v4117 = vrot.slane %v3887, 1
      %v4118 = vsel %vm1183, %v4115, %v4117
      %v4119 = vrot.slane %v3888, 1
      %v4120 = vsel %vm1183, %v4117, %v4119
      %v4121 = vrot.slane %v3889, 1
      %v4122 = vrot.slane %v3890, 1
      %v4123 = vsel %vm1183, %v4121, %v4122
      %v4124 = vrot.slane %v3891, 1
      %v4125 = vsel %vm1183, %v4122, %v4124
      %v4126 = vrot.slane %v3892, 1
      %v4127 = vsel %vm1183, %v4124, %v4126
      %v4128 = vrot.slane %v3893, 1
      %v4129 = vrot.slane %v3894, 1
      %v4130 = vsel %vm1183, %v4128, %v4129
      %v4131 = vrot.slane %v3895, 1
      %v4132 = vsel %vm1183, %v4129, %v4131
      %v4133 = vrot.slane %v3896, 1
      %v4134 = vsel %vm1183, %v4131, %v4133
      %v4135 = vrot.slane %v3897, 1
      %v4136 = vrot.slane %v3898, 1
      %v4137 = vsel %vm1183, %v4135, %v4136
      %v4138 = vrot.slane %v3899, 1
      %v4139 = vsel %vm1183, %v4136, %v4138
      %v4140 = vrot.slane %v3900, 1
      %v4141 = vsel %vm1183, %v4138, %v4140
      %v4142 = vrot.slane %v3901, 1
      %v4143 = vrot.slane %v3902, 1
      %v4144 = vsel %vm1183, %v4142, %v4143
      %v4145 = vrot.slane %v3903, 1
      %v4146 = vsel %vm1183, %v4143, %v4145
      %v4147 = vrot.slane %v3904, 1
      %v4148 = vsel %vm1183, %v4145, %v4147
      %v4149 = vrot.slane %v3905, 1
      %v4150 = vrot.slane %v3906, 1
      %v4151 = vsel %vm1183, %v4149, %v4150
      %v4152 = vrot.slane %v3907, 1
      %v4153 = vsel %vm1183, %v4150, %v4152
      %v4154 = vrot.slane %v3908, 1
      %v4155 = vsel %vm1183, %v4152, %v4154
      %v4156 = vrot.slane %v3909, 1
      %v4157 = vrot.slane %v3910, 1
      %v4158 = vsel %vm1183, %v4156, %v4157
      %v4159 = vrot.slane %v3911, 1
      %v4160 = vsel %vm1183, %v4157, %v4159
      %v4161 = vrot.slane %v3912, 1
      %v4162 = vsel %vm1183, %v4159, %v4161
      %v4163 = vrot.slane %v3913, 1
      %v4164 = vrot.slane %v3914, 1
      %v4165 = vsel %vm1183, %v4163, %v4164
      %v4166 = vrot.slane %v3915, 1
      %v4167 = vsel %vm1183, %v4164, %v4166
      %v4168 = vrot.slane %v3916, 1
      %v4169 = vsel %vm1183, %v4166, %v4168
      %v4170 = vrot.slane %v3917, 1
      %v4171 = vrot.slane %v3918, 1
      %v4172 = vsel %vm1183, %v4170, %v4171
      %v4173 = vrot.slane %v3919, 1
      %v4174 = vsel %vm1183, %v4171, %v4173
      %v4175 = vrot.slane %v3920, 1
      %v4176 = vsel %vm1183, %v4173, %v4175
      %v4177 = vrot.slane %v3921, 1
      %v4178 = vrot.slane %v3922, 1
      %v4179 = vsel %vm1183, %v4177, %v4178
      %v4180 = vrot.slane %v3923, 1
      %v4181 = vsel %vm1183, %v4178, %v4180
      %v4182 = vrot.slane %v3924, 1
      %v4183 = vsel %vm1183, %v4180, %v4182
      %v4184 = vrot.slane %v3925, 1
      %v4185 = vrot.slane %v3926, 1
      %v4186 = vsel %vm1183, %v4184, %v4185
      %v4187 = vrot.slane %v3927, 1
      %v4188 = vsel %vm1183, %v4185, %v4187
      %v4189 = vrot.slane %v3928, 1
      %v4190 = vsel %vm1183, %v4187, %v4189
      %v4191 = vrot.slane %v3929, 1
      %v4192 = vrot.slane %v3930, 1
      %v4193 = vsel %vm1183, %v4191, %v4192
      %v4194 = vrot.slane %v3931, 1
      %v4195 = vsel %vm1183, %v4192, %v4194
      %v4196 = vrot.slane %v3932, 1
      %v4197 = vsel %vm1183, %v4194, %v4196
      %v4198 = vrot.slane %v3933, 1
      %v4199 = vrot.slane %v3934, 1
      %v4200 = vsel %vm1183, %v4198, %v4199
      %v4201 = vrot.slane %v3935, 1
      %v4202 = vsel %vm1183, %v4199, %v4201
      %v4203 = vrot.slane %v3936, 1
      %v4204 = vsel %vm1183, %v4201, %v4203
      %v4205 = vrot.slane %v3937, 1
      %v4206 = vrot.slane %v3938, 1
      %v4207 = vsel %vm1183, %v4205, %v4206
      %v4208 = vrot.slane %v3939, 1
      %v4209 = vsel %vm1183, %v4206, %v4208
      %v4210 = vrot.slane %v3940, 1
      %v4211 = vsel %vm1183, %v4208, %v4210
      %v4212 = vrot.slane %v3941, 1
      %v4213 = vrot.slane %v3942, 1
      %v4214 = vsel %vm1183, %v4212, %v4213
      %v4215 = vrot.slane %v3943, 1
      %v4216 = vsel %vm1183, %v4213, %v4215
      %v4217 = vrot.slane %v3944, 1
      %v4218 = vsel %vm1183, %v4215, %v4217
      %v4219 = vrot.slane %v3945, 1
      %v4220 = vrot.slane %v3946, 1
      %v4221 = vsel %vm1183, %v4219, %v4220
      %v4222 = vrot.slane %v3947, 1
      %v4223 = vsel %vm1183, %v4220, %v4222
      %v4224 = vrot.slane %v3948, 1
      %v4225 = vsel %vm1183, %v4222, %v4224
      %v4226 = vrot.slane %v3949, 1
      %v4227 = vrot.slane %v3950, 1
      %v4228 = vsel %vm1183, %v4226, %v4227
      %v4229 = vrot.slane %v3951, 1
      %v4230 = vsel %vm1183, %v4227, %v4229
      %v4231 = vrot.slane %v3952, 1
      %v4232 = vsel %vm1183, %v4229, %v4231
      %v4233 = vrot.slane %v3953, 1
      %v4234 = vrot.slane %v3954, 1
      %v4235 = vsel %vm1183, %v4233, %v4234
      %v4236 = vrot.slane %v3955, 1
      %v4237 = vsel %vm1183, %v4234, %v4236
      %v4238 = vrot.slane %v3956, 1
      %v4239 = vsel %vm1183, %v4236, %v4238
      %v4240 = vrot.slane %v3957, 1
      %v4241 = vrot.slane %v3958, 1
      %v4242 = vsel %vm1183, %v4240, %v4241
      %v4243 = vrot.slane %v3959, 1
      %v4244 = vsel %vm1183, %v4241, %v4243
      %v4245 = vrot.slane %v3960, 1
      %v4246 = vsel %vm1183, %v4243, %v4245
      %v4351 = vadd.f32 %v3748, %v4067
      %v4352 = vadd.f32 %v3749, %v4069
      %v4353 = vadd.f32 %v3750, %v4071
      %v4354 = vadd.f32 %v3751, %v4070
      %v4355 = vadd.f32 %v3752, %v4074
      %v4356 = vadd.f32 %v3753, %v4076
      %v4357 = vadd.f32 %v3754, %v4078
      %v4358 = vadd.f32 %v3755, %v4077
      %v4359 = vadd.f32 %v3756, %v4081
      %v4360 = vadd.f32 %v3757, %v4083
      %v4361 = vadd.f32 %v3758, %v4085
      %v4362 = vadd.f32 %v3759, %v4084
      %v4363 = vadd.f32 %v3760, %v4088
      %v4364 = vadd.f32 %v3761, %v4090
      %v4365 = vadd.f32 %v3762, %v4092
      %v4366 = vadd.f32 %v3763, %v4091
      %v4367 = vadd.f32 %v3764, %v4095
      %v4368 = vadd.f32 %v3765, %v4097
      %v4369 = vadd.f32 %v3766, %v4099
      %v4370 = vadd.f32 %v3767, %v4098
      %v4371 = vadd.f32 %v3768, %v4102
      %v4372 = vadd.f32 %v3769, %v4104
      %v4373 = vadd.f32 %v3770, %v4106
      %v4374 = vadd.f32 %v3771, %v4105
      %v4375 = vadd.f32 %v3772, %v4109
      %v4376 = vadd.f32 %v3773, %v4111
      %v4377 = vadd.f32 %v3774, %v4113
      %v4378 = vadd.f32 %v3775, %v4112
      %v4379 = vadd.f32 %v3776, %v4116
      %v4380 = vadd.f32 %v3777, %v4118
      %v4381 = vadd.f32 %v3778, %v4120
      %v4382 = vadd.f32 %v3779, %v4119
      %v4383 = vadd.f32 %v3780, %v4123
      %v4384 = vadd.f32 %v3781, %v4125
      %v4385 = vadd.f32 %v3782, %v4127
      %v4386 = vadd.f32 %v3783, %v4126
      %v4387 = vadd.f32 %v3784, %v4130
      %v4388 = vadd.f32 %v3785, %v4132
      %v4389 = vadd.f32 %v3786, %v4134
      %v4390 = vadd.f32 %v3787, %v4133
      %v4391 = vadd.f32 %v3788, %v4137
      %v4392 = vadd.f32 %v3789, %v4139
      %v4393 = vadd.f32 %v3790, %v4141
      %v4394 = vadd.f32 %v3791, %v4140
      %v4395 = vadd.f32 %v3792, %v4144
      %v4396 = vadd.f32 %v3793, %v4146
      %v4397 = vadd.f32 %v3794, %v4148
      %v4398 = vadd.f32 %v3795, %v4147
      %v4399 = vadd.f32 %v3796, %v4151
      %v4400 = vadd.f32 %v3797, %v4153
      %v4401 = vadd.f32 %v3798, %v4155
      %v4402 = vadd.f32 %v3799, %v4154
      %v4403 = vadd.f32 %v3800, %v4158
      %v4404 = vadd.f32 %v3801, %v4160
      %v4405 = vadd.f32 %v3802, %v4162
      %v4406 = vadd.f32 %v3803, %v4161
      %v4407 = vadd.f32 %v3804, %v4165
      %v4408 = vadd.f32 %v3805, %v4167
      %v4409 = vadd.f32 %v3806, %v4169
      %v4410 = vadd.f32 %v3807, %v4168
      %v4411 = vadd.f32 %v3808, %v4172
      %v4412 = vadd.f32 %v3809, %v4174
      %v4413 = vadd.f32 %v3810, %v4176
      %v4414 = vadd.f32 %v3811, %v4175
      %v4415 = vadd.f32 %v3812, %v4179
      %v4416 = vadd.f32 %v3813, %v4181
      %v4417 = vadd.f32 %v3814, %v4183
      %v4418 = vadd.f32 %v3815, %v4182
      %v4419 = vadd.f32 %v3816, %v4186
      %v4420 = vadd.f32 %v3817, %v4188
      %v4421 = vadd.f32 %v3818, %v4190
      %v4422 = vadd.f32 %v3819, %v4189
      %v4423 = vadd.f32 %v3820, %v4193
      %v4424 = vadd.f32 %v3821, %v4195
      %v4425 = vadd.f32 %v3822, %v4197
      %v4426 = vadd.f32 %v3823, %v4196
      %v4427 = vadd.f32 %v3824, %v4200
      %v4428 = vadd.f32 %v3825, %v4202
      %v4429 = vadd.f32 %v3826, %v4204
      %v4430 = vadd.f32 %v3827, %v4203
      %v4431 = vadd.f32 %v3828, %v4207
      %v4432 = vadd.f32 %v3829, %v4209
      %v4433 = vadd.f32 %v3830, %v4211
      %v4434 = vadd.f32 %v3831, %v4210
      %v4435 = vadd.f32 %v3832, %v4214
      %v4436 = vadd.f32 %v3833, %v4216
      %v4437 = vadd.f32 %v3834, %v4218
      %v4438 = vadd.f32 %v3835, %v4217
      %v4439 = vadd.f32 %v3836, %v4221
      %v4440 = vadd.f32 %v3837, %v4223
      %v4441 = vadd.f32 %v3838, %v4225
      %v4442 = vadd.f32 %v3839, %v4224
      %v4443 = vadd.f32 %v3840, %v4228
      %v4444 = vadd.f32 %v3841, %v4230
      %v4445 = vadd.f32 %v3842, %v4232
      %v4446 = vadd.f32 %v3843, %v4231
      %v4447 = vadd.f32 %v3844, %v4235
      %v4448 = vadd.f32 %v3845, %v4237
      %v4449 = vadd.f32 %v3846, %v4239
      %v4450 = vadd.f32 %v3847, %v4238
      %v4451 = vadd.f32 %v3848, %v4242
      %v4452 = vadd.f32 %v3849, %v4244
      %v4453 = vadd.f32 %v3850, %v4246
      %v4454 = vadd.f32 %v3851, %v4245
      %v4455 = vld [vmem:[%s3618 + $0x2] sm:$0x1]
      %v4456 = vlaneseq
      %v4457 = vshrl.u32 %v4456, 7
      %v4458 = vsub.s32 0, %v4457
      %v4459 = vrot.slane %v4455, %v4458
      %v4460 = vmul.f32 %v385, %v4459
      %v4461 = vmul.f32 %v390, %v4459
      %v4462 = vmul.f32 %v395, %v4459
      %v4463 = vmul.f32 %v400, %v4459
      %v4464 = vmul.f32 %v405, %v4459
      %v4465 = vmul.f32 %v410, %v4459
      %v4466 = vmul.f32 %v415, %v4459
      %v4467 = vmul.f32 %v420, %v4459
      %v4468 = vmul.f32 %v425, %v4459
      %v4469 = vmul.f32 %v430, %v4459
      %v4470 = vmul.f32 %v435, %v4459
      %v4471 = vmul.f32 %v440, %v4459
      %v4472 = vmul.f32 %v445, %v4459
      %v4473 = vmul.f32 %v450, %v4459
      %v4474 = vmul.f32 %v455, %v4459
      %v4475 = vmul.f32 %v460, %v4459
      %v4476 = vmul.f32 %v465, %v4459
      %v4477 = vmul.f32 %v470, %v4459
      %v4478 = vmul.f32 %v475, %v4459
      %v4479 = vmul.f32 %v480, %v4459
      %v4480 = vmul.f32 %v485, %v4459
      %v4481 = vmul.f32 %v490, %v4459
      %v4482 = vmul.f32 %v495, %v4459
      %v4483 = vmul.f32 %v500, %v4459
      %v4484 = vmul.f32 %v505, %v4459
      %v4485 = vmul.f32 %v510, %v4459
      %v4486 = vmul.f32 %v515, %v4459
      %v4487 = vmul.f32 %v520, %v4459
      %v4488 = vmul.f32 %v525, %v4459
      %v4489 = vmul.f32 %v530, %v4459
      %v4490 = vmul.f32 %v535, %v4459
      %v4491 = vmul.f32 %v540, %v4459
      %v4492 = vmul.f32 %v545, %v4459
      %v4493 = vmul.f32 %v550, %v4459
      %v4494 = vmul.f32 %v555, %v4459
      %v4495 = vmul.f32 %v560, %v4459
      %v4496 = vmul.f32 %v565, %v4459
      %v4497 = vmul.f32 %v570, %v4459
      %v4498 = vmul.f32 %v575, %v4459
      %v4499 = vmul.f32 %v580, %v4459
      %v4500 = vmul.f32 %v585, %v4459
      %v4501 = vmul.f32 %v590, %v4459
      %v4502 = vmul.f32 %v595, %v4459
      %v4503 = vmul.f32 %v600, %v4459
      %v4504 = vmul.f32 %v605, %v4459
      %v4505 = vmul.f32 %v610, %v4459
      %v4506 = vmul.f32 %v615, %v4459
      %v4507 = vmul.f32 %v620, %v4459
      %v4508 = vmul.f32 %v625, %v4459
      %v4509 = vmul.f32 %v630, %v4459
      %v4510 = vmul.f32 %v635, %v4459
      %v4511 = vmul.f32 %v640, %v4459
      %v4512 = vmul.f32 %v645, %v4459
      %v4513 = vmul.f32 %v650, %v4459
      %v4514 = vmul.f32 %v655, %v4459
      %v4515 = vmul.f32 %v660, %v4459
      %v4516 = vmul.f32 %v665, %v4459
      %v4517 = vmul.f32 %v670, %v4459
      %v4518 = vmul.f32 %v675, %v4459
      %v4519 = vmul.f32 %v680, %v4459
      %v4520 = vmul.f32 %v685, %v4459
      %v4521 = vmul.f32 %v690, %v4459
      %v4522 = vmul.f32 %v695, %v4459
      %v4523 = vmul.f32 %v700, %v4459
      %v4524 = vmul.f32 %v705, %v4459
      %v4525 = vmul.f32 %v710, %v4459
      %v4526 = vmul.f32 %v715, %v4459
      %v4527 = vmul.f32 %v720, %v4459
      %v4528 = vmul.f32 %v725, %v4459
      %v4529 = vmul.f32 %v730, %v4459
      %v4530 = vmul.f32 %v735, %v4459
      %v4531 = vmul.f32 %v740, %v4459
      %v4532 = vmul.f32 %v745, %v4459
      %v4533 = vmul.f32 %v750, %v4459
      %v4534 = vmul.f32 %v755, %v4459
      %v4535 = vmul.f32 %v760, %v4459
      %v4536 = vmul.f32 %v765, %v4459
      %v4537 = vmul.f32 %v770, %v4459
      %v4538 = vmul.f32 %v775, %v4459
      %v4539 = vmul.f32 %v780, %v4459
      %v4540 = vmul.f32 %v785, %v4459
      %v4541 = vmul.f32 %v790, %v4459
      %v4542 = vmul.f32 %v795, %v4459
      %v4543 = vmul.f32 %v800, %v4459
      %v4544 = vmul.f32 %v805, %v4459
      %v4545 = vmul.f32 %v810, %v4459
      %v4546 = vmul.f32 %v815, %v4459
      %v4547 = vmul.f32 %v820, %v4459
      %v4548 = vmul.f32 %v825, %v4459
      %v4549 = vmul.f32 %v830, %v4459
      %v4550 = vmul.f32 %v835, %v4459
      %v4551 = vmul.f32 %v840, %v4459
      %v4552 = vmul.f32 %v845, %v4459
      %v4553 = vmul.f32 %v850, %v4459
      %v4554 = vmul.f32 %v855, %v4459
      %v4555 = vmul.f32 %v860, %v4459
      %v4556 = vmul.f32 %v2183, %v4459
      %v4557 = vmul.f32 %v2188, %v4459
      %v4558 = vmul.f32 %v2193, %v4459
      %v4559 = vmul.f32 %v2198, %v4459
      %v4560 = vmul.f32 %v3623, %v4459
      %v4561 = vmul.f32 %v3628, %v4459
      %v4562 = vmul.f32 %v3633, %v4459
      %v4563 = vmul.f32 %v3638, %v4459
      %v4668 = vrot.slane %v4460, 2
      %v4669 = vrot.slane %v4461, 2
      %v4670 = vsel %vm1787, %v4668, %v4669
      %v4671 = vrot.slane %v4462, 2
      %v4672 = vsel %vm1787, %v4669, %v4671
      %v4673 = vrot.slane %v4463, 2
      %v4674 = vsel %vm1787, %v4671, %v4673
      %v4675 = vrot.slane %v4464, 2
      %v4676 = vrot.slane %v4465, 2
      %v4677 = vsel %vm1787, %v4675, %v4676
      %v4678 = vrot.slane %v4466, 2
      %v4679 = vsel %vm1787, %v4676, %v4678
      %v4680 = vrot.slane %v4467, 2
      %v4681 = vsel %vm1787, %v4678, %v4680
      %v4682 = vrot.slane %v4468, 2
      %v4683 = vrot.slane %v4469, 2
      %v4684 = vsel %vm1787, %v4682, %v4683
      %v4685 = vrot.slane %v4470, 2
      %v4686 = vsel %vm1787, %v4683, %v4685
      %v4687 = vrot.slane %v4471, 2
      %v4688 = vsel %vm1787, %v4685, %v4687
      %v4689 = vrot.slane %v4472, 2
      %v4690 = vrot.slane %v4473, 2
      %v4691 = vsel %vm1787, %v4689, %v4690
      %v4692 = vrot.slane %v4474, 2
      %v4693 = vsel %vm1787, %v4690, %v4692
      %v4694 = vrot.slane %v4475, 2
      %v4695 = vsel %vm1787, %v4692, %v4694
      %v4696 = vrot.slane %v4476, 2
      %v4697 = vrot.slane %v4477, 2
      %v4698 = vsel %vm1787, %v4696, %v4697
      %v4699 = vrot.slane %v4478, 2
      %v4700 = vsel %vm1787, %v4697, %v4699
      %v4701 = vrot.slane %v4479, 2
      %v4702 = vsel %vm1787, %v4699, %v4701
      %v4703 = vrot.slane %v4480, 2
      %v4704 = vrot.slane %v4481, 2
      %v4705 = vsel %vm1787, %v4703, %v4704
      %v4706 = vrot.slane %v4482, 2
      %v4707 = vsel %vm1787, %v4704, %v4706
      %v4708 = vrot.slane %v4483, 2
      %v4709 = vsel %vm1787, %v4706, %v4708
      %v4710 = vrot.slane %v4484, 2
      %v4711 = vrot.slane %v4485, 2
      %v4712 = vsel %vm1787, %v4710, %v4711
      %v4713 = vrot.slane %v4486, 2
      %v4714 = vsel %vm1787, %v4711, %v4713
      %v4715 = vrot.slane %v4487, 2
      %v4716 = vsel %vm1787, %v4713, %v4715
      %v4717 = vrot.slane %v4488, 2
      %v4718 = vrot.slane %v4489, 2
      %v4719 = vsel %vm1787, %v4717, %v4718
      %v4720 = vrot.slane %v4490, 2
      %v4721 = vsel %vm1787, %v4718, %v4720
      %v4722 = vrot.slane %v4491, 2
      %v4723 = vsel %vm1787, %v4720, %v4722
      %v4724 = vrot.slane %v4492, 2
      %v4725 = vrot.slane %v4493, 2
      %v4726 = vsel %vm1787, %v4724, %v4725
      %v4727 = vrot.slane %v4494, 2
      %v4728 = vsel %vm1787, %v4725, %v4727
      %v4729 = vrot.slane %v4495, 2
      %v4730 = vsel %vm1787, %v4727, %v4729
      %v4731 = vrot.slane %v4496, 2
      %v4732 = vrot.slane %v4497, 2
      %v4733 = vsel %vm1787, %v4731, %v4732
      %v4734 = vrot.slane %v4498, 2
      %v4735 = vsel %vm1787, %v4732, %v4734
      %v4736 = vrot.slane %v4499, 2
      %v4737 = vsel %vm1787, %v4734, %v4736
      %v4738 = vrot.slane %v4500, 2
      %v4739 = vrot.slane %v4501, 2
      %v4740 = vsel %vm1787, %v4738, %v4739
      %v4741 = vrot.slane %v4502, 2
      %v4742 = vsel %vm1787, %v4739, %v4741
      %v4743 = vrot.slane %v4503, 2
      %v4744 = vsel %vm1787, %v4741, %v4743
      %v4745 = vrot.slane %v4504, 2
      %v4746 = vrot.slane %v4505, 2
      %v4747 = vsel %vm1787, %v4745, %v4746
      %v4748 = vrot.slane %v4506, 2
      %v4749 = vsel %vm1787, %v4746, %v4748
      %v4750 = vrot.slane %v4507, 2
      %v4751 = vsel %vm1787, %v4748, %v4750
      %v4752 = vrot.slane %v4508, 2
      %v4753 = vrot.slane %v4509, 2
      %v4754 = vsel %vm1787, %v4752, %v4753
      %v4755 = vrot.slane %v4510, 2
      %v4756 = vsel %vm1787, %v4753, %v4755
      %v4757 = vrot.slane %v4511, 2
      %v4758 = vsel %vm1787, %v4755, %v4757
      %v4759 = vrot.slane %v4512, 2
      %v4760 = vrot.slane %v4513, 2
      %v4761 = vsel %vm1787, %v4759, %v4760
      %v4762 = vrot.slane %v4514, 2
      %v4763 = vsel %vm1787, %v4760, %v4762
      %v4764 = vrot.slane %v4515, 2
      %v4765 = vsel %vm1787, %v4762, %v4764
      %v4766 = vrot.slane %v4516, 2
      %v4767 = vrot.slane %v4517, 2
      %v4768 = vsel %vm1787, %v4766, %v4767
      %v4769 = vrot.slane %v4518, 2
      %v4770 = vsel %vm1787, %v4767, %v4769
      %v4771 = vrot.slane %v4519, 2
      %v4772 = vsel %vm1787, %v4769, %v4771
      %v4773 = vrot.slane %v4520, 2
      %v4774 = vrot.slane %v4521, 2
      %v4775 = vsel %vm1787, %v4773, %v4774
      %v4776 = vrot.slane %v4522, 2
      %v4777 = vsel %vm1787, %v4774, %v4776
      %v4778 = vrot.slane %v4523, 2
      %v4779 = vsel %vm1787, %v4776, %v4778
      %v4780 = vrot.slane %v4524, 2
      %v4781 = vrot.slane %v4525, 2
      %v4782 = vsel %vm1787, %v4780, %v4781
      %v4783 = vrot.slane %v4526, 2
      %v4784 = vsel %vm1787, %v4781, %v4783
      %v4785 = vrot.slane %v4527, 2
      %v4786 = vsel %vm1787, %v4783, %v4785
      %v4787 = vrot.slane %v4528, 2
      %v4788 = vrot.slane %v4529, 2
      %v4789 = vsel %vm1787, %v4787, %v4788
      %v4790 = vrot.slane %v4530, 2
      %v4791 = vsel %vm1787, %v4788, %v4790
      %v4792 = vrot.slane %v4531, 2
      %v4793 = vsel %vm1787, %v4790, %v4792
      %v4794 = vrot.slane %v4532, 2
      %v4795 = vrot.slane %v4533, 2
      %v4796 = vsel %vm1787, %v4794, %v4795
      %v4797 = vrot.slane %v4534, 2
      %v4798 = vsel %vm1787, %v4795, %v4797
      %v4799 = vrot.slane %v4535, 2
      %v4800 = vsel %vm1787, %v4797, %v4799
      %v4801 = vrot.slane %v4536, 2
      %v4802 = vrot.slane %v4537, 2
      %v4803 = vsel %vm1787, %v4801, %v4802
      %v4804 = vrot.slane %v4538, 2
      %v4805 = vsel %vm1787, %v4802, %v4804
      %v4806 = vrot.slane %v4539, 2
      %v4807 = vsel %vm1787, %v4804, %v4806
      %v4808 = vrot.slane %v4540, 2
      %v4809 = vrot.slane %v4541, 2
      %v4810 = vsel %vm1787, %v4808, %v4809
      %v4811 = vrot.slane %v4542, 2
      %v4812 = vsel %vm1787, %v4809, %v4811
      %v4813 = vrot.slane %v4543, 2
      %v4814 = vsel %vm1787, %v4811, %v4813
      %v4815 = vrot.slane %v4544, 2
      %v4816 = vrot.slane %v4545, 2
      %v4817 = vsel %vm1787, %v4815, %v4816
      %v4818 = vrot.slane %v4546, 2
      %v4819 = vsel %vm1787, %v4816, %v4818
      %v4820 = vrot.slane %v4547, 2
      %v4821 = vsel %vm1787, %v4818, %v4820
      %v4822 = vrot.slane %v4548, 2
      %v4823 = vrot.slane %v4549, 2
      %v4824 = vsel %vm1787, %v4822, %v4823
      %v4825 = vrot.slane %v4550, 2
      %v4826 = vsel %vm1787, %v4823, %v4825
      %v4827 = vrot.slane %v4551, 2
      %v4828 = vsel %vm1787, %v4825, %v4827
      %v4829 = vrot.slane %v4552, 2
      %v4830 = vrot.slane %v4553, 2
      %v4831 = vsel %vm1787, %v4829, %v4830
      %v4832 = vrot.slane %v4554, 2
      %v4833 = vsel %vm1787, %v4830, %v4832
      %v4834 = vrot.slane %v4555, 2
      %v4835 = vsel %vm1787, %v4832, %v4834
      %v4836 = vrot.slane %v4556, 2
      %v4837 = vrot.slane %v4557, 2
      %v4838 = vsel %vm1787, %v4836, %v4837
      %v4839 = vrot.slane %v4558, 2
      %v4840 = vsel %vm1787, %v4837, %v4839
      %v4841 = vrot.slane %v4559, 2
      %v4842 = vsel %vm1787, %v4839, %v4841
      %v4843 = vrot.slane %v4560, 2
      %v4844 = vrot.slane %v4561, 2
      %v4845 = vsel %vm1787, %v4843, %v4844
      %v4846 = vrot.slane %v4562, 2
      %v4847 = vsel %vm1787, %v4844, %v4846
      %v4848 = vrot.slane %v4563, 2
      %v4849 = vsel %vm1787, %v4846, %v4848
      %v4954 = vadd.f32 %v4351, %v4670
      %v4955 = vadd.f32 %v4352, %v4672
      %v4956 = vadd.f32 %v4353, %v4674
      %v4957 = vadd.f32 %v4354, %v4673
      %v4958 = vadd.f32 %v4355, %v4677
      %v4959 = vadd.f32 %v4356, %v4679
      %v4960 = vadd.f32 %v4357, %v4681
      %v4961 = vadd.f32 %v4358, %v4680
      %v4962 = vadd.f32 %v4359, %v4684
      %v4963 = vadd.f32 %v4360, %v4686
      %v4964 = vadd.f32 %v4361, %v4688
      %v4965 = vadd.f32 %v4362, %v4687
      %v4966 = vadd.f32 %v4363, %v4691
      %v4967 = vadd.f32 %v4364, %v4693
      %v4968 = vadd.f32 %v4365, %v4695
      %v4969 = vadd.f32 %v4366, %v4694
      %v4970 = vadd.f32 %v4367, %v4698
      %v4971 = vadd.f32 %v4368, %v4700
      %v4972 = vadd.f32 %v4369, %v4702
      %v4973 = vadd.f32 %v4370, %v4701
      %v4974 = vadd.f32 %v4371, %v4705
      %v4975 = vadd.f32 %v4372, %v4707
      %v4976 = vadd.f32 %v4373, %v4709
      %v4977 = vadd.f32 %v4374, %v4708
      %v4978 = vadd.f32 %v4375, %v4712
      %v4979 = vadd.f32 %v4376, %v4714
      %v4980 = vadd.f32 %v4377, %v4716
      %v4981 = vadd.f32 %v4378, %v4715
      %v4982 = vadd.f32 %v4379, %v4719
      %v4983 = vadd.f32 %v4380, %v4721
      %v4984 = vadd.f32 %v4381, %v4723
      %v4985 = vadd.f32 %v4382, %v4722
      %v4986 = vadd.f32 %v4383, %v4726
      %v4987 = vadd.f32 %v4384, %v4728
      %v4988 = vadd.f32 %v4385, %v4730
      %v4989 = vadd.f32 %v4386, %v4729
      %v4990 = vadd.f32 %v4387, %v4733
      %v4991 = vadd.f32 %v4388, %v4735
      %v4992 = vadd.f32 %v4389, %v4737
      %v4993 = vadd.f32 %v4390, %v4736
      %v4994 = vadd.f32 %v4391, %v4740
      %v4995 = vadd.f32 %v4392, %v4742
      %v4996 = vadd.f32 %v4393, %v4744
      %v4997 = vadd.f32 %v4394, %v4743
      %v4998 = vadd.f32 %v4395, %v4747
      %v4999 = vadd.f32 %v4396, %v4749
      %v5000 = vadd.f32 %v4397, %v4751
      %v5001 = vadd.f32 %v4398, %v4750
      %v5002 = vadd.f32 %v4399, %v4754
      %v5003 = vadd.f32 %v4400, %v4756
      %v5004 = vadd.f32 %v4401, %v4758
      %v5005 = vadd.f32 %v4402, %v4757
      %v5006 = vadd.f32 %v4403, %v4761
      %v5007 = vadd.f32 %v4404, %v4763
      %v5008 = vadd.f32 %v4405, %v4765
      %v5009 = vadd.f32 %v4406, %v4764
      %v5010 = vadd.f32 %v4407, %v4768
      %v5011 = vadd.f32 %v4408, %v4770
      %v5012 = vadd.f32 %v4409, %v4772
      %v5013 = vadd.f32 %v4410, %v4771
      %v5014 = vadd.f32 %v4411, %v4775
      %v5015 = vadd.f32 %v4412, %v4777
      %v5016 = vadd.f32 %v4413, %v4779
      %v5017 = vadd.f32 %v4414, %v4778
      %v5018 = vadd.f32 %v4415, %v4782
      %v5019 = vadd.f32 %v4416, %v4784
      %v5020 = vadd.f32 %v4417, %v4786
      %v5021 = vadd.f32 %v4418, %v4785
      %v5022 = vadd.f32 %v4419, %v4789
      %v5023 = vadd.f32 %v4420, %v4791
      %v5024 = vadd.f32 %v4421, %v4793
      %v5025 = vadd.f32 %v4422, %v4792
      %v5026 = vadd.f32 %v4423, %v4796
      %v5027 = vadd.f32 %v4424, %v4798
      %v5028 = vadd.f32 %v4425, %v4800
      %v5029 = vadd.f32 %v4426, %v4799
      %v5030 = vadd.f32 %v4427, %v4803
      %v5031 = vadd.f32 %v4428, %v4805
      %v5032 = vadd.f32 %v4429, %v4807
      %v5033 = vadd.f32 %v4430, %v4806
      %v5034 = vadd.f32 %v4431, %v4810
      %v5035 = vadd.f32 %v4432, %v4812
      %v5036 = vadd.f32 %v4433, %v4814
      %v5037 = vadd.f32 %v4434, %v4813
      %v5038 = vadd.f32 %v4435, %v4817
      %v5039 = vadd.f32 %v4436, %v4819
      %v5040 = vadd.f32 %v4437, %v4821
      %v5041 = vadd.f32 %v4438, %v4820
      %v5042 = vadd.f32 %v4439, %v4824
      %v5043 = vadd.f32 %v4440, %v4826
      %v5044 = vadd.f32 %v4441, %v4828
      %v5045 = vadd.f32 %v4442, %v4827
      %v5046 = vadd.f32 %v4443, %v4831
      %v5047 = vadd.f32 %v4444, %v4833
      %v5048 = vadd.f32 %v4445, %v4835
      %v5049 = vadd.f32 %v4446, %v4834
      %v5050 = vadd.f32 %v4447, %v4838
      %v5051 = vadd.f32 %v4448, %v4840
      %v5052 = vadd.f32 %v4449, %v4842
      %v5053 = vadd.f32 %v4450, %v4841
      %v5054 = vadd.f32 %v4451, %v4845
      %v5055 = vadd.f32 %v4452, %v4847
      %v5056 = vadd.f32 %v4453, %v4849
      %v5057 = vadd.f32 %v4454, %v4848
      %v5058 = vld [vmem:[%s2] sm:$0x1]
      %v5060 = vlaneseq
      %v5061 = vshrl.u32 %v5060, 7
      %v5062 = vsub.s32 0, %v5061
      %v5063 = vrot.slane %v5058, %v5062
      %v5065 = vadd.f32 %v4954, %v5063
      %v5066 = vadd.f32 %v4955, %v5063
      %v5067 = vadd.f32 %v4956, %v5063
      %v5068 = vadd.f32 %v4957, %v5063
      %v5069 = vadd.f32 %v4958, %v5063
      %v5070 = vadd.f32 %v4959, %v5063
      %v5071 = vadd.f32 %v4960, %v5063
      %v5072 = vadd.f32 %v4961, %v5063
      %v5073 = vadd.f32 %v4962, %v5063
      %v5074 = vadd.f32 %v4963, %v5063
      %v5075 = vadd.f32 %v4964, %v5063
      %v5076 = vadd.f32 %v4965, %v5063
      %v5077 = vadd.f32 %v4966, %v5063
      %v5078 = vadd.f32 %v4967, %v5063
      %v5079 = vadd.f32 %v4968, %v5063
      %v5080 = vadd.f32 %v4969, %v5063
      %v5081 = vadd.f32 %v4970, %v5063
      %v5082 = vadd.f32 %v4971, %v5063
      %v5083 = vadd.f32 %v4972, %v5063
      %v5084 = vadd.f32 %v4973, %v5063
      %v5085 = vadd.f32 %v4974, %v5063
      %v5086 = vadd.f32 %v4975, %v5063
      %v5087 = vadd.f32 %v4976, %v5063
      %v5088 = vadd.f32 %v4977, %v5063
      %v5089 = vadd.f32 %v4978, %v5063
      %v5090 = vadd.f32 %v4979, %v5063
      %v5091 = vadd.f32 %v4980, %v5063
      %v5092 = vadd.f32 %v4981, %v5063
      %v5093 = vadd.f32 %v4982, %v5063
      %v5094 = vadd.f32 %v4983, %v5063
      %v5095 = vadd.f32 %v4984, %v5063
      %v5096 = vadd.f32 %v4985, %v5063
      %v5097 = vadd.f32 %v4986, %v5063
      %v5098 = vadd.f32 %v4987, %v5063
      %v5099 = vadd.f32 %v4988, %v5063
      %v5100 = vadd.f32 %v4989, %v5063
      %v5101 = vadd.f32 %v4990, %v5063
      %v5102 = vadd.f32 %v4991, %v5063
      %v5103 = vadd.f32 %v4992, %v5063
      %v5104 = vadd.f32 %v4993, %v5063
      %v5105 = vadd.f32 %v4994, %v5063
      %v5106 = vadd.f32 %v4995, %v5063
      %v5107 = vadd.f32 %v4996, %v5063
      %v5108 = vadd.f32 %v4997, %v5063
      %v5109 = vadd.f32 %v4998, %v5063
      %v5110 = vadd.f32 %v4999, %v5063
      %v5111 = vadd.f32 %v5000, %v5063
      %v5112 = vadd.f32 %v5001, %v5063
      %v5113 = vadd.f32 %v5002, %v5063
      %v5114 = vadd.f32 %v5003, %v5063
      %v5115 = vadd.f32 %v5004, %v5063
      %v5116 = vadd.f32 %v5005, %v5063
      %v5117 = vadd.f32 %v5006, %v5063
      %v5118 = vadd.f32 %v5007, %v5063
      %v5119 = vadd.f32 %v5008, %v5063
      %v5120 = vadd.f32 %v5009, %v5063
      %v5121 = vadd.f32 %v5010, %v5063
      %v5122 = vadd.f32 %v5011, %v5063
      %v5123 = vadd.f32 %v5012, %v5063
      %v5124 = vadd.f32 %v5013, %v5063
      %v5125 = vadd.f32 %v5014, %v5063
      %v5126 = vadd.f32 %v5015, %v5063
      %v5127 = vadd.f32 %v5016, %v5063
      %v5128 = vadd.f32 %v5017, %v5063
      %v5129 = vadd.f32 %v5018, %v5063
      %v5130 = vadd.f32 %v5019, %v5063
      %v5131 = vadd.f32 %v5020, %v5063
      %v5132 = vadd.f32 %v5021, %v5063
      %v5133 = vadd.f32 %v5022, %v5063
      %v5134 = vadd.f32 %v5023, %v5063
      %v5135 = vadd.f32 %v5024, %v5063
      %v5136 = vadd.f32 %v5025, %v5063
      %v5137 = vadd.f32 %v5026, %v5063
      %v5138 = vadd.f32 %v5027, %v5063
      %v5139 = vadd.f32 %v5028, %v5063
      %v5140 = vadd.f32 %v5029, %v5063
      %v5141 = vadd.f32 %v5030, %v5063
      %v5142 = vadd.f32 %v5031, %v5063
      %v5143 = vadd.f32 %v5032, %v5063
      %v5144 = vadd.f32 %v5033, %v5063
      %v5145 = vadd.f32 %v5034, %v5063
      %v5146 = vadd.f32 %v5035, %v5063
      %v5147 = vadd.f32 %v5036, %v5063
      %v5148 = vadd.f32 %v5037, %v5063
      %v5149 = vadd.f32 %v5038, %v5063
      %v5150 = vadd.f32 %v5039, %v5063
      %v5151 = vadd.f32 %v5040, %v5063
      %v5152 = vadd.f32 %v5041, %v5063
      %v5153 = vadd.f32 %v5042, %v5063
      %v5154 = vadd.f32 %v5043, %v5063
      %v5155 = vadd.f32 %v5044, %v5063
      %v5156 = vadd.f32 %v5045, %v5063
      %v5157 = vadd.f32 %v5046, %v5063
      %v5158 = vadd.f32 %v5047, %v5063
      %v5159 = vadd.f32 %v5048, %v5063
      %v5160 = vadd.f32 %v5049, %v5063
      %v5161 = vadd.f32 %v5050, %v5063
      %v5162 = vadd.f32 %v5051, %v5063
      %v5163 = vadd.f32 %v5052, %v5063
      %v5164 = vadd.f32 %v5053, %v5063
      %v5165 = vadd.f32 %v5054, %v5063
      %v5166 = vadd.f32 %v5055, %v5063
      %v5167 = vadd.f32 %v5056, %v5063
      %v5168 = vadd.f32 %v5057, %v5063
      %v5169 = vmax.f32 %v5065, 0.0
      %v5170 = vmax.f32 %v5066, 0.0
      %v5171 = vmax.f32 %v5067, 0.0
      %v5172 = vmax.f32 %v5068, 0.0
      %v5173 = vmax.f32 %v5069, 0.0
      %v5174 = vmax.f32 %v5070, 0.0
      %v5175 = vmax.f32 %v5071, 0.0
      %v5176 = vmax.f32 %v5072, 0.0
      %v5177 = vmax.f32 %v5073, 0.0
      %v5178 = vmax.f32 %v5074, 0.0
      %v5179 = vmax.f32 %v5075, 0.0
      %v5180 = vmax.f32 %v5076, 0.0
      %v5181 = vmax.f32 %v5077, 0.0
      %v5182 = vmax.f32 %v5078, 0.0
      %v5183 = vmax.f32 %v5079, 0.0
      %v5184 = vmax.f32 %v5080, 0.0
      %v5185 = vmax.f32 %v5081, 0.0
      %v5186 = vmax.f32 %v5082, 0.0
      %v5187 = vmax.f32 %v5083, 0.0
      %v5188 = vmax.f32 %v5084, 0.0
      %v5189 = vmax.f32 %v5085, 0.0
      %v5190 = vmax.f32 %v5086, 0.0
      %v5191 = vmax.f32 %v5087, 0.0
      %v5192 = vmax.f32 %v5088, 0.0
      %v5193 = vmax.f32 %v5089, 0.0
      %v5194 = vmax.f32 %v5090, 0.0
      %v5195 = vmax.f32 %v5091, 0.0
      %v5196 = vmax.f32 %v5092, 0.0
      %v5197 = vmax.f32 %v5093, 0.0
      %v5198 = vmax.f32 %v5094, 0.0
      %v5199 = vmax.f32 %v5095, 0.0
      %v5200 = vmax.f32 %v5096, 0.0
      %v5201 = vmax.f32 %v5097, 0.0
      %v5202 = vmax.f32 %v5098, 0.0
      %v5203 = vmax.f32 %v5099, 0.0
      %v5204 = vmax.f32 %v5100, 0.0
      %v5205 = vmax.f32 %v5101, 0.0
      %v5206 = vmax.f32 %v5102, 0.0
      %v5207 = vmax.f32 %v5103, 0.0
      %v5208 = vmax.f32 %v5104, 0.0
      %v5209 = vmax.f32 %v5105, 0.0
      %v5210 = vmax.f32 %v5106, 0.0
      %v5211 = vmax.f32 %v5107, 0.0
      %v5212 = vmax.f32 %v5108, 0.0
      %v5213 = vmax.f32 %v5109, 0.0
      %v5214 = vmax.f32 %v5110, 0.0
      %v5215 = vmax.f32 %v5111, 0.0
      %v5216 = vmax.f32 %v5112, 0.0
      %v5217 = vmax.f32 %v5113, 0.0
      %v5218 = vmax.f32 %v5114, 0.0
      %v5219 = vmax.f32 %v5115, 0.0
      %v5220 = vmax.f32 %v5116, 0.0
      %v5221 = vmax.f32 %v5117, 0.0
      %v5222 = vmax.f32 %v5118, 0.0
      %v5223 = vmax.f32 %v5119, 0.0
      %v5224 = vmax.f32 %v5120, 0.0
      %v5225 = vmax.f32 %v5121, 0.0
      %v5226 = vmax.f32 %v5122, 0.0
      %v5227 = vmax.f32 %v5123, 0.0
      %v5228 = vmax.f32 %v5124, 0.0
      %v5229 = vmax.f32 %v5125, 0.0
      %v5230 = vmax.f32 %v5126, 0.0
      %v5231 = vmax.f32 %v5127, 0.0
      %v5232 = vmax.f32 %v5128, 0.0
      %v5233 = vmax.f32 %v5129, 0.0
      %v5234 = vmax.f32 %v5130, 0.0
      %v5235 = vmax.f32 %v5131, 0.0
      %v5236 = vmax.f32 %v5132, 0.0
      %v5237 = vmax.f32 %v5133, 0.0
      %v5238 = vmax.f32 %v5134, 0.0
      %v5239 = vmax.f32 %v5135, 0.0
      %v5240 = vmax.f32 %v5136, 0.0
      %v5241 = vmax.f32 %v5137, 0.0
      %v5242 = vmax.f32 %v5138, 0.0
      %v5243 = vmax.f32 %v5139, 0.0
      %v5244 = vmax.f32 %v5140, 0.0
      %v5245 = vmax.f32 %v5141, 0.0
      %v5246 = vmax.f32 %v5142, 0.0
      %v5247 = vmax.f32 %v5143, 0.0
      %v5248 = vmax.f32 %v5144, 0.0
      %v5249 = vmax.f32 %v5145, 0.0
      %v5250 = vmax.f32 %v5146, 0.0
      %v5251 = vmax.f32 %v5147, 0.0
      %v5252 = vmax.f32 %v5148, 0.0
      %v5253 = vmax.f32 %v5149, 0.0
      %v5254 = vmax.f32 %v5150, 0.0
      %v5255 = vmax.f32 %v5151, 0.0
      %v5256 = vmax.f32 %v5152, 0.0
      %v5257 = vmax.f32 %v5153, 0.0
      %v5258 = vmax.f32 %v5154, 0.0
      %v5259 = vmax.f32 %v5155, 0.0
      %v5260 = vmax.f32 %v5156, 0.0
      %v5261 = vmax.f32 %v5157, 0.0
      %v5262 = vmax.f32 %v5158, 0.0
      %v5263 = vmax.f32 %v5159, 0.0
      %v5264 = vmax.f32 %v5160, 0.0
      %v5265 = vmax.f32 %v5161, 0.0
      %v5266 = vmax.f32 %v5162, 0.0
      %v5267 = vmax.f32 %v5163, 0.0
      %v5268 = vmax.f32 %v5164, 0.0
      %v5269 = vmax.f32 %v5165, 0.0
      %v5270 = vmax.f32 %v5166, 0.0
      %v5271 = vmax.f32 %v5167, 0.0
      %v5272 = vmax.f32 %v5168, 0.0
      %v5273 = vpack.c.bf16 %v5170, %v5169
      %v5274 = vpack.c.bf16 %v5172, %v5171
      %v5275 = vpack.c.bf16 %v5174, %v5173
      %v5276 = vpack.c.bf16 %v5176, %v5175
      %v5277 = vpack.c.bf16 %v5178, %v5177
      %v5278 = vpack.c.bf16 %v5180, %v5179
      %v5279 = vpack.c.bf16 %v5182, %v5181
      %v5280 = vpack.c.bf16 %v5184, %v5183
      %v5281 = vpack.c.bf16 %v5186, %v5185
      %v5282 = vpack.c.bf16 %v5188, %v5187
      %v5283 = vpack.c.bf16 %v5190, %v5189
      %v5284 = vpack.c.bf16 %v5192, %v5191
      %v5285 = vpack.c.bf16 %v5194, %v5193
      %v5286 = vpack.c.bf16 %v5196, %v5195
      %v5287 = vpack.c.bf16 %v5198, %v5197
      %v5288 = vpack.c.bf16 %v5200, %v5199
      %v5289 = vpack.c.bf16 %v5202, %v5201
      %v5290 = vpack.c.bf16 %v5204, %v5203
      %v5291 = vpack.c.bf16 %v5206, %v5205
      %v5292 = vpack.c.bf16 %v5208, %v5207
      %v5293 = vpack.c.bf16 %v5210, %v5209
      %v5294 = vpack.c.bf16 %v5212, %v5211
      %v5295 = vpack.c.bf16 %v5214, %v5213
      %v5296 = vpack.c.bf16 %v5216, %v5215
      %v5297 = vpack.c.bf16 %v5218, %v5217
      %v5298 = vpack.c.bf16 %v5220, %v5219
      %v5299 = vpack.c.bf16 %v5222, %v5221
      %v5300 = vpack.c.bf16 %v5224, %v5223
      %v5301 = vpack.c.bf16 %v5226, %v5225
      %v5302 = vpack.c.bf16 %v5228, %v5227
      %v5303 = vpack.c.bf16 %v5230, %v5229
      %v5304 = vpack.c.bf16 %v5232, %v5231
      %v5305 = vpack.c.bf16 %v5234, %v5233
      %v5306 = vpack.c.bf16 %v5236, %v5235
      %v5307 = vpack.c.bf16 %v5238, %v5237
      %v5308 = vpack.c.bf16 %v5240, %v5239
      %v5309 = vpack.c.bf16 %v5242, %v5241
      %v5310 = vpack.c.bf16 %v5244, %v5243
      %v5311 = vpack.c.bf16 %v5246, %v5245
      %v5312 = vpack.c.bf16 %v5248, %v5247
      %v5313 = vpack.c.bf16 %v5250, %v5249
      %v5314 = vpack.c.bf16 %v5252, %v5251
      %v5315 = vpack.c.bf16 %v5254, %v5253
      %v5316 = vpack.c.bf16 %v5256, %v5255
      %v5317 = vpack.c.bf16 %v5258, %v5257
      %v5318 = vpack.c.bf16 %v5260, %v5259
      %v5319 = vpack.c.bf16 %v5262, %v5261
      %v5320 = vpack.c.bf16 %v5264, %v5263
      %v5321 = vpack.c.bf16 %v5266, %v5265
      %v5322 = vpack.c.bf16 %v5268, %v5267
      %v5323 = vpack.c.bf16 %v5270, %v5269
      %v5324 = vpack.c.bf16 %v5272, %v5271
      %v5325 = vld [vmem:[%s3] sm:$0xf]
      %v5326 = vld [vmem:[%s3 + $0x4] sm:$0xf]
      %v5327 = vld [vmem:[%s3 + $0x8] sm:$0xf]
      %v5328 = vld [vmem:[%s3 + $0xc] sm:$0xf]
      %v5329 = vld [vmem:[%s3 + $0x10] sm:$0xf]
      %v5330 = vld [vmem:[%s3 + $0x14] sm:$0xf]
      %v5331 = vld [vmem:[%s3 + $0x18] sm:$0xf]
      %v5332 = vld [vmem:[%s3 + $0x1c] sm:$0xf]
      %v5333 = vld [vmem:[%s3 + $0x20] sm:$0xf]
      %v5334 = vld [vmem:[%s3 + $0x24] sm:$0xf]
      %v5335 = vld [vmem:[%s3 + $0x28] sm:$0xf]
      %v5336 = vld [vmem:[%s3 + $0x2c] sm:$0xf]
      %v5337 = vld [vmem:[%s3 + $0x30] sm:$0xf]
      %v5338 = vld [vmem:[%s3 + $0x34] sm:$0xf]
      %v5339 = vld [vmem:[%s3 + $0x38] sm:$0xf]
      %v5340 = vld [vmem:[%s3 + $0x3c] sm:$0xf]
      %v5341 = vld [vmem:[%s3 + $0x40] sm:$0xf]
      %v5342 = vld [vmem:[%s3 + $0x44] sm:$0xf]
      %v5343 = vld [vmem:[%s3 + $0x48] sm:$0xf]
      %v5344 = vld [vmem:[%s3 + $0x4c] sm:$0xf]
      %v5345 = vld [vmem:[%s3 + $0x50] sm:$0xf]
      %v5346 = vld [vmem:[%s3 + $0x54] sm:$0xf]
      %v5347 = vld [vmem:[%s3 + $0x58] sm:$0xf]
      %v5348 = vld [vmem:[%s3 + $0x5c] sm:$0xf]
      %v5349 = vld [vmem:[%s3 + $0x60] sm:$0xf]
      %v5350 = vld [vmem:[%s3 + $0x64] sm:$0xf]
      %v5351 = vld [vmem:[%s3 + $0x68] sm:$0xf]
      %v5352 = vld [vmem:[%s3 + $0x6c] sm:$0xf]
      %v5353 = vld [vmem:[%s3 + $0x70] sm:$0xf]
      %v5354 = vld [vmem:[%s3 + $0x74] sm:$0xf]
      %v5355 = vld [vmem:[%s3 + $0x78] sm:$0xf]
      %v5356 = vld [vmem:[%s3 + $0x7c] sm:$0xf]
      %v5357 = vld [vmem:[%s3 + $0x80] sm:$0xf]
      %v5358 = vld [vmem:[%s3 + $0x84] sm:$0xf]
      %v5359 = vld [vmem:[%s3 + $0x88] sm:$0xf]
      %v5360 = vld [vmem:[%s3 + $0x8c] sm:$0xf]
      %v5409 = vunpack.c.l.b16 %v5273
      %v5410 = vunpack.c.h.b16 %v5273
      %v5411 = vunpack.c.l.b16 %v5274
      %v5412 = vunpack.c.l.b16 %v5275
      %v5413 = vunpack.c.h.b16 %v5275
      %v5414 = vunpack.c.l.b16 %v5276
      %v5415 = vunpack.c.l.b16 %v5277
      %v5416 = vunpack.c.h.b16 %v5277
      %v5417 = vunpack.c.l.b16 %v5278
      %v5418 = vunpack.c.l.b16 %v5279
      %v5419 = vunpack.c.h.b16 %v5279
      %v5420 = vunpack.c.l.b16 %v5280
      %v5421 = vunpack.c.l.b16 %v5281
      %v5422 = vunpack.c.h.b16 %v5281
      %v5423 = vunpack.c.l.b16 %v5282
      %v5424 = vunpack.c.l.b16 %v5283
      %v5425 = vunpack.c.h.b16 %v5283
      %v5426 = vunpack.c.l.b16 %v5284
      %v5427 = vunpack.c.l.b16 %v5285
      %v5428 = vunpack.c.h.b16 %v5285
      %v5429 = vunpack.c.l.b16 %v5286
      %v5430 = vunpack.c.l.b16 %v5287
      %v5431 = vunpack.c.h.b16 %v5287
      %v5432 = vunpack.c.l.b16 %v5288
      %v5433 = vunpack.c.l.b16 %v5289
      %v5434 = vunpack.c.h.b16 %v5289
      %v5435 = vunpack.c.l.b16 %v5290
      %v5436 = vunpack.c.l.b16 %v5291
      %v5437 = vunpack.c.h.b16 %v5291
      %v5438 = vunpack.c.l.b16 %v5292
      %v5439 = vunpack.c.l.b16 %v5293
      %v5440 = vunpack.c.h.b16 %v5293
      %v5441 = vunpack.c.l.b16 %v5294
      %v5442 = vunpack.c.l.b16 %v5295
      %v5443 = vunpack.c.h.b16 %v5295
      %v5444 = vunpack.c.l.b16 %v5296
      %v5445 = vunpack.c.l.b16 %v5297
      %v5446 = vunpack.c.h.b16 %v5297
      %v5447 = vunpack.c.l.b16 %v5298
      %v5448 = vunpack.c.l.b16 %v5299
      %v5449 = vunpack.c.h.b16 %v5299
      %v5450 = vunpack.c.l.b16 %v5300
      %v5451 = vunpack.c.l.b16 %v5301
      %v5452 = vunpack.c.h.b16 %v5301
      %v5453 = vunpack.c.l.b16 %v5302
      %v5454 = vunpack.c.l.b16 %v5303
      %v5455 = vunpack.c.h.b16 %v5303
      %v5456 = vunpack.c.l.b16 %v5304
      %v5457 = vunpack.c.l.b16 %v5305
      %v5458 = vunpack.c.h.b16 %v5305
      %v5459 = vunpack.c.l.b16 %v5306
      %v5460 = vunpack.c.l.b16 %v5307
      %v5461 = vunpack.c.h.b16 %v5307
      %v5462 = vunpack.c.l.b16 %v5308
      %v5463 = vunpack.c.l.b16 %v5309
      %v5464 = vunpack.c.h.b16 %v5309
      %v5465 = vunpack.c.l.b16 %v5310
      %v5466 = vunpack.c.l.b16 %v5311
      %v5467 = vunpack.c.h.b16 %v5311
      %v5468 = vunpack.c.l.b16 %v5312
      %v5469 = vunpack.c.l.b16 %v5313
      %v5470 = vunpack.c.h.b16 %v5313
      %v5471 = vunpack.c.l.b16 %v5314
      %v5472 = vunpack.c.l.b16 %v5315
      %v5473 = vunpack.c.h.b16 %v5315
      %v5474 = vunpack.c.l.b16 %v5316
      %v5475 = vunpack.c.l.b16 %v5317
      %v5476 = vunpack.c.h.b16 %v5317
      %v5477 = vunpack.c.l.b16 %v5318
      %v5478 = vunpack.c.l.b16 %v5319
      %v5479 = vunpack.c.h.b16 %v5319
      %v5480 = vunpack.c.l.b16 %v5320
      %v5481 = vunpack.c.h.b16 %v5274
      %v5482 = vunpack.c.h.b16 %v5276
      %v5483 = vunpack.c.h.b16 %v5278
      %v5484 = vunpack.c.h.b16 %v5280
      %v5485 = vunpack.c.h.b16 %v5282
      %v5486 = vunpack.c.h.b16 %v5284
      %v5487 = vunpack.c.h.b16 %v5286
      %v5488 = vunpack.c.h.b16 %v5288
      %v5489 = vunpack.c.h.b16 %v5290
      %v5490 = vunpack.c.h.b16 %v5292
      %v5491 = vunpack.c.h.b16 %v5294
      %v5492 = vunpack.c.h.b16 %v5296
      %v5493 = vunpack.c.h.b16 %v5298
      %v5494 = vunpack.c.h.b16 %v5300
      %v5495 = vunpack.c.h.b16 %v5302
      %v5496 = vunpack.c.h.b16 %v5304
      %v5497 = vunpack.c.h.b16 %v5306
      %v5498 = vunpack.c.h.b16 %v5308
      %v5499 = vunpack.c.h.b16 %v5310
      %v5500 = vunpack.c.h.b16 %v5312
      %v5501 = vunpack.c.h.b16 %v5314
      %v5502 = vunpack.c.h.b16 %v5316
      %v5503 = vunpack.c.h.b16 %v5318
      %v5504 = vunpack.c.h.b16 %v5320
      %v5505 = vpack.c.b16 %v5409, %v5409
      %v5506 = vpack.c.b16 %v5410, %v5410
      %v5507 = vpack.c.b16 %v5411, %v5411
      %v5508 = vpack.c.b16 %v5481, %v5481
      %v5509 = vpack.c.b16 %v5412, %v5412
      %v5510 = vpack.c.b16 %v5413, %v5413
      %v5511 = vpack.c.b16 %v5414, %v5414
      %v5512 = vpack.c.b16 %v5482, %v5482
      %v5513 = vpack.c.b16 %v5415, %v5415
      %v5514 = vpack.c.b16 %v5416, %v5416
      %v5515 = vpack.c.b16 %v5417, %v5417
      %v5516 = vpack.c.b16 %v5483, %v5483
      %v5517 = vpack.c.b16 %v5418, %v5418
      %v5518 = vpack.c.b16 %v5419, %v5419
      %v5519 = vpack.c.b16 %v5420, %v5420
      %v5520 = vpack.c.b16 %v5484, %v5484
      %v5521 = vpack.c.b16 %v5421, %v5421
      %v5522 = vpack.c.b16 %v5422, %v5422
      %v5523 = vpack.c.b16 %v5423, %v5423
      %v5524 = vpack.c.b16 %v5485, %v5485
      %v5525 = vpack.c.b16 %v5424, %v5424
      %v5526 = vpack.c.b16 %v5425, %v5425
      %v5527 = vpack.c.b16 %v5426, %v5426
      %v5528 = vpack.c.b16 %v5486, %v5486
      %v5529 = vpack.c.b16 %v5427, %v5427
      %v5530 = vpack.c.b16 %v5428, %v5428
      %v5531 = vpack.c.b16 %v5429, %v5429
      %v5532 = vpack.c.b16 %v5487, %v5487
      %v5533 = vpack.c.b16 %v5430, %v5430
      %v5534 = vpack.c.b16 %v5431, %v5431
      %v5535 = vpack.c.b16 %v5432, %v5432
      %v5536 = vpack.c.b16 %v5488, %v5488
      %v5537 = vpack.c.b16 %v5433, %v5433
      %v5538 = vpack.c.b16 %v5434, %v5434
      %v5539 = vpack.c.b16 %v5435, %v5435
      %v5540 = vpack.c.b16 %v5489, %v5489
      %v5541 = vpack.c.b16 %v5436, %v5436
      %v5542 = vpack.c.b16 %v5437, %v5437
      %v5543 = vpack.c.b16 %v5438, %v5438
      %v5544 = vpack.c.b16 %v5490, %v5490
      %v5545 = vpack.c.b16 %v5439, %v5439
      %v5546 = vpack.c.b16 %v5440, %v5440
      %v5547 = vpack.c.b16 %v5441, %v5441
      %v5548 = vpack.c.b16 %v5491, %v5491
      %v5549 = vpack.c.b16 %v5442, %v5442
      %v5550 = vpack.c.b16 %v5443, %v5443
      %v5551 = vpack.c.b16 %v5444, %v5444
      %v5552 = vpack.c.b16 %v5492, %v5492
      %v5553 = vpack.c.b16 %v5445, %v5445
      %v5554 = vpack.c.b16 %v5446, %v5446
      %v5555 = vpack.c.b16 %v5447, %v5447
      %v5556 = vpack.c.b16 %v5493, %v5493
      %v5557 = vpack.c.b16 %v5448, %v5448
      %v5558 = vpack.c.b16 %v5449, %v5449
      %v5559 = vpack.c.b16 %v5450, %v5450
      %v5560 = vpack.c.b16 %v5494, %v5494
      %v5561 = vpack.c.b16 %v5451, %v5451
      %v5562 = vpack.c.b16 %v5452, %v5452
      %v5563 = vpack.c.b16 %v5453, %v5453
      %v5564 = vpack.c.b16 %v5495, %v5495
      %v5565 = vpack.c.b16 %v5454, %v5454
      %v5566 = vpack.c.b16 %v5455, %v5455
      %v5567 = vpack.c.b16 %v5456, %v5456
      %v5568 = vpack.c.b16 %v5496, %v5496
      %v5569 = vpack.c.b16 %v5457, %v5457
      %v5570 = vpack.c.b16 %v5458, %v5458
      %v5571 = vpack.c.b16 %v5459, %v5459
      %v5572 = vpack.c.b16 %v5497, %v5497
      %v5573 = vpack.c.b16 %v5460, %v5460
      %v5574 = vpack.c.b16 %v5461, %v5461
      %v5575 = vpack.c.b16 %v5462, %v5462
      %v5576 = vpack.c.b16 %v5498, %v5498
      %v5577 = vpack.c.b16 %v5463, %v5463
      %v5578 = vpack.c.b16 %v5464, %v5464
      %v5579 = vpack.c.b16 %v5465, %v5465
      %v5580 = vpack.c.b16 %v5499, %v5499
      %v5581 = vpack.c.b16 %v5466, %v5466
      %v5582 = vpack.c.b16 %v5467, %v5467
      %v5583 = vpack.c.b16 %v5468, %v5468
      %v5584 = vpack.c.b16 %v5500, %v5500
      %v5585 = vpack.c.b16 %v5469, %v5469
      %v5586 = vpack.c.b16 %v5470, %v5470
      %v5587 = vpack.c.b16 %v5471, %v5471
      %v5588 = vpack.c.b16 %v5501, %v5501
      %v5589 = vpack.c.b16 %v5472, %v5472
      %v5590 = vpack.c.b16 %v5473, %v5473
      %v5591 = vpack.c.b16 %v5474, %v5474
      %v5592 = vpack.c.b16 %v5502, %v5502
      %v5593 = vpack.c.b16 %v5475, %v5475
      %v5594 = vpack.c.b16 %v5476, %v5476
      %v5595 = vpack.c.b16 %v5477, %v5477
      %v5596 = vpack.c.b16 %v5503, %v5503
      %v5597 = vpack.c.b16 %v5478, %v5478
      %v5598 = vpack.c.b16 %v5479, %v5479
      %v5599 = vpack.c.b16 %v5480, %v5480
      %v5600 = vpack.c.b16 %v5504, %v5504
      %vm5601 = vsmask.f32 3328
      %vm5602 = vsmask.f32 7440
      %vm5603 = vmor %vm5601, %vm5602
      %v5605 = vshrl.u32 %v5505, 16
      %v5607 = vrot.slane %v5605, 4
      %v5608 = vshll.u32 %v5505, 16
      %v5610 = vrot.slane %v5608, 5
      %v5611 = vor.u32 %v5607, %v5610
      %v5612 = vrot.slane %v5611, 4
      %v5614 = vshll.u32 %v5506, 16
      %v5616 = vrot.slane %v5614, 5
      %v5617 = vsel %vm5603, %v5612, %v5616
      %v5618 = vshrl.u32 %v5506, 16
      %v5620 = vrot.slane %v5618, 4
      %v5621 = vor.u32 %v5620, %v5616
      %v5622 = vrot.slane %v5621, 4
      %v5624 = vshll.u32 %v5507, 16
      %v5626 = vrot.slane %v5624, 5
      %v5627 = vsel %vm5603, %v5622, %v5626
      %v5628 = vshrl.u32 %v5507, 16
      %v5630 = vrot.slane %v5628, 4
      %v5631 = vor.u32 %v5630, %v5626
      %v5632 = vrot.slane %v5631, 4
      %v5634 = vshll.u32 %v5508, 16
      %v5636 = vrot.slane %v5634, 5
      %v5637 = vsel %vm5603, %v5632, %v5636
      %v5639 = vshrl.u32 %v5509, 16
      %v5641 = vrot.slane %v5639, 4
      %v5642 = vshll.u32 %v5509, 16
      %v5644 = vrot.slane %v5642, 5
      %v5645 = vor.u32 %v5641, %v5644
      %v5646 = vrot.slane %v5645, 4
      %v5648 = vshll.u32 %v5510, 16
      %v5650 = vrot.slane %v5648, 5
      %v5651 = vsel %vm5603, %v5646, %v5650
      %v5652 = vshrl.u32 %v5510, 16
      %v5654 = vrot.slane %v5652, 4
      %v5655 = vor.u32 %v5654, %v5650
      %v5656 = vrot.slane %v5655, 4
      %v5658 = vshll.u32 %v5511, 16
      %v5660 = vrot.slane %v5658, 5
      %v5661 = vsel %vm5603, %v5656, %v5660
      %v5662 = vshrl.u32 %v5511, 16
      %v5664 = vrot.slane %v5662, 4
      %v5665 = vor.u32 %v5664, %v5660
      %v5666 = vrot.slane %v5665, 4
      %v5668 = vshll.u32 %v5512, 16
      %v5670 = vrot.slane %v5668, 5
      %v5671 = vsel %vm5603, %v5666, %v5670
      %v5673 = vshrl.u32 %v5513, 16
      %v5675 = vrot.slane %v5673, 4
      %v5676 = vshll.u32 %v5513, 16
      %v5678 = vrot.slane %v5676, 5
      %v5679 = vor.u32 %v5675, %v5678
      %v5680 = vrot.slane %v5679, 4
      %v5682 = vshll.u32 %v5514, 16
      %v5684 = vrot.slane %v5682, 5
      %v5685 = vsel %vm5603, %v5680, %v5684
      %v5686 = vshrl.u32 %v5514, 16
      %v5688 = vrot.slane %v5686, 4
      %v5689 = vor.u32 %v5688, %v5684
      %v5690 = vrot.slane %v5689, 4
      %v5692 = vshll.u32 %v5515, 16
      %v5694 = vrot.slane %v5692, 5
      %v5695 = vsel %vm5603, %v5690, %v5694
      %v5696 = vshrl.u32 %v5515, 16
      %v5698 = vrot.slane %v5696, 4
      %v5699 = vor.u32 %v5698, %v5694
      %v5700 = vrot.slane %v5699, 4
      %v5702 = vshll.u32 %v5516, 16
      %v5704 = vrot.slane %v5702, 5
      %v5705 = vsel %vm5603, %v5700, %v5704
      %v5707 = vshrl.u32 %v5517, 16
      %v5709 = vrot.slane %v5707, 4
      %v5710 = vshll.u32 %v5517, 16
      %v5712 = vrot.slane %v5710, 5
      %v5713 = vor.u32 %v5709, %v5712
      %v5714 = vrot.slane %v5713, 4
      %v5716 = vshll.u32 %v5518, 16
      %v5718 = vrot.slane %v5716, 5
      %v5719 = vsel %vm5603, %v5714, %v5718
      %v5720 = vshrl.u32 %v5518, 16
      %v5722 = vrot.slane %v5720, 4
      %v5723 = vor.u32 %v5722, %v5718
      %v5724 = vrot.slane %v5723, 4
      %v5726 = vshll.u32 %v5519, 16
      %v5728 = vrot.slane %v5726, 5
      %v5729 = vsel %vm5603, %v5724, %v5728
      %v5730 = vshrl.u32 %v5519, 16
      %v5732 = vrot.slane %v5730, 4
      %v5733 = vor.u32 %v5732, %v5728
      %v5734 = vrot.slane %v5733, 4
      %v5736 = vshll.u32 %v5520, 16
      %v5738 = vrot.slane %v5736, 5
      %v5739 = vsel %vm5603, %v5734, %v5738
      %v5741 = vshrl.u32 %v5521, 16
      %v5743 = vrot.slane %v5741, 4
      %v5744 = vshll.u32 %v5521, 16
      %v5746 = vrot.slane %v5744, 5
      %v5747 = vor.u32 %v5743, %v5746
      %v5748 = vrot.slane %v5747, 4
      %v5750 = vshll.u32 %v5522, 16
      %v5752 = vrot.slane %v5750, 5
      %v5753 = vsel %vm5603, %v5748, %v5752
      %v5754 = vshrl.u32 %v5522, 16
      %v5756 = vrot.slane %v5754, 4
      %v5757 = vor.u32 %v5756, %v5752
      %v5758 = vrot.slane %v5757, 4
      %v5760 = vshll.u32 %v5523, 16
      %v5762 = vrot.slane %v5760, 5
      %v5763 = vsel %vm5603, %v5758, %v5762
      %v5764 = vshrl.u32 %v5523, 16
      %v5766 = vrot.slane %v5764, 4
      %v5767 = vor.u32 %v5766, %v5762
      %v5768 = vrot.slane %v5767, 4
      %v5770 = vshll.u32 %v5524, 16
      %v5772 = vrot.slane %v5770, 5
      %v5773 = vsel %vm5603, %v5768, %v5772
      %v5775 = vshrl.u32 %v5525, 16
      %v5777 = vrot.slane %v5775, 4
      %v5778 = vshll.u32 %v5525, 16
      %v5780 = vrot.slane %v5778, 5
      %v5781 = vor.u32 %v5777, %v5780
      %v5782 = vrot.slane %v5781, 4
      %v5784 = vshll.u32 %v5526, 16
      %v5786 = vrot.slane %v5784, 5
      %v5787 = vsel %vm5603, %v5782, %v5786
      %v5788 = vshrl.u32 %v5526, 16
      %v5790 = vrot.slane %v5788, 4
      %v5791 = vor.u32 %v5790, %v5786
      %v5792 = vrot.slane %v5791, 4
      %v5794 = vshll.u32 %v5527, 16
      %v5796 = vrot.slane %v5794, 5
      %v5797 = vsel %vm5603, %v5792, %v5796
      %v5798 = vshrl.u32 %v5527, 16
      %v5800 = vrot.slane %v5798, 4
      %v5801 = vor.u32 %v5800, %v5796
      %v5802 = vrot.slane %v5801, 4
      %v5804 = vshll.u32 %v5528, 16
      %v5806 = vrot.slane %v5804, 5
      %v5807 = vsel %vm5603, %v5802, %v5806
      %v5809 = vshrl.u32 %v5529, 16
      %v5811 = vrot.slane %v5809, 4
      %v5812 = vshll.u32 %v5529, 16
      %v5814 = vrot.slane %v5812, 5
      %v5815 = vor.u32 %v5811, %v5814
      %v5816 = vrot.slane %v5815, 4
      %v5818 = vshll.u32 %v5530, 16
      %v5820 = vrot.slane %v5818, 5
      %v5821 = vsel %vm5603, %v5816, %v5820
      %v5822 = vshrl.u32 %v5530, 16
      %v5824 = vrot.slane %v5822, 4
      %v5825 = vor.u32 %v5824, %v5820
      %v5826 = vrot.slane %v5825, 4
      %v5828 = vshll.u32 %v5531, 16
      %v5830 = vrot.slane %v5828, 5
      %v5831 = vsel %vm5603, %v5826, %v5830
      %v5832 = vshrl.u32 %v5531, 16
      %v5834 = vrot.slane %v5832, 4
      %v5835 = vor.u32 %v5834, %v5830
      %v5836 = vrot.slane %v5835, 4
      %v5838 = vshll.u32 %v5532, 16
      %v5840 = vrot.slane %v5838, 5
      %v5841 = vsel %vm5603, %v5836, %v5840
      %v5843 = vshrl.u32 %v5533, 16
      %v5845 = vrot.slane %v5843, 4
      %v5846 = vshll.u32 %v5533, 16
      %v5848 = vrot.slane %v5846, 5
      %v5849 = vor.u32 %v5845, %v5848
      %v5850 = vrot.slane %v5849, 4
      %v5852 = vshll.u32 %v5534, 16
      %v5854 = vrot.slane %v5852, 5
      %v5855 = vsel %vm5603, %v5850, %v5854
      %v5856 = vshrl.u32 %v5534, 16
      %v5858 = vrot.slane %v5856, 4
      %v5859 = vor.u32 %v5858, %v5854
      %v5860 = vrot.slane %v5859, 4
      %v5862 = vshll.u32 %v5535, 16
      %v5864 = vrot.slane %v5862, 5
      %v5865 = vsel %vm5603, %v5860, %v5864
      %v5866 = vshrl.u32 %v5535, 16
      %v5868 = vrot.slane %v5866, 4
      %v5869 = vor.u32 %v5868, %v5864
      %v5870 = vrot.slane %v5869, 4
      %v5872 = vshll.u32 %v5536, 16
      %v5874 = vrot.slane %v5872, 5
      %v5875 = vsel %vm5603, %v5870, %v5874
      %v5877 = vshrl.u32 %v5537, 16
      %v5879 = vrot.slane %v5877, 4
      %v5880 = vshll.u32 %v5537, 16
      %v5882 = vrot.slane %v5880, 5
      %v5883 = vor.u32 %v5879, %v5882
      %v5884 = vrot.slane %v5883, 4
      %v5886 = vshll.u32 %v5538, 16
      %v5888 = vrot.slane %v5886, 5
      %v5889 = vsel %vm5603, %v5884, %v5888
      %v5890 = vshrl.u32 %v5538, 16
      %v5892 = vrot.slane %v5890, 4
      %v5893 = vor.u32 %v5892, %v5888
      %v5894 = vrot.slane %v5893, 4
      %v5896 = vshll.u32 %v5539, 16
      %v5898 = vrot.slane %v5896, 5
      %v5899 = vsel %vm5603, %v5894, %v5898
      %v5900 = vshrl.u32 %v5539, 16
      %v5902 = vrot.slane %v5900, 4
      %v5903 = vor.u32 %v5902, %v5898
      %v5904 = vrot.slane %v5903, 4
      %v5906 = vshll.u32 %v5540, 16
      %v5908 = vrot.slane %v5906, 5
      %v5909 = vsel %vm5603, %v5904, %v5908
      %v5911 = vshrl.u32 %v5541, 16
      %v5913 = vrot.slane %v5911, 4
      %v5914 = vshll.u32 %v5541, 16
      %v5916 = vrot.slane %v5914, 5
      %v5917 = vor.u32 %v5913, %v5916
      %v5918 = vrot.slane %v5917, 4
      %v5920 = vshll.u32 %v5542, 16
      %v5922 = vrot.slane %v5920, 5
      %v5923 = vsel %vm5603, %v5918, %v5922
      %v5924 = vshrl.u32 %v5542, 16
      %v5926 = vrot.slane %v5924, 4
      %v5927 = vor.u32 %v5926, %v5922
      %v5928 = vrot.slane %v5927, 4
      %v5930 = vshll.u32 %v5543, 16
      %v5932 = vrot.slane %v5930, 5
      %v5933 = vsel %vm5603, %v5928, %v5932
      %v5934 = vshrl.u32 %v5543, 16
      %v5936 = vrot.slane %v5934, 4
      %v5937 = vor.u32 %v5936, %v5932
      %v5938 = vrot.slane %v5937, 4
      %v5940 = vshll.u32 %v5544, 16
      %v5942 = vrot.slane %v5940, 5
      %v5943 = vsel %vm5603, %v5938, %v5942
      %v5945 = vshrl.u32 %v5545, 16
      %v5947 = vrot.slane %v5945, 4
      %v5948 = vshll.u32 %v5545, 16
      %v5950 = vrot.slane %v5948, 5
      %v5951 = vor.u32 %v5947, %v5950
      %v5952 = vrot.slane %v5951, 4
      %v5954 = vshll.u32 %v5546, 16
      %v5956 = vrot.slane %v5954, 5
      %v5957 = vsel %vm5603, %v5952, %v5956
      %v5958 = vshrl.u32 %v5546, 16
      %v5960 = vrot.slane %v5958, 4
      %v5961 = vor.u32 %v5960, %v5956
      %v5962 = vrot.slane %v5961, 4
      %v5964 = vshll.u32 %v5547, 16
      %v5966 = vrot.slane %v5964, 5
      %v5967 = vsel %vm5603, %v5962, %v5966
      %v5968 = vshrl.u32 %v5547, 16
      %v5970 = vrot.slane %v5968, 4
      %v5971 = vor.u32 %v5970, %v5966
      %v5972 = vrot.slane %v5971, 4
      %v5974 = vshll.u32 %v5548, 16
      %v5976 = vrot.slane %v5974, 5
      %v5977 = vsel %vm5603, %v5972, %v5976
      %v5979 = vshrl.u32 %v5549, 16
      %v5981 = vrot.slane %v5979, 4
      %v5982 = vshll.u32 %v5549, 16
      %v5984 = vrot.slane %v5982, 5
      %v5985 = vor.u32 %v5981, %v5984
      %v5986 = vrot.slane %v5985, 4
      %v5988 = vshll.u32 %v5550, 16
      %v5990 = vrot.slane %v5988, 5
      %v5991 = vsel %vm5603, %v5986, %v5990
      %v5992 = vshrl.u32 %v5550, 16
      %v5994 = vrot.slane %v5992, 4
      %v5995 = vor.u32 %v5994, %v5990
      %v5996 = vrot.slane %v5995, 4
      %v5998 = vshll.u32 %v5551, 16
      %v6000 = vrot.slane %v5998, 5
      %v6001 = vsel %vm5603, %v5996, %v6000
      %v6002 = vshrl.u32 %v5551, 16
      %v6004 = vrot.slane %v6002, 4
      %v6005 = vor.u32 %v6004, %v6000
      %v6006 = vrot.slane %v6005, 4
      %v6008 = vshll.u32 %v5552, 16
      %v6010 = vrot.slane %v6008, 5
      %v6011 = vsel %vm5603, %v6006, %v6010
      %v6013 = vshrl.u32 %v5553, 16
      %v6015 = vrot.slane %v6013, 4
      %v6016 = vshll.u32 %v5553, 16
      %v6018 = vrot.slane %v6016, 5
      %v6019 = vor.u32 %v6015, %v6018
      %v6020 = vrot.slane %v6019, 4
      %v6022 = vshll.u32 %v5554, 16
      %v6024 = vrot.slane %v6022, 5
      %v6025 = vsel %vm5603, %v6020, %v6024
      %v6026 = vshrl.u32 %v5554, 16
      %v6028 = vrot.slane %v6026, 4
      %v6029 = vor.u32 %v6028, %v6024
      %v6030 = vrot.slane %v6029, 4
      %v6032 = vshll.u32 %v5555, 16
      %v6034 = vrot.slane %v6032, 5
      %v6035 = vsel %vm5603, %v6030, %v6034
      %v6036 = vshrl.u32 %v5555, 16
      %v6038 = vrot.slane %v6036, 4
      %v6039 = vor.u32 %v6038, %v6034
      %v6040 = vrot.slane %v6039, 4
      %v6042 = vshll.u32 %v5556, 16
      %v6044 = vrot.slane %v6042, 5
      %v6045 = vsel %vm5603, %v6040, %v6044
      %v6047 = vshrl.u32 %v5557, 16
      %v6049 = vrot.slane %v6047, 4
      %v6050 = vshll.u32 %v5557, 16
      %v6052 = vrot.slane %v6050, 5
      %v6053 = vor.u32 %v6049, %v6052
      %v6054 = vrot.slane %v6053, 4
      %v6056 = vshll.u32 %v5558, 16
      %v6058 = vrot.slane %v6056, 5
      %v6059 = vsel %vm5603, %v6054, %v6058
      %v6060 = vshrl.u32 %v5558, 16
      %v6062 = vrot.slane %v6060, 4
      %v6063 = vor.u32 %v6062, %v6058
      %v6064 = vrot.slane %v6063, 4
      %v6066 = vshll.u32 %v5559, 16
      %v6068 = vrot.slane %v6066, 5
      %v6069 = vsel %vm5603, %v6064, %v6068
      %v6070 = vshrl.u32 %v5559, 16
      %v6072 = vrot.slane %v6070, 4
      %v6073 = vor.u32 %v6072, %v6068
      %v6074 = vrot.slane %v6073, 4
      %v6076 = vshll.u32 %v5560, 16
      %v6078 = vrot.slane %v6076, 5
      %v6079 = vsel %vm5603, %v6074, %v6078
      %v6081 = vshrl.u32 %v5561, 16
      %v6083 = vrot.slane %v6081, 4
      %v6084 = vshll.u32 %v5561, 16
      %v6086 = vrot.slane %v6084, 5
      %v6087 = vor.u32 %v6083, %v6086
      %v6088 = vrot.slane %v6087, 4
      %v6090 = vshll.u32 %v5562, 16
      %v6092 = vrot.slane %v6090, 5
      %v6093 = vsel %vm5603, %v6088, %v6092
      %v6094 = vshrl.u32 %v5562, 16
      %v6096 = vrot.slane %v6094, 4
      %v6097 = vor.u32 %v6096, %v6092
      %v6098 = vrot.slane %v6097, 4
      %v6100 = vshll.u32 %v5563, 16
      %v6102 = vrot.slane %v6100, 5
      %v6103 = vsel %vm5603, %v6098, %v6102
      %v6104 = vshrl.u32 %v5563, 16
      %v6106 = vrot.slane %v6104, 4
      %v6107 = vor.u32 %v6106, %v6102
      %v6108 = vrot.slane %v6107, 4
      %v6110 = vshll.u32 %v5564, 16
      %v6112 = vrot.slane %v6110, 5
      %v6113 = vsel %vm5603, %v6108, %v6112
      %v6115 = vshrl.u32 %v5565, 16
      %v6117 = vrot.slane %v6115, 4
      %v6118 = vshll.u32 %v5565, 16
      %v6120 = vrot.slane %v6118, 5
      %v6121 = vor.u32 %v6117, %v6120
      %v6122 = vrot.slane %v6121, 4
      %v6124 = vshll.u32 %v5566, 16
      %v6126 = vrot.slane %v6124, 5
      %v6127 = vsel %vm5603, %v6122, %v6126
      %v6128 = vshrl.u32 %v5566, 16
      %v6130 = vrot.slane %v6128, 4
      %v6131 = vor.u32 %v6130, %v6126
      %v6132 = vrot.slane %v6131, 4
      %v6134 = vshll.u32 %v5567, 16
      %v6136 = vrot.slane %v6134, 5
      %v6137 = vsel %vm5603, %v6132, %v6136
      %v6138 = vshrl.u32 %v5567, 16
      %v6140 = vrot.slane %v6138, 4
      %v6141 = vor.u32 %v6140, %v6136
      %v6142 = vrot.slane %v6141, 4
      %v6144 = vshll.u32 %v5568, 16
      %v6146 = vrot.slane %v6144, 5
      %v6147 = vsel %vm5603, %v6142, %v6146
      %v6149 = vshrl.u32 %v5569, 16
      %v6151 = vrot.slane %v6149, 4
      %v6152 = vshll.u32 %v5569, 16
      %v6154 = vrot.slane %v6152, 5
      %v6155 = vor.u32 %v6151, %v6154
      %v6156 = vrot.slane %v6155, 4
      %v6158 = vshll.u32 %v5570, 16
      %v6160 = vrot.slane %v6158, 5
      %v6161 = vsel %vm5603, %v6156, %v6160
      %v6162 = vshrl.u32 %v5570, 16
      %v6164 = vrot.slane %v6162, 4
      %v6165 = vor.u32 %v6164, %v6160
      %v6166 = vrot.slane %v6165, 4
      %v6168 = vshll.u32 %v5571, 16
      %v6170 = vrot.slane %v6168, 5
      %v6171 = vsel %vm5603, %v6166, %v6170
      %v6172 = vshrl.u32 %v5571, 16
      %v6174 = vrot.slane %v6172, 4
      %v6175 = vor.u32 %v6174, %v6170
      %v6176 = vrot.slane %v6175, 4
      %v6178 = vshll.u32 %v5572, 16
      %v6180 = vrot.slane %v6178, 5
      %v6181 = vsel %vm5603, %v6176, %v6180
      %v6183 = vshrl.u32 %v5573, 16
      %v6185 = vrot.slane %v6183, 4
      %v6186 = vshll.u32 %v5573, 16
      %v6188 = vrot.slane %v6186, 5
      %v6189 = vor.u32 %v6185, %v6188
      %v6190 = vrot.slane %v6189, 4
      %v6192 = vshll.u32 %v5574, 16
      %v6194 = vrot.slane %v6192, 5
      %v6195 = vsel %vm5603, %v6190, %v6194
      %v6196 = vshrl.u32 %v5574, 16
      %v6198 = vrot.slane %v6196, 4
      %v6199 = vor.u32 %v6198, %v6194
      %v6200 = vrot.slane %v6199, 4
      %v6202 = vshll.u32 %v5575, 16
      %v6204 = vrot.slane %v6202, 5
      %v6205 = vsel %vm5603, %v6200, %v6204
      %v6206 = vshrl.u32 %v5575, 16
      %v6208 = vrot.slane %v6206, 4
      %v6209 = vor.u32 %v6208, %v6204
      %v6210 = vrot.slane %v6209, 4
      %v6212 = vshll.u32 %v5576, 16
      %v6214 = vrot.slane %v6212, 5
      %v6215 = vsel %vm5603, %v6210, %v6214
      %v6217 = vshrl.u32 %v5577, 16
      %v6219 = vrot.slane %v6217, 4
      %v6220 = vshll.u32 %v5577, 16
      %v6222 = vrot.slane %v6220, 5
      %v6223 = vor.u32 %v6219, %v6222
      %v6224 = vrot.slane %v6223, 4
      %v6226 = vshll.u32 %v5578, 16
      %v6228 = vrot.slane %v6226, 5
      %v6229 = vsel %vm5603, %v6224, %v6228
      %v6230 = vshrl.u32 %v5578, 16
      %v6232 = vrot.slane %v6230, 4
      %v6233 = vor.u32 %v6232, %v6228
      %v6234 = vrot.slane %v6233, 4
      %v6236 = vshll.u32 %v5579, 16
      %v6238 = vrot.slane %v6236, 5
      %v6239 = vsel %vm5603, %v6234, %v6238
      %v6240 = vshrl.u32 %v5579, 16
      %v6242 = vrot.slane %v6240, 4
      %v6243 = vor.u32 %v6242, %v6238
      %v6244 = vrot.slane %v6243, 4
      %v6246 = vshll.u32 %v5580, 16
      %v6248 = vrot.slane %v6246, 5
      %v6249 = vsel %vm5603, %v6244, %v6248
      %v6251 = vshrl.u32 %v5581, 16
      %v6253 = vrot.slane %v6251, 4
      %v6254 = vshll.u32 %v5581, 16
      %v6256 = vrot.slane %v6254, 5
      %v6257 = vor.u32 %v6253, %v6256
      %v6258 = vrot.slane %v6257, 4
      %v6260 = vshll.u32 %v5582, 16
      %v6262 = vrot.slane %v6260, 5
      %v6263 = vsel %vm5603, %v6258, %v6262
      %v6264 = vshrl.u32 %v5582, 16
      %v6266 = vrot.slane %v6264, 4
      %v6267 = vor.u32 %v6266, %v6262
      %v6268 = vrot.slane %v6267, 4
      %v6270 = vshll.u32 %v5583, 16
      %v6272 = vrot.slane %v6270, 5
      %v6273 = vsel %vm5603, %v6268, %v6272
      %v6274 = vshrl.u32 %v5583, 16
      %v6276 = vrot.slane %v6274, 4
      %v6277 = vor.u32 %v6276, %v6272
      %v6278 = vrot.slane %v6277, 4
      %v6280 = vshll.u32 %v5584, 16
      %v6282 = vrot.slane %v6280, 5
      %v6283 = vsel %vm5603, %v6278, %v6282
      %v6285 = vshrl.u32 %v5585, 16
      %v6287 = vrot.slane %v6285, 4
      %v6288 = vshll.u32 %v5585, 16
      %v6290 = vrot.slane %v6288, 5
      %v6291 = vor.u32 %v6287, %v6290
      %v6292 = vrot.slane %v6291, 4
      %v6294 = vshll.u32 %v5586, 16
      %v6296 = vrot.slane %v6294, 5
      %v6297 = vsel %vm5603, %v6292, %v6296
      %v6298 = vshrl.u32 %v5586, 16
      %v6300 = vrot.slane %v6298, 4
      %v6301 = vor.u32 %v6300, %v6296
      %v6302 = vrot.slane %v6301, 4
      %v6304 = vshll.u32 %v5587, 16
      %v6306 = vrot.slane %v6304, 5
      %v6307 = vsel %vm5603, %v6302, %v6306
      %v6308 = vshrl.u32 %v5587, 16
      %v6310 = vrot.slane %v6308, 4
      %v6311 = vor.u32 %v6310, %v6306
      %v6312 = vrot.slane %v6311, 4
      %v6314 = vshll.u32 %v5588, 16
      %v6316 = vrot.slane %v6314, 5
      %v6317 = vsel %vm5603, %v6312, %v6316
      %v6319 = vshrl.u32 %v5589, 16
      %v6321 = vrot.slane %v6319, 4
      %v6322 = vshll.u32 %v5589, 16
      %v6324 = vrot.slane %v6322, 5
      %v6325 = vor.u32 %v6321, %v6324
      %v6326 = vrot.slane %v6325, 4
      %v6328 = vshll.u32 %v5590, 16
      %v6330 = vrot.slane %v6328, 5
      %v6331 = vsel %vm5603, %v6326, %v6330
      %v6332 = vshrl.u32 %v5590, 16
      %v6334 = vrot.slane %v6332, 4
      %v6335 = vor.u32 %v6334, %v6330
      %v6336 = vrot.slane %v6335, 4
      %v6338 = vshll.u32 %v5591, 16
      %v6340 = vrot.slane %v6338, 5
      %v6341 = vsel %vm5603, %v6336, %v6340
      %v6342 = vshrl.u32 %v5591, 16
      %v6344 = vrot.slane %v6342, 4
      %v6345 = vor.u32 %v6344, %v6340
      %v6346 = vrot.slane %v6345, 4
      %v6348 = vshll.u32 %v5592, 16
      %v6350 = vrot.slane %v6348, 5
      %v6351 = vsel %vm5603, %v6346, %v6350
      %v6353 = vshrl.u32 %v5593, 16
      %v6355 = vrot.slane %v6353, 4
      %v6356 = vshll.u32 %v5593, 16
      %v6358 = vrot.slane %v6356, 5
      %v6359 = vor.u32 %v6355, %v6358
      %v6360 = vrot.slane %v6359, 4
      %v6362 = vshll.u32 %v5594, 16
      %v6364 = vrot.slane %v6362, 5
      %v6365 = vsel %vm5603, %v6360, %v6364
      %v6366 = vshrl.u32 %v5594, 16
      %v6368 = vrot.slane %v6366, 4
      %v6369 = vor.u32 %v6368, %v6364
      %v6370 = vrot.slane %v6369, 4
      %v6372 = vshll.u32 %v5595, 16
      %v6374 = vrot.slane %v6372, 5
      %v6375 = vsel %vm5603, %v6370, %v6374
      %v6376 = vshrl.u32 %v5595, 16
      %v6378 = vrot.slane %v6376, 4
      %v6379 = vor.u32 %v6378, %v6374
      %v6380 = vrot.slane %v6379, 4
      %v6382 = vshll.u32 %v5596, 16
      %v6384 = vrot.slane %v6382, 5
      %v6385 = vsel %vm5603, %v6380, %v6384
      %v6387 = vshrl.u32 %v5597, 16
      %v6389 = vrot.slane %v6387, 4
      %v6390 = vshll.u32 %v5597, 16
      %v6392 = vrot.slane %v6390, 5
      %v6393 = vor.u32 %v6389, %v6392
      %v6394 = vrot.slane %v6393, 4
      %v6396 = vshll.u32 %v5598, 16
      %v6398 = vrot.slane %v6396, 5
      %v6399 = vsel %vm5603, %v6394, %v6398
      %v6400 = vshrl.u32 %v5598, 16
      %v6402 = vrot.slane %v6400, 4
      %v6403 = vor.u32 %v6402, %v6398
      %v6404 = vrot.slane %v6403, 4
      %v6406 = vshll.u32 %v5599, 16
      %v6408 = vrot.slane %v6406, 5
      %v6409 = vsel %vm5603, %v6404, %v6408
      %v6410 = vshrl.u32 %v5599, 16
      %v6412 = vrot.slane %v6410, 4
      %v6413 = vor.u32 %v6412, %v6408
      %v6414 = vrot.slane %v6413, 4
      %v6416 = vshll.u32 %v5600, 16
      %v6418 = vrot.slane %v6416, 5
      %v6419 = vsel %vm5603, %v6414, %v6418
      %v6420 = vunpack.c.l.b16 %v5617
      %v6421 = vunpack.c.l.b16 %v5627
      %v6422 = vunpack.c.l.b16 %v5637
      %v6423 = vunpack.c.l.b16 %v5651
      %v6424 = vunpack.c.l.b16 %v5661
      %v6425 = vunpack.c.l.b16 %v5671
      %v6426 = vunpack.c.l.b16 %v5685
      %v6427 = vunpack.c.l.b16 %v5695
      %v6428 = vunpack.c.l.b16 %v5705
      %v6429 = vunpack.c.l.b16 %v5719
      %v6430 = vunpack.c.l.b16 %v5729
      %v6431 = vunpack.c.l.b16 %v5739
      %v6432 = vunpack.c.l.b16 %v5753
      %v6433 = vunpack.c.l.b16 %v5763
      %v6434 = vunpack.c.l.b16 %v5773
      %v6435 = vunpack.c.l.b16 %v5787
      %v6436 = vunpack.c.l.b16 %v5797
      %v6437 = vunpack.c.l.b16 %v5807
      %v6438 = vunpack.c.l.b16 %v5821
      %v6439 = vunpack.c.l.b16 %v5831
      %v6440 = vunpack.c.l.b16 %v5841
      %v6441 = vunpack.c.l.b16 %v5855
      %v6442 = vunpack.c.l.b16 %v5865
      %v6443 = vunpack.c.l.b16 %v5875
      %v6444 = vunpack.c.l.b16 %v5889
      %v6445 = vunpack.c.l.b16 %v5899
      %v6446 = vunpack.c.l.b16 %v5909
      %v6447 = vunpack.c.l.b16 %v5923
      %v6448 = vunpack.c.l.b16 %v5933
      %v6449 = vunpack.c.l.b16 %v5943
      %v6450 = vunpack.c.l.b16 %v5957
      %v6451 = vunpack.c.l.b16 %v5967
      %v6452 = vunpack.c.l.b16 %v5977
      %v6453 = vunpack.c.l.b16 %v5991
      %v6454 = vunpack.c.l.b16 %v6001
      %v6455 = vunpack.c.l.b16 %v6011
      %v6456 = vunpack.c.l.b16 %v6025
      %v6457 = vunpack.c.l.b16 %v6035
      %v6458 = vunpack.c.l.b16 %v6045
      %v6459 = vunpack.c.l.b16 %v6059
      %v6460 = vunpack.c.l.b16 %v6069
      %v6461 = vunpack.c.l.b16 %v6079
      %v6462 = vunpack.c.l.b16 %v6093
      %v6463 = vunpack.c.l.b16 %v6103
      %v6464 = vunpack.c.l.b16 %v6113
      %v6465 = vunpack.c.l.b16 %v6127
      %v6466 = vunpack.c.l.b16 %v6137
      %v6467 = vunpack.c.l.b16 %v6147
      %v6468 = vunpack.c.l.b16 %v6161
      %v6469 = vunpack.c.l.b16 %v6171
      %v6470 = vunpack.c.l.b16 %v6181
      %v6471 = vunpack.c.l.b16 %v6195
      %v6472 = vunpack.c.l.b16 %v6205
      %v6473 = vunpack.c.l.b16 %v6215
      %v6474 = vunpack.c.l.b16 %v6229
      %v6475 = vunpack.c.l.b16 %v6239
      %v6476 = vunpack.c.l.b16 %v6249
      %v6477 = vunpack.c.l.b16 %v6263
      %v6478 = vunpack.c.l.b16 %v6273
      %v6479 = vunpack.c.l.b16 %v6283
      %v6480 = vunpack.c.l.b16 %v6297
      %v6481 = vunpack.c.l.b16 %v6307
      %v6482 = vunpack.c.l.b16 %v6317
      %v6483 = vunpack.c.l.b16 %v6331
      %v6484 = vunpack.c.l.b16 %v6341
      %v6485 = vunpack.c.l.b16 %v6351
      %v6486 = vunpack.c.l.b16 %v6365
      %v6487 = vunpack.c.l.b16 %v6375
      %v6488 = vunpack.c.l.b16 %v6385
      %v6489 = vunpack.c.l.b16 %v6399
      %v6490 = vunpack.c.l.b16 %v6409
      %v6491 = vunpack.c.l.b16 %v6419
      %v6492 = vpack.c.b16 %v6421, %v6420
      %v6493 = vpack.c.b16 %v6423, %v6422
      %v6494 = vpack.c.b16 %v6425, %v6424
      %v6495 = vpack.c.b16 %v6427, %v6426
      %v6496 = vpack.c.b16 %v6429, %v6428
      %v6497 = vpack.c.b16 %v6431, %v6430
      %v6498 = vpack.c.b16 %v6433, %v6432
      %v6499 = vpack.c.b16 %v6435, %v6434
      %v6500 = vpack.c.b16 %v6437, %v6436
      %v6501 = vpack.c.b16 %v6439, %v6438
      %v6502 = vpack.c.b16 %v6441, %v6440
      %v6503 = vpack.c.b16 %v6443, %v6442
      %v6504 = vpack.c.b16 %v6445, %v6444
      %v6505 = vpack.c.b16 %v6447, %v6446
      %v6506 = vpack.c.b16 %v6449, %v6448
      %v6507 = vpack.c.b16 %v6451, %v6450
      %v6508 = vpack.c.b16 %v6453, %v6452
      %v6509 = vpack.c.b16 %v6455, %v6454
      %v6510 = vpack.c.b16 %v6457, %v6456
      %v6511 = vpack.c.b16 %v6459, %v6458
      %v6512 = vpack.c.b16 %v6461, %v6460
      %v6513 = vpack.c.b16 %v6463, %v6462
      %v6514 = vpack.c.b16 %v6465, %v6464
      %v6515 = vpack.c.b16 %v6467, %v6466
      %v6516 = vpack.c.b16 %v6469, %v6468
      %v6517 = vpack.c.b16 %v6471, %v6470
      %v6518 = vpack.c.b16 %v6473, %v6472
      %v6519 = vpack.c.b16 %v6475, %v6474
      %v6520 = vpack.c.b16 %v6477, %v6476
      %v6521 = vpack.c.b16 %v6479, %v6478
      %v6522 = vpack.c.b16 %v6481, %v6480
      %v6523 = vpack.c.b16 %v6483, %v6482
      %v6524 = vpack.c.b16 %v6485, %v6484
      %v6525 = vpack.c.b16 %v6487, %v6486
      %v6526 = vpack.c.b16 %v6489, %v6488
      %v6527 = vpack.c.b16 %v6491, %v6490
      %v6532 = vunpack.c.l.b16 %v5329
      %v6533 = vunpack.c.l.b16 %v5330
      %v6534 = vunpack.c.l.b16 %v5331
      %v6535 = vunpack.c.l.b16 %v5332
      %v6536 = vpack.c.b16 %v6533, %v6532
      %v6537 = vpack.c.b16 %v6535, %v6534
      %vm6540 = vcmask 261120
      %v6542 = vsel %vm6540, %v6492, 0
      %v6545 = vsel %vm6540, %v6493, 0
      %v6548 = vsel %vm6540, %v6494, 0
      %v6551 = vsel %vm6540, %v6495, 0
      %v6554 = vsel %vm6540, %v6496, 0
      %v6557 = vsel %vm6540, %v6497, 0
      %v6560 = vsel %vm6540, %v6498, 0
      %v6563 = vsel %vm6540, %v6499, 0
      %v6566 = vsel %vm6540, %v6500, 0
      %v6569 = vsel %vm6540, %v6501, 0
      %v6572 = vsel %vm6540, %v6502, 0
      %v6575 = vsel %vm6540, %v6503, 0
      %v6578 = vsel %vm6540, %v6504, 0
      %v6581 = vsel %vm6540, %v6505, 0
      %v6584 = vsel %vm6540, %v6506, 0
      %v6587 = vsel %vm6540, %v6507, 0
      %v6590 = vsel %vm6540, %v6508, 0
      %v6593 = vsel %vm6540, %v6509, 0
      %v6596 = vsel %vm6540, %v6510, 0
      %v6599 = vsel %vm6540, %v6511, 0
      %v6602 = vsel %vm6540, %v6512, 0
      %v6605 = vsel %vm6540, %v6513, 0
      %v6608 = vsel %vm6540, %v6514, 0
      %v6611 = vsel %vm6540, %v6515, 0
      %v6614 = vsel %vm6540, %v6516, 0
      %v6617 = vsel %vm6540, %v6517, 0
      %v6620 = vsel %vm6540, %v6518, 0
      %v6623 = vsel %vm6540, %v6519, 0
      %v6626 = vsel %vm6540, %v6520, 0
      %v6629 = vsel %vm6540, %v6521, 0
      %v6632 = vsel %vm6540, %v6522, 0
      %v6635 = vsel %vm6540, %v6523, 0
      %v6638 = vsel %vm6540, %v6524, 0
      %v6641 = vsel %vm6540, %v6525, 0
      %v6644 = vsel %vm6540, %v6526, 0
      %v6647 = vsel %vm6540, %v6527, 0
      %6649 = vmatprep.subr.bf16.mxu0 0
      %6650 = vmatpush1.bf16.msra.mxu0 %v6536
      %6651 = vmatprep.subr.bf16.mxu0 0
      %6652 = vmatpush1.bf16.msra.mxu0 %v6537
      %6653 = vmatprep.subr.bf16.mxu0 0
      %6654 = vmatpush1.bf16.msra.mxu0 0
      %6655 = vmatprep.subr.bf16.mxu0 0
      %6656 = vmatpush1.bf16.msra.mxu0 0
      %6657 = vmatprep.subr.bf16.mxu0 0
      %6658 = vmatpush1.bf16.msra.mxu0 0
      %6659 = vmatprep.subr.bf16.mxu0 0
      %6660 = vmatpush1.bf16.msra.mxu0 0
      %6661 = vmatprep.subr.bf16.mxu0 0
      %6662 = vmatpush1.bf16.msra.mxu0 0
      %6663 = vmatprep.subr.bf16.mxu0 0
      %6664 = vmatpush1.bf16.msra.mxu0 0
      %6665 = vmatprep.subr.bf16.mxu0 0
      %6666 = vmatpush1.bf16.msra.mxu0 0
      %6667 = vmatprep.subr.bf16.mxu0 0
      %6668 = vmatpush1.bf16.msra.mxu0 0
      %6669 = vmatprep.subr.bf16.mxu0 0
      %6670 = vmatpush1.bf16.msra.mxu0 0
      %6671 = vmatprep.subr.bf16.mxu0 0
      %6672 = vmatpush1.bf16.msra.mxu0 0
      %6673 = vmatprep.subr.bf16.mxu0 0
      %6674 = vmatpush1.bf16.msra.mxu0 0
      %6675 = vmatprep.subr.bf16.mxu0 0
      %6676 = vmatpush1.bf16.msra.mxu0 0
      %6677 = vmatprep.subr.bf16.mxu0 0
      %6678 = vmatpush1.bf16.msra.mxu0 0
      %6679 = vmatprep.subr.bf16.mxu0 0
      %6680 = vmatpush1.bf16.msra.mxu0 0
      %6681 = vmatprep.mubr.bf16.mxu0 0
      %6682 = vmatmul.mubr.bf16.gmra.mrb[0].mxu0 %v6542
      %v6683 = vpop.f32.mrb[0].mxu0
      %v6684 = vadd.f32 0.0, %v6683
      %v6685 = vpop.f32.mrb[0].mxu0
      %v6686 = vpop.f32.mrb[0].mxu0
      %v6687 = vadd.f32 0.0, %v6686
      %v6688 = vpop.f32.mrb[0].mxu0
      %6689 = vmatprep.mubr.bf16.mxu0 0
      %6690 = vmatmul.mubr.bf16.gmra.mrb[0].mxu0 %v6545
      %v6691 = vpop.f32.mrb[0].mxu0
      %v6692 = vadd.f32 0.0, %v6691
      %v6693 = vpop.f32.mrb[0].mxu0
      %v6694 = vpop.f32.mrb[0].mxu0
      %v6695 = vadd.f32 0.0, %v6694
      %v6696 = vpop.f32.mrb[0].mxu0
      %6697 = vmatprep.mubr.bf16.mxu0 0
      %6698 = vmatmul.mubr.bf16.gmra.mrb[0].mxu0 %v6548
      %v6699 = vpop.f32.mrb[0].mxu0
      %v6700 = vadd.f32 0.0, %v6699
      %v6701 = vpop.f32.mrb[0].mxu0
      %v6702 = vpop.f32.mrb[0].mxu0
      %v6703 = vadd.f32 0.0, %v6702
      %v6704 = vpop.f32.mrb[0].mxu0
      %6705 = vmatprep.mubr.bf16.mxu0 0
      %6706 = vmatmul.mubr.bf16.gmra.mrb[0].mxu0 %v6551
      %v6707 = vpop.f32.mrb[0].mxu0
      %v6708 = vadd.f32 0.0, %v6707
      %v6709 = vpop.f32.mrb[0].mxu0
      %v6710 = vpop.f32.mrb[0].mxu0
      %v6711 = vadd.f32 0.0, %v6710
      %v6712 = vpop.f32.mrb[0].mxu0
      %6713 = vmatprep.mubr.bf16.mxu0 0
      %6714 = vmatmul.mubr.bf16.gmra.mrb[0].mxu0 %v6554
      %v6715 = vpop.f32.mrb[0].mxu0
      %v6716 = vadd.f32 0.0, %v6715
      %v6717 = vpop.f32.mrb[0].mxu0
      %v6718 = vpop.f32.mrb[0].mxu0
      %v6719 = vadd.f32 0.0, %v6718
      %v6720 = vpop.f32.mrb[0].mxu0
      %6721 = vmatprep.mubr.bf16.mxu0 0
      %6722 = vmatmul.mubr.bf16.gmra.mrb[0].mxu0 %v6557
      %v6723 = vpop.f32.mrb[0].mxu0
      %v6724 = vadd.f32 0.0, %v6723
      %v6725 = vpop.f32.mrb[0].mxu0
      %v6726 = vpop.f32.mrb[0].mxu0
      %v6727 = vadd.f32 0.0, %v6726
      %v6728 = vpop.f32.mrb[0].mxu0
      %6729 = vmatprep.mubr.bf16.mxu0 0
      %6730 = vmatmul.mubr.bf16.gmra.mrb[0].mxu0 %v6560
      %v6731 = vpop.f32.mrb[0].mxu0
      %v6732 = vadd.f32 0.0, %v6731
      %v6733 = vpop.f32.mrb[0].mxu0
      %v6734 = vpop.f32.mrb[0].mxu0
      %v6735 = vadd.f32 0.0, %v6734
      %v6736 = vpop.f32.mrb[0].mxu0
      %6737 = vmatprep.mubr.bf16.mxu0 0
      %6738 = vmatmul.mubr.bf16.gmra.mrb[0].mxu0 %v6563
      %v6739 = vpop.f32.mrb[0].mxu0
      %v6740 = vadd.f32 0.0, %v6739
      %v6741 = vpop.f32.mrb[0].mxu0
      %v6742 = vpop.f32.mrb[0].mxu0
      %v6743 = vadd.f32 0.0, %v6742
      %v6744 = vpop.f32.mrb[0].mxu0
      %6745 = vmatprep.mubr.bf16.mxu0 0
      %6746 = vmatmul.mubr.bf16.gmra.mrb[0].mxu0 %v6566
      %v6747 = vpop.f32.mrb[0].mxu0
      %v6748 = vadd.f32 0.0, %v6747
      %v6749 = vpop.f32.mrb[0].mxu0
      %v6750 = vpop.f32.mrb[0].mxu0
      %v6751 = vadd.f32 0.0, %v6750
      %v6752 = vpop.f32.mrb[0].mxu0
      %6753 = vmatprep.mubr.bf16.mxu0 0
      %6754 = vmatmul.mubr.bf16.gmra.mrb[0].mxu0 %v6569
      %v6755 = vpop.f32.mrb[0].mxu0
      %v6756 = vadd.f32 0.0, %v6755
      %v6757 = vpop.f32.mrb[0].mxu0
      %v6758 = vpop.f32.mrb[0].mxu0
      %v6759 = vadd.f32 0.0, %v6758
      %v6760 = vpop.f32.mrb[0].mxu0
      %6761 = vmatprep.mubr.bf16.mxu0 0
      %6762 = vmatmul.mubr.bf16.gmra.mrb[0].mxu0 %v6572
      %v6763 = vpop.f32.mrb[0].mxu0
      %v6764 = vadd.f32 0.0, %v6763
      %v6765 = vpop.f32.mrb[0].mxu0
      %v6766 = vpop.f32.mrb[0].mxu0
      %v6767 = vadd.f32 0.0, %v6766
      %v6768 = vpop.f32.mrb[0].mxu0
      %6769 = vmatprep.mubr.bf16.mxu0 0
      %6770 = vmatmul.mubr.bf16.gmra.mrb[0].mxu0 %v6575
      %v6771 = vpop.f32.mrb[0].mxu0
      %v6772 = vadd.f32 0.0, %v6771
      %v6773 = vpop.f32.mrb[0].mxu0
      %v6774 = vpop.f32.mrb[0].mxu0
      %v6775 = vadd.f32 0.0, %v6774
      %v6776 = vpop.f32.mrb[0].mxu0
      %6777 = vmatprep.mubr.bf16.mxu0 0
      %6778 = vmatmul.mubr.bf16.gmra.mrb[0].mxu0 %v6578
      %v6779 = vpop.f32.mrb[0].mxu0
      %v6780 = vadd.f32 0.0, %v6779
      %v6781 = vpop.f32.mrb[0].mxu0
      %v6782 = vpop.f32.mrb[0].mxu0
      %v6783 = vadd.f32 0.0, %v6782
      %v6784 = vpop.f32.mrb[0].mxu0
      %6785 = vmatprep.mubr.bf16.mxu0 0
      %6786 = vmatmul.mubr.bf16.gmra.mrb[0].mxu0 %v6581
      %v6787 = vpop.f32.mrb[0].mxu0
      %v6788 = vadd.f32 0.0, %v6787
      %v6789 = vpop.f32.mrb[0].mxu0
      %v6790 = vpop.f32.mrb[0].mxu0
      %v6791 = vadd.f32 0.0, %v6790
      %v6792 = vpop.f32.mrb[0].mxu0
      %6793 = vmatprep.mubr.bf16.mxu0 0
      %6794 = vmatmul.mubr.bf16.gmra.mrb[0].mxu0 %v6584
      %v6795 = vpop.f32.mrb[0].mxu0
      %v6796 = vadd.f32 0.0, %v6795
      %v6797 = vpop.f32.mrb[0].mxu0
      %v6798 = vpop.f32.mrb[0].mxu0
      %v6799 = vadd.f32 0.0, %v6798
      %v6800 = vpop.f32.mrb[0].mxu0
      %6801 = vmatprep.mubr.bf16.mxu0 0
      %6802 = vmatmul.mubr.bf16.gmra.mrb[0].mxu0 %v6587
      %v6803 = vpop.f32.mrb[0].mxu0
      %v6804 = vadd.f32 0.0, %v6803
      %v6805 = vpop.f32.mrb[0].mxu0
      %v6806 = vpop.f32.mrb[0].mxu0
      %v6807 = vadd.f32 0.0, %v6806
      %v6808 = vpop.f32.mrb[0].mxu0
      %6809 = vmatprep.mubr.bf16.mxu0 0
      %6810 = vmatmul.mubr.bf16.gmra.mrb[0].mxu0 %v6590
      %v6811 = vpop.f32.mrb[0].mxu0
      %v6812 = vadd.f32 0.0, %v6811
      %v6813 = vpop.f32.mrb[0].mxu0
      %v6814 = vpop.f32.mrb[0].mxu0
      %v6815 = vadd.f32 0.0, %v6814
      %v6816 = vpop.f32.mrb[0].mxu0
      %6817 = vmatprep.mubr.bf16.mxu0 0
      %6818 = vmatmul.mubr.bf16.gmra.mrb[0].mxu0 %v6593
      %v6819 = vpop.f32.mrb[0].mxu0
      %v6820 = vadd.f32 0.0, %v6819
      %v6821 = vpop.f32.mrb[0].mxu0
      %v6822 = vpop.f32.mrb[0].mxu0
      %v6823 = vadd.f32 0.0, %v6822
      %v6824 = vpop.f32.mrb[0].mxu0
      %6825 = vmatprep.mubr.bf16.mxu0 0
      %6826 = vmatmul.mubr.bf16.gmra.mrb[0].mxu0 %v6596
      %v6827 = vpop.f32.mrb[0].mxu0
      %v6828 = vadd.f32 0.0, %v6827
      %v6829 = vpop.f32.mrb[0].mxu0
      %v6830 = vpop.f32.mrb[0].mxu0
      %v6831 = vadd.f32 0.0, %v6830
      %v6832 = vpop.f32.mrb[0].mxu0
      %6833 = vmatprep.mubr.bf16.mxu0 0
      %6834 = vmatmul.mubr.bf16.gmra.mrb[0].mxu0 %v6599
      %v6835 = vpop.f32.mrb[0].mxu0
      %v6836 = vadd.f32 0.0, %v6835
      %v6837 = vpop.f32.mrb[0].mxu0
      %v6838 = vpop.f32.mrb[0].mxu0
      %v6839 = vadd.f32 0.0, %v6838
      %v6840 = vpop.f32.mrb[0].mxu0
      %6841 = vmatprep.mubr.bf16.mxu0 0
      %6842 = vmatmul.mubr.bf16.gmra.mrb[0].mxu0 %v6602
      %v6843 = vpop.f32.mrb[0].mxu0
      %v6844 = vadd.f32 0.0, %v6843
      %v6845 = vpop.f32.mrb[0].mxu0
      %v6846 = vpop.f32.mrb[0].mxu0
      %v6847 = vadd.f32 0.0, %v6846
      %v6848 = vpop.f32.mrb[0].mxu0
      %6849 = vmatprep.mubr.bf16.mxu0 0
      %6850 = vmatmul.mubr.bf16.gmra.mrb[0].mxu0 %v6605
      %v6851 = vpop.f32.mrb[0].mxu0
      %v6852 = vadd.f32 0.0, %v6851
      %v6853 = vpop.f32.mrb[0].mxu0
      %v6854 = vpop.f32.mrb[0].mxu0
      %v6855 = vadd.f32 0.0, %v6854
      %v6856 = vpop.f32.mrb[0].mxu0
      %6857 = vmatprep.mubr.bf16.mxu0 0
      %6858 = vmatmul.mubr.bf16.gmra.mrb[0].mxu0 %v6608
      %v6859 = vpop.f32.mrb[0].mxu0
      %v6860 = vadd.f32 0.0, %v6859
      %v6861 = vpop.f32.mrb[0].mxu0
      %v6862 = vpop.f32.mrb[0].mxu0
      %v6863 = vadd.f32 0.0, %v6862
      %v6864 = vpop.f32.mrb[0].mxu0
      %6865 = vmatprep.mubr.bf16.mxu0 0
      %6866 = vmatmul.mubr.bf16.gmra.mrb[0].mxu0 %v6611
      %v6867 = vpop.f32.mrb[0].mxu0
      %v6868 = vadd.f32 0.0, %v6867
      %v6869 = vpop.f32.mrb[0].mxu0
      %v6870 = vpop.f32.mrb[0].mxu0
      %v6871 = vadd.f32 0.0, %v6870
      %v6872 = vpop.f32.mrb[0].mxu0
      %6873 = vmatprep.mubr.bf16.mxu0 0
      %6874 = vmatmul.mubr.bf16.gmra.mrb[0].mxu0 %v6614
      %v6875 = vpop.f32.mrb[0].mxu0
      %v6876 = vadd.f32 0.0, %v6875
      %v6877 = vpop.f32.mrb[0].mxu0
      %v6878 = vpop.f32.mrb[0].mxu0
      %v6879 = vadd.f32 0.0, %v6878
      %v6880 = vpop.f32.mrb[0].mxu0
      %6881 = vmatprep.mubr.bf16.mxu0 0
      %6882 = vmatmul.mubr.bf16.gmra.mrb[0].mxu0 %v6617
      %v6883 = vpop.f32.mrb[0].mxu0
      %v6884 = vadd.f32 0.0, %v6883
      %v6885 = vpop.f32.mrb[0].mxu0
      %v6886 = vpop.f32.mrb[0].mxu0
      %v6887 = vadd.f32 0.0, %v6886
      %v6888 = vpop.f32.mrb[0].mxu0
      %6889 = vmatprep.mubr.bf16.mxu0 0
      %6890 = vmatmul.mubr.bf16.gmra.mrb[0].mxu0 %v6620
      %v6891 = vpop.f32.mrb[0].mxu0
      %v6892 = vadd.f32 0.0, %v6891
      %v6893 = vpop.f32.mrb[0].mxu0
      %v6894 = vpop.f32.mrb[0].mxu0
      %v6895 = vadd.f32 0.0, %v6894
      %v6896 = vpop.f32.mrb[0].mxu0
      %6897 = vmatprep.mubr.bf16.mxu0 0
      %6898 = vmatmul.mubr.bf16.gmra.mrb[0].mxu0 %v6623
      %v6899 = vpop.f32.mrb[0].mxu0
      %v6900 = vadd.f32 0.0, %v6899
      %v6901 = vpop.f32.mrb[0].mxu0
      %v6902 = vpop.f32.mrb[0].mxu0
      %v6903 = vadd.f32 0.0, %v6902
      %v6904 = vpop.f32.mrb[0].mxu0
      %6905 = vmatprep.mubr.bf16.mxu0 0
      %6906 = vmatmul.mubr.bf16.gmra.mrb[0].mxu0 %v6626
      %v6907 = vpop.f32.mrb[0].mxu0
      %v6908 = vadd.f32 0.0, %v6907
      %v6909 = vpop.f32.mrb[0].mxu0
      %v6910 = vpop.f32.mrb[0].mxu0
      %v6911 = vadd.f32 0.0, %v6910
      %v6912 = vpop.f32.mrb[0].mxu0
      %6913 = vmatprep.mubr.bf16.mxu0 0
      %6914 = vmatmul.mubr.bf16.gmra.mrb[0].mxu0 %v6629
      %v6915 = vpop.f32.mrb[0].mxu0
      %v6916 = vadd.f32 0.0, %v6915
      %v6917 = vpop.f32.mrb[0].mxu0
      %v6918 = vpop.f32.mrb[0].mxu0
      %v6919 = vadd.f32 0.0, %v6918
      %v6920 = vpop.f32.mrb[0].mxu0
      %6921 = vmatprep.mubr.bf16.mxu0 0
      %6922 = vmatmul.mubr.bf16.gmra.mrb[0].mxu0 %v6632
      %v6923 = vpop.f32.mrb[0].mxu0
      %v6924 = vadd.f32 0.0, %v6923
      %v6925 = vpop.f32.mrb[0].mxu0
      %v6926 = vpop.f32.mrb[0].mxu0
      %v6927 = vadd.f32 0.0, %v6926
      %v6928 = vpop.f32.mrb[0].mxu0
      %6929 = vmatprep.mubr.bf16.mxu0 0
      %6930 = vmatmul.mubr.bf16.gmra.mrb[0].mxu0 %v6635
      %v6931 = vpop.f32.mrb[0].mxu0
      %v6932 = vadd.f32 0.0, %v6931
      %v6933 = vpop.f32.mrb[0].mxu0
      %v6934 = vpop.f32.mrb[0].mxu0
      %v6935 = vadd.f32 0.0, %v6934
      %v6936 = vpop.f32.mrb[0].mxu0
      %6937 = vmatprep.mubr.bf16.mxu0 0
      %6938 = vmatmul.mubr.bf16.gmra.mrb[0].mxu0 %v6638
      %v6939 = vpop.f32.mrb[0].mxu0
      %v6940 = vadd.f32 0.0, %v6939
      %v6941 = vpop.f32.mrb[0].mxu0
      %v6942 = vpop.f32.mrb[0].mxu0
      %v6943 = vadd.f32 0.0, %v6942
      %v6944 = vpop.f32.mrb[0].mxu0
      %6945 = vmatprep.mubr.bf16.mxu0 0
      %6946 = vmatmul.mubr.bf16.gmra.mrb[0].mxu0 %v6641
      %v6947 = vpop.f32.mrb[0].mxu0
      %v6948 = vadd.f32 0.0, %v6947
      %v6949 = vpop.f32.mrb[0].mxu0
      %v6950 = vpop.f32.mrb[0].mxu0
      %v6951 = vadd.f32 0.0, %v6950
      %v6952 = vpop.f32.mrb[0].mxu0
      %6953 = vmatprep.mubr.bf16.mxu0 0
      %6954 = vmatmul.mubr.bf16.gmra.mrb[0].mxu0 %v6644
      %v6955 = vpop.f32.mrb[0].mxu0
      %v6956 = vadd.f32 0.0, %v6955
      %v6957 = vpop.f32.mrb[0].mxu0
      %v6958 = vpop.f32.mrb[0].mxu0
      %v6959 = vadd.f32 0.0, %v6958
      %v6960 = vpop.f32.mrb[0].mxu0
      %6961 = vmatprep.mubr.bf16.mxu0 0
      %6962 = vmatmul.mubr.bf16.gmra.mrb[0].mxu0 %v6647
      %v6963 = vpop.f32.mrb[0].mxu0
      %v6964 = vadd.f32 0.0, %v6963
      %v6965 = vpop.f32.mrb[0].mxu0
      %v6966 = vpop.f32.mrb[0].mxu0
      %v6967 = vadd.f32 0.0, %v6966
      %v6968 = vpop.f32.mrb[0].mxu0
      %6969 = vdwg.mxu0
      %v6970 = vpack.c.b16 %v5410, %v5409
      %v6971 = vpack.c.b16 %v5412, %v5411
      %v6972 = vpack.c.b16 %v5414, %v5413
      %v6973 = vpack.c.b16 %v5416, %v5415
      %v6974 = vpack.c.b16 %v5418, %v5417
      %v6975 = vpack.c.b16 %v5420, %v5419
      %v6976 = vpack.c.b16 %v5422, %v5421
      %v6977 = vpack.c.b16 %v5424, %v5423
      %v6978 = vpack.c.b16 %v5426, %v5425
      %v6979 = vpack.c.b16 %v5428, %v5427
      %v6980 = vpack.c.b16 %v5430, %v5429
      %v6981 = vpack.c.b16 %v5432, %v5431
      %v6982 = vpack.c.b16 %v5434, %v5433
      %v6983 = vpack.c.b16 %v5436, %v5435
      %v6984 = vpack.c.b16 %v5438, %v5437
      %v6985 = vpack.c.b16 %v5440, %v5439
      %v6986 = vpack.c.b16 %v5442, %v5441
      %v6987 = vpack.c.b16 %v5444, %v5443
      %v6988 = vpack.c.b16 %v5446, %v5445
      %v6989 = vpack.c.b16 %v5448, %v5447
      %v6990 = vpack.c.b16 %v5450, %v5449
      %v6991 = vpack.c.b16 %v5452, %v5451
      %v6992 = vpack.c.b16 %v5454, %v5453
      %v6993 = vpack.c.b16 %v5456, %v5455
      %v6994 = vpack.c.b16 %v5458, %v5457
      %v6995 = vpack.c.b16 %v5460, %v5459
      %v6996 = vpack.c.b16 %v5462, %v5461
      %v6997 = vpack.c.b16 %v5464, %v5463
      %v6998 = vpack.c.b16 %v5466, %v5465
      %v6999 = vpack.c.b16 %v5468, %v5467
      %v7000 = vpack.c.b16 %v5470, %v5469
      %v7001 = vpack.c.b16 %v5472, %v5471
      %v7002 = vpack.c.b16 %v5474, %v5473
      %v7003 = vpack.c.b16 %v5476, %v5475
      %v7004 = vpack.c.b16 %v5478, %v5477
      %v7005 = vpack.c.b16 %v5480, %v5479
      %v7010 = vunpack.c.l.b16 %v5325
      %v7011 = vunpack.c.l.b16 %v5326
      %v7012 = vunpack.c.l.b16 %v5327
      %v7013 = vunpack.c.l.b16 %v5328
      %v7014 = vpack.c.b16 %v7011, %v7010
      %v7015 = vpack.c.b16 %v7013, %v7012
      %v7019 = vsel %vm6540, %v6970, 0
      %v7022 = vsel %vm6540, %v6971, 0
      %v7025 = vsel %vm6540, %v6972, 0
      %v7028 = vsel %vm6540, %v6973, 0
      %v7031 = vsel %vm6540, %v6974, 0
      %v7034 = vsel %vm6540, %v6975, 0
      %v7037 = vsel %vm6540, %v6976, 0
      %v7040 = vsel %vm6540, %v6977, 0
      %v7043 = vsel %vm6540, %v6978, 0
      %v7046 = vsel %vm6540, %v6979, 0
      %v7049 = vsel %vm6540, %v6980, 0
      %v7052 = vsel %vm6540, %v6981, 0
      %v7055 = vsel %vm6540, %v6982, 0
      %v7058 = vsel %vm6540, %v6983, 0
      %v7061 = vsel %vm6540, %v6984, 0
      %v7064 = vsel %vm6540, %v6985, 0
      %v7067 = vsel %vm6540, %v6986, 0
      %v7070 = vsel %vm6540, %v6987, 0
      %v7073 = vsel %vm6540, %v6988, 0
      %v7076 = vsel %vm6540, %v6989, 0
      %v7079 = vsel %vm6540, %v6990, 0
      %v7082 = vsel %vm6540, %v6991, 0
      %v7085 = vsel %vm6540, %v6992, 0
      %v7088 = vsel %vm6540, %v6993, 0
      %v7091 = vsel %vm6540, %v6994, 0
      %v7094 = vsel %vm6540, %v6995, 0
      %v7097 = vsel %vm6540, %v6996, 0
      %v7100 = vsel %vm6540, %v6997, 0
      %v7103 = vsel %vm6540, %v6998, 0
      %v7106 = vsel %vm6540, %v6999, 0
      %v7109 = vsel %vm6540, %v7000, 0
      %v7112 = vsel %vm6540, %v7001, 0
      %v7115 = vsel %vm6540, %v7002, 0
      %v7118 = vsel %vm6540, %v7003, 0
      %v7121 = vsel %vm6540, %v7004, 0
      %v7124 = vsel %vm6540, %v7005, 0
      %7126 = vmatprep.subr.bf16.mxu0 0
      %7127 = vmatpush1.bf16.msra.mxu0 %v7014
      %7128 = vmatprep.subr.bf16.mxu0 0
      %7129 = vmatpush1.bf16.msra.mxu0 %v7015
      %7130 = vmatprep.subr.bf16.mxu0 0
      %7131 = vmatpush1.bf16.msra.mxu0 0
      %7132 = vmatprep.subr.bf16.mxu0 0
      %7133 = vmatpush1.bf16.msra.mxu0 0
      %7134 = vmatprep.subr.bf16.mxu0 0
      %7135 = vmatpush1.bf16.msra.mxu0 0
      %7136 = vmatprep.subr.bf16.mxu0 0
      %7137 = vmatpush1.bf16.msra.mxu0 0
      %7138 = vmatprep.subr.bf16.mxu0 0
      %7139 = vmatpush1.bf16.msra.mxu0 0
      %7140 = vmatprep.subr.bf16.mxu0 0
      %7141 = vmatpush1.bf16.msra.mxu0 0
      %7142 = vmatprep.subr.bf16.mxu0 0
      %7143 = vmatpush1.bf16.msra.mxu0 0
      %7144 = vmatprep.subr.bf16.mxu0 0
      %7145 = vmatpush1.bf16.msra.mxu0 0
      %7146 = vmatprep.subr.bf16.mxu0 0
      %7147 = vmatpush1.bf16.msra.mxu0 0
      %7148 = vmatprep.subr.bf16.mxu0 0
      %7149 = vmatpush1.bf16.msra.mxu0 0
      %7150 = vmatprep.subr.bf16.mxu0 0
      %7151 = vmatpush1.bf16.msra.mxu0 0
      %7152 = vmatprep.subr.bf16.mxu0 0
      %7153 = vmatpush1.bf16.msra.mxu0 0
      %7154 = vmatprep.subr.bf16.mxu0 0
      %7155 = vmatpush1.bf16.msra.mxu0 0
      %7156 = vmatprep.subr.bf16.mxu0 0
      %7157 = vmatpush1.bf16.msra.mxu0 0
      %7158 = vmatprep.mubr.bf16.mxu0 0
      %7159 = vmatmul.mubr.bf16.gmra.mrb[0].mxu0 %v7019
      %v7160 = vpop.f32.mrb[0].mxu0
      %v7161 = vadd.f32 %v6684, %v7160
      %v7162 = vpop.f32.mrb[0].mxu0
      %v7163 = vpop.f32.mrb[0].mxu0
      %v7164 = vadd.f32 %v6687, %v7163
      %v7165 = vpop.f32.mrb[0].mxu0
      %7166 = vmatprep.mubr.bf16.mxu0 0
      %7167 = vmatmul.mubr.bf16.gmra.mrb[0].mxu0 %v7022
      %v7168 = vpop.f32.mrb[0].mxu0
      %v7169 = vadd.f32 %v6692, %v7168
      %v7170 = vpop.f32.mrb[0].mxu0
      %v7171 = vpop.f32.mrb[0].mxu0
      %v7172 = vadd.f32 %v6695, %v7171
      %v7173 = vpop.f32.mrb[0].mxu0
      %7174 = vmatprep.mubr.bf16.mxu0 0
      %7175 = vmatmul.mubr.bf16.gmra.mrb[0].mxu0 %v7025
      %v7176 = vpop.f32.mrb[0].mxu0
      %v7177 = vadd.f32 %v6700, %v7176
      %v7178 = vpop.f32.mrb[0].mxu0
      %v7179 = vpop.f32.mrb[0].mxu0
      %v7180 = vadd.f32 %v6703, %v7179
      %v7181 = vpop.f32.mrb[0].mxu0
      %7182 = vmatprep.mubr.bf16.mxu0 0
      %7183 = vmatmul.mubr.bf16.gmra.mrb[0].mxu0 %v7028
      %v7184 = vpop.f32.mrb[0].mxu0
      %v7185 = vadd.f32 %v6708, %v7184
      %v7186 = vpop.f32.mrb[0].mxu0
      %v7187 = vpop.f32.mrb[0].mxu0
      %v7188 = vadd.f32 %v6711, %v7187
      %v7189 = vpop.f32.mrb[0].mxu0
      %7190 = vmatprep.mubr.bf16.mxu0 0
      %7191 = vmatmul.mubr.bf16.gmra.mrb[0].mxu0 %v7031
      %v7192 = vpop.f32.mrb[0].mxu0
      %v7193 = vadd.f32 %v6716, %v7192
      %v7194 = vpop.f32.mrb[0].mxu0
      %v7195 = vpop.f32.mrb[0].mxu0
      %v7196 = vadd.f32 %v6719, %v7195
      %v7197 = vpop.f32.mrb[0].mxu0
      %7198 = vmatprep.mubr.bf16.mxu0 0
      %7199 = vmatmul.mubr.bf16.gmra.mrb[0].mxu0 %v7034
      %v7200 = vpop.f32.mrb[0].mxu0
      %v7201 = vadd.f32 %v6724, %v7200
      %v7202 = vpop.f32.mrb[0].mxu0
      %v7203 = vpop.f32.mrb[0].mxu0
      %v7204 = vadd.f32 %v6727, %v7203
      %v7205 = vpop.f32.mrb[0].mxu0
      %7206 = vmatprep.mubr.bf16.mxu0 0
      %7207 = vmatmul.mubr.bf16.gmra.mrb[0].mxu0 %v7037
      %v7208 = vpop.f32.mrb[0].mxu0
      %v7209 = vadd.f32 %v6732, %v7208
      %v7210 = vpop.f32.mrb[0].mxu0
      %v7211 = vpop.f32.mrb[0].mxu0
      %v7212 = vadd.f32 %v6735, %v7211
      %v7213 = vpop.f32.mrb[0].mxu0
      %7214 = vmatprep.mubr.bf16.mxu0 0
      %7215 = vmatmul.mubr.bf16.gmra.mrb[0].mxu0 %v7040
      %v7216 = vpop.f32.mrb[0].mxu0
      %v7217 = vadd.f32 %v6740, %v7216
      %v7218 = vpop.f32.mrb[0].mxu0
      %v7219 = vpop.f32.mrb[0].mxu0
      %v7220 = vadd.f32 %v6743, %v7219
      %v7221 = vpop.f32.mrb[0].mxu0
      %7222 = vmatprep.mubr.bf16.mxu0 0
      %7223 = vmatmul.mubr.bf16.gmra.mrb[0].mxu0 %v7043
      %v7224 = vpop.f32.mrb[0].mxu0
      %v7225 = vadd.f32 %v6748, %v7224
      %v7226 = vpop.f32.mrb[0].mxu0
      %v7227 = vpop.f32.mrb[0].mxu0
      %v7228 = vadd.f32 %v6751, %v7227
      %v7229 = vpop.f32.mrb[0].mxu0
      %7230 = vmatprep.mubr.bf16.mxu0 0
      %7231 = vmatmul.mubr.bf16.gmra.mrb[0].mxu0 %v7046
      %v7232 = vpop.f32.mrb[0].mxu0
      %v7233 = vadd.f32 %v6756, %v7232
      %v7234 = vpop.f32.mrb[0].mxu0
      %v7235 = vpop.f32.mrb[0].mxu0
      %v7236 = vadd.f32 %v6759, %v7235
      %v7237 = vpop.f32.mrb[0].mxu0
      %7238 = vmatprep.mubr.bf16.mxu0 0
      %7239 = vmatmul.mubr.bf16.gmra.mrb[0].mxu0 %v7049
      %v7240 = vpop.f32.mrb[0].mxu0
      %v7241 = vadd.f32 %v6764, %v7240
      %v7242 = vpop.f32.mrb[0].mxu0
      %v7243 = vpop.f32.mrb[0].mxu0
      %v7244 = vadd.f32 %v6767, %v7243
      %v7245 = vpop.f32.mrb[0].mxu0
      %7246 = vmatprep.mubr.bf16.mxu0 0
      %7247 = vmatmul.mubr.bf16.gmra.mrb[0].mxu0 %v7052
      %v7248 = vpop.f32.mrb[0].mxu0
      %v7249 = vadd.f32 %v6772, %v7248
      %v7250 = vpop.f32.mrb[0].mxu0
      %v7251 = vpop.f32.mrb[0].mxu0
      %v7252 = vadd.f32 %v6775, %v7251
      %v7253 = vpop.f32.mrb[0].mxu0
      %7254 = vmatprep.mubr.bf16.mxu0 0
      %7255 = vmatmul.mubr.bf16.gmra.mrb[0].mxu0 %v7055
      %v7256 = vpop.f32.mrb[0].mxu0
      %v7257 = vadd.f32 %v6780, %v7256
      %v7258 = vpop.f32.mrb[0].mxu0
      %v7259 = vpop.f32.mrb[0].mxu0
      %v7260 = vadd.f32 %v6783, %v7259
      %v7261 = vpop.f32.mrb[0].mxu0
      %7262 = vmatprep.mubr.bf16.mxu0 0
      %7263 = vmatmul.mubr.bf16.gmra.mrb[0].mxu0 %v7058
      %v7264 = vpop.f32.mrb[0].mxu0
      %v7265 = vadd.f32 %v6788, %v7264
      %v7266 = vpop.f32.mrb[0].mxu0
      %v7267 = vpop.f32.mrb[0].mxu0
      %v7268 = vadd.f32 %v6791, %v7267
      %v7269 = vpop.f32.mrb[0].mxu0
      %7270 = vmatprep.mubr.bf16.mxu0 0
      %7271 = vmatmul.mubr.bf16.gmra.mrb[0].mxu0 %v7061
      %v7272 = vpop.f32.mrb[0].mxu0
      %v7273 = vadd.f32 %v6796, %v7272
      %v7274 = vpop.f32.mrb[0].mxu0
      %v7275 = vpop.f32.mrb[0].mxu0
      %v7276 = vadd.f32 %v6799, %v7275
      %v7277 = vpop.f32.mrb[0].mxu0
      %7278 = vmatprep.mubr.bf16.mxu0 0
      %7279 = vmatmul.mubr.bf16.gmra.mrb[0].mxu0 %v7064
      %v7280 = vpop.f32.mrb[0].mxu0
      %v7281 = vadd.f32 %v6804, %v7280
      %v7282 = vpop.f32.mrb[0].mxu0
      %v7283 = vpop.f32.mrb[0].mxu0
      %v7284 = vadd.f32 %v6807, %v7283
      %v7285 = vpop.f32.mrb[0].mxu0
      %7286 = vmatprep.mubr.bf16.mxu0 0
      %7287 = vmatmul.mubr.bf16.gmra.mrb[0].mxu0 %v7067
      %v7288 = vpop.f32.mrb[0].mxu0
      %v7289 = vadd.f32 %v6812, %v7288
      %v7290 = vpop.f32.mrb[0].mxu0
      %v7291 = vpop.f32.mrb[0].mxu0
      %v7292 = vadd.f32 %v6815, %v7291
      %v7293 = vpop.f32.mrb[0].mxu0
      %7294 = vmatprep.mubr.bf16.mxu0 0
      %7295 = vmatmul.mubr.bf16.gmra.mrb[0].mxu0 %v7070
      %v7296 = vpop.f32.mrb[0].mxu0
      %v7297 = vadd.f32 %v6820, %v7296
      %v7298 = vpop.f32.mrb[0].mxu0
      %v7299 = vpop.f32.mrb[0].mxu0
      %v7300 = vadd.f32 %v6823, %v7299
      %v7301 = vpop.f32.mrb[0].mxu0
      %7302 = vmatprep.mubr.bf16.mxu0 0
      %7303 = vmatmul.mubr.bf16.gmra.mrb[0].mxu0 %v7073
      %v7304 = vpop.f32.mrb[0].mxu0
      %v7305 = vadd.f32 %v6828, %v7304
      %v7306 = vpop.f32.mrb[0].mxu0
      %v7307 = vpop.f32.mrb[0].mxu0
      %v7308 = vadd.f32 %v6831, %v7307
      %v7309 = vpop.f32.mrb[0].mxu0
      %7310 = vmatprep.mubr.bf16.mxu0 0
      %7311 = vmatmul.mubr.bf16.gmra.mrb[0].mxu0 %v7076
      %v7312 = vpop.f32.mrb[0].mxu0
      %v7313 = vadd.f32 %v6836, %v7312
      %v7314 = vpop.f32.mrb[0].mxu0
      %v7315 = vpop.f32.mrb[0].mxu0
      %v7316 = vadd.f32 %v6839, %v7315
      %v7317 = vpop.f32.mrb[0].mxu0
      %7318 = vmatprep.mubr.bf16.mxu0 0
      %7319 = vmatmul.mubr.bf16.gmra.mrb[0].mxu0 %v7079
      %v7320 = vpop.f32.mrb[0].mxu0
      %v7321 = vadd.f32 %v6844, %v7320
      %v7322 = vpop.f32.mrb[0].mxu0
      %v7323 = vpop.f32.mrb[0].mxu0
      %v7324 = vadd.f32 %v6847, %v7323
      %v7325 = vpop.f32.mrb[0].mxu0
      %7326 = vmatprep.mubr.bf16.mxu0 0
      %7327 = vmatmul.mubr.bf16.gmra.mrb[0].mxu0 %v7082
      %v7328 = vpop.f32.mrb[0].mxu0
      %v7329 = vadd.f32 %v6852, %v7328
      %v7330 = vpop.f32.mrb[0].mxu0
      %v7331 = vpop.f32.mrb[0].mxu0
      %v7332 = vadd.f32 %v6855, %v7331
      %v7333 = vpop.f32.mrb[0].mxu0
      %7334 = vmatprep.mubr.bf16.mxu0 0
      %7335 = vmatmul.mubr.bf16.gmra.mrb[0].mxu0 %v7085
      %v7336 = vpop.f32.mrb[0].mxu0
      %v7337 = vadd.f32 %v6860, %v7336
      %v7338 = vpop.f32.mrb[0].mxu0
      %v7339 = vpop.f32.mrb[0].mxu0
      %v7340 = vadd.f32 %v6863, %v7339
      %v7341 = vpop.f32.mrb[0].mxu0
      %7342 = vmatprep.mubr.bf16.mxu0 0
      %7343 = vmatmul.mubr.bf16.gmra.mrb[0].mxu0 %v7088
      %v7344 = vpop.f32.mrb[0].mxu0
      %v7345 = vadd.f32 %v6868, %v7344
      %v7346 = vpop.f32.mrb[0].mxu0
      %v7347 = vpop.f32.mrb[0].mxu0
      %v7348 = vadd.f32 %v6871, %v7347
      %v7349 = vpop.f32.mrb[0].mxu0
      %7350 = vmatprep.mubr.bf16.mxu0 0
      %7351 = vmatmul.mubr.bf16.gmra.mrb[0].mxu0 %v7091
      %v7352 = vpop.f32.mrb[0].mxu0
      %v7353 = vadd.f32 %v6876, %v7352
      %v7354 = vpop.f32.mrb[0].mxu0
      %v7355 = vpop.f32.mrb[0].mxu0
      %v7356 = vadd.f32 %v6879, %v7355
      %v7357 = vpop.f32.mrb[0].mxu0
      %7358 = vmatprep.mubr.bf16.mxu0 0
      %7359 = vmatmul.mubr.bf16.gmra.mrb[0].mxu0 %v7094
      %v7360 = vpop.f32.mrb[0].mxu0
      %v7361 = vadd.f32 %v6884, %v7360
      %v7362 = vpop.f32.mrb[0].mxu0
      %v7363 = vpop.f32.mrb[0].mxu0
      %v7364 = vadd.f32 %v6887, %v7363
      %v7365 = vpop.f32.mrb[0].mxu0
      %7366 = vmatprep.mubr.bf16.mxu0 0
      %7367 = vmatmul.mubr.bf16.gmra.mrb[0].mxu0 %v7097
      %v7368 = vpop.f32.mrb[0].mxu0
      %v7369 = vadd.f32 %v6892, %v7368
      %v7370 = vpop.f32.mrb[0].mxu0
      %v7371 = vpop.f32.mrb[0].mxu0
      %v7372 = vadd.f32 %v6895, %v7371
      %v7373 = vpop.f32.mrb[0].mxu0
      %7374 = vmatprep.mubr.bf16.mxu0 0
      %7375 = vmatmul.mubr.bf16.gmra.mrb[0].mxu0 %v7100
      %v7376 = vpop.f32.mrb[0].mxu0
      %v7377 = vadd.f32 %v6900, %v7376
      %v7378 = vpop.f32.mrb[0].mxu0
      %v7379 = vpop.f32.mrb[0].mxu0
      %v7380 = vadd.f32 %v6903, %v7379
      %v7381 = vpop.f32.mrb[0].mxu0
      %7382 = vmatprep.mubr.bf16.mxu0 0
      %7383 = vmatmul.mubr.bf16.gmra.mrb[0].mxu0 %v7103
      %v7384 = vpop.f32.mrb[0].mxu0
      %v7385 = vadd.f32 %v6908, %v7384
      %v7386 = vpop.f32.mrb[0].mxu0
      %v7387 = vpop.f32.mrb[0].mxu0
      %v7388 = vadd.f32 %v6911, %v7387
      %v7389 = vpop.f32.mrb[0].mxu0
      %7390 = vmatprep.mubr.bf16.mxu0 0
      %7391 = vmatmul.mubr.bf16.gmra.mrb[0].mxu0 %v7106
      %v7392 = vpop.f32.mrb[0].mxu0
      %v7393 = vadd.f32 %v6916, %v7392
      %v7394 = vpop.f32.mrb[0].mxu0
      %v7395 = vpop.f32.mrb[0].mxu0
      %v7396 = vadd.f32 %v6919, %v7395
      %v7397 = vpop.f32.mrb[0].mxu0
      %7398 = vmatprep.mubr.bf16.mxu0 0
      %7399 = vmatmul.mubr.bf16.gmra.mrb[0].mxu0 %v7109
      %v7400 = vpop.f32.mrb[0].mxu0
      %v7401 = vadd.f32 %v6924, %v7400
      %v7402 = vpop.f32.mrb[0].mxu0
      %v7403 = vpop.f32.mrb[0].mxu0
      %v7404 = vadd.f32 %v6927, %v7403
      %v7405 = vpop.f32.mrb[0].mxu0
      %7406 = vmatprep.mubr.bf16.mxu0 0
      %7407 = vmatmul.mubr.bf16.gmra.mrb[0].mxu0 %v7112
      %v7408 = vpop.f32.mrb[0].mxu0
      %v7409 = vadd.f32 %v6932, %v7408
      %v7410 = vpop.f32.mrb[0].mxu0
      %v7411 = vpop.f32.mrb[0].mxu0
      %v7412 = vadd.f32 %v6935, %v7411
      %v7413 = vpop.f32.mrb[0].mxu0
      %7414 = vmatprep.mubr.bf16.mxu0 0
      %7415 = vmatmul.mubr.bf16.gmra.mrb[0].mxu0 %v7115
      %v7416 = vpop.f32.mrb[0].mxu0
      %v7417 = vadd.f32 %v6940, %v7416
      %v7418 = vpop.f32.mrb[0].mxu0
      %v7419 = vpop.f32.mrb[0].mxu0
      %v7420 = vadd.f32 %v6943, %v7419
      %v7421 = vpop.f32.mrb[0].mxu0
      %7422 = vmatprep.mubr.bf16.mxu0 0
      %7423 = vmatmul.mubr.bf16.gmra.mrb[0].mxu0 %v7118
      %v7424 = vpop.f32.mrb[0].mxu0
      %v7425 = vadd.f32 %v6948, %v7424
      %v7426 = vpop.f32.mrb[0].mxu0
      %v7427 = vpop.f32.mrb[0].mxu0
      %v7428 = vadd.f32 %v6951, %v7427
      %v7429 = vpop.f32.mrb[0].mxu0
      %7430 = vmatprep.mubr.bf16.mxu0 0
      %7431 = vmatmul.mubr.bf16.gmra.mrb[0].mxu0 %v7121
      %v7432 = vpop.f32.mrb[0].mxu0
      %v7433 = vadd.f32 %v6956, %v7432
      %v7434 = vpop.f32.mrb[0].mxu0
      %v7435 = vpop.f32.mrb[0].mxu0
      %v7436 = vadd.f32 %v6959, %v7435
      %v7437 = vpop.f32.mrb[0].mxu0
      %7438 = vmatprep.mubr.bf16.mxu0 0
      %7439 = vmatmul.mubr.bf16.gmra.mrb[0].mxu0 %v7124
      %v7440 = vpop.f32.mrb[0].mxu0
      %v7441 = vadd.f32 %v6964, %v7440
      %v7442 = vpop.f32.mrb[0].mxu0
      %v7443 = vpop.f32.mrb[0].mxu0
      %v7444 = vadd.f32 %v6967, %v7443
      %v7445 = vpop.f32.mrb[0].mxu0
      %7446 = vdwg.mxu0
      %vm7447 = vcmask 1042432
      %vm7448 = vcmask 1046532
      %vm7449 = vmor %vm7447, %vm7448
      %v7450 = vrot.slane %v5505, 5
      %v7451 = vrot.slane %v7450, 4
      %v7452 = vrot.slane %v5506, 5
      %v7453 = vsel %vm7449, %v7451, %v7452
      %v7454 = vrot.slane %v7452, 4
      %v7455 = vrot.slane %v5507, 5
      %v7456 = vsel %vm7449, %v7454, %v7455
      %v7457 = vrot.slane %v7455, 4
      %v7458 = vrot.slane %v5508, 5
      %v7459 = vsel %vm7449, %v7457, %v7458
      %v7460 = vrot.slane %v5509, 5
      %v7461 = vrot.slane %v7460, 4
      %v7462 = vrot.slane %v5510, 5
      %v7463 = vsel %vm7449, %v7461, %v7462
      %v7464 = vrot.slane %v7462, 4
      %v7465 = vrot.slane %v5511, 5
      %v7466 = vsel %vm7449, %v7464, %v7465
      %v7467 = vrot.slane %v7465, 4
      %v7468 = vrot.slane %v5512, 5
      %v7469 = vsel %vm7449, %v7467, %v7468
      %v7470 = vrot.slane %v5513, 5
      %v7471 = vrot.slane %v7470, 4
      %v7472 = vrot.slane %v5514, 5
      %v7473 = vsel %vm7449, %v7471, %v7472
      %v7474 = vrot.slane %v7472, 4
      %v7475 = vrot.slane %v5515, 5
      %v7476 = vsel %vm7449, %v7474, %v7475
      %v7477 = vrot.slane %v7475, 4
      %v7478 = vrot.slane %v5516, 5
      %v7479 = vsel %vm7449, %v7477, %v7478
      %v7480 = vrot.slane %v5517, 5
      %v7481 = vrot.slane %v7480, 4
      %v7482 = vrot.slane %v5518, 5
      %v7483 = vsel %vm7449, %v7481, %v7482
      %v7484 = vrot.slane %v7482, 4
      %v7485 = vrot.slane %v5519, 5
      %v7486 = vsel %vm7449, %v7484, %v7485
      %v7487 = vrot.slane %v7485, 4
      %v7488 = vrot.slane %v5520, 5
      %v7489 = vsel %vm7449, %v7487, %v7488
      %v7490 = vrot.slane %v5521, 5
      %v7491 = vrot.slane %v7490, 4
      %v7492 = vrot.slane %v5522, 5
      %v7493 = vsel %vm7449, %v7491, %v7492
      %v7494 = vrot.slane %v7492, 4
      %v7495 = vrot.slane %v5523, 5
      %v7496 = vsel %vm7449, %v7494, %v7495
      %v7497 = vrot.slane %v7495, 4
      %v7498 = vrot.slane %v5524, 5
      %v7499 = vsel %vm7449, %v7497, %v7498
      %v7500 = vrot.slane %v5525, 5
      %v7501 = vrot.slane %v7500, 4
      %v7502 = vrot.slane %v5526, 5
      %v7503 = vsel %vm7449, %v7501, %v7502
      %v7504 = vrot.slane %v7502, 4
      %v7505 = vrot.slane %v5527, 5
      %v7506 = vsel %vm7449, %v7504, %v7505
      %v7507 = vrot.slane %v7505, 4
      %v7508 = vrot.slane %v5528, 5
      %v7509 = vsel %vm7449, %v7507, %v7508
      %v7510 = vrot.slane %v5529, 5
      %v7511 = vrot.slane %v7510, 4
      %v7512 = vrot.slane %v5530, 5
      %v7513 = vsel %vm7449, %v7511, %v7512
      %v7514 = vrot.slane %v7512, 4
      %v7515 = vrot.slane %v5531, 5
      %v7516 = vsel %vm7449, %v7514, %v7515
      %v7517 = vrot.slane %v7515, 4
      %v7518 = vrot.slane %v5532, 5
      %v7519 = vsel %vm7449, %v7517, %v7518
      %v7520 = vrot.slane %v5533, 5
      %v7521 = vrot.slane %v7520, 4
      %v7522 = vrot.slane %v5534, 5
      %v7523 = vsel %vm7449, %v7521, %v7522
      %v7524 = vrot.slane %v7522, 4
      %v7525 = vrot.slane %v5535, 5
      %v7526 = vsel %vm7449, %v7524, %v7525
      %v7527 = vrot.slane %v7525, 4
      %v7528 = vrot.slane %v5536, 5
      %v7529 = vsel %vm7449, %v7527, %v7528
      %v7530 = vrot.slane %v5537, 5
      %v7531 = vrot.slane %v7530, 4
      %v7532 = vrot.slane %v5538, 5
      %v7533 = vsel %vm7449, %v7531, %v7532
      %v7534 = vrot.slane %v7532, 4
      %v7535 = vrot.slane %v5539, 5
      %v7536 = vsel %vm7449, %v7534, %v7535
      %v7537 = vrot.slane %v7535, 4
      %v7538 = vrot.slane %v5540, 5
      %v7539 = vsel %vm7449, %v7537, %v7538
      %v7540 = vrot.slane %v5541, 5
      %v7541 = vrot.slane %v7540, 4
      %v7542 = vrot.slane %v5542, 5
      %v7543 = vsel %vm7449, %v7541, %v7542
      %v7544 = vrot.slane %v7542, 4
      %v7545 = vrot.slane %v5543, 5
      %v7546 = vsel %vm7449, %v7544, %v7545
      %v7547 = vrot.slane %v7545, 4
      %v7548 = vrot.slane %v5544, 5
      %v7549 = vsel %vm7449, %v7547, %v7548
      %v7550 = vrot.slane %v5545, 5
      %v7551 = vrot.slane %v7550, 4
      %v7552 = vrot.slane %v5546, 5
      %v7553 = vsel %vm7449, %v7551, %v7552
      %v7554 = vrot.slane %v7552, 4
      %v7555 = vrot.slane %v5547, 5
      %v7556 = vsel %vm7449, %v7554, %v7555
      %v7557 = vrot.slane %v7555, 4
      %v7558 = vrot.slane %v5548, 5
      %v7559 = vsel %vm7449, %v7557, %v7558
      %v7560 = vrot.slane %v5549, 5
      %v7561 = vrot.slane %v7560, 4
      %v7562 = vrot.slane %v5550, 5
      %v7563 = vsel %vm7449, %v7561, %v7562
      %v7564 = vrot.slane %v7562, 4
      %v7565 = vrot.slane %v5551, 5
      %v7566 = vsel %vm7449, %v7564, %v7565
      %v7567 = vrot.slane %v7565, 4
      %v7568 = vrot.slane %v5552, 5
      %v7569 = vsel %vm7449, %v7567, %v7568
      %v7570 = vrot.slane %v5553, 5
      %v7571 = vrot.slane %v7570, 4
      %v7572 = vrot.slane %v5554, 5
      %v7573 = vsel %vm7449, %v7571, %v7572
      %v7574 = vrot.slane %v7572, 4
      %v7575 = vrot.slane %v5555, 5
      %v7576 = vsel %vm7449, %v7574, %v7575
      %v7577 = vrot.slane %v7575, 4
      %v7578 = vrot.slane %v5556, 5
      %v7579 = vsel %vm7449, %v7577, %v7578
      %v7580 = vrot.slane %v5557, 5
      %v7581 = vrot.slane %v7580, 4
      %v7582 = vrot.slane %v5558, 5
      %v7583 = vsel %vm7449, %v7581, %v7582
      %v7584 = vrot.slane %v7582, 4
      %v7585 = vrot.slane %v5559, 5
      %v7586 = vsel %vm7449, %v7584, %v7585
      %v7587 = vrot.slane %v7585, 4
      %v7588 = vrot.slane %v5560, 5
      %v7589 = vsel %vm7449, %v7587, %v7588
      %v7590 = vrot.slane %v5561, 5
      %v7591 = vrot.slane %v7590, 4
      %v7592 = vrot.slane %v5562, 5
      %v7593 = vsel %vm7449, %v7591, %v7592
      %v7594 = vrot.slane %v7592, 4
      %v7595 = vrot.slane %v5563, 5
      %v7596 = vsel %vm7449, %v7594, %v7595
      %v7597 = vrot.slane %v7595, 4
      %v7598 = vrot.slane %v5564, 5
      %v7599 = vsel %vm7449, %v7597, %v7598
      %v7600 = vrot.slane %v5565, 5
      %v7601 = vrot.slane %v7600, 4
      %v7602 = vrot.slane %v5566, 5
      %v7603 = vsel %vm7449, %v7601, %v7602
      %v7604 = vrot.slane %v7602, 4
      %v7605 = vrot.slane %v5567, 5
      %v7606 = vsel %vm7449, %v7604, %v7605
      %v7607 = vrot.slane %v7605, 4
      %v7608 = vrot.slane %v5568, 5
      %v7609 = vsel %vm7449, %v7607, %v7608
      %v7610 = vrot.slane %v5569, 5
      %v7611 = vrot.slane %v7610, 4
      %v7612 = vrot.slane %v5570, 5
      %v7613 = vsel %vm7449, %v7611, %v7612
      %v7614 = vrot.slane %v7612, 4
      %v7615 = vrot.slane %v5571, 5
      %v7616 = vsel %vm7449, %v7614, %v7615
      %v7617 = vrot.slane %v7615, 4
      %v7618 = vrot.slane %v5572, 5
      %v7619 = vsel %vm7449, %v7617, %v7618
      %v7620 = vrot.slane %v5573, 5
      %v7621 = vrot.slane %v7620, 4
      %v7622 = vrot.slane %v5574, 5
      %v7623 = vsel %vm7449, %v7621, %v7622
      %v7624 = vrot.slane %v7622, 4
      %v7625 = vrot.slane %v5575, 5
      %v7626 = vsel %vm7449, %v7624, %v7625
      %v7627 = vrot.slane %v7625, 4
      %v7628 = vrot.slane %v5576, 5
      %v7629 = vsel %vm7449, %v7627, %v7628
      %v7630 = vrot.slane %v5577, 5
      %v7631 = vrot.slane %v7630, 4
      %v7632 = vrot.slane %v5578, 5
      %v7633 = vsel %vm7449, %v7631, %v7632
      %v7634 = vrot.slane %v7632, 4
      %v7635 = vrot.slane %v5579, 5
      %v7636 = vsel %vm7449, %v7634, %v7635
      %v7637 = vrot.slane %v7635, 4
      %v7638 = vrot.slane %v5580, 5
      %v7639 = vsel %vm7449, %v7637, %v7638
      %v7640 = vrot.slane %v5581, 5
      %v7641 = vrot.slane %v7640, 4
      %v7642 = vrot.slane %v5582, 5
      %v7643 = vsel %vm7449, %v7641, %v7642
      %v7644 = vrot.slane %v7642, 4
      %v7645 = vrot.slane %v5583, 5
      %v7646 = vsel %vm7449, %v7644, %v7645
      %v7647 = vrot.slane %v7645, 4
      %v7648 = vrot.slane %v5584, 5
      %v7649 = vsel %vm7449, %v7647, %v7648
      %v7650 = vrot.slane %v5585, 5
      %v7651 = vrot.slane %v7650, 4
      %v7652 = vrot.slane %v5586, 5
      %v7653 = vsel %vm7449, %v7651, %v7652
      %v7654 = vrot.slane %v7652, 4
      %v7655 = vrot.slane %v5587, 5
      %v7656 = vsel %vm7449, %v7654, %v7655
      %v7657 = vrot.slane %v7655, 4
      %v7658 = vrot.slane %v5588, 5
      %v7659 = vsel %vm7449, %v7657, %v7658
      %v7660 = vrot.slane %v5589, 5
      %v7661 = vrot.slane %v7660, 4
      %v7662 = vrot.slane %v5590, 5
      %v7663 = vsel %vm7449, %v7661, %v7662
      %v7664 = vrot.slane %v7662, 4
      %v7665 = vrot.slane %v5591, 5
      %v7666 = vsel %vm7449, %v7664, %v7665
      %v7667 = vrot.slane %v7665, 4
      %v7668 = vrot.slane %v5592, 5
      %v7669 = vsel %vm7449, %v7667, %v7668
      %v7670 = vrot.slane %v5593, 5
      %v7671 = vrot.slane %v7670, 4
      %v7672 = vrot.slane %v5594, 5
      %v7673 = vsel %vm7449, %v7671, %v7672
      %v7674 = vrot.slane %v7672, 4
      %v7675 = vrot.slane %v5595, 5
      %v7676 = vsel %vm7449, %v7674, %v7675
      %v7677 = vrot.slane %v7675, 4
      %v7678 = vrot.slane %v5596, 5
      %v7679 = vsel %vm7449, %v7677, %v7678
      %v7680 = vrot.slane %v5597, 5
      %v7681 = vrot.slane %v7680, 4
      %v7682 = vrot.slane %v5598, 5
      %v7683 = vsel %vm7449, %v7681, %v7682
      %v7684 = vrot.slane %v7682, 4
      %v7685 = vrot.slane %v5599, 5
      %v7686 = vsel %vm7449, %v7684, %v7685
      %v7687 = vrot.slane %v7685, 4
      %v7688 = vrot.slane %v5600, 5
      %v7689 = vsel %vm7449, %v7687, %v7688
      %v7690 = vunpack.c.l.b16 %v7453
      %v7691 = vunpack.c.l.b16 %v7456
      %v7692 = vunpack.c.l.b16 %v7459
      %v7693 = vunpack.c.l.b16 %v7463
      %v7694 = vunpack.c.l.b16 %v7466
      %v7695 = vunpack.c.l.b16 %v7469
      %v7696 = vunpack.c.l.b16 %v7473
      %v7697 = vunpack.c.l.b16 %v7476
      %v7698 = vunpack.c.l.b16 %v7479
      %v7699 = vunpack.c.l.b16 %v7483
      %v7700 = vunpack.c.l.b16 %v7486
      %v7701 = vunpack.c.l.b16 %v7489
      %v7702 = vunpack.c.l.b16 %v7493
      %v7703 = vunpack.c.l.b16 %v7496
      %v7704 = vunpack.c.l.b16 %v7499
      %v7705 = vunpack.c.l.b16 %v7503
      %v7706 = vunpack.c.l.b16 %v7506
      %v7707 = vunpack.c.l.b16 %v7509
      %v7708 = vunpack.c.l.b16 %v7513
      %v7709 = vunpack.c.l.b16 %v7516
      %v7710 = vunpack.c.l.b16 %v7519
      %v7711 = vunpack.c.l.b16 %v7523
      %v7712 = vunpack.c.l.b16 %v7526
      %v7713 = vunpack.c.l.b16 %v7529
      %v7714 = vunpack.c.l.b16 %v7533
      %v7715 = vunpack.c.l.b16 %v7536
      %v7716 = vunpack.c.l.b16 %v7539
      %v7717 = vunpack.c.l.b16 %v7543
      %v7718 = vunpack.c.l.b16 %v7546
      %v7719 = vunpack.c.l.b16 %v7549
      %v7720 = vunpack.c.l.b16 %v7553
      %v7721 = vunpack.c.l.b16 %v7556
      %v7722 = vunpack.c.l.b16 %v7559
      %v7723 = vunpack.c.l.b16 %v7563
      %v7724 = vunpack.c.l.b16 %v7566
      %v7725 = vunpack.c.l.b16 %v7569
      %v7726 = vunpack.c.l.b16 %v7573
      %v7727 = vunpack.c.l.b16 %v7576
      %v7728 = vunpack.c.l.b16 %v7579
      %v7729 = vunpack.c.l.b16 %v7583
      %v7730 = vunpack.c.l.b16 %v7586
      %v7731 = vunpack.c.l.b16 %v7589
      %v7732 = vunpack.c.l.b16 %v7593
      %v7733 = vunpack.c.l.b16 %v7596
      %v7734 = vunpack.c.l.b16 %v7599
      %v7735 = vunpack.c.l.b16 %v7603
      %v7736 = vunpack.c.l.b16 %v7606
      %v7737 = vunpack.c.l.b16 %v7609
      %v7738 = vunpack.c.l.b16 %v7613
      %v7739 = vunpack.c.l.b16 %v7616
      %v7740 = vunpack.c.l.b16 %v7619
      %v7741 = vunpack.c.l.b16 %v7623
      %v7742 = vunpack.c.l.b16 %v7626
      %v7743 = vunpack.c.l.b16 %v7629
      %v7744 = vunpack.c.l.b16 %v7633
      %v7745 = vunpack.c.l.b16 %v7636
      %v7746 = vunpack.c.l.b16 %v7639
      %v7747 = vunpack.c.l.b16 %v7643
      %v7748 = vunpack.c.l.b16 %v7646
      %v7749 = vunpack.c.l.b16 %v7649
      %v7750 = vunpack.c.l.b16 %v7653
      %v7751 = vunpack.c.l.b16 %v7656
      %v7752 = vunpack.c.l.b16 %v7659
      %v7753 = vunpack.c.l.b16 %v7663
      %v7754 = vunpack.c.l.b16 %v7666
      %v7755 = vunpack.c.l.b16 %v7669
      %v7756 = vunpack.c.l.b16 %v7673
      %v7757 = vunpack.c.l.b16 %v7676
      %v7758 = vunpack.c.l.b16 %v7679
      %v7759 = vunpack.c.l.b16 %v7683
      %v7760 = vunpack.c.l.b16 %v7686
      %v7761 = vunpack.c.l.b16 %v7689
      %v7762 = vpack.c.b16 %v7691, %v7690
      %v7763 = vpack.c.b16 %v7693, %v7692
      %v7764 = vpack.c.b16 %v7695, %v7694
      %v7765 = vpack.c.b16 %v7697, %v7696
      %v7766 = vpack.c.b16 %v7699, %v7698
      %v7767 = vpack.c.b16 %v7701, %v7700
      %v7768 = vpack.c.b16 %v7703, %v7702
      %v7769 = vpack.c.b16 %v7705, %v7704
      %v7770 = vpack.c.b16 %v7707, %v7706
      %v7771 = vpack.c.b16 %v7709, %v7708
      %v7772 = vpack.c.b16 %v7711, %v7710
      %v7773 = vpack.c.b16 %v7713, %v7712
      %v7774 = vpack.c.b16 %v7715, %v7714
      %v7775 = vpack.c.b16 %v7717, %v7716
      %v7776 = vpack.c.b16 %v7719, %v7718
      %v7777 = vpack.c.b16 %v7721, %v7720
      %v7778 = vpack.c.b16 %v7723, %v7722
      %v7779 = vpack.c.b16 %v7725, %v7724
      %v7780 = vpack.c.b16 %v7727, %v7726
      %v7781 = vpack.c.b16 %v7729, %v7728
      %v7782 = vpack.c.b16 %v7731, %v7730
      %v7783 = vpack.c.b16 %v7733, %v7732
      %v7784 = vpack.c.b16 %v7735, %v7734
      %v7785 = vpack.c.b16 %v7737, %v7736
      %v7786 = vpack.c.b16 %v7739, %v7738
      %v7787 = vpack.c.b16 %v7741, %v7740
      %v7788 = vpack.c.b16 %v7743, %v7742
      %v7789 = vpack.c.b16 %v7745, %v7744
      %v7790 = vpack.c.b16 %v7747, %v7746
      %v7791 = vpack.c.b16 %v7749, %v7748
      %v7792 = vpack.c.b16 %v7751, %v7750
      %v7793 = vpack.c.b16 %v7753, %v7752
      %v7794 = vpack.c.b16 %v7755, %v7754
      %v7795 = vpack.c.b16 %v7757, %v7756
      %v7796 = vpack.c.b16 %v7759, %v7758
      %v7797 = vpack.c.b16 %v7761, %v7760
      %v7802 = vunpack.c.l.b16 %v5333
      %v7803 = vunpack.c.l.b16 %v5334
      %v7804 = vunpack.c.l.b16 %v5335
      %v7805 = vunpack.c.l.b16 %v5336
      %v7806 = vpack.c.b16 %v7803, %v7802
      %v7807 = vpack.c.b16 %v7805, %v7804
      %v7811 = vsel %vm6540, %v7762, 0
      %v7814 = vsel %vm6540, %v7763, 0
      %v7817 = vsel %vm6540, %v7764, 0
      %v7820 = vsel %vm6540, %v7765, 0
      %v7823 = vsel %vm6540, %v7766, 0
      %v7826 = vsel %vm6540, %v7767, 0
      %v7829 = vsel %vm6540, %v7768, 0
      %v7832 = vsel %vm6540, %v7769, 0
      %v7835 = vsel %vm6540, %v7770, 0
      %v7838 = vsel %vm6540, %v7771, 0
      %v7841 = vsel %vm6540, %v7772, 0
      %v7844 = vsel %vm6540, %v7773, 0
      %v7847 = vsel %vm6540, %v7774, 0
      %v7850 = vsel %vm6540, %v7775, 0
      %v7853 = vsel %vm6540, %v7776, 0
      %v7856 = vsel %vm6540, %v7777, 0
      %v7859 = vsel %vm6540, %v7778, 0
      %v7862 = vsel %vm6540, %v7779, 0
      %v7865 = vsel %vm6540, %v7780, 0
      %v7868 = vsel %vm6540, %v7781, 0
      %v7871 = vsel %vm6540, %v7782, 0
      %v7874 = vsel %vm6540, %v7783, 0
      %v7877 = vsel %vm6540, %v7784, 0
      %v7880 = vsel %vm6540, %v7785, 0
      %v7883 = vsel %vm6540, %v7786, 0
      %v7886 = vsel %vm6540, %v7787, 0
      %v7889 = vsel %vm6540, %v7788, 0
      %v7892 = vsel %vm6540, %v7789, 0
      %v7895 = vsel %vm6540, %v7790, 0
      %v7898 = vsel %vm6540, %v7791, 0
      %v7901 = vsel %vm6540, %v7792, 0
      %v7904 = vsel %vm6540, %v7793, 0
      %v7907 = vsel %vm6540, %v7794, 0
      %v7910 = vsel %vm6540, %v7795, 0
      %v7913 = vsel %vm6540, %v7796, 0
      %v7916 = vsel %vm6540, %v7797, 0
      %7918 = vmatprep.subr.bf16.mxu0 0
      %7919 = vmatpush1.bf16.msra.mxu0 %v7806
      %7920 = vmatprep.subr.bf16.mxu0 0
      %7921 = vmatpush1.bf16.msra.mxu0 %v7807
      %7922 = vmatprep.subr.bf16.mxu0 0
      %7923 = vmatpush1.bf16.msra.mxu0 0
      %7924 = vmatprep.subr.bf16.mxu0 0
      %7925 = vmatpush1.bf16.msra.mxu0 0
      %7926 = vmatprep.subr.bf16.mxu0 0
      %7927 = vmatpush1.bf16.msra.mxu0 0
      %7928 = vmatprep.subr.bf16.mxu0 0
      %7929 = vmatpush1.bf16.msra.mxu0 0
      %7930 = vmatprep.subr.bf16.mxu0 0
      %7931 = vmatpush1.bf16.msra.mxu0 0
      %7932 = vmatprep.subr.bf16.mxu0 0
      %7933 = vmatpush1.bf16.msra.mxu0 0
      %7934 = vmatprep.subr.bf16.mxu0 0
      %7935 = vmatpush1.bf16.msra.mxu0 0
      %7936 = vmatprep.subr.bf16.mxu0 0
      %7937 = vmatpush1.bf16.msra.mxu0 0
      %7938 = vmatprep.subr.bf16.mxu0 0
      %7939 = vmatpush1.bf16.msra.mxu0 0
      %7940 = vmatprep.subr.bf16.mxu0 0
      %7941 = vmatpush1.bf16.msra.mxu0 0
      %7942 = vmatprep.subr.bf16.mxu0 0
      %7943 = vmatpush1.bf16.msra.mxu0 0
      %7944 = vmatprep.subr.bf16.mxu0 0
      %7945 = vmatpush1.bf16.msra.mxu0 0
      %7946 = vmatprep.subr.bf16.mxu0 0
      %7947 = vmatpush1.bf16.msra.mxu0 0
      %7948 = vmatprep.subr.bf16.mxu0 0
      %7949 = vmatpush1.bf16.msra.mxu0 0
      %7950 = vmatprep.mubr.bf16.mxu0 0
      %7951 = vmatmul.mubr.bf16.gmra.mrb[0].mxu0 %v7811
      %v7952 = vpop.f32.mrb[0].mxu0
      %v7953 = vadd.f32 0.0, %v7952
      %v7954 = vpop.f32.mrb[0].mxu0
      %v7955 = vpop.f32.mrb[0].mxu0
      %v7956 = vadd.f32 0.0, %v7955
      %v7957 = vpop.f32.mrb[0].mxu0
      %7958 = vmatprep.mubr.bf16.mxu0 0
      %7959 = vmatmul.mubr.bf16.gmra.mrb[0].mxu0 %v7814
      %v7960 = vpop.f32.mrb[0].mxu0
      %v7961 = vadd.f32 0.0, %v7960
      %v7962 = vpop.f32.mrb[0].mxu0
      %v7963 = vpop.f32.mrb[0].mxu0
      %v7964 = vadd.f32 0.0, %v7963
      %v7965 = vpop.f32.mrb[0].mxu0
      %7966 = vmatprep.mubr.bf16.mxu0 0
      %7967 = vmatmul.mubr.bf16.gmra.mrb[0].mxu0 %v7817
      %v7968 = vpop.f32.mrb[0].mxu0
      %v7969 = vadd.f32 0.0, %v7968
      %v7970 = vpop.f32.mrb[0].mxu0
      %v7971 = vpop.f32.mrb[0].mxu0
      %v7972 = vadd.f32 0.0, %v7971
      %v7973 = vpop.f32.mrb[0].mxu0
      %7974 = vmatprep.mubr.bf16.mxu0 0
      %7975 = vmatmul.mubr.bf16.gmra.mrb[0].mxu0 %v7820
      %v7976 = vpop.f32.mrb[0].mxu0
      %v7977 = vadd.f32 0.0, %v7976
      %v7978 = vpop.f32.mrb[0].mxu0
      %v7979 = vpop.f32.mrb[0].mxu0
      %v7980 = vadd.f32 0.0, %v7979
      %v7981 = vpop.f32.mrb[0].mxu0
      %7982 = vmatprep.mubr.bf16.mxu0 0
      %7983 = vmatmul.mubr.bf16.gmra.mrb[0].mxu0 %v7823
      %v7984 = vpop.f32.mrb[0].mxu0
      %v7985 = vadd.f32 0.0, %v7984
      %v7986 = vpop.f32.mrb[0].mxu0
      %v7987 = vpop.f32.mrb[0].mxu0
      %v7988 = vadd.f32 0.0, %v7987
      %v7989 = vpop.f32.mrb[0].mxu0
      %7990 = vmatprep.mubr.bf16.mxu0 0
      %7991 = vmatmul.mubr.bf16.gmra.mrb[0].mxu0 %v7826
      %v7992 = vpop.f32.mrb[0].mxu0
      %v7993 = vadd.f32 0.0, %v7992
      %v7994 = vpop.f32.mrb[0].mxu0
      %v7995 = vpop.f32.mrb[0].mxu0
      %v7996 = vadd.f32 0.0, %v7995
      %v7997 = vpop.f32.mrb[0].mxu0
      %7998 = vmatprep.mubr.bf16.mxu0 0
      %7999 = vmatmul.mubr.bf16.gmra.mrb[0].mxu0 %v7829
      %v8000 = vpop.f32.mrb[0].mxu0
      %v8001 = vadd.f32 0.0, %v8000
      %v8002 = vpop.f32.mrb[0].mxu0
      %v8003 = vpop.f32.mrb[0].mxu0
      %v8004 = vadd.f32 0.0, %v8003
      %v8005 = vpop.f32.mrb[0].mxu0
      %8006 = vmatprep.mubr.bf16.mxu0 0
      %8007 = vmatmul.mubr.bf16.gmra.mrb[0].mxu0 %v7832
      %v8008 = vpop.f32.mrb[0].mxu0
      %v8009 = vadd.f32 0.0, %v8008
      %v8010 = vpop.f32.mrb[0].mxu0
      %v8011 = vpop.f32.mrb[0].mxu0
      %v8012 = vadd.f32 0.0, %v8011
      %v8013 = vpop.f32.mrb[0].mxu0
      %8014 = vmatprep.mubr.bf16.mxu0 0
      %8015 = vmatmul.mubr.bf16.gmra.mrb[0].mxu0 %v7835
      %v8016 = vpop.f32.mrb[0].mxu0
      %v8017 = vadd.f32 0.0, %v8016
      %v8018 = vpop.f32.mrb[0].mxu0
      %v8019 = vpop.f32.mrb[0].mxu0
      %v8020 = vadd.f32 0.0, %v8019
      %v8021 = vpop.f32.mrb[0].mxu0
      %8022 = vmatprep.mubr.bf16.mxu0 0
      %8023 = vmatmul.mubr.bf16.gmra.mrb[0].mxu0 %v7838
      %v8024 = vpop.f32.mrb[0].mxu0
      %v8025 = vadd.f32 0.0, %v8024
      %v8026 = vpop.f32.mrb[0].mxu0
      %v8027 = vpop.f32.mrb[0].mxu0
      %v8028 = vadd.f32 0.0, %v8027
      %v8029 = vpop.f32.mrb[0].mxu0
      %8030 = vmatprep.mubr.bf16.mxu0 0
      %8031 = vmatmul.mubr.bf16.gmra.mrb[0].mxu0 %v7841
      %v8032 = vpop.f32.mrb[0].mxu0
      %v8033 = vadd.f32 0.0, %v8032
      %v8034 = vpop.f32.mrb[0].mxu0
      %v8035 = vpop.f32.mrb[0].mxu0
      %v8036 = vadd.f32 0.0, %v8035
      %v8037 = vpop.f32.mrb[0].mxu0
      %8038 = vmatprep.mubr.bf16.mxu0 0
      %8039 = vmatmul.mubr.bf16.gmra.mrb[0].mxu0 %v7844
      %v8040 = vpop.f32.mrb[0].mxu0
      %v8041 = vadd.f32 0.0, %v8040
      %v8042 = vpop.f32.mrb[0].mxu0
      %v8043 = vpop.f32.mrb[0].mxu0
      %v8044 = vadd.f32 0.0, %v8043
      %v8045 = vpop.f32.mrb[0].mxu0
      %8046 = vmatprep.mubr.bf16.mxu0 0
      %8047 = vmatmul.mubr.bf16.gmra.mrb[0].mxu0 %v7847
      %v8048 = vpop.f32.mrb[0].mxu0
      %v8049 = vadd.f32 0.0, %v8048
      %v8050 = vpop.f32.mrb[0].mxu0
      %v8051 = vpop.f32.mrb[0].mxu0
      %v8052 = vadd.f32 0.0, %v8051
      %v8053 = vpop.f32.mrb[0].mxu0
      %8054 = vmatprep.mubr.bf16.mxu0 0
      %8055 = vmatmul.mubr.bf16.gmra.mrb[0].mxu0 %v7850
      %v8056 = vpop.f32.mrb[0].mxu0
      %v8057 = vadd.f32 0.0, %v8056
      %v8058 = vpop.f32.mrb[0].mxu0
      %v8059 = vpop.f32.mrb[0].mxu0
      %v8060 = vadd.f32 0.0, %v8059
      %v8061 = vpop.f32.mrb[0].mxu0
      %8062 = vmatprep.mubr.bf16.mxu0 0
      %8063 = vmatmul.mubr.bf16.gmra.mrb[0].mxu0 %v7853
      %v8064 = vpop.f32.mrb[0].mxu0
      %v8065 = vadd.f32 0.0, %v8064
      %v8066 = vpop.f32.mrb[0].mxu0
      %v8067 = vpop.f32.mrb[0].mxu0
      %v8068 = vadd.f32 0.0, %v8067
      %v8069 = vpop.f32.mrb[0].mxu0
      %8070 = vmatprep.mubr.bf16.mxu0 0
      %8071 = vmatmul.mubr.bf16.gmra.mrb[0].mxu0 %v7856
      %v8072 = vpop.f32.mrb[0].mxu0
      %v8073 = vadd.f32 0.0, %v8072
      %v8074 = vpop.f32.mrb[0].mxu0
      %v8075 = vpop.f32.mrb[0].mxu0
      %v8076 = vadd.f32 0.0, %v8075
      %v8077 = vpop.f32.mrb[0].mxu0
      %8078 = vmatprep.mubr.bf16.mxu0 0
      %8079 = vmatmul.mubr.bf16.gmra.mrb[0].mxu0 %v7859
      %v8080 = vpop.f32.mrb[0].mxu0
      %v8081 = vadd.f32 0.0, %v8080
      %v8082 = vpop.f32.mrb[0].mxu0
      %v8083 = vpop.f32.mrb[0].mxu0
      %v8084 = vadd.f32 0.0, %v8083
      %v8085 = vpop.f32.mrb[0].mxu0
      %8086 = vmatprep.mubr.bf16.mxu0 0
      %8087 = vmatmul.mubr.bf16.gmra.mrb[0].mxu0 %v7862
      %v8088 = vpop.f32.mrb[0].mxu0
      %v8089 = vadd.f32 0.0, %v8088
      %v8090 = vpop.f32.mrb[0].mxu0
      %v8091 = vpop.f32.mrb[0].mxu0
      %v8092 = vadd.f32 0.0, %v8091
      %v8093 = vpop.f32.mrb[0].mxu0
      %8094 = vmatprep.mubr.bf16.mxu0 0
      %8095 = vmatmul.mubr.bf16.gmra.mrb[0].mxu0 %v7865
      %v8096 = vpop.f32.mrb[0].mxu0
      %v8097 = vadd.f32 0.0, %v8096
      %v8098 = vpop.f32.mrb[0].mxu0
      %v8099 = vpop.f32.mrb[0].mxu0
      %v8100 = vadd.f32 0.0, %v8099
      %v8101 = vpop.f32.mrb[0].mxu0
      %8102 = vmatprep.mubr.bf16.mxu0 0
      %8103 = vmatmul.mubr.bf16.gmra.mrb[0].mxu0 %v7868
      %v8104 = vpop.f32.mrb[0].mxu0
      %v8105 = vadd.f32 0.0, %v8104
      %v8106 = vpop.f32.mrb[0].mxu0
      %v8107 = vpop.f32.mrb[0].mxu0
      %v8108 = vadd.f32 0.0, %v8107
      %v8109 = vpop.f32.mrb[0].mxu0
      %8110 = vmatprep.mubr.bf16.mxu0 0
      %8111 = vmatmul.mubr.bf16.gmra.mrb[0].mxu0 %v7871
      %v8112 = vpop.f32.mrb[0].mxu0
      %v8113 = vadd.f32 0.0, %v8112
      %v8114 = vpop.f32.mrb[0].mxu0
      %v8115 = vpop.f32.mrb[0].mxu0
      %v8116 = vadd.f32 0.0, %v8115
      %v8117 = vpop.f32.mrb[0].mxu0
      %8118 = vmatprep.mubr.bf16.mxu0 0
      %8119 = vmatmul.mubr.bf16.gmra.mrb[0].mxu0 %v7874
      %v8120 = vpop.f32.mrb[0].mxu0
      %v8121 = vadd.f32 0.0, %v8120
      %v8122 = vpop.f32.mrb[0].mxu0
      %v8123 = vpop.f32.mrb[0].mxu0
      %v8124 = vadd.f32 0.0, %v8123
      %v8125 = vpop.f32.mrb[0].mxu0
      %8126 = vmatprep.mubr.bf16.mxu0 0
      %8127 = vmatmul.mubr.bf16.gmra.mrb[0].mxu0 %v7877
      %v8128 = vpop.f32.mrb[0].mxu0
      %v8129 = vadd.f32 0.0, %v8128
      %v8130 = vpop.f32.mrb[0].mxu0
      %v8131 = vpop.f32.mrb[0].mxu0
      %v8132 = vadd.f32 0.0, %v8131
      %v8133 = vpop.f32.mrb[0].mxu0
      %8134 = vmatprep.mubr.bf16.mxu0 0
      %8135 = vmatmul.mubr.bf16.gmra.mrb[0].mxu0 %v7880
      %v8136 = vpop.f32.mrb[0].mxu0
      %v8137 = vadd.f32 0.0, %v8136
      %v8138 = vpop.f32.mrb[0].mxu0
      %v8139 = vpop.f32.mrb[0].mxu0
      %v8140 = vadd.f32 0.0, %v8139
      %v8141 = vpop.f32.mrb[0].mxu0
      %8142 = vmatprep.mubr.bf16.mxu0 0
      %8143 = vmatmul.mubr.bf16.gmra.mrb[0].mxu0 %v7883
      %v8144 = vpop.f32.mrb[0].mxu0
      %v8145 = vadd.f32 0.0, %v8144
      %v8146 = vpop.f32.mrb[0].mxu0
      %v8147 = vpop.f32.mrb[0].mxu0
      %v8148 = vadd.f32 0.0, %v8147
      %v8149 = vpop.f32.mrb[0].mxu0
      %8150 = vmatprep.mubr.bf16.mxu0 0
      %8151 = vmatmul.mubr.bf16.gmra.mrb[0].mxu0 %v7886
      %v8152 = vpop.f32.mrb[0].mxu0
      %v8153 = vadd.f32 0.0, %v8152
      %v8154 = vpop.f32.mrb[0].mxu0
      %v8155 = vpop.f32.mrb[0].mxu0
      %v8156 = vadd.f32 0.0, %v8155
      %v8157 = vpop.f32.mrb[0].mxu0
      %8158 = vmatprep.mubr.bf16.mxu0 0
      %8159 = vmatmul.mubr.bf16.gmra.mrb[0].mxu0 %v7889
      %v8160 = vpop.f32.mrb[0].mxu0
      %v8161 = vadd.f32 0.0, %v8160
      %v8162 = vpop.f32.mrb[0].mxu0
      %v8163 = vpop.f32.mrb[0].mxu0
      %v8164 = vadd.f32 0.0, %v8163
      %v8165 = vpop.f32.mrb[0].mxu0
      %8166 = vmatprep.mubr.bf16.mxu0 0
      %8167 = vmatmul.mubr.bf16.gmra.mrb[0].mxu0 %v7892
      %v8168 = vpop.f32.mrb[0].mxu0
      %v8169 = vadd.f32 0.0, %v8168
      %v8170 = vpop.f32.mrb[0].mxu0
      %v8171 = vpop.f32.mrb[0].mxu0
      %v8172 = vadd.f32 0.0, %v8171
      %v8173 = vpop.f32.mrb[0].mxu0
      %8174 = vmatprep.mubr.bf16.mxu0 0
      %8175 = vmatmul.mubr.bf16.gmra.mrb[0].mxu0 %v7895
      %v8176 = vpop.f32.mrb[0].mxu0
      %v8177 = vadd.f32 0.0, %v8176
      %v8178 = vpop.f32.mrb[0].mxu0
      %v8179 = vpop.f32.mrb[0].mxu0
      %v8180 = vadd.f32 0.0, %v8179
      %v8181 = vpop.f32.mrb[0].mxu0
      %8182 = vmatprep.mubr.bf16.mxu0 0
      %8183 = vmatmul.mubr.bf16.gmra.mrb[0].mxu0 %v7898
      %v8184 = vpop.f32.mrb[0].mxu0
      %v8185 = vadd.f32 0.0, %v8184
      %v8186 = vpop.f32.mrb[0].mxu0
      %v8187 = vpop.f32.mrb[0].mxu0
      %v8188 = vadd.f32 0.0, %v8187
      %v8189 = vpop.f32.mrb[0].mxu0
      %8190 = vmatprep.mubr.bf16.mxu0 0
      %8191 = vmatmul.mubr.bf16.gmra.mrb[0].mxu0 %v7901
      %v8192 = vpop.f32.mrb[0].mxu0
      %v8193 = vadd.f32 0.0, %v8192
      %v8194 = vpop.f32.mrb[0].mxu0
      %v8195 = vpop.f32.mrb[0].mxu0
      %v8196 = vadd.f32 0.0, %v8195
      %v8197 = vpop.f32.mrb[0].mxu0
      %8198 = vmatprep.mubr.bf16.mxu0 0
      %8199 = vmatmul.mubr.bf16.gmra.mrb[0].mxu0 %v7904
      %v8200 = vpop.f32.mrb[0].mxu0
      %v8201 = vadd.f32 0.0, %v8200
      %v8202 = vpop.f32.mrb[0].mxu0
      %v8203 = vpop.f32.mrb[0].mxu0
      %v8204 = vadd.f32 0.0, %v8203
      %v8205 = vpop.f32.mrb[0].mxu0
      %8206 = vmatprep.mubr.bf16.mxu0 0
      %8207 = vmatmul.mubr.bf16.gmra.mrb[0].mxu0 %v7907
      %v8208 = vpop.f32.mrb[0].mxu0
      %v8209 = vadd.f32 0.0, %v8208
      %v8210 = vpop.f32.mrb[0].mxu0
      %v8211 = vpop.f32.mrb[0].mxu0
      %v8212 = vadd.f32 0.0, %v8211
      %v8213 = vpop.f32.mrb[0].mxu0
      %8214 = vmatprep.mubr.bf16.mxu0 0
      %8215 = vmatmul.mubr.bf16.gmra.mrb[0].mxu0 %v7910
      %v8216 = vpop.f32.mrb[0].mxu0
      %v8217 = vadd.f32 0.0, %v8216
      %v8218 = vpop.f32.mrb[0].mxu0
      %v8219 = vpop.f32.mrb[0].mxu0
      %v8220 = vadd.f32 0.0, %v8219
      %v8221 = vpop.f32.mrb[0].mxu0
      %8222 = vmatprep.mubr.bf16.mxu0 0
      %8223 = vmatmul.mubr.bf16.gmra.mrb[0].mxu0 %v7913
      %v8224 = vpop.f32.mrb[0].mxu0
      %v8225 = vadd.f32 0.0, %v8224
      %v8226 = vpop.f32.mrb[0].mxu0
      %v8227 = vpop.f32.mrb[0].mxu0
      %v8228 = vadd.f32 0.0, %v8227
      %v8229 = vpop.f32.mrb[0].mxu0
      %8230 = vmatprep.mubr.bf16.mxu0 0
      %8231 = vmatmul.mubr.bf16.gmra.mrb[0].mxu0 %v7916
      %v8232 = vpop.f32.mrb[0].mxu0
      %v8233 = vadd.f32 0.0, %v8232
      %v8234 = vpop.f32.mrb[0].mxu0
      %v8235 = vpop.f32.mrb[0].mxu0
      %v8236 = vadd.f32 0.0, %v8235
      %v8237 = vpop.f32.mrb[0].mxu0
      %8238 = vdwg.mxu0
      %v8239 = vadd.f32 %v7161, %v7953
      %v8240 = vadd.f32 %v7164, %v7956
      %v8241 = vadd.f32 %v7169, %v7961
      %v8242 = vadd.f32 %v7172, %v7964
      %v8243 = vadd.f32 %v7177, %v7969
      %v8244 = vadd.f32 %v7180, %v7972
      %v8245 = vadd.f32 %v7185, %v7977
      %v8246 = vadd.f32 %v7188, %v7980
      %v8247 = vadd.f32 %v7193, %v7985
      %v8248 = vadd.f32 %v7196, %v7988
      %v8249 = vadd.f32 %v7201, %v7993
      %v8250 = vadd.f32 %v7204, %v7996
      %v8251 = vadd.f32 %v7209, %v8001
      %v8252 = vadd.f32 %v7212, %v8004
      %v8253 = vadd.f32 %v7217, %v8009
      %v8254 = vadd.f32 %v7220, %v8012
      %v8255 = vadd.f32 %v7225, %v8017
      %v8256 = vadd.f32 %v7228, %v8020
      %v8257 = vadd.f32 %v7233, %v8025
      %v8258 = vadd.f32 %v7236, %v8028
      %v8259 = vadd.f32 %v7241, %v8033
      %v8260 = vadd.f32 %v7244, %v8036
      %v8261 = vadd.f32 %v7249, %v8041
      %v8262 = vadd.f32 %v7252, %v8044
      %v8263 = vadd.f32 %v7257, %v8049
      %v8264 = vadd.f32 %v7260, %v8052
      %v8265 = vadd.f32 %v7265, %v8057
      %v8266 = vadd.f32 %v7268, %v8060
      %v8267 = vadd.f32 %v7273, %v8065
      %v8268 = vadd.f32 %v7276, %v8068
      %v8269 = vadd.f32 %v7281, %v8073
      %v8270 = vadd.f32 %v7284, %v8076
      %v8271 = vadd.f32 %v7289, %v8081
      %v8272 = vadd.f32 %v7292, %v8084
      %v8273 = vadd.f32 %v7297, %v8089
      %v8274 = vadd.f32 %v7300, %v8092
      %v8275 = vadd.f32 %v7305, %v8097
      %v8276 = vadd.f32 %v7308, %v8100
      %v8277 = vadd.f32 %v7313, %v8105
      %v8278 = vadd.f32 %v7316, %v8108
      %v8279 = vadd.f32 %v7321, %v8113
      %v8280 = vadd.f32 %v7324, %v8116
      %v8281 = vadd.f32 %v7329, %v8121
      %v8282 = vadd.f32 %v7332, %v8124
      %v8283 = vadd.f32 %v7337, %v8129
      %v8284 = vadd.f32 %v7340, %v8132
      %v8285 = vadd.f32 %v7345, %v8137
      %v8286 = vadd.f32 %v7348, %v8140
      %v8287 = vadd.f32 %v7353, %v8145
      %v8288 = vadd.f32 %v7356, %v8148
      %v8289 = vadd.f32 %v7361, %v8153
      %v8290 = vadd.f32 %v7364, %v8156
      %v8291 = vadd.f32 %v7369, %v8161
      %v8292 = vadd.f32 %v7372, %v8164
      %v8293 = vadd.f32 %v7377, %v8169
      %v8294 = vadd.f32 %v7380, %v8172
      %v8295 = vadd.f32 %v7385, %v8177
      %v8296 = vadd.f32 %v7388, %v8180
      %v8297 = vadd.f32 %v7393, %v8185
      %v8298 = vadd.f32 %v7396, %v8188
      %v8299 = vadd.f32 %v7401, %v8193
      %v8300 = vadd.f32 %v7404, %v8196
      %v8301 = vadd.f32 %v7409, %v8201
      %v8302 = vadd.f32 %v7412, %v8204
      %v8303 = vadd.f32 %v7417, %v8209
      %v8304 = vadd.f32 %v7420, %v8212
      %v8305 = vadd.f32 %v7425, %v8217
      %v8306 = vadd.f32 %v7428, %v8220
      %v8307 = vadd.f32 %v7433, %v8225
      %v8308 = vadd.f32 %v7436, %v8228
      %v8309 = vadd.f32 %v7441, %v8233
      %v8310 = vadd.f32 %v7444, %v8236
      %v8313 = vunpack.c.l.b16 %v5321
      %v8314 = vunpack.c.h.b16 %v5321
      %v8315 = vunpack.c.l.b16 %v5322
      %v8316 = vpack.c.b16 %v5413, %v5412
      %v8317 = vpack.c.b16 %v5415, %v5414
      %v8318 = vpack.c.b16 %v5417, %v5416
      %v8319 = vpack.c.b16 %v5419, %v5418
      %v8320 = vpack.c.b16 %v5421, %v5420
      %v8321 = vpack.c.b16 %v5423, %v5422
      %v8322 = vpack.c.b16 %v5425, %v5424
      %v8323 = vpack.c.b16 %v5427, %v5426
      %v8324 = vpack.c.b16 %v5429, %v5428
      %v8325 = vpack.c.b16 %v5431, %v5430
      %v8326 = vpack.c.b16 %v5433, %v5432
      %v8327 = vpack.c.b16 %v5435, %v5434
      %v8328 = vpack.c.b16 %v5437, %v5436
      %v8329 = vpack.c.b16 %v5439, %v5438
      %v8330 = vpack.c.b16 %v5441, %v5440
      %v8331 = vpack.c.b16 %v5443, %v5442
      %v8332 = vpack.c.b16 %v5445, %v5444
      %v8333 = vpack.c.b16 %v5447, %v5446
      %v8334 = vpack.c.b16 %v5449, %v5448
      %v8335 = vpack.c.b16 %v5451, %v5450
      %v8336 = vpack.c.b16 %v5453, %v5452
      %v8337 = vpack.c.b16 %v5455, %v5454
      %v8338 = vpack.c.b16 %v5457, %v5456
      %v8339 = vpack.c.b16 %v5459, %v5458
      %v8340 = vpack.c.b16 %v5461, %v5460
      %v8341 = vpack.c.b16 %v5463, %v5462
      %v8342 = vpack.c.b16 %v5465, %v5464
      %v8343 = vpack.c.b16 %v5467, %v5466
      %v8344 = vpack.c.b16 %v5469, %v5468
      %v8345 = vpack.c.b16 %v5471, %v5470
      %v8346 = vpack.c.b16 %v5473, %v5472
      %v8347 = vpack.c.b16 %v5475, %v5474
      %v8348 = vpack.c.b16 %v5477, %v5476
      %v8349 = vpack.c.b16 %v5479, %v5478
      %v8350 = vpack.c.b16 %v8313, %v5480
      %v8351 = vpack.c.b16 %v8315, %v8314
      %v8356 = vunpack.c.l.b16 %v5337
      %v8357 = vunpack.c.l.b16 %v5338
      %v8358 = vunpack.c.l.b16 %v5339
      %v8359 = vunpack.c.l.b16 %v5340
      %v8360 = vpack.c.b16 %v8357, %v8356
      %v8361 = vpack.c.b16 %v8359, %v8358
      %v8365 = vsel %vm6540, %v8316, 0
      %v8368 = vsel %vm6540, %v8317, 0
      %v8371 = vsel %vm6540, %v8318, 0
      %v8374 = vsel %vm6540, %v8319, 0
      %v8377 = vsel %vm6540, %v8320, 0
      %v8380 = vsel %vm6540, %v8321, 0
      %v8383 = vsel %vm6540, %v8322, 0
      %v8386 = vsel %vm6540, %v8323, 0
      %v8389 = vsel %vm6540, %v8324, 0
      %v8392 = vsel %vm6540, %v8325, 0
      %v8395 = vsel %vm6540, %v8326, 0
      %v8398 = vsel %vm6540, %v8327, 0
      %v8401 = vsel %vm6540, %v8328, 0
      %v8404 = vsel %vm6540, %v8329, 0
      %v8407 = vsel %vm6540, %v8330, 0
      %v8410 = vsel %vm6540, %v8331, 0
      %v8413 = vsel %vm6540, %v8332, 0
      %v8416 = vsel %vm6540, %v8333, 0
      %v8419 = vsel %vm6540, %v8334, 0
      %v8422 = vsel %vm6540, %v8335, 0
      %v8425 = vsel %vm6540, %v8336, 0
      %v8428 = vsel %vm6540, %v8337, 0
      %v8431 = vsel %vm6540, %v8338, 0
      %v8434 = vsel %vm6540, %v8339, 0
      %v8437 = vsel %vm6540, %v8340, 0
      %v8440 = vsel %vm6540, %v8341, 0
      %v8443 = vsel %vm6540, %v8342, 0
      %v8446 = vsel %vm6540, %v8343, 0
      %v8449 = vsel %vm6540, %v8344, 0
      %v8452 = vsel %vm6540, %v8345, 0
      %v8455 = vsel %vm6540, %v8346, 0
      %v8458 = vsel %vm6540, %v8347, 0
      %v8461 = vsel %vm6540, %v8348, 0
      %v8464 = vsel %vm6540, %v8349, 0
      %v8467 = vsel %vm6540, %v8350, 0
      %v8470 = vsel %vm6540, %v8351, 0
      %8472 = vmatprep.subr.bf16.mxu0 0
      %8473 = vmatpush1.bf16.msra.mxu0 %v8360
      %8474 = vmatprep.subr.bf16.mxu0 0
      %8475 = vmatpush1.bf16.msra.mxu0 %v8361
      %8476 = vmatprep.subr.bf16.mxu0 0
      %8477 = vmatpush1.bf16.msra.mxu0 0
      %8478 = vmatprep.subr.bf16.mxu0 0
      %8479 = vmatpush1.bf16.msra.mxu0 0
      %8480 = vmatprep.subr.bf16.mxu0 0
      %8481 = vmatpush1.bf16.msra.mxu0 0
      %8482 = vmatprep.subr.bf16.mxu0 0
      %8483 = vmatpush1.bf16.msra.mxu0 0
      %8484 = vmatprep.subr.bf16.mxu0 0
      %8485 = vmatpush1.bf16.msra.mxu0 0
      %8486 = vmatprep.subr.bf16.mxu0 0
      %8487 = vmatpush1.bf16.msra.mxu0 0
      %8488 = vmatprep.subr.bf16.mxu0 0
      %8489 = vmatpush1.bf16.msra.mxu0 0
      %8490 = vmatprep.subr.bf16.mxu0 0
      %8491 = vmatpush1.bf16.msra.mxu0 0
      %8492 = vmatprep.subr.bf16.mxu0 0
      %8493 = vmatpush1.bf16.msra.mxu0 0
      %8494 = vmatprep.subr.bf16.mxu0 0
      %8495 = vmatpush1.bf16.msra.mxu0 0
      %8496 = vmatprep.subr.bf16.mxu0 0
      %8497 = vmatpush1.bf16.msra.mxu0 0
      %8498 = vmatprep.subr.bf16.mxu0 0
      %8499 = vmatpush1.bf16.msra.mxu0 0
      %8500 = vmatprep.subr.bf16.mxu0 0
      %8501 = vmatpush1.bf16.msra.mxu0 0
      %8502 = vmatprep.subr.bf16.mxu0 0
      %8503 = vmatpush1.bf16.msra.mxu0 0
      %8504 = vmatprep.mubr.bf16.mxu0 0
      %8505 = vmatmul.mubr.bf16.gmra.mrb[0].mxu0 %v8365
      %v8506 = vpop.f32.mrb[0].mxu0
      %v8507 = vadd.f32 0.0, %v8506
      %v8508 = vpop.f32.mrb[0].mxu0
      %v8509 = vpop.f32.mrb[0].mxu0
      %v8510 = vadd.f32 0.0, %v8509
      %v8511 = vpop.f32.mrb[0].mxu0
      %8512 = vmatprep.mubr.bf16.mxu0 0
      %8513 = vmatmul.mubr.bf16.gmra.mrb[0].mxu0 %v8368
      %v8514 = vpop.f32.mrb[0].mxu0
      %v8515 = vadd.f32 0.0, %v8514
      %v8516 = vpop.f32.mrb[0].mxu0
      %v8517 = vpop.f32.mrb[0].mxu0
      %v8518 = vadd.f32 0.0, %v8517
      %v8519 = vpop.f32.mrb[0].mxu0
      %8520 = vmatprep.mubr.bf16.mxu0 0
      %8521 = vmatmul.mubr.bf16.gmra.mrb[0].mxu0 %v8371
      %v8522 = vpop.f32.mrb[0].mxu0
      %v8523 = vadd.f32 0.0, %v8522
      %v8524 = vpop.f32.mrb[0].mxu0
      %v8525 = vpop.f32.mrb[0].mxu0
      %v8526 = vadd.f32 0.0, %v8525
      %v8527 = vpop.f32.mrb[0].mxu0
      %8528 = vmatprep.mubr.bf16.mxu0 0
      %8529 = vmatmul.mubr.bf16.gmra.mrb[0].mxu0 %v8374
      %v8530 = vpop.f32.mrb[0].mxu0
      %v8531 = vadd.f32 0.0, %v8530
      %v8532 = vpop.f32.mrb[0].mxu0
      %v8533 = vpop.f32.mrb[0].mxu0
      %v8534 = vadd.f32 0.0, %v8533
      %v8535 = vpop.f32.mrb[0].mxu0
      %8536 = vmatprep.mubr.bf16.mxu0 0
      %8537 = vmatmul.mubr.bf16.gmra.mrb[0].mxu0 %v8377
      %v8538 = vpop.f32.mrb[0].mxu0
      %v8539 = vadd.f32 0.0, %v8538
      %v8540 = vpop.f32.mrb[0].mxu0
      %v8541 = vpop.f32.mrb[0].mxu0
      %v8542 = vadd.f32 0.0, %v8541
      %v8543 = vpop.f32.mrb[0].mxu0
      %8544 = vmatprep.mubr.bf16.mxu0 0
      %8545 = vmatmul.mubr.bf16.gmra.mrb[0].mxu0 %v8380
      %v8546 = vpop.f32.mrb[0].mxu0
      %v8547 = vadd.f32 0.0, %v8546
      %v8548 = vpop.f32.mrb[0].mxu0
      %v8549 = vpop.f32.mrb[0].mxu0
      %v8550 = vadd.f32 0.0, %v8549
      %v8551 = vpop.f32.mrb[0].mxu0
      %8552 = vmatprep.mubr.bf16.mxu0 0
      %8553 = vmatmul.mubr.bf16.gmra.mrb[0].mxu0 %v8383
      %v8554 = vpop.f32.mrb[0].mxu0
      %v8555 = vadd.f32 0.0, %v8554
      %v8556 = vpop.f32.mrb[0].mxu0
      %v8557 = vpop.f32.mrb[0].mxu0
      %v8558 = vadd.f32 0.0, %v8557
      %v8559 = vpop.f32.mrb[0].mxu0
      %8560 = vmatprep.mubr.bf16.mxu0 0
      %8561 = vmatmul.mubr.bf16.gmra.mrb[0].mxu0 %v8386
      %v8562 = vpop.f32.mrb[0].mxu0
      %v8563 = vadd.f32 0.0, %v8562
      %v8564 = vpop.f32.mrb[0].mxu0
      %v8565 = vpop.f32.mrb[0].mxu0
      %v8566 = vadd.f32 0.0, %v8565
      %v8567 = vpop.f32.mrb[0].mxu0
      %8568 = vmatprep.mubr.bf16.mxu0 0
      %8569 = vmatmul.mubr.bf16.gmra.mrb[0].mxu0 %v8389
      %v8570 = vpop.f32.mrb[0].mxu0
      %v8571 = vadd.f32 0.0, %v8570
      %v8572 = vpop.f32.mrb[0].mxu0
      %v8573 = vpop.f32.mrb[0].mxu0
      %v8574 = vadd.f32 0.0, %v8573
      %v8575 = vpop.f32.mrb[0].mxu0
      %8576 = vmatprep.mubr.bf16.mxu0 0
      %8577 = vmatmul.mubr.bf16.gmra.mrb[0].mxu0 %v8392
      %v8578 = vpop.f32.mrb[0].mxu0
      %v8579 = vadd.f32 0.0, %v8578
      %v8580 = vpop.f32.mrb[0].mxu0
      %v8581 = vpop.f32.mrb[0].mxu0
      %v8582 = vadd.f32 0.0, %v8581
      %v8583 = vpop.f32.mrb[0].mxu0
      %8584 = vmatprep.mubr.bf16.mxu0 0
      %8585 = vmatmul.mubr.bf16.gmra.mrb[0].mxu0 %v8395
      %v8586 = vpop.f32.mrb[0].mxu0
      %v8587 = vadd.f32 0.0, %v8586
      %v8588 = vpop.f32.mrb[0].mxu0
      %v8589 = vpop.f32.mrb[0].mxu0
      %v8590 = vadd.f32 0.0, %v8589
      %v8591 = vpop.f32.mrb[0].mxu0
      %8592 = vmatprep.mubr.bf16.mxu0 0
      %8593 = vmatmul.mubr.bf16.gmra.mrb[0].mxu0 %v8398
      %v8594 = vpop.f32.mrb[0].mxu0
      %v8595 = vadd.f32 0.0, %v8594
      %v8596 = vpop.f32.mrb[0].mxu0
      %v8597 = vpop.f32.mrb[0].mxu0
      %v8598 = vadd.f32 0.0, %v8597
      %v8599 = vpop.f32.mrb[0].mxu0
      %8600 = vmatprep.mubr.bf16.mxu0 0
      %8601 = vmatmul.mubr.bf16.gmra.mrb[0].mxu0 %v8401
      %v8602 = vpop.f32.mrb[0].mxu0
      %v8603 = vadd.f32 0.0, %v8602
      %v8604 = vpop.f32.mrb[0].mxu0
      %v8605 = vpop.f32.mrb[0].mxu0
      %v8606 = vadd.f32 0.0, %v8605
      %v8607 = vpop.f32.mrb[0].mxu0
      %8608 = vmatprep.mubr.bf16.mxu0 0
      %8609 = vmatmul.mubr.bf16.gmra.mrb[0].mxu0 %v8404
      %v8610 = vpop.f32.mrb[0].mxu0
      %v8611 = vadd.f32 0.0, %v8610
      %v8612 = vpop.f32.mrb[0].mxu0
      %v8613 = vpop.f32.mrb[0].mxu0
      %v8614 = vadd.f32 0.0, %v8613
      %v8615 = vpop.f32.mrb[0].mxu0
      %8616 = vmatprep.mubr.bf16.mxu0 0
      %8617 = vmatmul.mubr.bf16.gmra.mrb[0].mxu0 %v8407
      %v8618 = vpop.f32.mrb[0].mxu0
      %v8619 = vadd.f32 0.0, %v8618
      %v8620 = vpop.f32.mrb[0].mxu0
      %v8621 = vpop.f32.mrb[0].mxu0
      %v8622 = vadd.f32 0.0, %v8621
      %v8623 = vpop.f32.mrb[0].mxu0
      %8624 = vmatprep.mubr.bf16.mxu0 0
      %8625 = vmatmul.mubr.bf16.gmra.mrb[0].mxu0 %v8410
      %v8626 = vpop.f32.mrb[0].mxu0
      %v8627 = vadd.f32 0.0, %v8626
      %v8628 = vpop.f32.mrb[0].mxu0
      %v8629 = vpop.f32.mrb[0].mxu0
      %v8630 = vadd.f32 0.0, %v8629
      %v8631 = vpop.f32.mrb[0].mxu0
      %8632 = vmatprep.mubr.bf16.mxu0 0
      %8633 = vmatmul.mubr.bf16.gmra.mrb[0].mxu0 %v8413
      %v8634 = vpop.f32.mrb[0].mxu0
      %v8635 = vadd.f32 0.0, %v8634
      %v8636 = vpop.f32.mrb[0].mxu0
      %v8637 = vpop.f32.mrb[0].mxu0
      %v8638 = vadd.f32 0.0, %v8637
      %v8639 = vpop.f32.mrb[0].mxu0
      %8640 = vmatprep.mubr.bf16.mxu0 0
      %8641 = vmatmul.mubr.bf16.gmra.mrb[0].mxu0 %v8416
      %v8642 = vpop.f32.mrb[0].mxu0
      %v8643 = vadd.f32 0.0, %v8642
      %v8644 = vpop.f32.mrb[0].mxu0
      %v8645 = vpop.f32.mrb[0].mxu0
      %v8646 = vadd.f32 0.0, %v8645
      %v8647 = vpop.f32.mrb[0].mxu0
      %8648 = vmatprep.mubr.bf16.mxu0 0
      %8649 = vmatmul.mubr.bf16.gmra.mrb[0].mxu0 %v8419
      %v8650 = vpop.f32.mrb[0].mxu0
      %v8651 = vadd.f32 0.0, %v8650
      %v8652 = vpop.f32.mrb[0].mxu0
      %v8653 = vpop.f32.mrb[0].mxu0
      %v8654 = vadd.f32 0.0, %v8653
      %v8655 = vpop.f32.mrb[0].mxu0
      %8656 = vmatprep.mubr.bf16.mxu0 0
      %8657 = vmatmul.mubr.bf16.gmra.mrb[0].mxu0 %v8422
      %v8658 = vpop.f32.mrb[0].mxu0
      %v8659 = vadd.f32 0.0, %v8658
      %v8660 = vpop.f32.mrb[0].mxu0
      %v8661 = vpop.f32.mrb[0].mxu0
      %v8662 = vadd.f32 0.0, %v8661
      %v8663 = vpop.f32.mrb[0].mxu0
      %8664 = vmatprep.mubr.bf16.mxu0 0
      %8665 = vmatmul.mubr.bf16.gmra.mrb[0].mxu0 %v8425
      %v8666 = vpop.f32.mrb[0].mxu0
      %v8667 = vadd.f32 0.0, %v8666
      %v8668 = vpop.f32.mrb[0].mxu0
      %v8669 = vpop.f32.mrb[0].mxu0
      %v8670 = vadd.f32 0.0, %v8669
      %v8671 = vpop.f32.mrb[0].mxu0
      %8672 = vmatprep.mubr.bf16.mxu0 0
      %8673 = vmatmul.mubr.bf16.gmra.mrb[0].mxu0 %v8428
      %v8674 = vpop.f32.mrb[0].mxu0
      %v8675 = vadd.f32 0.0, %v8674
      %v8676 = vpop.f32.mrb[0].mxu0
      %v8677 = vpop.f32.mrb[0].mxu0
      %v8678 = vadd.f32 0.0, %v8677
      %v8679 = vpop.f32.mrb[0].mxu0
      %8680 = vmatprep.mubr.bf16.mxu0 0
      %8681 = vmatmul.mubr.bf16.gmra.mrb[0].mxu0 %v8431
      %v8682 = vpop.f32.mrb[0].mxu0
      %v8683 = vadd.f32 0.0, %v8682
      %v8684 = vpop.f32.mrb[0].mxu0
      %v8685 = vpop.f32.mrb[0].mxu0
      %v8686 = vadd.f32 0.0, %v8685
      %v8687 = vpop.f32.mrb[0].mxu0
      %8688 = vmatprep.mubr.bf16.mxu0 0
      %8689 = vmatmul.mubr.bf16.gmra.mrb[0].mxu0 %v8434
      %v8690 = vpop.f32.mrb[0].mxu0
      %v8691 = vadd.f32 0.0, %v8690
      %v8692 = vpop.f32.mrb[0].mxu0
      %v8693 = vpop.f32.mrb[0].mxu0
      %v8694 = vadd.f32 0.0, %v8693
      %v8695 = vpop.f32.mrb[0].mxu0
      %8696 = vmatprep.mubr.bf16.mxu0 0
      %8697 = vmatmul.mubr.bf16.gmra.mrb[0].mxu0 %v8437
      %v8698 = vpop.f32.mrb[0].mxu0
      %v8699 = vadd.f32 0.0, %v8698
      %v8700 = vpop.f32.mrb[0].mxu0
      %v8701 = vpop.f32.mrb[0].mxu0
      %v8702 = vadd.f32 0.0, %v8701
      %v8703 = vpop.f32.mrb[0].mxu0
      %8704 = vmatprep.mubr.bf16.mxu0 0
      %8705 = vmatmul.mubr.bf16.gmra.mrb[0].mxu0 %v8440
      %v8706 = vpop.f32.mrb[0].mxu0
      %v8707 = vadd.f32 0.0, %v8706
      %v8708 = vpop.f32.mrb[0].mxu0
      %v8709 = vpop.f32.mrb[0].mxu0
      %v8710 = vadd.f32 0.0, %v8709
      %v8711 = vpop.f32.mrb[0].mxu0
      %8712 = vmatprep.mubr.bf16.mxu0 0
      %8713 = vmatmul.mubr.bf16.gmra.mrb[0].mxu0 %v8443
      %v8714 = vpop.f32.mrb[0].mxu0
      %v8715 = vadd.f32 0.0, %v8714
      %v8716 = vpop.f32.mrb[0].mxu0
      %v8717 = vpop.f32.mrb[0].mxu0
      %v8718 = vadd.f32 0.0, %v8717
      %v8719 = vpop.f32.mrb[0].mxu0
      %8720 = vmatprep.mubr.bf16.mxu0 0
      %8721 = vmatmul.mubr.bf16.gmra.mrb[0].mxu0 %v8446
      %v8722 = vpop.f32.mrb[0].mxu0
      %v8723 = vadd.f32 0.0, %v8722
      %v8724 = vpop.f32.mrb[0].mxu0
      %v8725 = vpop.f32.mrb[0].mxu0
      %v8726 = vadd.f32 0.0, %v8725
      %v8727 = vpop.f32.mrb[0].mxu0
      %8728 = vmatprep.mubr.bf16.mxu0 0
      %8729 = vmatmul.mubr.bf16.gmra.mrb[0].mxu0 %v8449
      %v8730 = vpop.f32.mrb[0].mxu0
      %v8731 = vadd.f32 0.0, %v8730
      %v8732 = vpop.f32.mrb[0].mxu0
      %v8733 = vpop.f32.mrb[0].mxu0
      %v8734 = vadd.f32 0.0, %v8733
      %v8735 = vpop.f32.mrb[0].mxu0
      %8736 = vmatprep.mubr.bf16.mxu0 0
      %8737 = vmatmul.mubr.bf16.gmra.mrb[0].mxu0 %v8452
      %v8738 = vpop.f32.mrb[0].mxu0
      %v8739 = vadd.f32 0.0, %v8738
      %v8740 = vpop.f32.mrb[0].mxu0
      %v8741 = vpop.f32.mrb[0].mxu0
      %v8742 = vadd.f32 0.0, %v8741
      %v8743 = vpop.f32.mrb[0].mxu0
      %8744 = vmatprep.mubr.bf16.mxu0 0
      %8745 = vmatmul.mubr.bf16.gmra.mrb[0].mxu0 %v8455
      %v8746 = vpop.f32.mrb[0].mxu0
      %v8747 = vadd.f32 0.0, %v8746
      %v8748 = vpop.f32.mrb[0].mxu0
      %v8749 = vpop.f32.mrb[0].mxu0
      %v8750 = vadd.f32 0.0, %v8749
      %v8751 = vpop.f32.mrb[0].mxu0
      %8752 = vmatprep.mubr.bf16.mxu0 0
      %8753 = vmatmul.mubr.bf16.gmra.mrb[0].mxu0 %v8458
      %v8754 = vpop.f32.mrb[0].mxu0
      %v8755 = vadd.f32 0.0, %v8754
      %v8756 = vpop.f32.mrb[0].mxu0
      %v8757 = vpop.f32.mrb[0].mxu0
      %v8758 = vadd.f32 0.0, %v8757
      %v8759 = vpop.f32.mrb[0].mxu0
      %8760 = vmatprep.mubr.bf16.mxu0 0
      %8761 = vmatmul.mubr.bf16.gmra.mrb[0].mxu0 %v8461
      %v8762 = vpop.f32.mrb[0].mxu0
      %v8763 = vadd.f32 0.0, %v8762
      %v8764 = vpop.f32.mrb[0].mxu0
      %v8765 = vpop.f32.mrb[0].mxu0
      %v8766 = vadd.f32 0.0, %v8765
      %v8767 = vpop.f32.mrb[0].mxu0
      %8768 = vmatprep.mubr.bf16.mxu0 0
      %8769 = vmatmul.mubr.bf16.gmra.mrb[0].mxu0 %v8464
      %v8770 = vpop.f32.mrb[0].mxu0
      %v8771 = vadd.f32 0.0, %v8770
      %v8772 = vpop.f32.mrb[0].mxu0
      %v8773 = vpop.f32.mrb[0].mxu0
      %v8774 = vadd.f32 0.0, %v8773
      %v8775 = vpop.f32.mrb[0].mxu0
      %8776 = vmatprep.mubr.bf16.mxu0 0
      %8777 = vmatmul.mubr.bf16.gmra.mrb[0].mxu0 %v8467
      %v8778 = vpop.f32.mrb[0].mxu0
      %v8779 = vadd.f32 0.0, %v8778
      %v8780 = vpop.f32.mrb[0].mxu0
      %v8781 = vpop.f32.mrb[0].mxu0
      %v8782 = vadd.f32 0.0, %v8781
      %v8783 = vpop.f32.mrb[0].mxu0
      %8784 = vmatprep.mubr.bf16.mxu0 0
      %8785 = vmatmul.mubr.bf16.gmra.mrb[0].mxu0 %v8470
      %v8786 = vpop.f32.mrb[0].mxu0
      %v8787 = vadd.f32 0.0, %v8786
      %v8788 = vpop.f32.mrb[0].mxu0
      %v8789 = vpop.f32.mrb[0].mxu0
      %v8790 = vadd.f32 0.0, %v8789
      %v8791 = vpop.f32.mrb[0].mxu0
      %8792 = vdwg.mxu0
      %v8793 = vadd.f32 %v8239, %v8507
      %v8794 = vadd.f32 %v8240, %v8510
      %v8795 = vadd.f32 %v8241, %v8515
      %v8796 = vadd.f32 %v8242, %v8518
      %v8797 = vadd.f32 %v8243, %v8523
      %v8798 = vadd.f32 %v8244, %v8526
      %v8799 = vadd.f32 %v8245, %v8531
      %v8800 = vadd.f32 %v8246, %v8534
      %v8801 = vadd.f32 %v8247, %v8539
      %v8802 = vadd.f32 %v8248, %v8542
      %v8803 = vadd.f32 %v8249, %v8547
      %v8804 = vadd.f32 %v8250, %v8550
      %v8805 = vadd.f32 %v8251, %v8555
      %v8806 = vadd.f32 %v8252, %v8558
      %v8807 = vadd.f32 %v8253, %v8563
      %v8808 = vadd.f32 %v8254, %v8566
      %v8809 = vadd.f32 %v8255, %v8571
      %v8810 = vadd.f32 %v8256, %v8574
      %v8811 = vadd.f32 %v8257, %v8579
      %v8812 = vadd.f32 %v8258, %v8582
      %v8813 = vadd.f32 %v8259, %v8587
      %v8814 = vadd.f32 %v8260, %v8590
      %v8815 = vadd.f32 %v8261, %v8595
      %v8816 = vadd.f32 %v8262, %v8598
      %v8817 = vadd.f32 %v8263, %v8603
      %v8818 = vadd.f32 %v8264, %v8606
      %v8819 = vadd.f32 %v8265, %v8611
      %v8820 = vadd.f32 %v8266, %v8614
      %v8821 = vadd.f32 %v8267, %v8619
      %v8822 = vadd.f32 %v8268, %v8622
      %v8823 = vadd.f32 %v8269, %v8627
      %v8824 = vadd.f32 %v8270, %v8630
      %v8825 = vadd.f32 %v8271, %v8635
      %v8826 = vadd.f32 %v8272, %v8638
      %v8827 = vadd.f32 %v8273, %v8643
      %v8828 = vadd.f32 %v8274, %v8646
      %v8829 = vadd.f32 %v8275, %v8651
      %v8830 = vadd.f32 %v8276, %v8654
      %v8831 = vadd.f32 %v8277, %v8659
      %v8832 = vadd.f32 %v8278, %v8662
      %v8833 = vadd.f32 %v8279, %v8667
      %v8834 = vadd.f32 %v8280, %v8670
      %v8835 = vadd.f32 %v8281, %v8675
      %v8836 = vadd.f32 %v8282, %v8678
      %v8837 = vadd.f32 %v8283, %v8683
      %v8838 = vadd.f32 %v8284, %v8686
      %v8839 = vadd.f32 %v8285, %v8691
      %v8840 = vadd.f32 %v8286, %v8694
      %v8841 = vadd.f32 %v8287, %v8699
      %v8842 = vadd.f32 %v8288, %v8702
      %v8843 = vadd.f32 %v8289, %v8707
      %v8844 = vadd.f32 %v8290, %v8710
      %v8845 = vadd.f32 %v8291, %v8715
      %v8846 = vadd.f32 %v8292, %v8718
      %v8847 = vadd.f32 %v8293, %v8723
      %v8848 = vadd.f32 %v8294, %v8726
      %v8849 = vadd.f32 %v8295, %v8731
      %v8850 = vadd.f32 %v8296, %v8734
      %v8851 = vadd.f32 %v8297, %v8739
      %v8852 = vadd.f32 %v8298, %v8742
      %v8853 = vadd.f32 %v8299, %v8747
      %v8854 = vadd.f32 %v8300, %v8750
      %v8855 = vadd.f32 %v8301, %v8755
      %v8856 = vadd.f32 %v8302, %v8758
      %v8857 = vadd.f32 %v8303, %v8763
      %v8858 = vadd.f32 %v8304, %v8766
      %v8859 = vadd.f32 %v8305, %v8771
      %v8860 = vadd.f32 %v8306, %v8774
      %v8861 = vadd.f32 %v8307, %v8779
      %v8862 = vadd.f32 %v8308, %v8782
      %v8863 = vadd.f32 %v8309, %v8787
      %v8864 = vadd.f32 %v8310, %v8790
      %v8865 = vunpack.c.h.b16 %v5322
      %v8866 = vpack.c.b16 %v8313, %v8313
      %v8867 = vpack.c.b16 %v8314, %v8314
      %v8868 = vpack.c.b16 %v8315, %v8315
      %v8869 = vpack.c.b16 %v8865, %v8865
      %v8871 = vshrl.u32 %v8866, 16
      %v8873 = vrot.slane %v8871, 4
      %v8874 = vshll.u32 %v8866, 16
      %v8876 = vrot.slane %v8874, 5
      %v8877 = vor.u32 %v8873, %v8876
      %v8878 = vrot.slane %v8877, 4
      %v8880 = vshll.u32 %v8867, 16
      %v8882 = vrot.slane %v8880, 5
      %v8883 = vsel %vm5603, %v8878, %v8882
      %v8884 = vshrl.u32 %v8867, 16
      %v8886 = vrot.slane %v8884, 4
      %v8887 = vor.u32 %v8886, %v8882
      %v8888 = vrot.slane %v8887, 4
      %v8890 = vshll.u32 %v8868, 16
      %v8892 = vrot.slane %v8890, 5
      %v8893 = vsel %vm5603, %v8888, %v8892
      %v8894 = vshrl.u32 %v8868, 16
      %v8896 = vrot.slane %v8894, 4
      %v8897 = vor.u32 %v8896, %v8892
      %v8898 = vrot.slane %v8897, 4
      %v8900 = vshll.u32 %v8869, 16
      %v8902 = vrot.slane %v8900, 5
      %v8903 = vsel %vm5603, %v8898, %v8902
      %v8904 = vunpack.c.l.b16 %v8883
      %v8905 = vunpack.c.l.b16 %v8893
      %v8906 = vunpack.c.l.b16 %v8903
      %v8907 = vpack.c.b16 %v6424, %v6423
      %v8908 = vpack.c.b16 %v6426, %v6425
      %v8909 = vpack.c.b16 %v6428, %v6427
      %v8910 = vpack.c.b16 %v6430, %v6429
      %v8911 = vpack.c.b16 %v6432, %v6431
      %v8912 = vpack.c.b16 %v6434, %v6433
      %v8913 = vpack.c.b16 %v6436, %v6435
      %v8914 = vpack.c.b16 %v6438, %v6437
      %v8915 = vpack.c.b16 %v6440, %v6439
      %v8916 = vpack.c.b16 %v6442, %v6441
      %v8917 = vpack.c.b16 %v6444, %v6443
      %v8918 = vpack.c.b16 %v6446, %v6445
      %v8919 = vpack.c.b16 %v6448, %v6447
      %v8920 = vpack.c.b16 %v6450, %v6449
      %v8921 = vpack.c.b16 %v6452, %v6451
      %v8922 = vpack.c.b16 %v6454, %v6453
      %v8923 = vpack.c.b16 %v6456, %v6455
      %v8924 = vpack.c.b16 %v6458, %v6457
      %v8925 = vpack.c.b16 %v6460, %v6459
      %v8926 = vpack.c.b16 %v6462, %v6461
      %v8927 = vpack.c.b16 %v6464, %v6463
      %v8928 = vpack.c.b16 %v6466, %v6465
      %v8929 = vpack.c.b16 %v6468, %v6467
      %v8930 = vpack.c.b16 %v6470, %v6469
      %v8931 = vpack.c.b16 %v6472, %v6471
      %v8932 = vpack.c.b16 %v6474, %v6473
      %v8933 = vpack.c.b16 %v6476, %v6475
      %v8934 = vpack.c.b16 %v6478, %v6477
      %v8935 = vpack.c.b16 %v6480, %v6479
      %v8936 = vpack.c.b16 %v6482, %v6481
      %v8937 = vpack.c.b16 %v6484, %v6483
      %v8938 = vpack.c.b16 %v6486, %v6485
      %v8939 = vpack.c.b16 %v6488, %v6487
      %v8940 = vpack.c.b16 %v6490, %v6489
      %v8941 = vpack.c.b16 %v8904, %v6491
      %v8942 = vpack.c.b16 %v8906, %v8905
      %v8947 = vunpack.c.l.b16 %v5341
      %v8948 = vunpack.c.l.b16 %v5342
      %v8949 = vunpack.c.l.b16 %v5343
      %v8950 = vunpack.c.l.b16 %v5344
      %v8951 = vpack.c.b16 %v8948, %v8947
      %v8952 = vpack.c.b16 %v8950, %v8949
      %v8956 = vsel %vm6540, %v8907, 0
      %v8959 = vsel %vm6540, %v8908, 0
      %v8962 = vsel %vm6540, %v8909, 0
      %v8965 = vsel %vm6540, %v8910, 0
      %v8968 = vsel %vm6540, %v8911, 0
      %v8971 = vsel %vm6540, %v8912, 0
      %v8974 = vsel %vm6540, %v8913, 0
      %v8977 = vsel %vm6540, %v8914, 0
      %v8980 = vsel %vm6540, %v8915, 0
      %v8983 = vsel %vm6540, %v8916, 0
      %v8986 = vsel %vm6540, %v8917, 0
      %v8989 = vsel %vm6540, %v8918, 0
      %v8992 = vsel %vm6540, %v8919, 0
      %v8995 = vsel %vm6540, %v8920, 0
      %v8998 = vsel %vm6540, %v8921, 0
      %v9001 = vsel %vm6540, %v8922, 0
      %v9004 = vsel %vm6540, %v8923, 0
      %v9007 = vsel %vm6540, %v8924, 0
      %v9010 = vsel %vm6540, %v8925, 0
      %v9013 = vsel %vm6540, %v8926, 0
      %v9016 = vsel %vm6540, %v8927, 0
      %v9019 = vsel %vm6540, %v8928, 0
      %v9022 = vsel %vm6540, %v8929, 0
      %v9025 = vsel %vm6540, %v8930, 0
      %v9028 = vsel %vm6540, %v8931, 0
      %v9031 = vsel %vm6540, %v8932, 0
      %v9034 = vsel %vm6540, %v8933, 0
      %v9037 = vsel %vm6540, %v8934, 0
      %v9040 = vsel %vm6540, %v8935, 0
      %v9043 = vsel %vm6540, %v8936, 0
      %v9046 = vsel %vm6540, %v8937, 0
      %v9049 = vsel %vm6540, %v8938, 0
      %v9052 = vsel %vm6540, %v8939, 0
      %v9055 = vsel %vm6540, %v8940, 0
      %v9058 = vsel %vm6540, %v8941, 0
      %v9061 = vsel %vm6540, %v8942, 0
      %9063 = vmatprep.subr.bf16.mxu0 0
      %9064 = vmatpush1.bf16.msra.mxu0 %v8951
      %9065 = vmatprep.subr.bf16.mxu0 0
      %9066 = vmatpush1.bf16.msra.mxu0 %v8952
      %9067 = vmatprep.subr.bf16.mxu0 0
      %9068 = vmatpush1.bf16.msra.mxu0 0
      %9069 = vmatprep.subr.bf16.mxu0 0
      %9070 = vmatpush1.bf16.msra.mxu0 0
      %9071 = vmatprep.subr.bf16.mxu0 0
      %9072 = vmatpush1.bf16.msra.mxu0 0
      %9073 = vmatprep.subr.bf16.mxu0 0
      %9074 = vmatpush1.bf16.msra.mxu0 0
      %9075 = vmatprep.subr.bf16.mxu0 0
      %9076 = vmatpush1.bf16.msra.mxu0 0
      %9077 = vmatprep.subr.bf16.mxu0 0
      %9078 = vmatpush1.bf16.msra.mxu0 0
      %9079 = vmatprep.subr.bf16.mxu0 0
      %9080 = vmatpush1.bf16.msra.mxu0 0
      %9081 = vmatprep.subr.bf16.mxu0 0
      %9082 = vmatpush1.bf16.msra.mxu0 0
      %9083 = vmatprep.subr.bf16.mxu0 0
      %9084 = vmatpush1.bf16.msra.mxu0 0
      %9085 = vmatprep.subr.bf16.mxu0 0
      %9086 = vmatpush1.bf16.msra.mxu0 0
      %9087 = vmatprep.subr.bf16.mxu0 0
      %9088 = vmatpush1.bf16.msra.mxu0 0
      %9089 = vmatprep.subr.bf16.mxu0 0
      %9090 = vmatpush1.bf16.msra.mxu0 0
      %9091 = vmatprep.subr.bf16.mxu0 0
      %9092 = vmatpush1.bf16.msra.mxu0 0
      %9093 = vmatprep.subr.bf16.mxu0 0
      %9094 = vmatpush1.bf16.msra.mxu0 0
      %9095 = vmatprep.mubr.bf16.mxu0 0
      %9096 = vmatmul.mubr.bf16.gmra.mrb[0].mxu0 %v8956
      %v9097 = vpop.f32.mrb[0].mxu0
      %v9098 = vadd.f32 0.0, %v9097
      %v9099 = vpop.f32.mrb[0].mxu0
      %v9100 = vpop.f32.mrb[0].mxu0
      %v9101 = vadd.f32 0.0, %v9100
      %v9102 = vpop.f32.mrb[0].mxu0
      %9103 = vmatprep.mubr.bf16.mxu0 0
      %9104 = vmatmul.mubr.bf16.gmra.mrb[0].mxu0 %v8959
      %v9105 = vpop.f32.mrb[0].mxu0
      %v9106 = vadd.f32 0.0, %v9105
      %v9107 = vpop.f32.mrb[0].mxu0
      %v9108 = vpop.f32.mrb[0].mxu0
      %v9109 = vadd.f32 0.0, %v9108
      %v9110 = vpop.f32.mrb[0].mxu0
      %9111 = vmatprep.mubr.bf16.mxu0 0
      %9112 = vmatmul.mubr.bf16.gmra.mrb[0].mxu0 %v8962
      %v9113 = vpop.f32.mrb[0].mxu0
      %v9114 = vadd.f32 0.0, %v9113
      %v9115 = vpop.f32.mrb[0].mxu0
      %v9116 = vpop.f32.mrb[0].mxu0
      %v9117 = vadd.f32 0.0, %v9116
      %v9118 = vpop.f32.mrb[0].mxu0
      %9119 = vmatprep.mubr.bf16.mxu0 0
      %9120 = vmatmul.mubr.bf16.gmra.mrb[0].mxu0 %v8965
      %v9121 = vpop.f32.mrb[0].mxu0
      %v9122 = vadd.f32 0.0, %v9121
      %v9123 = vpop.f32.mrb[0].mxu0
      %v9124 = vpop.f32.mrb[0].mxu0
      %v9125 = vadd.f32 0.0, %v9124
      %v9126 = vpop.f32.mrb[0].mxu0
      %9127 = vmatprep.mubr.bf16.mxu0 0
      %9128 = vmatmul.mubr.bf16.gmra.mrb[0].mxu0 %v8968
      %v9129 = vpop.f32.mrb[0].mxu0
      %v9130 = vadd.f32 0.0, %v9129
      %v9131 = vpop.f32.mrb[0].mxu0
      %v9132 = vpop.f32.mrb[0].mxu0
      %v9133 = vadd.f32 0.0, %v9132
      %v9134 = vpop.f32.mrb[0].mxu0
      %9135 = vmatprep.mubr.bf16.mxu0 0
      %9136 = vmatmul.mubr.bf16.gmra.mrb[0].mxu0 %v8971
      %v9137 = vpop.f32.mrb[0].mxu0
      %v9138 = vadd.f32 0.0, %v9137
      %v9139 = vpop.f32.mrb[0].mxu0
      %v9140 = vpop.f32.mrb[0].mxu0
      %v9141 = vadd.f32 0.0, %v9140
      %v9142 = vpop.f32.mrb[0].mxu0
      %9143 = vmatprep.mubr.bf16.mxu0 0
      %9144 = vmatmul.mubr.bf16.gmra.mrb[0].mxu0 %v8974
      %v9145 = vpop.f32.mrb[0].mxu0
      %v9146 = vadd.f32 0.0, %v9145
      %v9147 = vpop.f32.mrb[0].mxu0
      %v9148 = vpop.f32.mrb[0].mxu0
      %v9149 = vadd.f32 0.0, %v9148
      %v9150 = vpop.f32.mrb[0].mxu0
      %9151 = vmatprep.mubr.bf16.mxu0 0
      %9152 = vmatmul.mubr.bf16.gmra.mrb[0].mxu0 %v8977
      %v9153 = vpop.f32.mrb[0].mxu0
      %v9154 = vadd.f32 0.0, %v9153
      %v9155 = vpop.f32.mrb[0].mxu0
      %v9156 = vpop.f32.mrb[0].mxu0
      %v9157 = vadd.f32 0.0, %v9156
      %v9158 = vpop.f32.mrb[0].mxu0
      %9159 = vmatprep.mubr.bf16.mxu0 0
      %9160 = vmatmul.mubr.bf16.gmra.mrb[0].mxu0 %v8980
      %v9161 = vpop.f32.mrb[0].mxu0
      %v9162 = vadd.f32 0.0, %v9161
      %v9163 = vpop.f32.mrb[0].mxu0
      %v9164 = vpop.f32.mrb[0].mxu0
      %v9165 = vadd.f32 0.0, %v9164
      %v9166 = vpop.f32.mrb[0].mxu0
      %9167 = vmatprep.mubr.bf16.mxu0 0
      %9168 = vmatmul.mubr.bf16.gmra.mrb[0].mxu0 %v8983
      %v9169 = vpop.f32.mrb[0].mxu0
      %v9170 = vadd.f32 0.0, %v9169
      %v9171 = vpop.f32.mrb[0].mxu0
      %v9172 = vpop.f32.mrb[0].mxu0
      %v9173 = vadd.f32 0.0, %v9172
      %v9174 = vpop.f32.mrb[0].mxu0
      %9175 = vmatprep.mubr.bf16.mxu0 0
      %9176 = vmatmul.mubr.bf16.gmra.mrb[0].mxu0 %v8986
      %v9177 = vpop.f32.mrb[0].mxu0
      %v9178 = vadd.f32 0.0, %v9177
      %v9179 = vpop.f32.mrb[0].mxu0
      %v9180 = vpop.f32.mrb[0].mxu0
      %v9181 = vadd.f32 0.0, %v9180
      %v9182 = vpop.f32.mrb[0].mxu0
      %9183 = vmatprep.mubr.bf16.mxu0 0
      %9184 = vmatmul.mubr.bf16.gmra.mrb[0].mxu0 %v8989
      %v9185 = vpop.f32.mrb[0].mxu0
      %v9186 = vadd.f32 0.0, %v9185
      %v9187 = vpop.f32.mrb[0].mxu0
      %v9188 = vpop.f32.mrb[0].mxu0
      %v9189 = vadd.f32 0.0, %v9188
      %v9190 = vpop.f32.mrb[0].mxu0
      %9191 = vmatprep.mubr.bf16.mxu0 0
      %9192 = vmatmul.mubr.bf16.gmra.mrb[0].mxu0 %v8992
      %v9193 = vpop.f32.mrb[0].mxu0
      %v9194 = vadd.f32 0.0, %v9193
      %v9195 = vpop.f32.mrb[0].mxu0
      %v9196 = vpop.f32.mrb[0].mxu0
      %v9197 = vadd.f32 0.0, %v9196
      %v9198 = vpop.f32.mrb[0].mxu0
      %9199 = vmatprep.mubr.bf16.mxu0 0
      %9200 = vmatmul.mubr.bf16.gmra.mrb[0].mxu0 %v8995
      %v9201 = vpop.f32.mrb[0].mxu0
      %v9202 = vadd.f32 0.0, %v9201
      %v9203 = vpop.f32.mrb[0].mxu0
      %v9204 = vpop.f32.mrb[0].mxu0
      %v9205 = vadd.f32 0.0, %v9204
      %v9206 = vpop.f32.mrb[0].mxu0
      %9207 = vmatprep.mubr.bf16.mxu0 0
      %9208 = vmatmul.mubr.bf16.gmra.mrb[0].mxu0 %v8998
      %v9209 = vpop.f32.mrb[0].mxu0
      %v9210 = vadd.f32 0.0, %v9209
      %v9211 = vpop.f32.mrb[0].mxu0
      %v9212 = vpop.f32.mrb[0].mxu0
      %v9213 = vadd.f32 0.0, %v9212
      %v9214 = vpop.f32.mrb[0].mxu0
      %9215 = vmatprep.mubr.bf16.mxu0 0
      %9216 = vmatmul.mubr.bf16.gmra.mrb[0].mxu0 %v9001
      %v9217 = vpop.f32.mrb[0].mxu0
      %v9218 = vadd.f32 0.0, %v9217
      %v9219 = vpop.f32.mrb[0].mxu0
      %v9220 = vpop.f32.mrb[0].mxu0
      %v9221 = vadd.f32 0.0, %v9220
      %v9222 = vpop.f32.mrb[0].mxu0
      %9223 = vmatprep.mubr.bf16.mxu0 0
      %9224 = vmatmul.mubr.bf16.gmra.mrb[0].mxu0 %v9004
      %v9225 = vpop.f32.mrb[0].mxu0
      %v9226 = vadd.f32 0.0, %v9225
      %v9227 = vpop.f32.mrb[0].mxu0
      %v9228 = vpop.f32.mrb[0].mxu0
      %v9229 = vadd.f32 0.0, %v9228
      %v9230 = vpop.f32.mrb[0].mxu0
      %9231 = vmatprep.mubr.bf16.mxu0 0
      %9232 = vmatmul.mubr.bf16.gmra.mrb[0].mxu0 %v9007
      %v9233 = vpop.f32.mrb[0].mxu0
      %v9234 = vadd.f32 0.0, %v9233
      %v9235 = vpop.f32.mrb[0].mxu0
      %v9236 = vpop.f32.mrb[0].mxu0
      %v9237 = vadd.f32 0.0, %v9236
      %v9238 = vpop.f32.mrb[0].mxu0
      %9239 = vmatprep.mubr.bf16.mxu0 0
      %9240 = vmatmul.mubr.bf16.gmra.mrb[0].mxu0 %v9010
      %v9241 = vpop.f32.mrb[0].mxu0
      %v9242 = vadd.f32 0.0, %v9241
      %v9243 = vpop.f32.mrb[0].mxu0
      %v9244 = vpop.f32.mrb[0].mxu0
      %v9245 = vadd.f32 0.0, %v9244
      %v9246 = vpop.f32.mrb[0].mxu0
      %9247 = vmatprep.mubr.bf16.mxu0 0
      %9248 = vmatmul.mubr.bf16.gmra.mrb[0].mxu0 %v9013
      %v9249 = vpop.f32.mrb[0].mxu0
      %v9250 = vadd.f32 0.0, %v9249
      %v9251 = vpop.f32.mrb[0].mxu0
      %v9252 = vpop.f32.mrb[0].mxu0
      %v9253 = vadd.f32 0.0, %v9252
      %v9254 = vpop.f32.mrb[0].mxu0
      %9255 = vmatprep.mubr.bf16.mxu0 0
      %9256 = vmatmul.mubr.bf16.gmra.mrb[0].mxu0 %v9016
      %v9257 = vpop.f32.mrb[0].mxu0
      %v9258 = vadd.f32 0.0, %v9257
      %v9259 = vpop.f32.mrb[0].mxu0
      %v9260 = vpop.f32.mrb[0].mxu0
      %v9261 = vadd.f32 0.0, %v9260
      %v9262 = vpop.f32.mrb[0].mxu0
      %9263 = vmatprep.mubr.bf16.mxu0 0
      %9264 = vmatmul.mubr.bf16.gmra.mrb[0].mxu0 %v9019
      %v9265 = vpop.f32.mrb[0].mxu0
      %v9266 = vadd.f32 0.0, %v9265
      %v9267 = vpop.f32.mrb[0].mxu0
      %v9268 = vpop.f32.mrb[0].mxu0
      %v9269 = vadd.f32 0.0, %v9268
      %v9270 = vpop.f32.mrb[0].mxu0
      %9271 = vmatprep.mubr.bf16.mxu0 0
      %9272 = vmatmul.mubr.bf16.gmra.mrb[0].mxu0 %v9022
      %v9273 = vpop.f32.mrb[0].mxu0
      %v9274 = vadd.f32 0.0, %v9273
      %v9275 = vpop.f32.mrb[0].mxu0
      %v9276 = vpop.f32.mrb[0].mxu0
      %v9277 = vadd.f32 0.0, %v9276
      %v9278 = vpop.f32.mrb[0].mxu0
      %9279 = vmatprep.mubr.bf16.mxu0 0
      %9280 = vmatmul.mubr.bf16.gmra.mrb[0].mxu0 %v9025
      %v9281 = vpop.f32.mrb[0].mxu0
      %v9282 = vadd.f32 0.0, %v9281
      %v9283 = vpop.f32.mrb[0].mxu0
      %v9284 = vpop.f32.mrb[0].mxu0
      %v9285 = vadd.f32 0.0, %v9284
      %v9286 = vpop.f32.mrb[0].mxu0
      %9287 = vmatprep.mubr.bf16.mxu0 0
      %9288 = vmatmul.mubr.bf16.gmra.mrb[0].mxu0 %v9028
      %v9289 = vpop.f32.mrb[0].mxu0
      %v9290 = vadd.f32 0.0, %v9289
      %v9291 = vpop.f32.mrb[0].mxu0
      %v9292 = vpop.f32.mrb[0].mxu0
      %v9293 = vadd.f32 0.0, %v9292
      %v9294 = vpop.f32.mrb[0].mxu0
      %9295 = vmatprep.mubr.bf16.mxu0 0
      %9296 = vmatmul.mubr.bf16.gmra.mrb[0].mxu0 %v9031
      %v9297 = vpop.f32.mrb[0].mxu0
      %v9298 = vadd.f32 0.0, %v9297
      %v9299 = vpop.f32.mrb[0].mxu0
      %v9300 = vpop.f32.mrb[0].mxu0
      %v9301 = vadd.f32 0.0, %v9300
      %v9302 = vpop.f32.mrb[0].mxu0
      %9303 = vmatprep.mubr.bf16.mxu0 0
      %9304 = vmatmul.mubr.bf16.gmra.mrb[0].mxu0 %v9034
      %v9305 = vpop.f32.mrb[0].mxu0
      %v9306 = vadd.f32 0.0, %v9305
      %v9307 = vpop.f32.mrb[0].mxu0
      %v9308 = vpop.f32.mrb[0].mxu0
      %v9309 = vadd.f32 0.0, %v9308
      %v9310 = vpop.f32.mrb[0].mxu0
      %9311 = vmatprep.mubr.bf16.mxu0 0
      %9312 = vmatmul.mubr.bf16.gmra.mrb[0].mxu0 %v9037
      %v9313 = vpop.f32.mrb[0].mxu0
      %v9314 = vadd.f32 0.0, %v9313
      %v9315 = vpop.f32.mrb[0].mxu0
      %v9316 = vpop.f32.mrb[0].mxu0
      %v9317 = vadd.f32 0.0, %v9316
      %v9318 = vpop.f32.mrb[0].mxu0
      %9319 = vmatprep.mubr.bf16.mxu0 0
      %9320 = vmatmul.mubr.bf16.gmra.mrb[0].mxu0 %v9040
      %v9321 = vpop.f32.mrb[0].mxu0
      %v9322 = vadd.f32 0.0, %v9321
      %v9323 = vpop.f32.mrb[0].mxu0
      %v9324 = vpop.f32.mrb[0].mxu0
      %v9325 = vadd.f32 0.0, %v9324
      %v9326 = vpop.f32.mrb[0].mxu0
      %9327 = vmatprep.mubr.bf16.mxu0 0
      %9328 = vmatmul.mubr.bf16.gmra.mrb[0].mxu0 %v9043
      %v9329 = vpop.f32.mrb[0].mxu0
      %v9330 = vadd.f32 0.0, %v9329
      %v9331 = vpop.f32.mrb[0].mxu0
      %v9332 = vpop.f32.mrb[0].mxu0
      %v9333 = vadd.f32 0.0, %v9332
      %v9334 = vpop.f32.mrb[0].mxu0
      %9335 = vmatprep.mubr.bf16.mxu0 0
      %9336 = vmatmul.mubr.bf16.gmra.mrb[0].mxu0 %v9046
      %v9337 = vpop.f32.mrb[0].mxu0
      %v9338 = vadd.f32 0.0, %v9337
      %v9339 = vpop.f32.mrb[0].mxu0
      %v9340 = vpop.f32.mrb[0].mxu0
      %v9341 = vadd.f32 0.0, %v9340
      %v9342 = vpop.f32.mrb[0].mxu0
      %9343 = vmatprep.mubr.bf16.mxu0 0
      %9344 = vmatmul.mubr.bf16.gmra.mrb[0].mxu0 %v9049
      %v9345 = vpop.f32.mrb[0].mxu0
      %v9346 = vadd.f32 0.0, %v9345
      %v9347 = vpop.f32.mrb[0].mxu0
      %v9348 = vpop.f32.mrb[0].mxu0
      %v9349 = vadd.f32 0.0, %v9348
      %v9350 = vpop.f32.mrb[0].mxu0
      %9351 = vmatprep.mubr.bf16.mxu0 0
      %9352 = vmatmul.mubr.bf16.gmra.mrb[0].mxu0 %v9052
      %v9353 = vpop.f32.mrb[0].mxu0
      %v9354 = vadd.f32 0.0, %v9353
      %v9355 = vpop.f32.mrb[0].mxu0
      %v9356 = vpop.f32.mrb[0].mxu0
      %v9357 = vadd.f32 0.0, %v9356
      %v9358 = vpop.f32.mrb[0].mxu0
      %9359 = vmatprep.mubr.bf16.mxu0 0
      %9360 = vmatmul.mubr.bf16.gmra.mrb[0].mxu0 %v9055
      %v9361 = vpop.f32.mrb[0].mxu0
      %v9362 = vadd.f32 0.0, %v9361
      %v9363 = vpop.f32.mrb[0].mxu0
      %v9364 = vpop.f32.mrb[0].mxu0
      %v9365 = vadd.f32 0.0, %v9364
      %v9366 = vpop.f32.mrb[0].mxu0
      %9367 = vmatprep.mubr.bf16.mxu0 0
      %9368 = vmatmul.mubr.bf16.gmra.mrb[0].mxu0 %v9058
      %v9369 = vpop.f32.mrb[0].mxu0
      %v9370 = vadd.f32 0.0, %v9369
      %v9371 = vpop.f32.mrb[0].mxu0
      %v9372 = vpop.f32.mrb[0].mxu0
      %v9373 = vadd.f32 0.0, %v9372
      %v9374 = vpop.f32.mrb[0].mxu0
      %9375 = vmatprep.mubr.bf16.mxu0 0
      %9376 = vmatmul.mubr.bf16.gmra.mrb[0].mxu0 %v9061
      %v9377 = vpop.f32.mrb[0].mxu0
      %v9378 = vadd.f32 0.0, %v9377
      %v9379 = vpop.f32.mrb[0].mxu0
      %v9380 = vpop.f32.mrb[0].mxu0
      %v9381 = vadd.f32 0.0, %v9380
      %v9382 = vpop.f32.mrb[0].mxu0
      %9383 = vdwg.mxu0
      %v9384 = vadd.f32 %v8793, %v9098
      %v9385 = vadd.f32 %v8794, %v9101
      %v9386 = vadd.f32 %v8795, %v9106
      %v9387 = vadd.f32 %v8796, %v9109
      %v9388 = vadd.f32 %v8797, %v9114
      %v9389 = vadd.f32 %v8798, %v9117
      %v9390 = vadd.f32 %v8799, %v9122
      %v9391 = vadd.f32 %v8800, %v9125
      %v9392 = vadd.f32 %v8801, %v9130
      %v9393 = vadd.f32 %v8802, %v9133
      %v9394 = vadd.f32 %v8803, %v9138
      %v9395 = vadd.f32 %v8804, %v9141
      %v9396 = vadd.f32 %v8805, %v9146
      %v9397 = vadd.f32 %v8806, %v9149
      %v9398 = vadd.f32 %v8807, %v9154
      %v9399 = vadd.f32 %v8808, %v9157
      %v9400 = vadd.f32 %v8809, %v9162
      %v9401 = vadd.f32 %v8810, %v9165
      %v9402 = vadd.f32 %v8811, %v9170
      %v9403 = vadd.f32 %v8812, %v9173
      %v9404 = vadd.f32 %v8813, %v9178
      %v9405 = vadd.f32 %v8814, %v9181
      %v9406 = vadd.f32 %v8815, %v9186
      %v9407 = vadd.f32 %v8816, %v9189
      %v9408 = vadd.f32 %v8817, %v9194
      %v9409 = vadd.f32 %v8818, %v9197
      %v9410 = vadd.f32 %v8819, %v9202
      %v9411 = vadd.f32 %v8820, %v9205
      %v9412 = vadd.f32 %v8821, %v9210
      %v9413 = vadd.f32 %v8822, %v9213
      %v9414 = vadd.f32 %v8823, %v9218
      %v9415 = vadd.f32 %v8824, %v9221
      %v9416 = vadd.f32 %v8825, %v9226
      %v9417 = vadd.f32 %v8826, %v9229
      %v9418 = vadd.f32 %v8827, %v9234
      %v9419 = vadd.f32 %v8828, %v9237
      %v9420 = vadd.f32 %v8829, %v9242
      %v9421 = vadd.f32 %v8830, %v9245
      %v9422 = vadd.f32 %v8831, %v9250
      %v9423 = vadd.f32 %v8832, %v9253
      %v9424 = vadd.f32 %v8833, %v9258
      %v9425 = vadd.f32 %v8834, %v9261
      %v9426 = vadd.f32 %v8835, %v9266
      %v9427 = vadd.f32 %v8836, %v9269
      %v9428 = vadd.f32 %v8837, %v9274
      %v9429 = vadd.f32 %v8838, %v9277
      %v9430 = vadd.f32 %v8839, %v9282
      %v9431 = vadd.f32 %v8840, %v9285
      %v9432 = vadd.f32 %v8841, %v9290
      %v9433 = vadd.f32 %v8842, %v9293
      %v9434 = vadd.f32 %v8843, %v9298
      %v9435 = vadd.f32 %v8844, %v9301
      %v9436 = vadd.f32 %v8845, %v9306
      %v9437 = vadd.f32 %v8846, %v9309
      %v9438 = vadd.f32 %v8847, %v9314
      %v9439 = vadd.f32 %v8848, %v9317
      %v9440 = vadd.f32 %v8849, %v9322
      %v9441 = vadd.f32 %v8850, %v9325
      %v9442 = vadd.f32 %v8851, %v9330
      %v9443 = vadd.f32 %v8852, %v9333
      %v9444 = vadd.f32 %v8853, %v9338
      %v9445 = vadd.f32 %v8854, %v9341
      %v9446 = vadd.f32 %v8855, %v9346
      %v9447 = vadd.f32 %v8856, %v9349
      %v9448 = vadd.f32 %v8857, %v9354
      %v9449 = vadd.f32 %v8858, %v9357
      %v9450 = vadd.f32 %v8859, %v9362
      %v9451 = vadd.f32 %v8860, %v9365
      %v9452 = vadd.f32 %v8861, %v9370
      %v9453 = vadd.f32 %v8862, %v9373
      %v9454 = vadd.f32 %v8863, %v9378
      %v9455 = vadd.f32 %v8864, %v9381
      %v9456 = vrot.slane %v8866, 5
      %v9457 = vrot.slane %v9456, 4
      %v9458 = vrot.slane %v8867, 5
      %v9459 = vsel %vm7449, %v9457, %v9458
      %v9460 = vrot.slane %v9458, 4
      %v9461 = vrot.slane %v8868, 5
      %v9462 = vsel %vm7449, %v9460, %v9461
      %v9463 = vrot.slane %v9461, 4
      %v9464 = vrot.slane %v8869, 5
      %v9465 = vsel %vm7449, %v9463, %v9464
      %v9466 = vunpack.c.l.b16 %v9459
      %v9467 = vunpack.c.l.b16 %v9462
      %v9468 = vunpack.c.l.b16 %v9465
      %v9469 = vpack.c.b16 %v7694, %v7693
      %v9470 = vpack.c.b16 %v7696, %v7695
      %v9471 = vpack.c.b16 %v7698, %v7697
      %v9472 = vpack.c.b16 %v7700, %v7699
      %v9473 = vpack.c.b16 %v7702, %v7701
      %v9474 = vpack.c.b16 %v7704, %v7703
      %v9475 = vpack.c.b16 %v7706, %v7705
      %v9476 = vpack.c.b16 %v7708, %v7707
      %v9477 = vpack.c.b16 %v7710, %v7709
      %v9478 = vpack.c.b16 %v7712, %v7711
      %v9479 = vpack.c.b16 %v7714, %v7713
      %v9480 = vpack.c.b16 %v7716, %v7715
      %v9481 = vpack.c.b16 %v7718, %v7717
      %v9482 = vpack.c.b16 %v7720, %v7719
      %v9483 = vpack.c.b16 %v7722, %v7721
      %v9484 = vpack.c.b16 %v7724, %v7723
      %v9485 = vpack.c.b16 %v7726, %v7725
      %v9486 = vpack.c.b16 %v7728, %v7727
      %v9487 = vpack.c.b16 %v7730, %v7729
      %v9488 = vpack.c.b16 %v7732, %v7731
      %v9489 = vpack.c.b16 %v7734, %v7733
      %v9490 = vpack.c.b16 %v7736, %v7735
      %v9491 = vpack.c.b16 %v7738, %v7737
      %v9492 = vpack.c.b16 %v7740, %v7739
      %v9493 = vpack.c.b16 %v7742, %v7741
      %v9494 = vpack.c.b16 %v7744, %v7743
      %v9495 = vpack.c.b16 %v7746, %v7745
      %v9496 = vpack.c.b16 %v7748, %v7747
      %v9497 = vpack.c.b16 %v7750, %v7749
      %v9498 = vpack.c.b16 %v7752, %v7751
      %v9499 = vpack.c.b16 %v7754, %v7753
      %v9500 = vpack.c.b16 %v7756, %v7755
      %v9501 = vpack.c.b16 %v7758, %v7757
      %v9502 = vpack.c.b16 %v7760, %v7759
      %v9503 = vpack.c.b16 %v9466, %v7761
      %v9504 = vpack.c.b16 %v9468, %v9467
      %v9509 = vunpack.c.l.b16 %v5345
      %v9510 = vunpack.c.l.b16 %v5346
      %v9511 = vunpack.c.l.b16 %v5347
      %v9512 = vunpack.c.l.b16 %v5348
      %v9513 = vpack.c.b16 %v9510, %v9509
      %v9514 = vpack.c.b16 %v9512, %v9511
      %v9518 = vsel %vm6540, %v9469, 0
      %v9521 = vsel %vm6540, %v9470, 0
      %v9524 = vsel %vm6540, %v9471, 0
      %v9527 = vsel %vm6540, %v9472, 0
      %v9530 = vsel %vm6540, %v9473, 0
      %v9533 = vsel %vm6540, %v9474, 0
      %v9536 = vsel %vm6540, %v9475, 0
      %v9539 = vsel %vm6540, %v9476, 0
      %v9542 = vsel %vm6540, %v9477, 0
      %v9545 = vsel %vm6540, %v9478, 0
      %v9548 = vsel %vm6540, %v9479, 0
      %v9551 = vsel %vm6540, %v9480, 0
      %v9554 = vsel %vm6540, %v9481, 0
      %v9557 = vsel %vm6540, %v9482, 0
      %v9560 = vsel %vm6540, %v9483, 0
      %v9563 = vsel %vm6540, %v9484, 0
      %v9566 = vsel %vm6540, %v9485, 0
      %v9569 = vsel %vm6540, %v9486, 0
      %v9572 = vsel %vm6540, %v9487, 0
      %v9575 = vsel %vm6540, %v9488, 0
      %v9578 = vsel %vm6540, %v9489, 0
      %v9581 = vsel %vm6540, %v9490, 0
      %v9584 = vsel %vm6540, %v9491, 0
      %v9587 = vsel %vm6540, %v9492, 0
      %v9590 = vsel %vm6540, %v9493, 0
      %v9593 = vsel %vm6540, %v9494, 0
      %v9596 = vsel %vm6540, %v9495, 0
      %v9599 = vsel %vm6540, %v9496, 0
      %v9602 = vsel %vm6540, %v9497, 0
      %v9605 = vsel %vm6540, %v9498, 0
      %v9608 = vsel %vm6540, %v9499, 0
      %v9611 = vsel %vm6540, %v9500, 0
      %v9614 = vsel %vm6540, %v9501, 0
      %v9617 = vsel %vm6540, %v9502, 0
      %v9620 = vsel %vm6540, %v9503, 0
      %v9623 = vsel %vm6540, %v9504, 0
      %9625 = vmatprep.subr.bf16.mxu0 0
      %9626 = vmatpush1.bf16.msra.mxu0 %v9513
      %9627 = vmatprep.subr.bf16.mxu0 0
      %9628 = vmatpush1.bf16.msra.mxu0 %v9514
      %9629 = vmatprep.subr.bf16.mxu0 0
      %9630 = vmatpush1.bf16.msra.mxu0 0
      %9631 = vmatprep.subr.bf16.mxu0 0
      %9632 = vmatpush1.bf16.msra.mxu0 0
      %9633 = vmatprep.subr.bf16.mxu0 0
      %9634 = vmatpush1.bf16.msra.mxu0 0
      %9635 = vmatprep.subr.bf16.mxu0 0
      %9636 = vmatpush1.bf16.msra.mxu0 0
      %9637 = vmatprep.subr.bf16.mxu0 0
      %9638 = vmatpush1.bf16.msra.mxu0 0
      %9639 = vmatprep.subr.bf16.mxu0 0
      %9640 = vmatpush1.bf16.msra.mxu0 0
      %9641 = vmatprep.subr.bf16.mxu0 0
      %9642 = vmatpush1.bf16.msra.mxu0 0
      %9643 = vmatprep.subr.bf16.mxu0 0
      %9644 = vmatpush1.bf16.msra.mxu0 0
      %9645 = vmatprep.subr.bf16.mxu0 0
      %9646 = vmatpush1.bf16.msra.mxu0 0
      %9647 = vmatprep.subr.bf16.mxu0 0
      %9648 = vmatpush1.bf16.msra.mxu0 0
      %9649 = vmatprep.subr.bf16.mxu0 0
      %9650 = vmatpush1.bf16.msra.mxu0 0
      %9651 = vmatprep.subr.bf16.mxu0 0
      %9652 = vmatpush1.bf16.msra.mxu0 0
      %9653 = vmatprep.subr.bf16.mxu0 0
      %9654 = vmatpush1.bf16.msra.mxu0 0
      %9655 = vmatprep.subr.bf16.mxu0 0
      %9656 = vmatpush1.bf16.msra.mxu0 0
      %9657 = vmatprep.mubr.bf16.mxu0 0
      %9658 = vmatmul.mubr.bf16.gmra.mrb[0].mxu0 %v9518
      %v9659 = vpop.f32.mrb[0].mxu0
      %v9660 = vadd.f32 0.0, %v9659
      %v9661 = vpop.f32.mrb[0].mxu0
      %v9662 = vpop.f32.mrb[0].mxu0
      %v9663 = vadd.f32 0.0, %v9662
      %v9664 = vpop.f32.mrb[0].mxu0
      %9665 = vmatprep.mubr.bf16.mxu0 0
      %9666 = vmatmul.mubr.bf16.gmra.mrb[0].mxu0 %v9521
      %v9667 = vpop.f32.mrb[0].mxu0
      %v9668 = vadd.f32 0.0, %v9667
      %v9669 = vpop.f32.mrb[0].mxu0
      %v9670 = vpop.f32.mrb[0].mxu0
      %v9671 = vadd.f32 0.0, %v9670
      %v9672 = vpop.f32.mrb[0].mxu0
      %9673 = vmatprep.mubr.bf16.mxu0 0
      %9674 = vmatmul.mubr.bf16.gmra.mrb[0].mxu0 %v9524
      %v9675 = vpop.f32.mrb[0].mxu0
      %v9676 = vadd.f32 0.0, %v9675
      %v9677 = vpop.f32.mrb[0].mxu0
      %v9678 = vpop.f32.mrb[0].mxu0
      %v9679 = vadd.f32 0.0, %v9678
      %v9680 = vpop.f32.mrb[0].mxu0
      %9681 = vmatprep.mubr.bf16.mxu0 0
      %9682 = vmatmul.mubr.bf16.gmra.mrb[0].mxu0 %v9527
      %v9683 = vpop.f32.mrb[0].mxu0
      %v9684 = vadd.f32 0.0, %v9683
      %v9685 = vpop.f32.mrb[0].mxu0
      %v9686 = vpop.f32.mrb[0].mxu0
      %v9687 = vadd.f32 0.0, %v9686
      %v9688 = vpop.f32.mrb[0].mxu0
      %9689 = vmatprep.mubr.bf16.mxu0 0
      %9690 = vmatmul.mubr.bf16.gmra.mrb[0].mxu0 %v9530
      %v9691 = vpop.f32.mrb[0].mxu0
      %v9692 = vadd.f32 0.0, %v9691
      %v9693 = vpop.f32.mrb[0].mxu0
      %v9694 = vpop.f32.mrb[0].mxu0
      %v9695 = vadd.f32 0.0, %v9694
      %v9696 = vpop.f32.mrb[0].mxu0
      %9697 = vmatprep.mubr.bf16.mxu0 0
      %9698 = vmatmul.mubr.bf16.gmra.mrb[0].mxu0 %v9533
      %v9699 = vpop.f32.mrb[0].mxu0
      %v9700 = vadd.f32 0.0, %v9699
      %v9701 = vpop.f32.mrb[0].mxu0
      %v9702 = vpop.f32.mrb[0].mxu0
      %v9703 = vadd.f32 0.0, %v9702
      %v9704 = vpop.f32.mrb[0].mxu0
      %9705 = vmatprep.mubr.bf16.mxu0 0
      %9706 = vmatmul.mubr.bf16.gmra.mrb[0].mxu0 %v9536
      %v9707 = vpop.f32.mrb[0].mxu0
      %v9708 = vadd.f32 0.0, %v9707
      %v9709 = vpop.f32.mrb[0].mxu0
      %v9710 = vpop.f32.mrb[0].mxu0
      %v9711 = vadd.f32 0.0, %v9710
      %v9712 = vpop.f32.mrb[0].mxu0
      %9713 = vmatprep.mubr.bf16.mxu0 0
      %9714 = vmatmul.mubr.bf16.gmra.mrb[0].mxu0 %v9539
      %v9715 = vpop.f32.mrb[0].mxu0
      %v9716 = vadd.f32 0.0, %v9715
      %v9717 = vpop.f32.mrb[0].mxu0
      %v9718 = vpop.f32.mrb[0].mxu0
      %v9719 = vadd.f32 0.0, %v9718
      %v9720 = vpop.f32.mrb[0].mxu0
      %9721 = vmatprep.mubr.bf16.mxu0 0
      %9722 = vmatmul.mubr.bf16.gmra.mrb[0].mxu0 %v9542
      %v9723 = vpop.f32.mrb[0].mxu0
      %v9724 = vadd.f32 0.0, %v9723
      %v9725 = vpop.f32.mrb[0].mxu0
      %v9726 = vpop.f32.mrb[0].mxu0
      %v9727 = vadd.f32 0.0, %v9726
      %v9728 = vpop.f32.mrb[0].mxu0
      %9729 = vmatprep.mubr.bf16.mxu0 0
      %9730 = vmatmul.mubr.bf16.gmra.mrb[0].mxu0 %v9545
      %v9731 = vpop.f32.mrb[0].mxu0
      %v9732 = vadd.f32 0.0, %v9731
      %v9733 = vpop.f32.mrb[0].mxu0
      %v9734 = vpop.f32.mrb[0].mxu0
      %v9735 = vadd.f32 0.0, %v9734
      %v9736 = vpop.f32.mrb[0].mxu0
      %9737 = vmatprep.mubr.bf16.mxu0 0
      %9738 = vmatmul.mubr.bf16.gmra.mrb[0].mxu0 %v9548
      %v9739 = vpop.f32.mrb[0].mxu0
      %v9740 = vadd.f32 0.0, %v9739
      %v9741 = vpop.f32.mrb[0].mxu0
      %v9742 = vpop.f32.mrb[0].mxu0
      %v9743 = vadd.f32 0.0, %v9742
      %v9744 = vpop.f32.mrb[0].mxu0
      %9745 = vmatprep.mubr.bf16.mxu0 0
      %9746 = vmatmul.mubr.bf16.gmra.mrb[0].mxu0 %v9551
      %v9747 = vpop.f32.mrb[0].mxu0
      %v9748 = vadd.f32 0.0, %v9747
      %v9749 = vpop.f32.mrb[0].mxu0
      %v9750 = vpop.f32.mrb[0].mxu0
      %v9751 = vadd.f32 0.0, %v9750
      %v9752 = vpop.f32.mrb[0].mxu0
      %9753 = vmatprep.mubr.bf16.mxu0 0
      %9754 = vmatmul.mubr.bf16.gmra.mrb[0].mxu0 %v9554
      %v9755 = vpop.f32.mrb[0].mxu0
      %v9756 = vadd.f32 0.0, %v9755
      %v9757 = vpop.f32.mrb[0].mxu0
      %v9758 = vpop.f32.mrb[0].mxu0
      %v9759 = vadd.f32 0.0, %v9758
      %v9760 = vpop.f32.mrb[0].mxu0
      %9761 = vmatprep.mubr.bf16.mxu0 0
      %9762 = vmatmul.mubr.bf16.gmra.mrb[0].mxu0 %v9557
      %v9763 = vpop.f32.mrb[0].mxu0
      %v9764 = vadd.f32 0.0, %v9763
      %v9765 = vpop.f32.mrb[0].mxu0
      %v9766 = vpop.f32.mrb[0].mxu0
      %v9767 = vadd.f32 0.0, %v9766
      %v9768 = vpop.f32.mrb[0].mxu0
      %9769 = vmatprep.mubr.bf16.mxu0 0
      %9770 = vmatmul.mubr.bf16.gmra.mrb[0].mxu0 %v9560
      %v9771 = vpop.f32.mrb[0].mxu0
      %v9772 = vadd.f32 0.0, %v9771
      %v9773 = vpop.f32.mrb[0].mxu0
      %v9774 = vpop.f32.mrb[0].mxu0
      %v9775 = vadd.f32 0.0, %v9774
      %v9776 = vpop.f32.mrb[0].mxu0
      %9777 = vmatprep.mubr.bf16.mxu0 0
      %9778 = vmatmul.mubr.bf16.gmra.mrb[0].mxu0 %v9563
      %v9779 = vpop.f32.mrb[0].mxu0
      %v9780 = vadd.f32 0.0, %v9779
      %v9781 = vpop.f32.mrb[0].mxu0
      %v9782 = vpop.f32.mrb[0].mxu0
      %v9783 = vadd.f32 0.0, %v9782
      %v9784 = vpop.f32.mrb[0].mxu0
      %9785 = vmatprep.mubr.bf16.mxu0 0
      %9786 = vmatmul.mubr.bf16.gmra.mrb[0].mxu0 %v9566
      %v9787 = vpop.f32.mrb[0].mxu0
      %v9788 = vadd.f32 0.0, %v9787
      %v9789 = vpop.f32.mrb[0].mxu0
      %v9790 = vpop.f32.mrb[0].mxu0
      %v9791 = vadd.f32 0.0, %v9790
      %v9792 = vpop.f32.mrb[0].mxu0
      %9793 = vmatprep.mubr.bf16.mxu0 0
      %9794 = vmatmul.mubr.bf16.gmra.mrb[0].mxu0 %v9569
      %v9795 = vpop.f32.mrb[0].mxu0
      %v9796 = vadd.f32 0.0, %v9795
      %v9797 = vpop.f32.mrb[0].mxu0
      %v9798 = vpop.f32.mrb[0].mxu0
      %v9799 = vadd.f32 0.0, %v9798
      %v9800 = vpop.f32.mrb[0].mxu0
      %9801 = vmatprep.mubr.bf16.mxu0 0
      %9802 = vmatmul.mubr.bf16.gmra.mrb[0].mxu0 %v9572
      %v9803 = vpop.f32.mrb[0].mxu0
      %v9804 = vadd.f32 0.0, %v9803
      %v9805 = vpop.f32.mrb[0].mxu0
      %v9806 = vpop.f32.mrb[0].mxu0
      %v9807 = vadd.f32 0.0, %v9806
      %v9808 = vpop.f32.mrb[0].mxu0
      %9809 = vmatprep.mubr.bf16.mxu0 0
      %9810 = vmatmul.mubr.bf16.gmra.mrb[0].mxu0 %v9575
      %v9811 = vpop.f32.mrb[0].mxu0
      %v9812 = vadd.f32 0.0, %v9811
      %v9813 = vpop.f32.mrb[0].mxu0
      %v9814 = vpop.f32.mrb[0].mxu0
      %v9815 = vadd.f32 0.0, %v9814
      %v9816 = vpop.f32.mrb[0].mxu0
      %9817 = vmatprep.mubr.bf16.mxu0 0
      %9818 = vmatmul.mubr.bf16.gmra.mrb[0].mxu0 %v9578
      %v9819 = vpop.f32.mrb[0].mxu0
      %v9820 = vadd.f32 0.0, %v9819
      %v9821 = vpop.f32.mrb[0].mxu0
      %v9822 = vpop.f32.mrb[0].mxu0
      %v9823 = vadd.f32 0.0, %v9822
      %v9824 = vpop.f32.mrb[0].mxu0
      %9825 = vmatprep.mubr.bf16.mxu0 0
      %9826 = vmatmul.mubr.bf16.gmra.mrb[0].mxu0 %v9581
      %v9827 = vpop.f32.mrb[0].mxu0
      %v9828 = vadd.f32 0.0, %v9827
      %v9829 = vpop.f32.mrb[0].mxu0
      %v9830 = vpop.f32.mrb[0].mxu0
      %v9831 = vadd.f32 0.0, %v9830
      %v9832 = vpop.f32.mrb[0].mxu0
      %9833 = vmatprep.mubr.bf16.mxu0 0
      %9834 = vmatmul.mubr.bf16.gmra.mrb[0].mxu0 %v9584
      %v9835 = vpop.f32.mrb[0].mxu0
      %v9836 = vadd.f32 0.0, %v9835
      %v9837 = vpop.f32.mrb[0].mxu0
      %v9838 = vpop.f32.mrb[0].mxu0
      %v9839 = vadd.f32 0.0, %v9838
      %v9840 = vpop.f32.mrb[0].mxu0
      %9841 = vmatprep.mubr.bf16.mxu0 0
      %9842 = vmatmul.mubr.bf16.gmra.mrb[0].mxu0 %v9587
      %v9843 = vpop.f32.mrb[0].mxu0
      %v9844 = vadd.f32 0.0, %v9843
      %v9845 = vpop.f32.mrb[0].mxu0
      %v9846 = vpop.f32.mrb[0].mxu0
      %v9847 = vadd.f32 0.0, %v9846
      %v9848 = vpop.f32.mrb[0].mxu0
      %9849 = vmatprep.mubr.bf16.mxu0 0
      %9850 = vmatmul.mubr.bf16.gmra.mrb[0].mxu0 %v9590
      %v9851 = vpop.f32.mrb[0].mxu0
      %v9852 = vadd.f32 0.0, %v9851
      %v9853 = vpop.f32.mrb[0].mxu0
      %v9854 = vpop.f32.mrb[0].mxu0
      %v9855 = vadd.f32 0.0, %v9854
      %v9856 = vpop.f32.mrb[0].mxu0
      %9857 = vmatprep.mubr.bf16.mxu0 0
      %9858 = vmatmul.mubr.bf16.gmra.mrb[0].mxu0 %v9593
      %v9859 = vpop.f32.mrb[0].mxu0
      %v9860 = vadd.f32 0.0, %v9859
      %v9861 = vpop.f32.mrb[0].mxu0
      %v9862 = vpop.f32.mrb[0].mxu0
      %v9863 = vadd.f32 0.0, %v9862
      %v9864 = vpop.f32.mrb[0].mxu0
      %9865 = vmatprep.mubr.bf16.mxu0 0
      %9866 = vmatmul.mubr.bf16.gmra.mrb[0].mxu0 %v9596
      %v9867 = vpop.f32.mrb[0].mxu0
      %v9868 = vadd.f32 0.0, %v9867
      %v9869 = vpop.f32.mrb[0].mxu0
      %v9870 = vpop.f32.mrb[0].mxu0
      %v9871 = vadd.f32 0.0, %v9870
      %v9872 = vpop.f32.mrb[0].mxu0
      %9873 = vmatprep.mubr.bf16.mxu0 0
      %9874 = vmatmul.mubr.bf16.gmra.mrb[0].mxu0 %v9599
      %v9875 = vpop.f32.mrb[0].mxu0
      %v9876 = vadd.f32 0.0, %v9875
      %v9877 = vpop.f32.mrb[0].mxu0
      %v9878 = vpop.f32.mrb[0].mxu0
      %v9879 = vadd.f32 0.0, %v9878
      %v9880 = vpop.f32.mrb[0].mxu0
      %9881 = vmatprep.mubr.bf16.mxu0 0
      %9882 = vmatmul.mubr.bf16.gmra.mrb[0].mxu0 %v9602
      %v9883 = vpop.f32.mrb[0].mxu0
      %v9884 = vadd.f32 0.0, %v9883
      %v9885 = vpop.f32.mrb[0].mxu0
      %v9886 = vpop.f32.mrb[0].mxu0
      %v9887 = vadd.f32 0.0, %v9886
      %v9888 = vpop.f32.mrb[0].mxu0
      %9889 = vmatprep.mubr.bf16.mxu0 0
      %9890 = vmatmul.mubr.bf16.gmra.mrb[0].mxu0 %v9605
      %v9891 = vpop.f32.mrb[0].mxu0
      %v9892 = vadd.f32 0.0, %v9891
      %v9893 = vpop.f32.mrb[0].mxu0
      %v9894 = vpop.f32.mrb[0].mxu0
      %v9895 = vadd.f32 0.0, %v9894
      %v9896 = vpop.f32.mrb[0].mxu0
      %9897 = vmatprep.mubr.bf16.mxu0 0
      %9898 = vmatmul.mubr.bf16.gmra.mrb[0].mxu0 %v9608
      %v9899 = vpop.f32.mrb[0].mxu0
      %v9900 = vadd.f32 0.0, %v9899
      %v9901 = vpop.f32.mrb[0].mxu0
      %v9902 = vpop.f32.mrb[0].mxu0
      %v9903 = vadd.f32 0.0, %v9902
      %v9904 = vpop.f32.mrb[0].mxu0
      %9905 = vmatprep.mubr.bf16.mxu0 0
      %9906 = vmatmul.mubr.bf16.gmra.mrb[0].mxu0 %v9611
      %v9907 = vpop.f32.mrb[0].mxu0
      %v9908 = vadd.f32 0.0, %v9907
      %v9909 = vpop.f32.mrb[0].mxu0
      %v9910 = vpop.f32.mrb[0].mxu0
      %v9911 = vadd.f32 0.0, %v9910
      %v9912 = vpop.f32.mrb[0].mxu0
      %9913 = vmatprep.mubr.bf16.mxu0 0
      %9914 = vmatmul.mubr.bf16.gmra.mrb[0].mxu0 %v9614
      %v9915 = vpop.f32.mrb[0].mxu0
      %v9916 = vadd.f32 0.0, %v9915
      %v9917 = vpop.f32.mrb[0].mxu0
      %v9918 = vpop.f32.mrb[0].mxu0
      %v9919 = vadd.f32 0.0, %v9918
      %v9920 = vpop.f32.mrb[0].mxu0
      %9921 = vmatprep.mubr.bf16.mxu0 0
      %9922 = vmatmul.mubr.bf16.gmra.mrb[0].mxu0 %v9617
      %v9923 = vpop.f32.mrb[0].mxu0
      %v9924 = vadd.f32 0.0, %v9923
      %v9925 = vpop.f32.mrb[0].mxu0
      %v9926 = vpop.f32.mrb[0].mxu0
      %v9927 = vadd.f32 0.0, %v9926
      %v9928 = vpop.f32.mrb[0].mxu0
      %9929 = vmatprep.mubr.bf16.mxu0 0
      %9930 = vmatmul.mubr.bf16.gmra.mrb[0].mxu0 %v9620
      %v9931 = vpop.f32.mrb[0].mxu0
      %v9932 = vadd.f32 0.0, %v9931
      %v9933 = vpop.f32.mrb[0].mxu0
      %v9934 = vpop.f32.mrb[0].mxu0
      %v9935 = vadd.f32 0.0, %v9934
      %v9936 = vpop.f32.mrb[0].mxu0
      %9937 = vmatprep.mubr.bf16.mxu0 0
      %9938 = vmatmul.mubr.bf16.gmra.mrb[0].mxu0 %v9623
      %v9939 = vpop.f32.mrb[0].mxu0
      %v9940 = vadd.f32 0.0, %v9939
      %v9941 = vpop.f32.mrb[0].mxu0
      %v9942 = vpop.f32.mrb[0].mxu0
      %v9943 = vadd.f32 0.0, %v9942
      %v9944 = vpop.f32.mrb[0].mxu0
      %9945 = vdwg.mxu0
      %v9946 = vadd.f32 %v9384, %v9660
      %v9947 = vadd.f32 %v9385, %v9663
      %v9948 = vadd.f32 %v9386, %v9668
      %v9949 = vadd.f32 %v9387, %v9671
      %v9950 = vadd.f32 %v9388, %v9676
      %v9951 = vadd.f32 %v9389, %v9679
      %v9952 = vadd.f32 %v9390, %v9684
      %v9953 = vadd.f32 %v9391, %v9687
      %v9954 = vadd.f32 %v9392, %v9692
      %v9955 = vadd.f32 %v9393, %v9695
      %v9956 = vadd.f32 %v9394, %v9700
      %v9957 = vadd.f32 %v9395, %v9703
      %v9958 = vadd.f32 %v9396, %v9708
      %v9959 = vadd.f32 %v9397, %v9711
      %v9960 = vadd.f32 %v9398, %v9716
      %v9961 = vadd.f32 %v9399, %v9719
      %v9962 = vadd.f32 %v9400, %v9724
      %v9963 = vadd.f32 %v9401, %v9727
      %v9964 = vadd.f32 %v9402, %v9732
      %v9965 = vadd.f32 %v9403, %v9735
      %v9966 = vadd.f32 %v9404, %v9740
      %v9967 = vadd.f32 %v9405, %v9743
      %v9968 = vadd.f32 %v9406, %v9748
      %v9969 = vadd.f32 %v9407, %v9751
      %v9970 = vadd.f32 %v9408, %v9756
      %v9971 = vadd.f32 %v9409, %v9759
      %v9972 = vadd.f32 %v9410, %v9764
      %v9973 = vadd.f32 %v9411, %v9767
      %v9974 = vadd.f32 %v9412, %v9772
      %v9975 = vadd.f32 %v9413, %v9775
      %v9976 = vadd.f32 %v9414, %v9780
      %v9977 = vadd.f32 %v9415, %v9783
      %v9978 = vadd.f32 %v9416, %v9788
      %v9979 = vadd.f32 %v9417, %v9791
      %v9980 = vadd.f32 %v9418, %v9796
      %v9981 = vadd.f32 %v9419, %v9799
      %v9982 = vadd.f32 %v9420, %v9804
      %v9983 = vadd.f32 %v9421, %v9807
      %v9984 = vadd.f32 %v9422, %v9812
      %v9985 = vadd.f32 %v9423, %v9815
      %v9986 = vadd.f32 %v9424, %v9820
      %v9987 = vadd.f32 %v9425, %v9823
      %v9988 = vadd.f32 %v9426, %v9828
      %v9989 = vadd.f32 %v9427, %v9831
      %v9990 = vadd.f32 %v9428, %v9836
      %v9991 = vadd.f32 %v9429, %v9839
      %v9992 = vadd.f32 %v9430, %v9844
      %v9993 = vadd.f32 %v9431, %v9847
      %v9994 = vadd.f32 %v9432, %v9852
      %v9995 = vadd.f32 %v9433, %v9855
      %v9996 = vadd.f32 %v9434, %v9860
      %v9997 = vadd.f32 %v9435, %v9863
      %v9998 = vadd.f32 %v9436, %v9868
      %v9999 = vadd.f32 %v9437, %v9871
      %v10000 = vadd.f32 %v9438, %v9876
      %v10001 = vadd.f32 %v9439, %v9879
      %v10002 = vadd.f32 %v9440, %v9884
      %v10003 = vadd.f32 %v9441, %v9887
      %v10004 = vadd.f32 %v9442, %v9892
      %v10005 = vadd.f32 %v9443, %v9895
      %v10006 = vadd.f32 %v9444, %v9900
      %v10007 = vadd.f32 %v9445, %v9903
      %v10008 = vadd.f32 %v9446, %v9908
      %v10009 = vadd.f32 %v9447, %v9911
      %v10010 = vadd.f32 %v9448, %v9916
      %v10011 = vadd.f32 %v9449, %v9919
      %v10012 = vadd.f32 %v9450, %v9924
      %v10013 = vadd.f32 %v9451, %v9927
      %v10014 = vadd.f32 %v9452, %v9932
      %v10015 = vadd.f32 %v9453, %v9935
      %v10016 = vadd.f32 %v9454, %v9940
      %v10017 = vadd.f32 %v9455, %v9943
      %v10020 = vunpack.c.l.b16 %v5323
      %v10021 = vunpack.c.h.b16 %v5323
      %v10022 = vunpack.c.l.b16 %v5324
      %v10023 = vpack.c.b16 %v8314, %v8313
      %v10024 = vpack.c.b16 %v10020, %v8315
      %v10025 = vpack.c.b16 %v10022, %v10021
      %v10030 = vunpack.c.l.b16 %v5349
      %v10031 = vunpack.c.l.b16 %v5350
      %v10032 = vunpack.c.l.b16 %v5351
      %v10033 = vunpack.c.l.b16 %v5352
      %v10034 = vpack.c.b16 %v10031, %v10030
      %v10035 = vpack.c.b16 %v10033, %v10032
      %v10039 = vsel %vm6540, %v10023, 0
      %v10042 = vsel %vm6540, %v10024, 0
      %v10045 = vsel %vm6540, %v10025, 0
      %10047 = vmatprep.subr.bf16.mxu0 0
      %10048 = vmatpush1.bf16.msra.mxu0 %v10034
      %10049 = vmatprep.subr.bf16.mxu0 0
      %10050 = vmatpush1.bf16.msra.mxu0 %v10035
      %10051 = vmatprep.subr.bf16.mxu0 0
      %10052 = vmatpush1.bf16.msra.mxu0 0
      %10053 = vmatprep.subr.bf16.mxu0 0
      %10054 = vmatpush1.bf16.msra.mxu0 0
      %10055 = vmatprep.subr.bf16.mxu0 0
      %10056 = vmatpush1.bf16.msra.mxu0 0
      %10057 = vmatprep.subr.bf16.mxu0 0
      %10058 = vmatpush1.bf16.msra.mxu0 0
      %10059 = vmatprep.subr.bf16.mxu0 0
      %10060 = vmatpush1.bf16.msra.mxu0 0
      %10061 = vmatprep.subr.bf16.mxu0 0
      %10062 = vmatpush1.bf16.msra.mxu0 0
      %10063 = vmatprep.subr.bf16.mxu0 0
      %10064 = vmatpush1.bf16.msra.mxu0 0
      %10065 = vmatprep.subr.bf16.mxu0 0
      %10066 = vmatpush1.bf16.msra.mxu0 0
      %10067 = vmatprep.subr.bf16.mxu0 0
      %10068 = vmatpush1.bf16.msra.mxu0 0
      %10069 = vmatprep.subr.bf16.mxu0 0
      %10070 = vmatpush1.bf16.msra.mxu0 0
      %10071 = vmatprep.subr.bf16.mxu0 0
      %10072 = vmatpush1.bf16.msra.mxu0 0
      %10073 = vmatprep.subr.bf16.mxu0 0
      %10074 = vmatpush1.bf16.msra.mxu0 0
      %10075 = vmatprep.subr.bf16.mxu0 0
      %10076 = vmatpush1.bf16.msra.mxu0 0
      %10077 = vmatprep.subr.bf16.mxu0 0
      %10078 = vmatpush1.bf16.msra.mxu0 0
      %10079 = vmatprep.mubr.bf16.mxu0 0
      %10080 = vmatmul.mubr.bf16.gmra.mrb[0].mxu0 %v7028
      %v10081 = vpop.f32.mrb[0].mxu0
      %v10082 = vadd.f32 0.0, %v10081
      %v10083 = vpop.f32.mrb[0].mxu0
      %v10084 = vpop.f32.mrb[0].mxu0
      %v10085 = vadd.f32 0.0, %v10084
      %v10086 = vpop.f32.mrb[0].mxu0
      %10087 = vmatprep.mubr.bf16.mxu0 0
      %10088 = vmatmul.mubr.bf16.gmra.mrb[0].mxu0 %v7031
      %v10089 = vpop.f32.mrb[0].mxu0
      %v10090 = vadd.f32 0.0, %v10089
      %v10091 = vpop.f32.mrb[0].mxu0
      %v10092 = vpop.f32.mrb[0].mxu0
      %v10093 = vadd.f32 0.0, %v10092
      %v10094 = vpop.f32.mrb[0].mxu0
      %10095 = vmatprep.mubr.bf16.mxu0 0
      %10096 = vmatmul.mubr.bf16.gmra.mrb[0].mxu0 %v7034
      %v10097 = vpop.f32.mrb[0].mxu0
      %v10098 = vadd.f32 0.0, %v10097
      %v10099 = vpop.f32.mrb[0].mxu0
      %v10100 = vpop.f32.mrb[0].mxu0
      %v10101 = vadd.f32 0.0, %v10100
      %v10102 = vpop.f32.mrb[0].mxu0
      %10103 = vmatprep.mubr.bf16.mxu0 0
      %10104 = vmatmul.mubr.bf16.gmra.mrb[0].mxu0 %v7037
      %v10105 = vpop.f32.mrb[0].mxu0
      %v10106 = vadd.f32 0.0, %v10105
      %v10107 = vpop.f32.mrb[0].mxu0
      %v10108 = vpop.f32.mrb[0].mxu0
      %v10109 = vadd.f32 0.0, %v10108
      %v10110 = vpop.f32.mrb[0].mxu0
      %10111 = vmatprep.mubr.bf16.mxu0 0
      %10112 = vmatmul.mubr.bf16.gmra.mrb[0].mxu0 %v7040
      %v10113 = vpop.f32.mrb[0].mxu0
      %v10114 = vadd.f32 0.0, %v10113
      %v10115 = vpop.f32.mrb[0].mxu0
      %v10116 = vpop.f32.mrb[0].mxu0
      %v10117 = vadd.f32 0.0, %v10116
      %v10118 = vpop.f32.mrb[0].mxu0
      %10119 = vmatprep.mubr.bf16.mxu0 0
      %10120 = vmatmul.mubr.bf16.gmra.mrb[0].mxu0 %v7043
      %v10121 = vpop.f32.mrb[0].mxu0
      %v10122 = vadd.f32 0.0, %v10121
      %v10123 = vpop.f32.mrb[0].mxu0
      %v10124 = vpop.f32.mrb[0].mxu0
      %v10125 = vadd.f32 0.0, %v10124
      %v10126 = vpop.f32.mrb[0].mxu0
      %10127 = vmatprep.mubr.bf16.mxu0 0
      %10128 = vmatmul.mubr.bf16.gmra.mrb[0].mxu0 %v7046
      %v10129 = vpop.f32.mrb[0].mxu0
      %v10130 = vadd.f32 0.0, %v10129
      %v10131 = vpop.f32.mrb[0].mxu0
      %v10132 = vpop.f32.mrb[0].mxu0
      %v10133 = vadd.f32 0.0, %v10132
      %v10134 = vpop.f32.mrb[0].mxu0
      %10135 = vmatprep.mubr.bf16.mxu0 0
      %10136 = vmatmul.mubr.bf16.gmra.mrb[0].mxu0 %v7049
      %v10137 = vpop.f32.mrb[0].mxu0
      %v10138 = vadd.f32 0.0, %v10137
      %v10139 = vpop.f32.mrb[0].mxu0
      %v10140 = vpop.f32.mrb[0].mxu0
      %v10141 = vadd.f32 0.0, %v10140
      %v10142 = vpop.f32.mrb[0].mxu0
      %10143 = vmatprep.mubr.bf16.mxu0 0
      %10144 = vmatmul.mubr.bf16.gmra.mrb[0].mxu0 %v7052
      %v10145 = vpop.f32.mrb[0].mxu0
      %v10146 = vadd.f32 0.0, %v10145
      %v10147 = vpop.f32.mrb[0].mxu0
      %v10148 = vpop.f32.mrb[0].mxu0
      %v10149 = vadd.f32 0.0, %v10148
      %v10150 = vpop.f32.mrb[0].mxu0
      %10151 = vmatprep.mubr.bf16.mxu0 0
      %10152 = vmatmul.mubr.bf16.gmra.mrb[0].mxu0 %v7055
      %v10153 = vpop.f32.mrb[0].mxu0
      %v10154 = vadd.f32 0.0, %v10153
      %v10155 = vpop.f32.mrb[0].mxu0
      %v10156 = vpop.f32.mrb[0].mxu0
      %v10157 = vadd.f32 0.0, %v10156
      %v10158 = vpop.f32.mrb[0].mxu0
      %10159 = vmatprep.mubr.bf16.mxu0 0
      %10160 = vmatmul.mubr.bf16.gmra.mrb[0].mxu0 %v7058
      %v10161 = vpop.f32.mrb[0].mxu0
      %v10162 = vadd.f32 0.0, %v10161
      %v10163 = vpop.f32.mrb[0].mxu0
      %v10164 = vpop.f32.mrb[0].mxu0
      %v10165 = vadd.f32 0.0, %v10164
      %v10166 = vpop.f32.mrb[0].mxu0
      %10167 = vmatprep.mubr.bf16.mxu0 0
      %10168 = vmatmul.mubr.bf16.gmra.mrb[0].mxu0 %v7061
      %v10169 = vpop.f32.mrb[0].mxu0
      %v10170 = vadd.f32 0.0, %v10169
      %v10171 = vpop.f32.mrb[0].mxu0
      %v10172 = vpop.f32.mrb[0].mxu0
      %v10173 = vadd.f32 0.0, %v10172
      %v10174 = vpop.f32.mrb[0].mxu0
      %10175 = vmatprep.mubr.bf16.mxu0 0
      %10176 = vmatmul.mubr.bf16.gmra.mrb[0].mxu0 %v7064
      %v10177 = vpop.f32.mrb[0].mxu0
      %v10178 = vadd.f32 0.0, %v10177
      %v10179 = vpop.f32.mrb[0].mxu0
      %v10180 = vpop.f32.mrb[0].mxu0
      %v10181 = vadd.f32 0.0, %v10180
      %v10182 = vpop.f32.mrb[0].mxu0
      %10183 = vmatprep.mubr.bf16.mxu0 0
      %10184 = vmatmul.mubr.bf16.gmra.mrb[0].mxu0 %v7067
      %v10185 = vpop.f32.mrb[0].mxu0
      %v10186 = vadd.f32 0.0, %v10185
      %v10187 = vpop.f32.mrb[0].mxu0
      %v10188 = vpop.f32.mrb[0].mxu0
      %v10189 = vadd.f32 0.0, %v10188
      %v10190 = vpop.f32.mrb[0].mxu0
      %10191 = vmatprep.mubr.bf16.mxu0 0
      %10192 = vmatmul.mubr.bf16.gmra.mrb[0].mxu0 %v7070
      %v10193 = vpop.f32.mrb[0].mxu0
      %v10194 = vadd.f32 0.0, %v10193
      %v10195 = vpop.f32.mrb[0].mxu0
      %v10196 = vpop.f32.mrb[0].mxu0
      %v10197 = vadd.f32 0.0, %v10196
      %v10198 = vpop.f32.mrb[0].mxu0
      %10199 = vmatprep.mubr.bf16.mxu0 0
      %10200 = vmatmul.mubr.bf16.gmra.mrb[0].mxu0 %v7073
      %v10201 = vpop.f32.mrb[0].mxu0
      %v10202 = vadd.f32 0.0, %v10201
      %v10203 = vpop.f32.mrb[0].mxu0
      %v10204 = vpop.f32.mrb[0].mxu0
      %v10205 = vadd.f32 0.0, %v10204
      %v10206 = vpop.f32.mrb[0].mxu0
      %10207 = vmatprep.mubr.bf16.mxu0 0
      %10208 = vmatmul.mubr.bf16.gmra.mrb[0].mxu0 %v7076
      %v10209 = vpop.f32.mrb[0].mxu0
      %v10210 = vadd.f32 0.0, %v10209
      %v10211 = vpop.f32.mrb[0].mxu0
      %v10212 = vpop.f32.mrb[0].mxu0
      %v10213 = vadd.f32 0.0, %v10212
      %v10214 = vpop.f32.mrb[0].mxu0
      %10215 = vmatprep.mubr.bf16.mxu0 0
      %10216 = vmatmul.mubr.bf16.gmra.mrb[0].mxu0 %v7079
      %v10217 = vpop.f32.mrb[0].mxu0
      %v10218 = vadd.f32 0.0, %v10217
      %v10219 = vpop.f32.mrb[0].mxu0
      %v10220 = vpop.f32.mrb[0].mxu0
      %v10221 = vadd.f32 0.0, %v10220
      %v10222 = vpop.f32.mrb[0].mxu0
      %10223 = vmatprep.mubr.bf16.mxu0 0
      %10224 = vmatmul.mubr.bf16.gmra.mrb[0].mxu0 %v7082
      %v10225 = vpop.f32.mrb[0].mxu0
      %v10226 = vadd.f32 0.0, %v10225
      %v10227 = vpop.f32.mrb[0].mxu0
      %v10228 = vpop.f32.mrb[0].mxu0
      %v10229 = vadd.f32 0.0, %v10228
      %v10230 = vpop.f32.mrb[0].mxu0
      %10231 = vmatprep.mubr.bf16.mxu0 0
      %10232 = vmatmul.mubr.bf16.gmra.mrb[0].mxu0 %v7085
      %v10233 = vpop.f32.mrb[0].mxu0
      %v10234 = vadd.f32 0.0, %v10233
      %v10235 = vpop.f32.mrb[0].mxu0
      %v10236 = vpop.f32.mrb[0].mxu0
      %v10237 = vadd.f32 0.0, %v10236
      %v10238 = vpop.f32.mrb[0].mxu0
      %10239 = vmatprep.mubr.bf16.mxu0 0
      %10240 = vmatmul.mubr.bf16.gmra.mrb[0].mxu0 %v7088
      %v10241 = vpop.f32.mrb[0].mxu0
      %v10242 = vadd.f32 0.0, %v10241
      %v10243 = vpop.f32.mrb[0].mxu0
      %v10244 = vpop.f32.mrb[0].mxu0
      %v10245 = vadd.f32 0.0, %v10244
      %v10246 = vpop.f32.mrb[0].mxu0
      %10247 = vmatprep.mubr.bf16.mxu0 0
      %10248 = vmatmul.mubr.bf16.gmra.mrb[0].mxu0 %v7091
      %v10249 = vpop.f32.mrb[0].mxu0
      %v10250 = vadd.f32 0.0, %v10249
      %v10251 = vpop.f32.mrb[0].mxu0
      %v10252 = vpop.f32.mrb[0].mxu0
      %v10253 = vadd.f32 0.0, %v10252
      %v10254 = vpop.f32.mrb[0].mxu0
      %10255 = vmatprep.mubr.bf16.mxu0 0
      %10256 = vmatmul.mubr.bf16.gmra.mrb[0].mxu0 %v7094
      %v10257 = vpop.f32.mrb[0].mxu0
      %v10258 = vadd.f32 0.0, %v10257
      %v10259 = vpop.f32.mrb[0].mxu0
      %v10260 = vpop.f32.mrb[0].mxu0
      %v10261 = vadd.f32 0.0, %v10260
      %v10262 = vpop.f32.mrb[0].mxu0
      %10263 = vmatprep.mubr.bf16.mxu0 0
      %10264 = vmatmul.mubr.bf16.gmra.mrb[0].mxu0 %v7097
      %v10265 = vpop.f32.mrb[0].mxu0
      %v10266 = vadd.f32 0.0, %v10265
      %v10267 = vpop.f32.mrb[0].mxu0
      %v10268 = vpop.f32.mrb[0].mxu0
      %v10269 = vadd.f32 0.0, %v10268
      %v10270 = vpop.f32.mrb[0].mxu0
      %10271 = vmatprep.mubr.bf16.mxu0 0
      %10272 = vmatmul.mubr.bf16.gmra.mrb[0].mxu0 %v7100
      %v10273 = vpop.f32.mrb[0].mxu0
      %v10274 = vadd.f32 0.0, %v10273
      %v10275 = vpop.f32.mrb[0].mxu0
      %v10276 = vpop.f32.mrb[0].mxu0
      %v10277 = vadd.f32 0.0, %v10276
      %v10278 = vpop.f32.mrb[0].mxu0
      %10279 = vmatprep.mubr.bf16.mxu0 0
      %10280 = vmatmul.mubr.bf16.gmra.mrb[0].mxu0 %v7103
      %v10281 = vpop.f32.mrb[0].mxu0
      %v10282 = vadd.f32 0.0, %v10281
      %v10283 = vpop.f32.mrb[0].mxu0
      %v10284 = vpop.f32.mrb[0].mxu0
      %v10285 = vadd.f32 0.0, %v10284
      %v10286 = vpop.f32.mrb[0].mxu0
      %10287 = vmatprep.mubr.bf16.mxu0 0
      %10288 = vmatmul.mubr.bf16.gmra.mrb[0].mxu0 %v7106
      %v10289 = vpop.f32.mrb[0].mxu0
      %v10290 = vadd.f32 0.0, %v10289
      %v10291 = vpop.f32.mrb[0].mxu0
      %v10292 = vpop.f32.mrb[0].mxu0
      %v10293 = vadd.f32 0.0, %v10292
      %v10294 = vpop.f32.mrb[0].mxu0
      %10295 = vmatprep.mubr.bf16.mxu0 0
      %10296 = vmatmul.mubr.bf16.gmra.mrb[0].mxu0 %v7109
      %v10297 = vpop.f32.mrb[0].mxu0
      %v10298 = vadd.f32 0.0, %v10297
      %v10299 = vpop.f32.mrb[0].mxu0
      %v10300 = vpop.f32.mrb[0].mxu0
      %v10301 = vadd.f32 0.0, %v10300
      %v10302 = vpop.f32.mrb[0].mxu0
      %10303 = vmatprep.mubr.bf16.mxu0 0
      %10304 = vmatmul.mubr.bf16.gmra.mrb[0].mxu0 %v7112
      %v10305 = vpop.f32.mrb[0].mxu0
      %v10306 = vadd.f32 0.0, %v10305
      %v10307 = vpop.f32.mrb[0].mxu0
      %v10308 = vpop.f32.mrb[0].mxu0
      %v10309 = vadd.f32 0.0, %v10308
      %v10310 = vpop.f32.mrb[0].mxu0
      %10311 = vmatprep.mubr.bf16.mxu0 0
      %10312 = vmatmul.mubr.bf16.gmra.mrb[0].mxu0 %v7115
      %v10313 = vpop.f32.mrb[0].mxu0
      %v10314 = vadd.f32 0.0, %v10313
      %v10315 = vpop.f32.mrb[0].mxu0
      %v10316 = vpop.f32.mrb[0].mxu0
      %v10317 = vadd.f32 0.0, %v10316
      %v10318 = vpop.f32.mrb[0].mxu0
      %10319 = vmatprep.mubr.bf16.mxu0 0
      %10320 = vmatmul.mubr.bf16.gmra.mrb[0].mxu0 %v7118
      %v10321 = vpop.f32.mrb[0].mxu0
      %v10322 = vadd.f32 0.0, %v10321
      %v10323 = vpop.f32.mrb[0].mxu0
      %v10324 = vpop.f32.mrb[0].mxu0
      %v10325 = vadd.f32 0.0, %v10324
      %v10326 = vpop.f32.mrb[0].mxu0
      %10327 = vmatprep.mubr.bf16.mxu0 0
      %10328 = vmatmul.mubr.bf16.gmra.mrb[0].mxu0 %v7121
      %v10329 = vpop.f32.mrb[0].mxu0
      %v10330 = vadd.f32 0.0, %v10329
      %v10331 = vpop.f32.mrb[0].mxu0
      %v10332 = vpop.f32.mrb[0].mxu0
      %v10333 = vadd.f32 0.0, %v10332
      %v10334 = vpop.f32.mrb[0].mxu0
      %10335 = vmatprep.mubr.bf16.mxu0 0
      %10336 = vmatmul.mubr.bf16.gmra.mrb[0].mxu0 %v7124
      %v10337 = vpop.f32.mrb[0].mxu0
      %v10338 = vadd.f32 0.0, %v10337
      %v10339 = vpop.f32.mrb[0].mxu0
      %v10340 = vpop.f32.mrb[0].mxu0
      %v10341 = vadd.f32 0.0, %v10340
      %v10342 = vpop.f32.mrb[0].mxu0
      %10343 = vmatprep.mubr.bf16.mxu0 0
      %10344 = vmatmul.mubr.bf16.gmra.mrb[0].mxu0 %v10039
      %v10345 = vpop.f32.mrb[0].mxu0
      %v10346 = vadd.f32 0.0, %v10345
      %v10347 = vpop.f32.mrb[0].mxu0
      %v10348 = vpop.f32.mrb[0].mxu0
      %v10349 = vadd.f32 0.0, %v10348
      %v10350 = vpop.f32.mrb[0].mxu0
      %10351 = vmatprep.mubr.bf16.mxu0 0
      %10352 = vmatmul.mubr.bf16.gmra.mrb[0].mxu0 %v10042
      %v10353 = vpop.f32.mrb[0].mxu0
      %v10354 = vadd.f32 0.0, %v10353
      %v10355 = vpop.f32.mrb[0].mxu0
      %v10356 = vpop.f32.mrb[0].mxu0
      %v10357 = vadd.f32 0.0, %v10356
      %v10358 = vpop.f32.mrb[0].mxu0
      %10359 = vmatprep.mubr.bf16.mxu0 0
      %10360 = vmatmul.mubr.bf16.gmra.mrb[0].mxu0 %v10045
      %v10361 = vpop.f32.mrb[0].mxu0
      %v10362 = vadd.f32 0.0, %v10361
      %v10363 = vpop.f32.mrb[0].mxu0
      %v10364 = vpop.f32.mrb[0].mxu0
      %v10365 = vadd.f32 0.0, %v10364
      %v10366 = vpop.f32.mrb[0].mxu0
      %10367 = vdwg.mxu0
      %v10368 = vadd.f32 %v9946, %v10082
      %v10369 = vadd.f32 %v9947, %v10085
      %v10370 = vadd.f32 %v9948, %v10090
      %v10371 = vadd.f32 %v9949, %v10093
      %v10372 = vadd.f32 %v9950, %v10098
      %v10373 = vadd.f32 %v9951, %v10101
      %v10374 = vadd.f32 %v9952, %v10106
      %v10375 = vadd.f32 %v9953, %v10109
      %v10376 = vadd.f32 %v9954, %v10114
      %v10377 = vadd.f32 %v9955, %v10117
      %v10378 = vadd.f32 %v9956, %v10122
      %v10379 = vadd.f32 %v9957, %v10125
      %v10380 = vadd.f32 %v9958, %v10130
      %v10381 = vadd.f32 %v9959, %v10133
      %v10382 = vadd.f32 %v9960, %v10138
      %v10383 = vadd.f32 %v9961, %v10141
      %v10384 = vadd.f32 %v9962, %v10146
      %v10385 = vadd.f32 %v9963, %v10149
      %v10386 = vadd.f32 %v9964, %v10154
      %v10387 = vadd.f32 %v9965, %v10157
      %v10388 = vadd.f32 %v9966, %v10162
      %v10389 = vadd.f32 %v9967, %v10165
      %v10390 = vadd.f32 %v9968, %v10170
      %v10391 = vadd.f32 %v9969, %v10173
      %v10392 = vadd.f32 %v9970, %v10178
      %v10393 = vadd.f32 %v9971, %v10181
      %v10394 = vadd.f32 %v9972, %v10186
      %v10395 = vadd.f32 %v9973, %v10189
      %v10396 = vadd.f32 %v9974, %v10194
      %v10397 = vadd.f32 %v9975, %v10197
      %v10398 = vadd.f32 %v9976, %v10202
      %v10399 = vadd.f32 %v9977, %v10205
      %v10400 = vadd.f32 %v9978, %v10210
      %v10401 = vadd.f32 %v9979, %v10213
      %v10402 = vadd.f32 %v9980, %v10218
      %v10403 = vadd.f32 %v9981, %v10221
      %v10404 = vadd.f32 %v9982, %v10226
      %v10405 = vadd.f32 %v9983, %v10229
      %v10406 = vadd.f32 %v9984, %v10234
      %v10407 = vadd.f32 %v9985, %v10237
      %v10408 = vadd.f32 %v9986, %v10242
      %v10409 = vadd.f32 %v9987, %v10245
      %v10410 = vadd.f32 %v9988, %v10250
      %v10411 = vadd.f32 %v9989, %v10253
      %v10412 = vadd.f32 %v9990, %v10258
      %v10413 = vadd.f32 %v9991, %v10261
      %v10414 = vadd.f32 %v9992, %v10266
      %v10415 = vadd.f32 %v9993, %v10269
      %v10416 = vadd.f32 %v9994, %v10274
      %v10417 = vadd.f32 %v9995, %v10277
      %v10418 = vadd.f32 %v9996, %v10282
      %v10419 = vadd.f32 %v9997, %v10285
      %v10420 = vadd.f32 %v9998, %v10290
      %v10421 = vadd.f32 %v9999, %v10293
      %v10422 = vadd.f32 %v10000, %v10298
      %v10423 = vadd.f32 %v10001, %v10301
      %v10424 = vadd.f32 %v10002, %v10306
      %v10425 = vadd.f32 %v10003, %v10309
      %v10426 = vadd.f32 %v10004, %v10314
      %v10427 = vadd.f32 %v10005, %v10317
      %v10428 = vadd.f32 %v10006, %v10322
      %v10429 = vadd.f32 %v10007, %v10325
      %v10430 = vadd.f32 %v10008, %v10330
      %v10431 = vadd.f32 %v10009, %v10333
      %v10432 = vadd.f32 %v10010, %v10338
      %v10433 = vadd.f32 %v10011, %v10341
      %v10434 = vadd.f32 %v10012, %v10346
      %v10435 = vadd.f32 %v10013, %v10349
      %v10436 = vadd.f32 %v10014, %v10354
      %v10437 = vadd.f32 %v10015, %v10357
      %v10438 = vadd.f32 %v10016, %v10362
      %v10439 = vadd.f32 %v10017, %v10365
      %v10440 = vunpack.c.h.b16 %v5324
      %v10441 = vpack.c.b16 %v10020, %v10020
      %v10442 = vpack.c.b16 %v10021, %v10021
      %v10443 = vpack.c.b16 %v10022, %v10022
      %v10444 = vpack.c.b16 %v10440, %v10440
      %v10446 = vshrl.u32 %v10441, 16
      %v10448 = vrot.slane %v10446, 4
      %v10449 = vshll.u32 %v10441, 16
      %v10451 = vrot.slane %v10449, 5
      %v10452 = vor.u32 %v10448, %v10451
      %v10453 = vrot.slane %v10452, 4
      %v10455 = vshll.u32 %v10442, 16
      %v10457 = vrot.slane %v10455, 5
      %v10458 = vsel %vm5603, %v10453, %v10457
      %v10459 = vshrl.u32 %v10442, 16
      %v10461 = vrot.slane %v10459, 4
      %v10462 = vor.u32 %v10461, %v10457
      %v10463 = vrot.slane %v10462, 4
      %v10465 = vshll.u32 %v10443, 16
      %v10467 = vrot.slane %v10465, 5
      %v10468 = vsel %vm5603, %v10463, %v10467
      %v10469 = vshrl.u32 %v10443, 16
      %v10471 = vrot.slane %v10469, 4
      %v10472 = vor.u32 %v10471, %v10467
      %v10473 = vrot.slane %v10472, 4
      %v10475 = vshll.u32 %v10444, 16
      %v10477 = vrot.slane %v10475, 5
      %v10478 = vsel %vm5603, %v10473, %v10477
      %v10479 = vunpack.c.l.b16 %v10458
      %v10480 = vunpack.c.l.b16 %v10468
      %v10481 = vunpack.c.l.b16 %v10478
      %v10482 = vpack.c.b16 %v8905, %v8904
      %v10483 = vpack.c.b16 %v10479, %v8906
      %v10484 = vpack.c.b16 %v10481, %v10480
      %v10489 = vunpack.c.l.b16 %v5353
      %v10490 = vunpack.c.l.b16 %v5354
      %v10491 = vunpack.c.l.b16 %v5355
      %v10492 = vunpack.c.l.b16 %v5356
      %v10493 = vpack.c.b16 %v10490, %v10489
      %v10494 = vpack.c.b16 %v10492, %v10491
      %v10498 = vsel %vm6540, %v10482, 0
      %v10501 = vsel %vm6540, %v10483, 0
      %v10504 = vsel %vm6540, %v10484, 0
      %10506 = vmatprep.subr.bf16.mxu0 0
      %10507 = vmatpush1.bf16.msra.mxu0 %v10493
      %10508 = vmatprep.subr.bf16.mxu0 0
      %10509 = vmatpush1.bf16.msra.mxu0 %v10494
      %10510 = vmatprep.subr.bf16.mxu0 0
      %10511 = vmatpush1.bf16.msra.mxu0 0
      %10512 = vmatprep.subr.bf16.mxu0 0
      %10513 = vmatpush1.bf16.msra.mxu0 0
      %10514 = vmatprep.subr.bf16.mxu0 0
      %10515 = vmatpush1.bf16.msra.mxu0 0
      %10516 = vmatprep.subr.bf16.mxu0 0
      %10517 = vmatpush1.bf16.msra.mxu0 0
      %10518 = vmatprep.subr.bf16.mxu0 0
      %10519 = vmatpush1.bf16.msra.mxu0 0
      %10520 = vmatprep.subr.bf16.mxu0 0
      %10521 = vmatpush1.bf16.msra.mxu0 0
      %10522 = vmatprep.subr.bf16.mxu0 0
      %10523 = vmatpush1.bf16.msra.mxu0 0
      %10524 = vmatprep.subr.bf16.mxu0 0
      %10525 = vmatpush1.bf16.msra.mxu0 0
      %10526 = vmatprep.subr.bf16.mxu0 0
      %10527 = vmatpush1.bf16.msra.mxu0 0
      %10528 = vmatprep.subr.bf16.mxu0 0
      %10529 = vmatpush1.bf16.msra.mxu0 0
      %10530 = vmatprep.subr.bf16.mxu0 0
      %10531 = vmatpush1.bf16.msra.mxu0 0
      %10532 = vmatprep.subr.bf16.mxu0 0
      %10533 = vmatpush1.bf16.msra.mxu0 0
      %10534 = vmatprep.subr.bf16.mxu0 0
      %10535 = vmatpush1.bf16.msra.mxu0 0
      %10536 = vmatprep.subr.bf16.mxu0 0
      %10537 = vmatpush1.bf16.msra.mxu0 0
      %10538 = vmatprep.mubr.bf16.mxu0 0
      %10539 = vmatmul.mubr.bf16.gmra.mrb[0].mxu0 %v6551
      %v10540 = vpop.f32.mrb[0].mxu0
      %v10541 = vadd.f32 0.0, %v10540
      %v10542 = vpop.f32.mrb[0].mxu0
      %v10543 = vpop.f32.mrb[0].mxu0
      %v10544 = vadd.f32 0.0, %v10543
      %v10545 = vpop.f32.mrb[0].mxu0
      %10546 = vmatprep.mubr.bf16.mxu0 0
      %10547 = vmatmul.mubr.bf16.gmra.mrb[0].mxu0 %v6554
      %v10548 = vpop.f32.mrb[0].mxu0
      %v10549 = vadd.f32 0.0, %v10548
      %v10550 = vpop.f32.mrb[0].mxu0
      %v10551 = vpop.f32.mrb[0].mxu0
      %v10552 = vadd.f32 0.0, %v10551
      %v10553 = vpop.f32.mrb[0].mxu0
      %10554 = vmatprep.mubr.bf16.mxu0 0
      %10555 = vmatmul.mubr.bf16.gmra.mrb[0].mxu0 %v6557
      %v10556 = vpop.f32.mrb[0].mxu0
      %v10557 = vadd.f32 0.0, %v10556
      %v10558 = vpop.f32.mrb[0].mxu0
      %v10559 = vpop.f32.mrb[0].mxu0
      %v10560 = vadd.f32 0.0, %v10559
      %v10561 = vpop.f32.mrb[0].mxu0
      %10562 = vmatprep.mubr.bf16.mxu0 0
      %10563 = vmatmul.mubr.bf16.gmra.mrb[0].mxu0 %v6560
      %v10564 = vpop.f32.mrb[0].mxu0
      %v10565 = vadd.f32 0.0, %v10564
      %v10566 = vpop.f32.mrb[0].mxu0
      %v10567 = vpop.f32.mrb[0].mxu0
      %v10568 = vadd.f32 0.0, %v10567
      %v10569 = vpop.f32.mrb[0].mxu0
      %10570 = vmatprep.mubr.bf16.mxu0 0
      %10571 = vmatmul.mubr.bf16.gmra.mrb[0].mxu0 %v6563
      %v10572 = vpop.f32.mrb[0].mxu0
      %v10573 = vadd.f32 0.0, %v10572
      %v10574 = vpop.f32.mrb[0].mxu0
      %v10575 = vpop.f32.mrb[0].mxu0
      %v10576 = vadd.f32 0.0, %v10575
      %v10577 = vpop.f32.mrb[0].mxu0
      %10578 = vmatprep.mubr.bf16.mxu0 0
      %10579 = vmatmul.mubr.bf16.gmra.mrb[0].mxu0 %v6566
      %v10580 = vpop.f32.mrb[0].mxu0
      %v10581 = vadd.f32 0.0, %v10580
      %v10582 = vpop.f32.mrb[0].mxu0
      %v10583 = vpop.f32.mrb[0].mxu0
      %v10584 = vadd.f32 0.0, %v10583
      %v10585 = vpop.f32.mrb[0].mxu0
      %10586 = vmatprep.mubr.bf16.mxu0 0
      %10587 = vmatmul.mubr.bf16.gmra.mrb[0].mxu0 %v6569
      %v10588 = vpop.f32.mrb[0].mxu0
      %v10589 = vadd.f32 0.0, %v10588
      %v10590 = vpop.f32.mrb[0].mxu0
      %v10591 = vpop.f32.mrb[0].mxu0
      %v10592 = vadd.f32 0.0, %v10591
      %v10593 = vpop.f32.mrb[0].mxu0
      %10594 = vmatprep.mubr.bf16.mxu0 0
      %10595 = vmatmul.mubr.bf16.gmra.mrb[0].mxu0 %v6572
      %v10596 = vpop.f32.mrb[0].mxu0
      %v10597 = vadd.f32 0.0, %v10596
      %v10598 = vpop.f32.mrb[0].mxu0
      %v10599 = vpop.f32.mrb[0].mxu0
      %v10600 = vadd.f32 0.0, %v10599
      %v10601 = vpop.f32.mrb[0].mxu0
      %10602 = vmatprep.mubr.bf16.mxu0 0
      %10603 = vmatmul.mubr.bf16.gmra.mrb[0].mxu0 %v6575
      %v10604 = vpop.f32.mrb[0].mxu0
      %v10605 = vadd.f32 0.0, %v10604
      %v10606 = vpop.f32.mrb[0].mxu0
      %v10607 = vpop.f32.mrb[0].mxu0
      %v10608 = vadd.f32 0.0, %v10607
      %v10609 = vpop.f32.mrb[0].mxu0
      %10610 = vmatprep.mubr.bf16.mxu0 0
      %10611 = vmatmul.mubr.bf16.gmra.mrb[0].mxu0 %v6578
      %v10612 = vpop.f32.mrb[0].mxu0
      %v10613 = vadd.f32 0.0, %v10612
      %v10614 = vpop.f32.mrb[0].mxu0
      %v10615 = vpop.f32.mrb[0].mxu0
      %v10616 = vadd.f32 0.0, %v10615
      %v10617 = vpop.f32.mrb[0].mxu0
      %10618 = vmatprep.mubr.bf16.mxu0 0
      %10619 = vmatmul.mubr.bf16.gmra.mrb[0].mxu0 %v6581
      %v10620 = vpop.f32.mrb[0].mxu0
      %v10621 = vadd.f32 0.0, %v10620
      %v10622 = vpop.f32.mrb[0].mxu0
      %v10623 = vpop.f32.mrb[0].mxu0
      %v10624 = vadd.f32 0.0, %v10623
      %v10625 = vpop.f32.mrb[0].mxu0
      %10626 = vmatprep.mubr.bf16.mxu0 0
      %10627 = vmatmul.mubr.bf16.gmra.mrb[0].mxu0 %v6584
      %v10628 = vpop.f32.mrb[0].mxu0
      %v10629 = vadd.f32 0.0, %v10628
      %v10630 = vpop.f32.mrb[0].mxu0
      %v10631 = vpop.f32.mrb[0].mxu0
      %v10632 = vadd.f32 0.0, %v10631
      %v10633 = vpop.f32.mrb[0].mxu0
      %10634 = vmatprep.mubr.bf16.mxu0 0
      %10635 = vmatmul.mubr.bf16.gmra.mrb[0].mxu0 %v6587
      %v10636 = vpop.f32.mrb[0].mxu0
      %v10637 = vadd.f32 0.0, %v10636
      %v10638 = vpop.f32.mrb[0].mxu0
      %v10639 = vpop.f32.mrb[0].mxu0
      %v10640 = vadd.f32 0.0, %v10639
      %v10641 = vpop.f32.mrb[0].mxu0
      %10642 = vmatprep.mubr.bf16.mxu0 0
      %10643 = vmatmul.mubr.bf16.gmra.mrb[0].mxu0 %v6590
      %v10644 = vpop.f32.mrb[0].mxu0
      %v10645 = vadd.f32 0.0, %v10644
      %v10646 = vpop.f32.mrb[0].mxu0
      %v10647 = vpop.f32.mrb[0].mxu0
      %v10648 = vadd.f32 0.0, %v10647
      %v10649 = vpop.f32.mrb[0].mxu0
      %10650 = vmatprep.mubr.bf16.mxu0 0
      %10651 = vmatmul.mubr.bf16.gmra.mrb[0].mxu0 %v6593
      %v10652 = vpop.f32.mrb[0].mxu0
      %v10653 = vadd.f32 0.0, %v10652
      %v10654 = vpop.f32.mrb[0].mxu0
      %v10655 = vpop.f32.mrb[0].mxu0
      %v10656 = vadd.f32 0.0, %v10655
      %v10657 = vpop.f32.mrb[0].mxu0
      %10658 = vmatprep.mubr.bf16.mxu0 0
      %10659 = vmatmul.mubr.bf16.gmra.mrb[0].mxu0 %v6596
      %v10660 = vpop.f32.mrb[0].mxu0
      %v10661 = vadd.f32 0.0, %v10660
      %v10662 = vpop.f32.mrb[0].mxu0
      %v10663 = vpop.f32.mrb[0].mxu0
      %v10664 = vadd.f32 0.0, %v10663
      %v10665 = vpop.f32.mrb[0].mxu0
      %10666 = vmatprep.mubr.bf16.mxu0 0
      %10667 = vmatmul.mubr.bf16.gmra.mrb[0].mxu0 %v6599
      %v10668 = vpop.f32.mrb[0].mxu0
      %v10669 = vadd.f32 0.0, %v10668
      %v10670 = vpop.f32.mrb[0].mxu0
      %v10671 = vpop.f32.mrb[0].mxu0
      %v10672 = vadd.f32 0.0, %v10671
      %v10673 = vpop.f32.mrb[0].mxu0
      %10674 = vmatprep.mubr.bf16.mxu0 0
      %10675 = vmatmul.mubr.bf16.gmra.mrb[0].mxu0 %v6602
      %v10676 = vpop.f32.mrb[0].mxu0
      %v10677 = vadd.f32 0.0, %v10676
      %v10678 = vpop.f32.mrb[0].mxu0
      %v10679 = vpop.f32.mrb[0].mxu0
      %v10680 = vadd.f32 0.0, %v10679
      %v10681 = vpop.f32.mrb[0].mxu0
      %10682 = vmatprep.mubr.bf16.mxu0 0
      %10683 = vmatmul.mubr.bf16.gmra.mrb[0].mxu0 %v6605
      %v10684 = vpop.f32.mrb[0].mxu0
      %v10685 = vadd.f32 0.0, %v10684
      %v10686 = vpop.f32.mrb[0].mxu0
      %v10687 = vpop.f32.mrb[0].mxu0
      %v10688 = vadd.f32 0.0, %v10687
      %v10689 = vpop.f32.mrb[0].mxu0
      %10690 = vmatprep.mubr.bf16.mxu0 0
      %10691 = vmatmul.mubr.bf16.gmra.mrb[0].mxu0 %v6608
      %v10692 = vpop.f32.mrb[0].mxu0
      %v10693 = vadd.f32 0.0, %v10692
      %v10694 = vpop.f32.mrb[0].mxu0
      %v10695 = vpop.f32.mrb[0].mxu0
      %v10696 = vadd.f32 0.0, %v10695
      %v10697 = vpop.f32.mrb[0].mxu0
      %10698 = vmatprep.mubr.bf16.mxu0 0
      %10699 = vmatmul.mubr.bf16.gmra.mrb[0].mxu0 %v6611
      %v10700 = vpop.f32.mrb[0].mxu0
      %v10701 = vadd.f32 0.0, %v10700
      %v10702 = vpop.f32.mrb[0].mxu0
      %v10703 = vpop.f32.mrb[0].mxu0
      %v10704 = vadd.f32 0.0, %v10703
      %v10705 = vpop.f32.mrb[0].mxu0
      %10706 = vmatprep.mubr.bf16.mxu0 0
      %10707 = vmatmul.mubr.bf16.gmra.mrb[0].mxu0 %v6614
      %v10708 = vpop.f32.mrb[0].mxu0
      %v10709 = vadd.f32 0.0, %v10708
      %v10710 = vpop.f32.mrb[0].mxu0
      %v10711 = vpop.f32.mrb[0].mxu0
      %v10712 = vadd.f32 0.0, %v10711
      %v10713 = vpop.f32.mrb[0].mxu0
      %10714 = vmatprep.mubr.bf16.mxu0 0
      %10715 = vmatmul.mubr.bf16.gmra.mrb[0].mxu0 %v6617
      %v10716 = vpop.f32.mrb[0].mxu0
      %v10717 = vadd.f32 0.0, %v10716
      %v10718 = vpop.f32.mrb[0].mxu0
      %v10719 = vpop.f32.mrb[0].mxu0
      %v10720 = vadd.f32 0.0, %v10719
      %v10721 = vpop.f32.mrb[0].mxu0
      %10722 = vmatprep.mubr.bf16.mxu0 0
      %10723 = vmatmul.mubr.bf16.gmra.mrb[0].mxu0 %v6620
      %v10724 = vpop.f32.mrb[0].mxu0
      %v10725 = vadd.f32 0.0, %v10724
      %v10726 = vpop.f32.mrb[0].mxu0
      %v10727 = vpop.f32.mrb[0].mxu0
      %v10728 = vadd.f32 0.0, %v10727
      %v10729 = vpop.f32.mrb[0].mxu0
      %10730 = vmatprep.mubr.bf16.mxu0 0
      %10731 = vmatmul.mubr.bf16.gmra.mrb[0].mxu0 %v6623
      %v10732 = vpop.f32.mrb[0].mxu0
      %v10733 = vadd.f32 0.0, %v10732
      %v10734 = vpop.f32.mrb[0].mxu0
      %v10735 = vpop.f32.mrb[0].mxu0
      %v10736 = vadd.f32 0.0, %v10735
      %v10737 = vpop.f32.mrb[0].mxu0
      %10738 = vmatprep.mubr.bf16.mxu0 0
      %10739 = vmatmul.mubr.bf16.gmra.mrb[0].mxu0 %v6626
      %v10740 = vpop.f32.mrb[0].mxu0
      %v10741 = vadd.f32 0.0, %v10740
      %v10742 = vpop.f32.mrb[0].mxu0
      %v10743 = vpop.f32.mrb[0].mxu0
      %v10744 = vadd.f32 0.0, %v10743
      %v10745 = vpop.f32.mrb[0].mxu0
      %10746 = vmatprep.mubr.bf16.mxu0 0
      %10747 = vmatmul.mubr.bf16.gmra.mrb[0].mxu0 %v6629
      %v10748 = vpop.f32.mrb[0].mxu0
      %v10749 = vadd.f32 0.0, %v10748
      %v10750 = vpop.f32.mrb[0].mxu0
      %v10751 = vpop.f32.mrb[0].mxu0
      %v10752 = vadd.f32 0.0, %v10751
      %v10753 = vpop.f32.mrb[0].mxu0
      %10754 = vmatprep.mubr.bf16.mxu0 0
      %10755 = vmatmul.mubr.bf16.gmra.mrb[0].mxu0 %v6632
      %v10756 = vpop.f32.mrb[0].mxu0
      %v10757 = vadd.f32 0.0, %v10756
      %v10758 = vpop.f32.mrb[0].mxu0
      %v10759 = vpop.f32.mrb[0].mxu0
      %v10760 = vadd.f32 0.0, %v10759
      %v10761 = vpop.f32.mrb[0].mxu0
      %10762 = vmatprep.mubr.bf16.mxu0 0
      %10763 = vmatmul.mubr.bf16.gmra.mrb[0].mxu0 %v6635
      %v10764 = vpop.f32.mrb[0].mxu0
      %v10765 = vadd.f32 0.0, %v10764
      %v10766 = vpop.f32.mrb[0].mxu0
      %v10767 = vpop.f32.mrb[0].mxu0
      %v10768 = vadd.f32 0.0, %v10767
      %v10769 = vpop.f32.mrb[0].mxu0
      %10770 = vmatprep.mubr.bf16.mxu0 0
      %10771 = vmatmul.mubr.bf16.gmra.mrb[0].mxu0 %v6638
      %v10772 = vpop.f32.mrb[0].mxu0
      %v10773 = vadd.f32 0.0, %v10772
      %v10774 = vpop.f32.mrb[0].mxu0
      %v10775 = vpop.f32.mrb[0].mxu0
      %v10776 = vadd.f32 0.0, %v10775
      %v10777 = vpop.f32.mrb[0].mxu0
      %10778 = vmatprep.mubr.bf16.mxu0 0
      %10779 = vmatmul.mubr.bf16.gmra.mrb[0].mxu0 %v6641
      %v10780 = vpop.f32.mrb[0].mxu0
      %v10781 = vadd.f32 0.0, %v10780
      %v10782 = vpop.f32.mrb[0].mxu0
      %v10783 = vpop.f32.mrb[0].mxu0
      %v10784 = vadd.f32 0.0, %v10783
      %v10785 = vpop.f32.mrb[0].mxu0
      %10786 = vmatprep.mubr.bf16.mxu0 0
      %10787 = vmatmul.mubr.bf16.gmra.mrb[0].mxu0 %v6644
      %v10788 = vpop.f32.mrb[0].mxu0
      %v10789 = vadd.f32 0.0, %v10788
      %v10790 = vpop.f32.mrb[0].mxu0
      %v10791 = vpop.f32.mrb[0].mxu0
      %v10792 = vadd.f32 0.0, %v10791
      %v10793 = vpop.f32.mrb[0].mxu0
      %10794 = vmatprep.mubr.bf16.mxu0 0
      %10795 = vmatmul.mubr.bf16.gmra.mrb[0].mxu0 %v6647
      %v10796 = vpop.f32.mrb[0].mxu0
      %v10797 = vadd.f32 0.0, %v10796
      %v10798 = vpop.f32.mrb[0].mxu0
      %v10799 = vpop.f32.mrb[0].mxu0
      %v10800 = vadd.f32 0.0, %v10799
      %v10801 = vpop.f32.mrb[0].mxu0
      %10802 = vmatprep.mubr.bf16.mxu0 0
      %10803 = vmatmul.mubr.bf16.gmra.mrb[0].mxu0 %v10498
      %v10804 = vpop.f32.mrb[0].mxu0
      %v10805 = vadd.f32 0.0, %v10804
      %v10806 = vpop.f32.mrb[0].mxu0
      %v10807 = vpop.f32.mrb[0].mxu0
      %v10808 = vadd.f32 0.0, %v10807
      %v10809 = vpop.f32.mrb[0].mxu0
      %10810 = vmatprep.mubr.bf16.mxu0 0
      %10811 = vmatmul.mubr.bf16.gmra.mrb[0].mxu0 %v10501
      %v10812 = vpop.f32.mrb[0].mxu0
      %v10813 = vadd.f32 0.0, %v10812
      %v10814 = vpop.f32.mrb[0].mxu0
      %v10815 = vpop.f32.mrb[0].mxu0
      %v10816 = vadd.f32 0.0, %v10815
      %v10817 = vpop.f32.mrb[0].mxu0
      %10818 = vmatprep.mubr.bf16.mxu0 0
      %10819 = vmatmul.mubr.bf16.gmra.mrb[0].mxu0 %v10504
      %v10820 = vpop.f32.mrb[0].mxu0
      %v10821 = vadd.f32 0.0, %v10820
      %v10822 = vpop.f32.mrb[0].mxu0
      %v10823 = vpop.f32.mrb[0].mxu0
      %v10824 = vadd.f32 0.0, %v10823
      %v10825 = vpop.f32.mrb[0].mxu0
      %10826 = vdwg.mxu0
      %v10827 = vadd.f32 %v10368, %v10541
      %v10828 = vadd.f32 %v10369, %v10544
      %v10829 = vadd.f32 %v10370, %v10549
      %v10830 = vadd.f32 %v10371, %v10552
      %v10831 = vadd.f32 %v10372, %v10557
      %v10832 = vadd.f32 %v10373, %v10560
      %v10833 = vadd.f32 %v10374, %v10565
      %v10834 = vadd.f32 %v10375, %v10568
      %v10835 = vadd.f32 %v10376, %v10573
      %v10836 = vadd.f32 %v10377, %v10576
      %v10837 = vadd.f32 %v10378, %v10581
      %v10838 = vadd.f32 %v10379, %v10584
      %v10839 = vadd.f32 %v10380, %v10589
      %v10840 = vadd.f32 %v10381, %v10592
      %v10841 = vadd.f32 %v10382, %v10597
      %v10842 = vadd.f32 %v10383, %v10600
      %v10843 = vadd.f32 %v10384, %v10605
      %v10844 = vadd.f32 %v10385, %v10608
      %v10845 = vadd.f32 %v10386, %v10613
      %v10846 = vadd.f32 %v10387, %v10616
      %v10847 = vadd.f32 %v10388, %v10621
      %v10848 = vadd.f32 %v10389, %v10624
      %v10849 = vadd.f32 %v10390, %v10629
      %v10850 = vadd.f32 %v10391, %v10632
      %v10851 = vadd.f32 %v10392, %v10637
      %v10852 = vadd.f32 %v10393, %v10640
      %v10853 = vadd.f32 %v10394, %v10645
      %v10854 = vadd.f32 %v10395, %v10648
      %v10855 = vadd.f32 %v10396, %v10653
      %v10856 = vadd.f32 %v10397, %v10656
      %v10857 = vadd.f32 %v10398, %v10661
      %v10858 = vadd.f32 %v10399, %v10664
      %v10859 = vadd.f32 %v10400, %v10669
      %v10860 = vadd.f32 %v10401, %v10672
      %v10861 = vadd.f32 %v10402, %v10677
      %v10862 = vadd.f32 %v10403, %v10680
      %v10863 = vadd.f32 %v10404, %v10685
      %v10864 = vadd.f32 %v10405, %v10688
      %v10865 = vadd.f32 %v10406, %v10693
      %v10866 = vadd.f32 %v10407, %v10696
      %v10867 = vadd.f32 %v10408, %v10701
      %v10868 = vadd.f32 %v10409, %v10704
      %v10869 = vadd.f32 %v10410, %v10709
      %v10870 = vadd.f32 %v10411, %v10712
      %v10871 = vadd.f32 %v10412, %v10717
      %v10872 = vadd.f32 %v10413, %v10720
      %v10873 = vadd.f32 %v10414, %v10725
      %v10874 = vadd.f32 %v10415, %v10728
      %v10875 = vadd.f32 %v10416, %v10733
      %v10876 = vadd.f32 %v10417, %v10736
      %v10877 = vadd.f32 %v10418, %v10741
      %v10878 = vadd.f32 %v10419, %v10744
      %v10879 = vadd.f32 %v10420, %v10749
      %v10880 = vadd.f32 %v10421, %v10752
      %v10881 = vadd.f32 %v10422, %v10757
      %v10882 = vadd.f32 %v10423, %v10760
      %v10883 = vadd.f32 %v10424, %v10765
      %v10884 = vadd.f32 %v10425, %v10768
      %v10885 = vadd.f32 %v10426, %v10773
      %v10886 = vadd.f32 %v10427, %v10776
      %v10887 = vadd.f32 %v10428, %v10781
      %v10888 = vadd.f32 %v10429, %v10784
      %v10889 = vadd.f32 %v10430, %v10789
      %v10890 = vadd.f32 %v10431, %v10792
      %v10891 = vadd.f32 %v10432, %v10797
      %v10892 = vadd.f32 %v10433, %v10800
      %v10893 = vadd.f32 %v10434, %v10805
      %v10894 = vadd.f32 %v10435, %v10808
      %v10895 = vadd.f32 %v10436, %v10813
      %v10896 = vadd.f32 %v10437, %v10816
      %v10897 = vadd.f32 %v10438, %v10821
      %v10898 = vadd.f32 %v10439, %v10824
      %v10899 = vrot.slane %v10441, 5
      %v10900 = vrot.slane %v10899, 4
      %v10901 = vrot.slane %v10442, 5
      %v10902 = vsel %vm7449, %v10900, %v10901
      %v10903 = vrot.slane %v10901, 4
      %v10904 = vrot.slane %v10443, 5
      %v10905 = vsel %vm7449, %v10903, %v10904
      %v10906 = vrot.slane %v10904, 4
      %v10907 = vrot.slane %v10444, 5
      %v10908 = vsel %vm7449, %v10906, %v10907
      %v10909 = vunpack.c.l.b16 %v10902
      %v10910 = vunpack.c.l.b16 %v10905
      %v10911 = vunpack.c.l.b16 %v10908
      %v10912 = vpack.c.b16 %v9467, %v9466
      %v10913 = vpack.c.b16 %v10909, %v9468
      %v10914 = vpack.c.b16 %v10911, %v10910
      %v10919 = vunpack.c.l.b16 %v5357
      %v10920 = vunpack.c.l.b16 %v5358
      %v10921 = vunpack.c.l.b16 %v5359
      %v10922 = vunpack.c.l.b16 %v5360
      %v10923 = vpack.c.b16 %v10920, %v10919
      %v10924 = vpack.c.b16 %v10922, %v10921
      %v10928 = vsel %vm6540, %v10912, 0
      %v10931 = vsel %vm6540, %v10913, 0
      %v10934 = vsel %vm6540, %v10914, 0
      %10936 = vmatprep.subr.bf16.mxu0 0
      %10937 = vmatpush1.bf16.msra.mxu0 %v10923
      %10938 = vmatprep.subr.bf16.mxu0 0
      %10939 = vmatpush1.bf16.msra.mxu0 %v10924
      %10940 = vmatprep.subr.bf16.mxu0 0
      %10941 = vmatpush1.bf16.msra.mxu0 0
      %10942 = vmatprep.subr.bf16.mxu0 0
      %10943 = vmatpush1.bf16.msra.mxu0 0
      %10944 = vmatprep.subr.bf16.mxu0 0
      %10945 = vmatpush1.bf16.msra.mxu0 0
      %10946 = vmatprep.subr.bf16.mxu0 0
      %10947 = vmatpush1.bf16.msra.mxu0 0
      %10948 = vmatprep.subr.bf16.mxu0 0
      %10949 = vmatpush1.bf16.msra.mxu0 0
      %10950 = vmatprep.subr.bf16.mxu0 0
      %10951 = vmatpush1.bf16.msra.mxu0 0
      %10952 = vmatprep.subr.bf16.mxu0 0
      %10953 = vmatpush1.bf16.msra.mxu0 0
      %10954 = vmatprep.subr.bf16.mxu0 0
      %10955 = vmatpush1.bf16.msra.mxu0 0
      %10956 = vmatprep.subr.bf16.mxu0 0
      %10957 = vmatpush1.bf16.msra.mxu0 0
      %10958 = vmatprep.subr.bf16.mxu0 0
      %10959 = vmatpush1.bf16.msra.mxu0 0
      %10960 = vmatprep.subr.bf16.mxu0 0
      %10961 = vmatpush1.bf16.msra.mxu0 0
      %10962 = vmatprep.subr.bf16.mxu0 0
      %10963 = vmatpush1.bf16.msra.mxu0 0
      %10964 = vmatprep.subr.bf16.mxu0 0
      %10965 = vmatpush1.bf16.msra.mxu0 0
      %10966 = vmatprep.subr.bf16.mxu0 0
      %10967 = vmatpush1.bf16.msra.mxu0 0
      %10968 = vmatprep.mubr.bf16.mxu0 0
      %10969 = vmatmul.mubr.bf16.gmra.mrb[0].mxu0 %v7820
      %v10970 = vpop.f32.mrb[0].mxu0
      %v10971 = vadd.f32 0.0, %v10970
      %v10972 = vpop.f32.mrb[0].mxu0
      %v10973 = vpop.f32.mrb[0].mxu0
      %v10974 = vadd.f32 0.0, %v10973
      %v10975 = vpop.f32.mrb[0].mxu0
      %10976 = vmatprep.mubr.bf16.mxu0 0
      %10977 = vmatmul.mubr.bf16.gmra.mrb[0].mxu0 %v7823
      %v10978 = vpop.f32.mrb[0].mxu0
      %v10979 = vadd.f32 0.0, %v10978
      %v10980 = vpop.f32.mrb[0].mxu0
      %v10981 = vpop.f32.mrb[0].mxu0
      %v10982 = vadd.f32 0.0, %v10981
      %v10983 = vpop.f32.mrb[0].mxu0
      %10984 = vmatprep.mubr.bf16.mxu0 0
      %10985 = vmatmul.mubr.bf16.gmra.mrb[0].mxu0 %v7826
      %v10986 = vpop.f32.mrb[0].mxu0
      %v10987 = vadd.f32 0.0, %v10986
      %v10988 = vpop.f32.mrb[0].mxu0
      %v10989 = vpop.f32.mrb[0].mxu0
      %v10990 = vadd.f32 0.0, %v10989
      %v10991 = vpop.f32.mrb[0].mxu0
      %10992 = vmatprep.mubr.bf16.mxu0 0
      %10993 = vmatmul.mubr.bf16.gmra.mrb[0].mxu0 %v7829
      %v10994 = vpop.f32.mrb[0].mxu0
      %v10995 = vadd.f32 0.0, %v10994
      %v10996 = vpop.f32.mrb[0].mxu0
      %v10997 = vpop.f32.mrb[0].mxu0
      %v10998 = vadd.f32 0.0, %v10997
      %v10999 = vpop.f32.mrb[0].mxu0
      %11000 = vmatprep.mubr.bf16.mxu0 0
      %11001 = vmatmul.mubr.bf16.gmra.mrb[0].mxu0 %v7832
      %v11002 = vpop.f32.mrb[0].mxu0
      %v11003 = vadd.f32 0.0, %v11002
      %v11004 = vpop.f32.mrb[0].mxu0
      %v11005 = vpop.f32.mrb[0].mxu0
      %v11006 = vadd.f32 0.0, %v11005
      %v11007 = vpop.f32.mrb[0].mxu0
      %11008 = vmatprep.mubr.bf16.mxu0 0
      %11009 = vmatmul.mubr.bf16.gmra.mrb[0].mxu0 %v7835
      %v11010 = vpop.f32.mrb[0].mxu0
      %v11011 = vadd.f32 0.0, %v11010
      %v11012 = vpop.f32.mrb[0].mxu0
      %v11013 = vpop.f32.mrb[0].mxu0
      %v11014 = vadd.f32 0.0, %v11013
      %v11015 = vpop.f32.mrb[0].mxu0
      %11016 = vmatprep.mubr.bf16.mxu0 0
      %11017 = vmatmul.mubr.bf16.gmra.mrb[0].mxu0 %v7838
      %v11018 = vpop.f32.mrb[0].mxu0
      %v11019 = vadd.f32 0.0, %v11018
      %v11020 = vpop.f32.mrb[0].mxu0
      %v11021 = vpop.f32.mrb[0].mxu0
      %v11022 = vadd.f32 0.0, %v11021
      %v11023 = vpop.f32.mrb[0].mxu0
      %11024 = vmatprep.mubr.bf16.mxu0 0
      %11025 = vmatmul.mubr.bf16.gmra.mrb[0].mxu0 %v7841
      %v11026 = vpop.f32.mrb[0].mxu0
      %v11027 = vadd.f32 0.0, %v11026
      %v11028 = vpop.f32.mrb[0].mxu0
      %v11029 = vpop.f32.mrb[0].mxu0
      %v11030 = vadd.f32 0.0, %v11029
      %v11031 = vpop.f32.mrb[0].mxu0
      %11032 = vmatprep.mubr.bf16.mxu0 0
      %11033 = vmatmul.mubr.bf16.gmra.mrb[0].mxu0 %v7844
      %v11034 = vpop.f32.mrb[0].mxu0
      %v11035 = vadd.f32 0.0, %v11034
      %v11036 = vpop.f32.mrb[0].mxu0
      %v11037 = vpop.f32.mrb[0].mxu0
      %v11038 = vadd.f32 0.0, %v11037
      %v11039 = vpop.f32.mrb[0].mxu0
      %11040 = vmatprep.mubr.bf16.mxu0 0
      %11041 = vmatmul.mubr.bf16.gmra.mrb[0].mxu0 %v7847
      %v11042 = vpop.f32.mrb[0].mxu0
      %v11043 = vadd.f32 0.0, %v11042
      %v11044 = vpop.f32.mrb[0].mxu0
      %v11045 = vpop.f32.mrb[0].mxu0
      %v11046 = vadd.f32 0.0, %v11045
      %v11047 = vpop.f32.mrb[0].mxu0
      %11048 = vmatprep.mubr.bf16.mxu0 0
      %11049 = vmatmul.mubr.bf16.gmra.mrb[0].mxu0 %v7850
      %v11050 = vpop.f32.mrb[0].mxu0
      %v11051 = vadd.f32 0.0, %v11050
      %v11052 = vpop.f32.mrb[0].mxu0
      %v11053 = vpop.f32.mrb[0].mxu0
      %v11054 = vadd.f32 0.0, %v11053
      %v11055 = vpop.f32.mrb[0].mxu0
      %11056 = vmatprep.mubr.bf16.mxu0 0
      %11057 = vmatmul.mubr.bf16.gmra.mrb[0].mxu0 %v7853
      %v11058 = vpop.f32.mrb[0].mxu0
      %v11059 = vadd.f32 0.0, %v11058
      %v11060 = vpop.f32.mrb[0].mxu0
      %v11061 = vpop.f32.mrb[0].mxu0
      %v11062 = vadd.f32 0.0, %v11061
      %v11063 = vpop.f32.mrb[0].mxu0
      %11064 = vmatprep.mubr.bf16.mxu0 0
      %11065 = vmatmul.mubr.bf16.gmra.mrb[0].mxu0 %v7856
      %v11066 = vpop.f32.mrb[0].mxu0
      %v11067 = vadd.f32 0.0, %v11066
      %v11068 = vpop.f32.mrb[0].mxu0
      %v11069 = vpop.f32.mrb[0].mxu0
      %v11070 = vadd.f32 0.0, %v11069
      %v11071 = vpop.f32.mrb[0].mxu0
      %11072 = vmatprep.mubr.bf16.mxu0 0
      %11073 = vmatmul.mubr.bf16.gmra.mrb[0].mxu0 %v7859
      %v11074 = vpop.f32.mrb[0].mxu0
      %v11075 = vadd.f32 0.0, %v11074
      %v11076 = vpop.f32.mrb[0].mxu0
      %v11077 = vpop.f32.mrb[0].mxu0
      %v11078 = vadd.f32 0.0, %v11077
      %v11079 = vpop.f32.mrb[0].mxu0
      %11080 = vmatprep.mubr.bf16.mxu0 0
      %11081 = vmatmul.mubr.bf16.gmra.mrb[0].mxu0 %v7862
      %v11082 = vpop.f32.mrb[0].mxu0
      %v11083 = vadd.f32 0.0, %v11082
      %v11084 = vpop.f32.mrb[0].mxu0
      %v11085 = vpop.f32.mrb[0].mxu0
      %v11086 = vadd.f32 0.0, %v11085
      %v11087 = vpop.f32.mrb[0].mxu0
      %11088 = vmatprep.mubr.bf16.mxu0 0
      %11089 = vmatmul.mubr.bf16.gmra.mrb[0].mxu0 %v7865
      %v11090 = vpop.f32.mrb[0].mxu0
      %v11091 = vadd.f32 0.0, %v11090
      %v11092 = vpop.f32.mrb[0].mxu0
      %v11093 = vpop.f32.mrb[0].mxu0
      %v11094 = vadd.f32 0.0, %v11093
      %v11095 = vpop.f32.mrb[0].mxu0
      %11096 = vmatprep.mubr.bf16.mxu0 0
      %11097 = vmatmul.mubr.bf16.gmra.mrb[0].mxu0 %v7868
      %v11098 = vpop.f32.mrb[0].mxu0
      %v11099 = vadd.f32 0.0, %v11098
      %v11100 = vpop.f32.mrb[0].mxu0
      %v11101 = vpop.f32.mrb[0].mxu0
      %v11102 = vadd.f32 0.0, %v11101
      %v11103 = vpop.f32.mrb[0].mxu0
      %11104 = vmatprep.mubr.bf16.mxu0 0
      %11105 = vmatmul.mubr.bf16.gmra.mrb[0].mxu0 %v7871
      %v11106 = vpop.f32.mrb[0].mxu0
      %v11107 = vadd.f32 0.0, %v11106
      %v11108 = vpop.f32.mrb[0].mxu0
      %v11109 = vpop.f32.mrb[0].mxu0
      %v11110 = vadd.f32 0.0, %v11109
      %v11111 = vpop.f32.mrb[0].mxu0
      %11112 = vmatprep.mubr.bf16.mxu0 0
      %11113 = vmatmul.mubr.bf16.gmra.mrb[0].mxu0 %v7874
      %v11114 = vpop.f32.mrb[0].mxu0
      %v11115 = vadd.f32 0.0, %v11114
      %v11116 = vpop.f32.mrb[0].mxu0
      %v11117 = vpop.f32.mrb[0].mxu0
      %v11118 = vadd.f32 0.0, %v11117
      %v11119 = vpop.f32.mrb[0].mxu0
      %11120 = vmatprep.mubr.bf16.mxu0 0
      %11121 = vmatmul.mubr.bf16.gmra.mrb[0].mxu0 %v7877
      %v11122 = vpop.f32.mrb[0].mxu0
      %v11123 = vadd.f32 0.0, %v11122
      %v11124 = vpop.f32.mrb[0].mxu0
      %v11125 = vpop.f32.mrb[0].mxu0
      %v11126 = vadd.f32 0.0, %v11125
      %v11127 = vpop.f32.mrb[0].mxu0
      %11128 = vmatprep.mubr.bf16.mxu0 0
      %11129 = vmatmul.mubr.bf16.gmra.mrb[0].mxu0 %v7880
      %v11130 = vpop.f32.mrb[0].mxu0
      %v11131 = vadd.f32 0.0, %v11130
      %v11132 = vpop.f32.mrb[0].mxu0
      %v11133 = vpop.f32.mrb[0].mxu0
      %v11134 = vadd.f32 0.0, %v11133
      %v11135 = vpop.f32.mrb[0].mxu0
      %11136 = vmatprep.mubr.bf16.mxu0 0
      %11137 = vmatmul.mubr.bf16.gmra.mrb[0].mxu0 %v7883
      %v11138 = vpop.f32.mrb[0].mxu0
      %v11139 = vadd.f32 0.0, %v11138
      %v11140 = vpop.f32.mrb[0].mxu0
      %v11141 = vpop.f32.mrb[0].mxu0
      %v11142 = vadd.f32 0.0, %v11141
      %v11143 = vpop.f32.mrb[0].mxu0
      %11144 = vmatprep.mubr.bf16.mxu0 0
      %11145 = vmatmul.mubr.bf16.gmra.mrb[0].mxu0 %v7886
      %v11146 = vpop.f32.mrb[0].mxu0
      %v11147 = vadd.f32 0.0, %v11146
      %v11148 = vpop.f32.mrb[0].mxu0
      %v11149 = vpop.f32.mrb[0].mxu0
      %v11150 = vadd.f32 0.0, %v11149
      %v11151 = vpop.f32.mrb[0].mxu0
      %11152 = vmatprep.mubr.bf16.mxu0 0
      %11153 = vmatmul.mubr.bf16.gmra.mrb[0].mxu0 %v7889
      %v11154 = vpop.f32.mrb[0].mxu0
      %v11155 = vadd.f32 0.0, %v11154
      %v11156 = vpop.f32.mrb[0].mxu0
      %v11157 = vpop.f32.mrb[0].mxu0
      %v11158 = vadd.f32 0.0, %v11157
      %v11159 = vpop.f32.mrb[0].mxu0
      %11160 = vmatprep.mubr.bf16.mxu0 0
      %11161 = vmatmul.mubr.bf16.gmra.mrb[0].mxu0 %v7892
      %v11162 = vpop.f32.mrb[0].mxu0
      %v11163 = vadd.f32 0.0, %v11162
      %v11164 = vpop.f32.mrb[0].mxu0
      %v11165 = vpop.f32.mrb[0].mxu0
      %v11166 = vadd.f32 0.0, %v11165
      %v11167 = vpop.f32.mrb[0].mxu0
      %11168 = vmatprep.mubr.bf16.mxu0 0
      %11169 = vmatmul.mubr.bf16.gmra.mrb[0].mxu0 %v7895
      %v11170 = vpop.f32.mrb[0].mxu0
      %v11171 = vadd.f32 0.0, %v11170
      %v11172 = vpop.f32.mrb[0].mxu0
      %v11173 = vpop.f32.mrb[0].mxu0
      %v11174 = vadd.f32 0.0, %v11173
      %v11175 = vpop.f32.mrb[0].mxu0
      %11176 = vmatprep.mubr.bf16.mxu0 0
      %11177 = vmatmul.mubr.bf16.gmra.mrb[0].mxu0 %v7898
      %v11178 = vpop.f32.mrb[0].mxu0
      %v11179 = vadd.f32 0.0, %v11178
      %v11180 = vpop.f32.mrb[0].mxu0
      %v11181 = vpop.f32.mrb[0].mxu0
      %v11182 = vadd.f32 0.0, %v11181
      %v11183 = vpop.f32.mrb[0].mxu0
      %11184 = vmatprep.mubr.bf16.mxu0 0
      %11185 = vmatmul.mubr.bf16.gmra.mrb[0].mxu0 %v7901
      %v11186 = vpop.f32.mrb[0].mxu0
      %v11187 = vadd.f32 0.0, %v11186
      %v11188 = vpop.f32.mrb[0].mxu0
      %v11189 = vpop.f32.mrb[0].mxu0
      %v11190 = vadd.f32 0.0, %v11189
      %v11191 = vpop.f32.mrb[0].mxu0
      %11192 = vmatprep.mubr.bf16.mxu0 0
      %11193 = vmatmul.mubr.bf16.gmra.mrb[0].mxu0 %v7904
      %v11194 = vpop.f32.mrb[0].mxu0
      %v11195 = vadd.f32 0.0, %v11194
      %v11196 = vpop.f32.mrb[0].mxu0
      %v11197 = vpop.f32.mrb[0].mxu0
      %v11198 = vadd.f32 0.0, %v11197
      %v11199 = vpop.f32.mrb[0].mxu0
      %11200 = vmatprep.mubr.bf16.mxu0 0
      %11201 = vmatmul.mubr.bf16.gmra.mrb[0].mxu0 %v7907
      %v11202 = vpop.f32.mrb[0].mxu0
      %v11203 = vadd.f32 0.0, %v11202
      %v11204 = vpop.f32.mrb[0].mxu0
      %v11205 = vpop.f32.mrb[0].mxu0
      %v11206 = vadd.f32 0.0, %v11205
      %v11207 = vpop.f32.mrb[0].mxu0
      %11208 = vmatprep.mubr.bf16.mxu0 0
      %11209 = vmatmul.mubr.bf16.gmra.mrb[0].mxu0 %v7910
      %v11210 = vpop.f32.mrb[0].mxu0
      %v11211 = vadd.f32 0.0, %v11210
      %v11212 = vpop.f32.mrb[0].mxu0
      %v11213 = vpop.f32.mrb[0].mxu0
      %v11214 = vadd.f32 0.0, %v11213
      %v11215 = vpop.f32.mrb[0].mxu0
      %11216 = vmatprep.mubr.bf16.mxu0 0
      %11217 = vmatmul.mubr.bf16.gmra.mrb[0].mxu0 %v7913
      %v11218 = vpop.f32.mrb[0].mxu0
      %v11219 = vadd.f32 0.0, %v11218
      %v11220 = vpop.f32.mrb[0].mxu0
      %v11221 = vpop.f32.mrb[0].mxu0
      %v11222 = vadd.f32 0.0, %v11221
      %v11223 = vpop.f32.mrb[0].mxu0
      %11224 = vmatprep.mubr.bf16.mxu0 0
      %11225 = vmatmul.mubr.bf16.gmra.mrb[0].mxu0 %v7916
      %v11226 = vpop.f32.mrb[0].mxu0
      %v11227 = vadd.f32 0.0, %v11226
      %v11228 = vpop.f32.mrb[0].mxu0
      %v11229 = vpop.f32.mrb[0].mxu0
      %v11230 = vadd.f32 0.0, %v11229
      %v11231 = vpop.f32.mrb[0].mxu0
      %11232 = vmatprep.mubr.bf16.mxu0 0
      %11233 = vmatmul.mubr.bf16.gmra.mrb[0].mxu0 %v10928
      %v11234 = vpop.f32.mrb[0].mxu0
      %v11235 = vadd.f32 0.0, %v11234
      %v11236 = vpop.f32.mrb[0].mxu0
      %v11237 = vpop.f32.mrb[0].mxu0
      %v11238 = vadd.f32 0.0, %v11237
      %v11239 = vpop.f32.mrb[0].mxu0
      %11240 = vmatprep.mubr.bf16.mxu0 0
      %11241 = vmatmul.mubr.bf16.gmra.mrb[0].mxu0 %v10931
      %v11242 = vpop.f32.mrb[0].mxu0
      %v11243 = vadd.f32 0.0, %v11242
      %v11244 = vpop.f32.mrb[0].mxu0
      %v11245 = vpop.f32.mrb[0].mxu0
      %v11246 = vadd.f32 0.0, %v11245
      %v11247 = vpop.f32.mrb[0].mxu0
      %11248 = vmatprep.mubr.bf16.mxu0 0
      %11249 = vmatmul.mubr.bf16.gmra.mrb[0].mxu0 %v10934
      %v11250 = vpop.f32.mrb[0].mxu0
      %v11251 = vadd.f32 0.0, %v11250
      %v11252 = vpop.f32.mrb[0].mxu0
      %v11253 = vpop.f32.mrb[0].mxu0
      %v11254 = vadd.f32 0.0, %v11253
      %v11255 = vpop.f32.mrb[0].mxu0
      %11256 = vdwg.mxu0
      %v11257 = vadd.f32 %v10827, %v10971
      %v11258 = vadd.f32 %v10828, %v10974
      %v11259 = vadd.f32 %v10829, %v10979
      %v11260 = vadd.f32 %v10830, %v10982
      %v11261 = vadd.f32 %v10831, %v10987
      %v11262 = vadd.f32 %v10832, %v10990
      %v11263 = vadd.f32 %v10833, %v10995
      %v11264 = vadd.f32 %v10834, %v10998
      %v11265 = vadd.f32 %v10835, %v11003
      %v11266 = vadd.f32 %v10836, %v11006
      %v11267 = vadd.f32 %v10837, %v11011
      %v11268 = vadd.f32 %v10838, %v11014
      %v11269 = vadd.f32 %v10839, %v11019
      %v11270 = vadd.f32 %v10840, %v11022
      %v11271 = vadd.f32 %v10841, %v11027
      %v11272 = vadd.f32 %v10842, %v11030
      %v11273 = vadd.f32 %v10843, %v11035
      %v11274 = vadd.f32 %v10844, %v11038
      %v11275 = vadd.f32 %v10845, %v11043
      %v11276 = vadd.f32 %v10846, %v11046
      %v11277 = vadd.f32 %v10847, %v11051
      %v11278 = vadd.f32 %v10848, %v11054
      %v11279 = vadd.f32 %v10849, %v11059
      %v11280 = vadd.f32 %v10850, %v11062
      %v11281 = vadd.f32 %v10851, %v11067
      %v11282 = vadd.f32 %v10852, %v11070
      %v11283 = vadd.f32 %v10853, %v11075
      %v11284 = vadd.f32 %v10854, %v11078
      %v11285 = vadd.f32 %v10855, %v11083
      %v11286 = vadd.f32 %v10856, %v11086
      %v11287 = vadd.f32 %v10857, %v11091
      %v11288 = vadd.f32 %v10858, %v11094
      %v11289 = vadd.f32 %v10859, %v11099
      %v11290 = vadd.f32 %v10860, %v11102
      %v11291 = vadd.f32 %v10861, %v11107
      %v11292 = vadd.f32 %v10862, %v11110
      %v11293 = vadd.f32 %v10863, %v11115
      %v11294 = vadd.f32 %v10864, %v11118
      %v11295 = vadd.f32 %v10865, %v11123
      %v11296 = vadd.f32 %v10866, %v11126
      %v11297 = vadd.f32 %v10867, %v11131
      %v11298 = vadd.f32 %v10868, %v11134
      %v11299 = vadd.f32 %v10869, %v11139
      %v11300 = vadd.f32 %v10870, %v11142
      %v11301 = vadd.f32 %v10871, %v11147
      %v11302 = vadd.f32 %v10872, %v11150
      %v11303 = vadd.f32 %v10873, %v11155
      %v11304 = vadd.f32 %v10874, %v11158
      %v11305 = vadd.f32 %v10875, %v11163
      %v11306 = vadd.f32 %v10876, %v11166
      %v11307 = vadd.f32 %v10877, %v11171
      %v11308 = vadd.f32 %v10878, %v11174
      %v11309 = vadd.f32 %v10879, %v11179
      %v11310 = vadd.f32 %v10880, %v11182
      %v11311 = vadd.f32 %v10881, %v11187
      %v11312 = vadd.f32 %v10882, %v11190
      %v11313 = vadd.f32 %v10883, %v11195
      %v11314 = vadd.f32 %v10884, %v11198
      %v11315 = vadd.f32 %v10885, %v11203
      %v11316 = vadd.f32 %v10886, %v11206
      %v11317 = vadd.f32 %v10887, %v11211
      %v11318 = vadd.f32 %v10888, %v11214
      %v11319 = vadd.f32 %v10889, %v11219
      %v11320 = vadd.f32 %v10890, %v11222
      %v11321 = vadd.f32 %v10891, %v11227
      %v11322 = vadd.f32 %v10892, %v11230
      %v11323 = vadd.f32 %v10893, %v11235
      %v11324 = vadd.f32 %v10894, %v11238
      %v11325 = vadd.f32 %v10895, %v11243
      %v11326 = vadd.f32 %v10896, %v11246
      %v11327 = vadd.f32 %v10897, %v11251
      %v11328 = vadd.f32 %v10898, %v11254
      %v11329 = vld [vmem:[%s4] sm:$0x1]
      %v11331 = vlaneseq
      %v11332 = vshrl.u32 %v11331, 7
      %v11333 = vsub.s32 0, %v11332
      %v11334 = vrot.slane %v11329, %v11333
      %v11336 = vadd.f32 %v11257, %v11334
      %v11337 = vadd.f32 %v11258, %v11334
      %v11338 = vadd.f32 %v11259, %v11334
      %v11339 = vadd.f32 %v11260, %v11334
      %v11340 = vadd.f32 %v11261, %v11334
      %v11341 = vadd.f32 %v11262, %v11334
      %v11342 = vadd.f32 %v11263, %v11334
      %v11343 = vadd.f32 %v11264, %v11334
      %v11344 = vadd.f32 %v11265, %v11334
      %v11345 = vadd.f32 %v11266, %v11334
      %v11346 = vadd.f32 %v11267, %v11334
      %v11347 = vadd.f32 %v11268, %v11334
      %v11348 = vadd.f32 %v11269, %v11334
      %v11349 = vadd.f32 %v11270, %v11334
      %v11350 = vadd.f32 %v11271, %v11334
      %v11351 = vadd.f32 %v11272, %v11334
      %v11352 = vadd.f32 %v11273, %v11334
      %v11353 = vadd.f32 %v11274, %v11334
      %v11354 = vadd.f32 %v11275, %v11334
      %v11355 = vadd.f32 %v11276, %v11334
      %v11356 = vadd.f32 %v11277, %v11334
      %v11357 = vadd.f32 %v11278, %v11334
      %v11358 = vadd.f32 %v11279, %v11334
      %v11359 = vadd.f32 %v11280, %v11334
      %v11360 = vadd.f32 %v11281, %v11334
      %v11361 = vadd.f32 %v11282, %v11334
      %v11362 = vadd.f32 %v11283, %v11334
      %v11363 = vadd.f32 %v11284, %v11334
      %v11364 = vadd.f32 %v11285, %v11334
      %v11365 = vadd.f32 %v11286, %v11334
      %v11366 = vadd.f32 %v11287, %v11334
      %v11367 = vadd.f32 %v11288, %v11334
      %v11368 = vadd.f32 %v11289, %v11334
      %v11369 = vadd.f32 %v11290, %v11334
      %v11370 = vadd.f32 %v11291, %v11334
      %v11371 = vadd.f32 %v11292, %v11334
      %v11372 = vadd.f32 %v11293, %v11334
      %v11373 = vadd.f32 %v11294, %v11334
      %v11374 = vadd.f32 %v11295, %v11334
      %v11375 = vadd.f32 %v11296, %v11334
      %v11376 = vadd.f32 %v11297, %v11334
      %v11377 = vadd.f32 %v11298, %v11334
      %v11378 = vadd.f32 %v11299, %v11334
      %v11379 = vadd.f32 %v11300, %v11334
      %v11380 = vadd.f32 %v11301, %v11334
      %v11381 = vadd.f32 %v11302, %v11334
      %v11382 = vadd.f32 %v11303, %v11334
      %v11383 = vadd.f32 %v11304, %v11334
      %v11384 = vadd.f32 %v11305, %v11334
      %v11385 = vadd.f32 %v11306, %v11334
      %v11386 = vadd.f32 %v11307, %v11334
      %v11387 = vadd.f32 %v11308, %v11334
      %v11388 = vadd.f32 %v11309, %v11334
      %v11389 = vadd.f32 %v11310, %v11334
      %v11390 = vadd.f32 %v11311, %v11334
      %v11391 = vadd.f32 %v11312, %v11334
      %v11392 = vadd.f32 %v11313, %v11334
      %v11393 = vadd.f32 %v11314, %v11334
      %v11394 = vadd.f32 %v11315, %v11334
      %v11395 = vadd.f32 %v11316, %v11334
      %v11396 = vadd.f32 %v11317, %v11334
      %v11397 = vadd.f32 %v11318, %v11334
      %v11398 = vadd.f32 %v11319, %v11334
      %v11399 = vadd.f32 %v11320, %v11334
      %v11400 = vadd.f32 %v11321, %v11334
      %v11401 = vadd.f32 %v11322, %v11334
      %v11402 = vadd.f32 %v11323, %v11334
      %v11403 = vadd.f32 %v11324, %v11334
      %v11404 = vadd.f32 %v11325, %v11334
      %v11405 = vadd.f32 %v11326, %v11334
      %v11406 = vadd.f32 %v11327, %v11334
      %v11407 = vadd.f32 %v11328, %v11334
      %v11408 = vmax.f32 %v11336, 0.0
      %v11409 = vmax.f32 %v11337, 0.0
      %v11410 = vmax.f32 %v11338, 0.0
      %v11411 = vmax.f32 %v11339, 0.0
      %v11412 = vmax.f32 %v11340, 0.0
      %v11413 = vmax.f32 %v11341, 0.0
      %v11414 = vmax.f32 %v11342, 0.0
      %v11415 = vmax.f32 %v11343, 0.0
      %v11416 = vmax.f32 %v11344, 0.0
      %v11417 = vmax.f32 %v11345, 0.0
      %v11418 = vmax.f32 %v11346, 0.0
      %v11419 = vmax.f32 %v11347, 0.0
      %v11420 = vmax.f32 %v11348, 0.0
      %v11421 = vmax.f32 %v11349, 0.0
      %v11422 = vmax.f32 %v11350, 0.0
      %v11423 = vmax.f32 %v11351, 0.0
      %v11424 = vmax.f32 %v11352, 0.0
      %v11425 = vmax.f32 %v11353, 0.0
      %v11426 = vmax.f32 %v11354, 0.0
      %v11427 = vmax.f32 %v11355, 0.0
      %v11428 = vmax.f32 %v11356, 0.0
      %v11429 = vmax.f32 %v11357, 0.0
      %v11430 = vmax.f32 %v11358, 0.0
      %v11431 = vmax.f32 %v11359, 0.0
      %v11432 = vmax.f32 %v11360, 0.0
      %v11433 = vmax.f32 %v11361, 0.0
      %v11434 = vmax.f32 %v11362, 0.0
      %v11435 = vmax.f32 %v11363, 0.0
      %v11436 = vmax.f32 %v11364, 0.0
      %v11437 = vmax.f32 %v11365, 0.0
      %v11438 = vmax.f32 %v11366, 0.0
      %v11439 = vmax.f32 %v11367, 0.0
      %v11440 = vmax.f32 %v11368, 0.0
      %v11441 = vmax.f32 %v11369, 0.0
      %v11442 = vmax.f32 %v11370, 0.0
      %v11443 = vmax.f32 %v11371, 0.0
      %v11444 = vmax.f32 %v11372, 0.0
      %v11445 = vmax.f32 %v11373, 0.0
      %v11446 = vmax.f32 %v11374, 0.0
      %v11447 = vmax.f32 %v11375, 0.0
      %v11448 = vmax.f32 %v11376, 0.0
      %v11449 = vmax.f32 %v11377, 0.0
      %v11450 = vmax.f32 %v11378, 0.0
      %v11451 = vmax.f32 %v11379, 0.0
      %v11452 = vmax.f32 %v11380, 0.0
      %v11453 = vmax.f32 %v11381, 0.0
      %v11454 = vmax.f32 %v11382, 0.0
      %v11455 = vmax.f32 %v11383, 0.0
      %v11456 = vmax.f32 %v11384, 0.0
      %v11457 = vmax.f32 %v11385, 0.0
      %v11458 = vmax.f32 %v11386, 0.0
      %v11459 = vmax.f32 %v11387, 0.0
      %v11460 = vmax.f32 %v11388, 0.0
      %v11461 = vmax.f32 %v11389, 0.0
      %v11462 = vmax.f32 %v11390, 0.0
      %v11463 = vmax.f32 %v11391, 0.0
      %v11464 = vmax.f32 %v11392, 0.0
      %v11465 = vmax.f32 %v11393, 0.0
      %v11466 = vmax.f32 %v11394, 0.0
      %v11467 = vmax.f32 %v11395, 0.0
      %v11468 = vmax.f32 %v11396, 0.0
      %v11469 = vmax.f32 %v11397, 0.0
      %v11470 = vmax.f32 %v11398, 0.0
      %v11471 = vmax.f32 %v11399, 0.0
      %v11472 = vmax.f32 %v11400, 0.0
      %v11473 = vmax.f32 %v11401, 0.0
      %v11474 = vmax.f32 %v11402, 0.0
      %v11475 = vmax.f32 %v11403, 0.0
      %v11476 = vmax.f32 %v11404, 0.0
      %v11477 = vmax.f32 %v11405, 0.0
      %v11478 = vmax.f32 %v11406, 0.0
      %v11479 = vmax.f32 %v11407, 0.0
      %v11480 = vmax.f32 %v11408, %v11411
      %v11481 = vmax.f32 %v11409, %v11412
      %v11482 = vmax.f32 %v11410, %v11413
      %v11483 = vmax.f32 %v11414, %v11417
      %v11484 = vmax.f32 %v11415, %v11418
      %v11485 = vmax.f32 %v11416, %v11419
      %v11486 = vmax.f32 %v11420, %v11423
      %v11487 = vmax.f32 %v11421, %v11424
      %v11488 = vmax.f32 %v11422, %v11425
      %v11489 = vmax.f32 %v11426, %v11429
      %v11490 = vmax.f32 %v11427, %v11430
      %v11491 = vmax.f32 %v11428, %v11431
      %v11492 = vmax.f32 %v11432, %v11435
      %v11493 = vmax.f32 %v11433, %v11436
      %v11494 = vmax.f32 %v11434, %v11437
      %v11495 = vmax.f32 %v11438, %v11441
      %v11496 = vmax.f32 %v11439, %v11442
      %v11497 = vmax.f32 %v11440, %v11443
      %v11498 = vmax.f32 %v11444, %v11447
      %v11499 = vmax.f32 %v11445, %v11448
      %v11500 = vmax.f32 %v11446, %v11449
      %v11501 = vmax.f32 %v11450, %v11453
      %v11502 = vmax.f32 %v11451, %v11454
      %v11503 = vmax.f32 %v11452, %v11455
      %v11504 = vmax.f32 %v11456, %v11459
      %v11505 = vmax.f32 %v11457, %v11460
      %v11506 = vmax.f32 %v11458, %v11461
      %v11507 = vmax.f32 %v11462, %v11465
      %v11508 = vmax.f32 %v11463, %v11466
      %v11509 = vmax.f32 %v11464, %v11467
      %v11510 = vmax.f32 %v11468, %v11471
      %v11511 = vmax.f32 %v11469, %v11472
      %v11512 = vmax.f32 %v11470, %v11473
      %v11513 = vmax.f32 %v11474, %v11477
      %v11514 = vmax.f32 %v11475, %v11478
      %v11515 = vmax.f32 %v11476, %v11479
      %vm11516 = vcmask 523264
      %11517 = vst.msk [vmem:[#allocation2] sm:$0xff] %vm11516, %v11480
      %11518 = vst.msk [vmem:[#allocation2 + $0x8] sm:$0xff] %vm11516, %v11481
      %11519 = vst.msk [vmem:[#allocation2 + $0x10] sm:$0xff] %vm11516, %v11482
      %11520 = vst.msk [vmem:[#allocation2 + $0x18] sm:$0xff] %vm11516, %v11483
      %11521 = vst.msk [vmem:[#allocation2 + $0x20] sm:$0xff] %vm11516, %v11484
      %11522 = vst.msk [vmem:[#allocation2 + $0x28] sm:$0xff] %vm11516, %v11485
      %11523 = vst.msk [vmem:[#allocation2 + $0x30] sm:$0xff] %vm11516, %v11486
      %11524 = vst.msk [vmem:[#allocation2 + $0x38] sm:$0xff] %vm11516, %v11487
      %11525 = vst.msk [vmem:[#allocation2 + $0x40] sm:$0xff] %vm11516, %v11488
      %11526 = vst.msk [vmem:[#allocation2 + $0x48] sm:$0xff] %vm11516, %v11489
      %11527 = vst.msk [vmem:[#allocation2 + $0x50] sm:$0xff] %vm11516, %v11490
      %11528 = vst.msk [vmem:[#allocation2 + $0x58] sm:$0xff] %vm11516, %v11491
      %11529 = vst.msk [vmem:[#allocation2 + $0x60] sm:$0xff] %vm11516, %v11492
      %11530 = vst.msk [vmem:[#allocation2 + $0x68] sm:$0xff] %vm11516, %v11493
      %11531 = vst.msk [vmem:[#allocation2 + $0x70] sm:$0xff] %vm11516, %v11494
      %11532 = vst.msk [vmem:[#allocation2 + $0x78] sm:$0xff] %vm11516, %v11495
      %11533 = vst.msk [vmem:[#allocation2 + $0x80] sm:$0xff] %vm11516, %v11496
      %11534 = vst.msk [vmem:[#allocation2 + $0x88] sm:$0xff] %vm11516, %v11497
      %11535 = vst.msk [vmem:[#allocation2 + $0x90] sm:$0xff] %vm11516, %v11498
      %11536 = vst.msk [vmem:[#allocation2 + $0x98] sm:$0xff] %vm11516, %v11499
      %11537 = vst.msk [vmem:[#allocation2 + $0xa0] sm:$0xff] %vm11516, %v11500
      %11538 = vst.msk [vmem:[#allocation2 + $0xa8] sm:$0xff] %vm11516, %v11501
      %11539 = vst.msk [vmem:[#allocation2 + $0xb0] sm:$0xff] %vm11516, %v11502
      %11540 = vst.msk [vmem:[#allocation2 + $0xb8] sm:$0xff] %vm11516, %v11503
      %11541 = vst.msk [vmem:[#allocation2 + $0xc0] sm:$0xff] %vm11516, %v11504
      %11542 = vst.msk [vmem:[#allocation2 + $0xc8] sm:$0xff] %vm11516, %v11505
      %11543 = vst.msk [vmem:[#allocation2 + $0xd0] sm:$0xff] %vm11516, %v11506
      %11544 = vst.msk [vmem:[#allocation2 + $0xd8] sm:$0xff] %vm11516, %v11507
      %11545 = vst.msk [vmem:[#allocation2 + $0xe0] sm:$0xff] %vm11516, %v11508
      %11546 = vst.msk [vmem:[#allocation2 + $0xe8] sm:$0xff] %vm11516, %v11509
      %11547 = vst.msk [vmem:[#allocation2 + $0xf0] sm:$0xff] %vm11516, %v11510
      %11548 = vst.msk [vmem:[#allocation2 + $0xf8] sm:$0xff] %vm11516, %v11511
      %11549 = vst.msk [vmem:[#allocation2 + $0x100] sm:$0xff] %vm11516, %v11512
      %11550 = vst.msk [vmem:[#allocation2 + $0x108] sm:$0xff] %vm11516, %v11513
      %11551 = vst.msk [vmem:[#allocation2 + $0x110] sm:$0xff] %vm11516, %v11514
      %11552 = vst.msk [vmem:[#allocation2 + $0x118] sm:$0xff] %vm11516, %v11515
      %v11553 = vld [vmem:[#allocation2] ss:$2 sm:$0xff]
      %s11554 = scalar_lea.vmem [#allocation2], 16
      %v11555 = vld [vmem:[%s11554] ss:$2 sm:$0xf]
      %s11556 = scalar_lea.vmem [#allocation2], 24
      %v11557 = vld [vmem:[%s11556] ss:$2 sm:$0xff]
      %s11558 = scalar_lea.vmem [#allocation2], 40
      %v11559 = vld [vmem:[%s11558] ss:$2 sm:$0xf]
      %s11560 = scalar_lea.vmem [#allocation2], 48
      %v11561 = vld [vmem:[%s11560] ss:$2 sm:$0xff]
      %s11562 = scalar_lea.vmem [#allocation2], 64
      %v11563 = vld [vmem:[%s11562] ss:$2 sm:$0xf]
      %s11564 = scalar_lea.vmem [#allocation2], 72
      %v11565 = vld [vmem:[%s11564] ss:$2 sm:$0xff]
      %s11566 = scalar_lea.vmem [#allocation2], 88
      %v11567 = vld [vmem:[%s11566] ss:$2 sm:$0xf]
      %s11568 = scalar_lea.vmem [#allocation2], 96
      %v11569 = vld [vmem:[%s11568] ss:$2 sm:$0xff]
      %s11570 = scalar_lea.vmem [#allocation2], 112
      %v11571 = vld [vmem:[%s11570] ss:$2 sm:$0xf]
      %s11572 = scalar_lea.vmem [#allocation2], 120
      %v11573 = vld [vmem:[%s11572] ss:$2 sm:$0xff]
      %s11574 = scalar_lea.vmem [#allocation2], 136
      %v11575 = vld [vmem:[%s11574] ss:$2 sm:$0xf]
      %s11576 = scalar_lea.vmem [#allocation2], 144
      %v11577 = vld [vmem:[%s11576] ss:$2 sm:$0xff]
      %s11578 = scalar_lea.vmem [#allocation2], 160
      %v11579 = vld [vmem:[%s11578] ss:$2 sm:$0xf]
      %s11580 = scalar_lea.vmem [#allocation2], 168
      %v11581 = vld [vmem:[%s11580] ss:$2 sm:$0xff]
      %s11582 = scalar_lea.vmem [#allocation2], 184
      %v11583 = vld [vmem:[%s11582] ss:$2 sm:$0xf]
      %s11584 = scalar_lea.vmem [#allocation2], 192
      %v11585 = vld [vmem:[%s11584] ss:$2 sm:$0xff]
      %s11586 = scalar_lea.vmem [#allocation2], 208
      %v11587 = vld [vmem:[%s11586] ss:$2 sm:$0xf]
      %s11588 = scalar_lea.vmem [#allocation2], 216
      %v11589 = vld [vmem:[%s11588] ss:$2 sm:$0xff]
      %s11590 = scalar_lea.vmem [#allocation2], 232
      %v11591 = vld [vmem:[%s11590] ss:$2 sm:$0xf]
      %s11592 = scalar_lea.vmem [#allocation2], 240
      %v11593 = vld [vmem:[%s11592] ss:$2 sm:$0xff]
      %s11594 = scalar_lea.vmem [#allocation2], 256
      %v11595 = vld [vmem:[%s11594] ss:$2 sm:$0xf]
      %s11596 = scalar_lea.vmem [#allocation2], 264
      %v11597 = vld [vmem:[%s11596] ss:$2 sm:$0xff]
      %s11598 = scalar_lea.vmem [#allocation2], 280
      %v11599 = vld [vmem:[%s11598] ss:$2 sm:$0xf]
      %s11600 = scalar_lea.vmem [#allocation2], 1
      %v11601 = vld [vmem:[%s11600] ss:$2 sm:$0xff]
      %s11602 = scalar_lea.vmem [#allocation2], 17
      %v11603 = vld [vmem:[%s11602] ss:$2 sm:$0xf]
      %s11604 = scalar_lea.vmem [#allocation2], 25
      %v11605 = vld [vmem:[%s11604] ss:$2 sm:$0xff]
      %s11606 = scalar_lea.vmem [#allocation2], 41
      %v11607 = vld [vmem:[%s11606] ss:$2 sm:$0xf]
      %s11608 = scalar_lea.vmem [#allocation2], 49
      %v11609 = vld [vmem:[%s11608] ss:$2 sm:$0xff]
      %s11610 = scalar_lea.vmem [#allocation2], 65
      %v11611 = vld [vmem:[%s11610] ss:$2 sm:$0xf]
      %s11612 = scalar_lea.vmem [#allocation2], 73
      %v11613 = vld [vmem:[%s11612] ss:$2 sm:$0xff]
      %s11614 = scalar_lea.vmem [#allocation2], 89
      %v11615 = vld [vmem:[%s11614] ss:$2 sm:$0xf]
      %s11616 = scalar_lea.vmem [#allocation2], 97
      %v11617 = vld [vmem:[%s11616] ss:$2 sm:$0xff]
      %s11618 = scalar_lea.vmem [#allocation2], 113
      %v11619 = vld [vmem:[%s11618] ss:$2 sm:$0xf]
      %s11620 = scalar_lea.vmem [#allocation2], 121
      %v11621 = vld [vmem:[%s11620] ss:$2 sm:$0xff]
      %s11622 = scalar_lea.vmem [#allocation2], 137
      %v11623 = vld [vmem:[%s11622] ss:$2 sm:$0xf]
      %s11624 = scalar_lea.vmem [#allocation2], 145
      %v11625 = vld [vmem:[%s11624] ss:$2 sm:$0xff]
      %s11626 = scalar_lea.vmem [#allocation2], 161
      %v11627 = vld [vmem:[%s11626] ss:$2 sm:$0xf]
      %s11628 = scalar_lea.vmem [#allocation2], 169
      %v11629 = vld [vmem:[%s11628] ss:$2 sm:$0xff]
      %s11630 = scalar_lea.vmem [#allocation2], 185
      %v11631 = vld [vmem:[%s11630] ss:$2 sm:$0xf]
      %s11632 = scalar_lea.vmem [#allocation2], 193
      %v11633 = vld [vmem:[%s11632] ss:$2 sm:$0xff]
      %s11634 = scalar_lea.vmem [#allocation2], 209
      %v11635 = vld [vmem:[%s11634] ss:$2 sm:$0xf]
      %s11636 = scalar_lea.vmem [#allocation2], 217
      %v11637 = vld [vmem:[%s11636] ss:$2 sm:$0xff]
      %s11638 = scalar_lea.vmem [#allocation2], 233
      %v11639 = vld [vmem:[%s11638] ss:$2 sm:$0xf]
      %s11640 = scalar_lea.vmem [#allocation2], 241
      %v11641 = vld [vmem:[%s11640] ss:$2 sm:$0xff]
      %s11642 = scalar_lea.vmem [#allocation2], 257
      %v11643 = vld [vmem:[%s11642] ss:$2 sm:$0xf]
      %s11644 = scalar_lea.vmem [#allocation2], 265
      %v11645 = vld [vmem:[%s11644] ss:$2 sm:$0xff]
      %s11646 = scalar_lea.vmem [#allocation2], 281
      %v11647 = vld [vmem:[%s11646] ss:$2 sm:$0xf]
      %v11648 = vmax.f32 %v11553, %v11601
      %v11649 = vmax.f32 %v11555, %v11603
      %v11650 = vmax.f32 %v11557, %v11605
      %v11651 = vmax.f32 %v11559, %v11607
      %v11652 = vmax.f32 %v11561, %v11609
      %v11653 = vmax.f32 %v11563, %v11611
      %v11654 = vmax.f32 %v11565, %v11613
      %v11655 = vmax.f32 %v11567, %v11615
      %v11656 = vmax.f32 %v11569, %v11617
      %v11657 = vmax.f32 %v11571, %v11619
      %v11658 = vmax.f32 %v11573, %v11621
      %v11659 = vmax.f32 %v11575, %v11623
      %v11660 = vmax.f32 %v11577, %v11625
      %v11661 = vmax.f32 %v11579, %v11627
      %v11662 = vmax.f32 %v11581, %v11629
      %v11663 = vmax.f32 %v11583, %v11631
      %v11664 = vmax.f32 %v11585, %v11633
      %v11665 = vmax.f32 %v11587, %v11635
      %v11666 = vmax.f32 %v11589, %v11637
      %v11667 = vmax.f32 %v11591, %v11639
      %v11668 = vmax.f32 %v11593, %v11641
      %v11669 = vmax.f32 %v11595, %v11643
      %v11670 = vmax.f32 %v11597, %v11645
      %v11671 = vmax.f32 %v11599, %v11647
      %v11672 = vpack.c.bf16 %v11649, %v11648
      %v11673 = vpack.c.bf16 %v11651, %v11650
      %v11674 = vpack.c.bf16 %v11653, %v11652
      %v11675 = vpack.c.bf16 %v11655, %v11654
      %v11676 = vpack.c.bf16 %v11657, %v11656
      %v11677 = vpack.c.bf16 %v11659, %v11658
      %v11678 = vpack.c.bf16 %v11661, %v11660
      %v11679 = vpack.c.bf16 %v11663, %v11662
      %v11680 = vpack.c.bf16 %v11665, %v11664
      %v11681 = vpack.c.bf16 %v11667, %v11666
      %v11682 = vpack.c.bf16 %v11669, %v11668
      %v11683 = vpack.c.bf16 %v11671, %v11670
      %v11696 = vunpack.c.l.b16 %v11672
      %v11697 = vunpack.c.h.b16 %v11672
      %v11698 = vunpack.c.l.b16 %v11673
      %v11699 = vunpack.c.h.b16 %v11673
      %v11700 = vunpack.c.l.b16 %v11674
      %v11701 = vunpack.c.h.b16 %v11674
      %v11702 = vunpack.c.l.b16 %v11675
      %v11703 = vunpack.c.h.b16 %v11675
      %v11704 = vunpack.c.l.b16 %v11676
      %v11705 = vunpack.c.h.b16 %v11676
      %v11706 = vunpack.c.l.b16 %v11677
      %v11707 = vunpack.c.h.b16 %v11677
      %v11708 = vunpack.c.l.b16 %v11678
      %v11709 = vunpack.c.h.b16 %v11678
      %v11710 = vunpack.c.l.b16 %v11679
      %v11711 = vunpack.c.h.b16 %v11679
      %v11712 = vunpack.c.l.b16 %v11680
      %v11713 = vunpack.c.h.b16 %v11680
      %v11714 = vunpack.c.l.b16 %v11681
      %v11715 = vunpack.c.h.b16 %v11681
      %v11716 = vunpack.c.l.b16 %v11682
      %v11717 = vunpack.c.h.b16 %v11682
      %v11718 = vunpack.c.l.b16 %v11683
      %v11719 = vunpack.c.h.b16 %v11683
      %v11720 = vpack.c.b16 %v11696, %v11696
      %v11721 = vpack.c.b16 %v11697, %v11697
      %v11722 = vpack.c.b16 %v11698, %v11698
      %v11723 = vpack.c.b16 %v11699, %v11699
      %v11724 = vpack.c.b16 %v11700, %v11700
      %v11725 = vpack.c.b16 %v11701, %v11701
      %v11726 = vpack.c.b16 %v11702, %v11702
      %v11727 = vpack.c.b16 %v11703, %v11703
      %v11728 = vpack.c.b16 %v11704, %v11704
      %v11729 = vpack.c.b16 %v11705, %v11705
      %v11730 = vpack.c.b16 %v11706, %v11706
      %v11731 = vpack.c.b16 %v11707, %v11707
      %v11732 = vpack.c.b16 %v11708, %v11708
      %v11733 = vpack.c.b16 %v11709, %v11709
      %v11734 = vpack.c.b16 %v11710, %v11710
      %v11735 = vpack.c.b16 %v11711, %v11711
      %v11736 = vpack.c.b16 %v11712, %v11712
      %v11737 = vpack.c.b16 %v11713, %v11713
      %v11738 = vpack.c.b16 %v11714, %v11714
      %v11739 = vpack.c.b16 %v11715, %v11715
      %v11740 = vpack.c.b16 %v11716, %v11716
      %v11741 = vpack.c.b16 %v11717, %v11717
      %v11742 = vpack.c.b16 %v11718, %v11718
      %v11743 = vpack.c.b16 %v11719, %v11719
      %vm11768 = vcmask 519168
      %11769 = vst.msk [vmem:[%s226] sm:$0xf] %vm11768, %v11720
      %vm11770 = vcmask 517120
      %11771 = vst.msk [vmem:[%s226 + $0x4] sm:$0x3] %vm11770, %v11721
      %11772 = vst.msk [vmem:[%s226 + $0x8] sm:$0xf] %vm11768, %v11722
      %11773 = vst.msk [vmem:[%s226 + $0xc] sm:$0x3] %vm11770, %v11723
      %11774 = vst.msk [vmem:[%s226 + $0x10] sm:$0xf] %vm11768, %v11724
      %11775 = vst.msk [vmem:[%s226 + $0x14] sm:$0x3] %vm11770, %v11725
      %11776 = vst.msk [vmem:[%s226 + $0x18] sm:$0xf] %vm11768, %v11726
      %11777 = vst.msk [vmem:[%s226 + $0x1c] sm:$0x3] %vm11770, %v11727
      %11778 = vst.msk [vmem:[%s226 + $0x20] sm:$0xf] %vm11768, %v11728
      %11779 = vst.msk [vmem:[%s226 + $0x24] sm:$0x3] %vm11770, %v11729
      %11780 = vst.msk [vmem:[%s226 + $0x28] sm:$0xf] %vm11768, %v11730
      %11781 = vst.msk [vmem:[%s226 + $0x2c] sm:$0x3] %vm11770, %v11731
      %11782 = vst.msk [vmem:[%s226 + $0x30] sm:$0xf] %vm11768, %v11732
      %11783 = vst.msk [vmem:[%s226 + $0x34] sm:$0x3] %vm11770, %v11733
      %11784 = vst.msk [vmem:[%s226 + $0x38] sm:$0xf] %vm11768, %v11734
      %11785 = vst.msk [vmem:[%s226 + $0x3c] sm:$0x3] %vm11770, %v11735
      %11786 = vst.msk [vmem:[%s226 + $0x40] sm:$0xf] %vm11768, %v11736
      %11787 = vst.msk [vmem:[%s226 + $0x44] sm:$0x3] %vm11770, %v11737
      %11788 = vst.msk [vmem:[%s226 + $0x48] sm:$0xf] %vm11768, %v11738
      %11789 = vst.msk [vmem:[%s226 + $0x4c] sm:$0x3] %vm11770, %v11739
      %11790 = vst.msk [vmem:[%s226 + $0x50] sm:$0xf] %vm11768, %v11740
      %11791 = vst.msk [vmem:[%s226 + $0x54] sm:$0x3] %vm11770, %v11741
      %11792 = vst.msk [vmem:[%s226 + $0x58] sm:$0xf] %vm11768, %v11742
      %11793 = vst.msk [vmem:[%s226 + $0x5c] sm:$0x3] %vm11770, %v11743
      %s11794 = smul.u32 12, %s16
      %p11795 = scmp.lt.s32.totalorder %s11794, 23
      %s11796 = scalar_select %p11795, %s11794, 23
      %s11797 = smul.addr %s11796, 2
      %s11798 = smul.addr %s11797, 4
      %s11799 = scalar_lea.vmem %s5, %s11798
      // Predicated region
      $region41: #{tpu_custom_call.1} parent=39 // pred_check
        %p11800 = pneg %p144
      $region42: #{tpu_custom_call.1} parent=39 // pred_check_branch
        %11802 = sbr.rel (%p11800) target = $region44
      $region43: #{tpu_custom_call.1} parent=39 // pred_region
        %s11803 = smul.u32 12, %s16
      $region44: #{tpu_custom_call.1} parent=39 // pred_fallthru
        _
    $region40: #{tpu_custom_call.1} parent=5 // pred_fallthru
      _
    %p11804 = scmp.le.s32.totalorder 2, %s11
    // Predicated region
    $region45: #{tpu_custom_call.1} parent=5 // pred_check
      %p11805 = pneg %p11804
    $region46: #{tpu_custom_call.1} parent=5 // pred_check_branch
      %11807 = sbr.rel (%p11805) target = $region48
    $region47: #{tpu_custom_call.1} parent=5 // pred_region
      %s11808 = ssub.s32 %s11, 2
      // Predicated region
      $region49: #{tpu_custom_call.1} parent=47 // pred_check
        %p11809 = pneg %p150
      $region50: #{tpu_custom_call.1} parent=47 // pred_check_branch
        %11811 = sbr.rel (%p11809) target = $region52
      $region51: #{tpu_custom_call.1} parent=47 // pred_region
        %s11812 = smul.u32 12, %s17
        %p11813 = scmp.lt.s32.totalorder %s11812, 23
        %s11814 = scalar_select %p11813, %s11812, 23
        %s11815 = smul.addr %s11814, 2
        %s11816 = smul.addr %s11815, 4
        %s11817 = scalar_lea.vmem %s5, %s11816
      $region52: #{tpu_custom_call.1} parent=47 // pred_fallthru
        _
    $region48: #{tpu_custom_call.1} parent=5 // pred_fallthru
      _
  $region6: #{tpu_custom_call.1} parent=0 // loop_footer
    %s15 = sadd.s32 1, %s11
  $region7: #{tpu_custom_call.1} parent=0 // loop_footer_branch
    %10 = sbr.rel target = $region3
  $region8: #{tpu_custom_call.1} parent=0 // loop_exit
    _

</llo_original>
